<compile_context>
chip_gen: v7x
topology: tpu7x:2x2x1
jax: 0.10.0
libtpu: 0.0.40
codegen_flags: <defaults>
</compile_context>

<pallas_src>
import math

import jax
import jax.numpy as jnp
from jax import lax
from jax.experimental import pallas as pl
from jax.experimental.pallas import tpu as pltpu

IMG_BLOCK = 16  # images per grid step; keeps block sublane counts a multiple of 16 (bf16 tile)


def _round_up(v, m):
    return (v + m - 1) // m * m


class CNNLSTMPallas:
    """Pallas equivalent of the PyTorch CNN_LSTM head."""

    def __init__(self, D_in, D_hidden=512, key=None):
        assert D_in[1] >= 36 and D_in[2] >= 36
        c_in, h, w = D_in
        self.c_in, self.h_in, self.w_in = c_in, h, w
        self.D_hidden = D_hidden

        key = jax.random.PRNGKey(0) if key is None else key
        ks = jax.random.split(key, 10)

        # ---- canonical f32 parameters (PyTorch default init) ----
        def conv_init(kw_, kb_, ksize, cin, cout):
            bound = 1.0 / math.sqrt(cin * ksize * ksize)
            wgt = jax.random.uniform(kw_, (ksize, ksize, cin, cout), jnp.float32, -bound, bound)
            bia = jax.random.uniform(kb_, (cout,), jnp.float32, -bound, bound)
            return wgt, bia

        self.w1, self.b1 = conv_init(ks[0], ks[1], 8, c_in, 32)   # HWIO
        self.w2, self.b2 = conv_init(ks[2], ks[3], 4, 32, 64)
        self.w3, self.b3 = conv_init(ks[4], ks[5], 3, 64, 64)

        self.oh1 = (h - 8) // 4 + 1
        self.ow1 = (w - 8) // 4 + 1
        self.oh2 = (self.oh1 - 4) // 2 + 1
        self.ow2 = (self.ow1 - 4) // 2 + 1
        self.oh3 = self.oh2 - 2
        self.ow3 = self.ow2 - 2
        self.D_conv_out = 64 * self.oh3 * self.ow3
        self.D_head_out = D_hidden

        bound = 1.0 / math.sqrt(D_hidden)
        self.w_ih = jax.random.uniform(ks[6], (4 * D_hidden, self.D_conv_out), jnp.float32, -bound, bound)
        self.w_hh = jax.random.uniform(ks[7], (4 * D_hidden, D_hidden), jnp.float32, -bound, bound)
        self.b_ih = jax.random.uniform(ks[8], (4 * D_hidden,), jnp.float32, -bound, bound)
        self.b_hh = jax.random.uniform(ks[9], (4 * D_hidden,), jnp.float32, -bound, bound)

        # ---- geometry of the space-to-depth'ed (stride-1) conv stages ----
        # conv1: s2d(4) on the input -> 2x2 / stride-1 conv on a (oh1+1, ow1+1) grid
        # conv2: s2d(2) on act1      -> 2x2 / stride-1 conv on a (oh2+1, ow2+1) grid
        # conv3: already stride 1    -> 3x3 conv on the conv2 output grid
        self.h1g, self.w1g = self.oh1 + 1, self.ow1 + 1
        self.r1 = self.h1g * self.w1g
        self.h2g, self.w2g = self.oh2 + 1, self.ow2 + 1
        self.r2 = self.h2g * self.w2g

        self.blk1 = IMG_BLOCK * self.r1
        self.l1 = self.blk1 - (self.w1g + 1)          # 2x2 kernel max offset
        self.blk2 = IMG_BLOCK * self.r2
        self.l2 = self.blk2 - (self.w2g + 1)          # 2x2 kernel max offset
        self.l3 = self.l2 - (2 * self.w2g + 2)        # 3x3 kernel max offset

        # every *valid* output row index must fall below L (junk rows beyond it)
        assert (IMG_BLOCK - 1) * self.r1 + (self.oh1 - 1) * self.w1g + self.ow1 - 1 < self.l1
        assert (IMG_BLOCK - 1) * self.r2 + (self.oh2 - 1) * self.w2g + self.ow2 - 1 < self.l2
        assert (IMG_BLOCK - 1) * self.r2 + (self.oh3 - 1) * self.w2g + self.ow3 - 1 < self.l3

        # ---- kernel-ready weights: bf16, 1/255 folded into w1, Cout padded to 128 ----
        c1 = 16 * c_in
        w1t = self.w1.reshape(2, 4, 2, 4, c_in, 32).transpose(0, 2, 1, 3, 4, 5)
        w1t = w1t.reshape(4, c1, 32) * (1.0 / 255.0)
        self.w1_k = jnp.pad(w1t, ((0, 0), (0, 0), (0, 96))).astype(jnp.bfloat16)
        self.b1_k = jnp.pad(self.b1, (0, 96)).reshape(1, 128).astype(jnp.float32)

        w2t = self.w2.reshape(2, 2, 2, 2, 32, 64).transpose(0, 2, 1, 3, 4, 5).reshape(4, 128, 64)
        self.w2_k = jnp.pad(w2t, ((0, 0), (0, 0), (0, 64))).astype(jnp.bfloat16)
        self.b2_k = jnp.pad(self.b2, (0, 64)).reshape(1, 128).astype(jnp.float32)

        w3t = self.w3.reshape(9, 64, 64)
        self.w3_k = jnp.pad(w3t, ((0, 0), (0, 64), (0, 64))).astype(jnp.bfloat16)
        self.b3_k = jnp.pad(self.b3, (0, 64)).reshape(1, 128).astype(jnp.float32)

        # LSTM input weights permuted once so the NHWC flatten of conv features
        # can be consumed directly (no activation transpose per forward).
        wih_nhwc = self.w_ih.reshape(4 * D_hidden, 64, self.oh3, self.ow3)
        wih_nhwc = wih_nhwc.transpose(0, 2, 3, 1).reshape(4 * D_hidden, self.D_conv_out)
        self.wih_k = jnp.asarray(wih_nhwc.T, jnp.float32)        # (D_conv, 4H)
        self.whh_k = jnp.asarray(self.w_hh.T, jnp.float32)       # (H, 4H)
        self.bl_k = (self.b_ih + self.b_hh).reshape(1, 4 * D_hidden).astype(jnp.float32)

    # ------------------------------------------------------------------ conv1
    def _conv1_call(self, x2d, grid):
        w1g, L, blk = self.w1g, self.l1, self.blk1
        offsets = [i * w1g + j for i in range(2) for j in range(2)]
        c1 = x2d.shape[1]
        M = x2d.shape[0]

        def kernel(x_ref, w_ref, b_ref, o_ref):
            acc = jnp.zeros((L, 128), jnp.float32)
            for k, off in enumerate(offsets):
                acc = acc + jnp.dot(x_ref[off:off + L, :], w_ref[k],
                                    preferred_element_type=jnp.float32)
            o_ref[0:L, :] = jnp.maximum(acc + b_ref[...], 0.0).astype(o_ref.dtype)
            o_ref[L:, :] = jnp.zeros((blk - L, 128), o_ref.dtype)

        cost = pl.CostEstimate(
            flops=2 * M * c1 * 128 * len(offsets),
            transcendentals=0,
            bytes_accessed=int(2 * (x2d.size + self.w1_k.size + M * 128) + 4 * 128))
        return pl.pallas_call(
            kernel,
            out_shape=jax.ShapeDtypeStruct((M, 128), jnp.bfloat16),
            grid_spec=pltpu.PrefetchScalarGridSpec(
                num_scalar_prefetch=0,
                grid=(grid,),
                in_specs=[
                    pl.BlockSpec((blk, c1), lambda b: (b, 0)),
                    pl.BlockSpec((4, c1, 128), lambda b: (0, 0, 0)),
                    pl.BlockSpec((1, 128), lambda b: (0, 0)),
                ],
                out_specs=pl.BlockSpec((blk, 128), lambda b: (b, 0)),
            ),
            compiler_params=pltpu.CompilerParams(dimension_semantics=("parallel",)),
            cost_estimate=cost,
        )(x2d, self.w1_k, self.b1_k)

    # ----------------------------------------------------------- conv2 + conv3
    def _conv23_call(self, x2d, grid):
        w2g, L2, L3, blk = self.w2g, self.l2, self.l3, self.blk2
        offs2 = [i * w2g + j for i in range(2) for j in range(2)]
        offs3 = [i * w2g + j for i in range(3) for j in range(3)]
        M = x2d.shape[0]

        def kernel(x_ref, w2_ref, b2_ref, w3_ref, b3_ref, o_ref):
            acc2 = jnp.zeros((L2, 128), jnp.float32)
            for k, off in enumerate(offs2):
                acc2 = acc2 + jnp.dot(x_ref[off:off + L2, :], w2_ref[k],
                                      preferred_element_type=jnp.float32)
            a2 = jnp.maximum(acc2 + b2_ref[...], 0.0).astype(jnp.bfloat16)
            acc3 = jnp.zeros((L3, 128), jnp.float32)
            for k, off in enumerate(offs3):
                acc3 = acc3 + jnp.dot(a2[off:off + L3, :], w3_ref[k],
                                      preferred_element_type=jnp.float32)
            o_ref[0:L3, :] = jnp.maximum(acc3 + b3_ref[...], 0.0).astype(o_ref.dtype)
            o_ref[L3:, :] = jnp.zeros((blk - L3, 128), o_ref.dtype)

        cost = pl.CostEstimate(
            flops=2 * M * 128 * 128 * (len(offs2) + len(offs3)),
            transcendentals=0,
            bytes_accessed=int(2 * (x2d.size + self.w2_k.size + self.w3_k.size + M * 128)))
        return pl.pallas_call(
            kernel,
            out_shape=jax.ShapeDtypeStruct((M, 128), jnp.bfloat16),
            grid_spec=pltpu.PrefetchScalarGridSpec(
                num_scalar_prefetch=0,
                grid=(grid,),
                in_specs=[
                    pl.BlockSpec((blk, 128), lambda b: (b, 0)),
                    pl.BlockSpec((4, 128, 128), lambda b: (0, 0, 0)),
                    pl.BlockSpec((1, 128), lambda b: (0, 0)),
                    pl.BlockSpec((9, 128, 128), lambda b: (0, 0, 0)),
                    pl.BlockSpec((1, 128), lambda b: (0, 0)),
                ],
                out_specs=pl.BlockSpec((blk, 128), lambda b: (b, 0)),
            ),
            compiler_params=pltpu.CompilerParams(dimension_semantics=("parallel",)),
            cost_estimate=cost,
        )(x2d, self.w2_k, self.b2_k, self.w3_k, self.b3_k)

    # -------------------------------------------------------------------- LSTM
    def _lstm_call(self, x_sbd, h0, c0):
        S, B, Dc = x_sbd.shape
        H = self.D_hidden

        def kernel(x_ref, wih_ref, whh_ref, b_ref, h0_ref, c0_ref,
                   y_ref, hn_ref, cn_ref, h_scr, c_scr):
            t = pl.program_id(0)

            @pl.when(t == 0)
            def _():
                h_scr[...] = h0_ref[...]
                c_scr[...] = c0_ref[...]

            z = jnp.dot(x_ref[0], wih_ref[...], preferred_element_type=jnp.float32)
            z = z + jnp.dot(h_scr[...], whh_ref[...], preferred_element_type=jnp.float32)
            z = z + b_ref[...]
            i = jax.nn.sigmoid(z[:, 0:H])
            f = jax.nn.sigmoid(z[:, H:2 * H])
            g = jnp.tanh(z[:, 2 * H:3 * H])
            o = jax.nn.sigmoid(z[:, 3 * H:4 * H])
            c = f * c_scr[...] + i * g
            hh = o * jnp.tanh(c)
            h_scr[...] = hh
            c_scr[...] = c
            y_ref[0] = hh
            hn_ref[...] = hh
            cn_ref[...] = c

        cost = pl.CostEstimate(
            flops=2 * S * B * (Dc + H) * 4 * H,
            transcendentals=5 * S * B * H,
            bytes_accessed=int(4 * (x_sbd.size + self.wih_k.size + self.whh_k.size + S * B * H)))
        return pl.pallas_call(
            kernel,
            out_shape=(jax.ShapeDtypeStruct((S, B, H), jnp.float32),
                       jax.ShapeDtypeStruct((B, H), jnp.float32),
                       jax.ShapeDtypeStruct((B, H), jnp.float32)),
            grid_spec=pltpu.PrefetchScalarGridSpec(
                num_scalar_prefetch=0,
                grid=(S,),
                in_specs=[
                    pl.BlockSpec((1, B, Dc), lambda t: (t, 0, 0)),
                    pl.BlockSpec((Dc, 4 * H), lambda t: (0, 0)),
                    pl.BlockSpec((H, 4 * H), lambda t: (0, 0)),
                    pl.BlockSpec((1, 4 * H), lambda t: (0, 0)),
                    pl.BlockSpec((B, H), lambda t: (0, 0)),
                    pl.BlockSpec((B, H), lambda t: (0, 0)),
                ],
                out_specs=(
                    pl.BlockSpec((1, B, H), lambda t: (t, 0, 0)),
                    pl.BlockSpec((B, H), lambda t: (0, 0)),
                    pl.BlockSpec((B, H), lambda t: (0, 0)),
                ),
                scratch_shapes=[pltpu.VMEM((B, H), jnp.float32),
                                pltpu.VMEM((B, H), jnp.float32)],
            ),
            compiler_params=pltpu.CompilerParams(dimension_semantics=("arbitrary",)),
            cost_estimate=cost,
        )(x_sbd, self.wih_k, self.whh_k, self.bl_k, h0, c0)

    # ---------------------------------------------------------------- forward
    def __call__(self, x, hidden_in=None):
        # x: (B, S, C, H, W), values in [0, 255] (same contract as the PyTorch forward)
        assert x.ndim == 5
        B, S = x.shape[0], x.shape[1]
        N = B * S
        N16 = _round_up(N, IMG_BLOCK)
        grid = N16 // IMG_BLOCK
        c_in = self.c_in

        # layer-1 input: NCHW -> NHWC -> crop -> space-to-depth(4) -> flat 2D bf16
        z = x.reshape(N, c_in, self.h_in, self.w_in).transpose(0, 2, 3, 1)
        z = z[:, :4 * self.h1g, :4 * self.w1g, :]
        z = z.reshape(N, self.h1g, 4, self.w1g, 4, c_in).transpose(0, 1, 3, 2, 4, 5)
        z = z.reshape(N, self.h1g, self.w1g, 16 * c_in)
        z = jnp.pad(z, ((0, N16 - N), (0, 0), (0, 0), (0, 0)))
        z = z.reshape(N16 * self.r1, 16 * c_in).astype(jnp.bfloat16)

        out1 = self._conv1_call(z, grid)

        # conv1 output -> valid region -> space-to-depth(2) -> flat 2D (bf16)
        a1 = out1.reshape(N16, self.h1g, self.w1g, 128)
        a1 = a1[:, :2 * self.h2g, :2 * self.w2g, :32]
        a1 = a1.reshape(N16, self.h2g, 2, self.w2g, 2, 32).transpose(0, 1, 3, 2, 4, 5)
        a1 = a1.reshape(N16 * self.r2, 128)

        out3 = self._conv23_call(a1, grid)

        # flatten conv features in NHWC order (LSTM weights were permuted to match)
        feat = out3.reshape(N16, self.h2g, self.w2g, 128)[:N, :self.oh3, :self.ow3, :64]
        feat = feat.reshape(B, S, self.D_conv_out).astype(jnp.float32)

        H = self.D_hidden
        if hidden_in is None:
            h0 = jnp.zeros((1, B, H), jnp.float32)
            c0 = jnp.zeros((1, B, H), jnp.float32)
        else:
            h0, c0 = hidden_in
        y_sbh, h_n, c_n = self._lstm_call(feat.transpose(1, 0, 2), h0[0], c0[0])
        y = y_sbh.transpose(1, 0, 2)
        return y, (h0, c0), (h_n[None, :, :], c_n[None, :, :])


# ------------------------------------------------------------------ reference
def _ref_forward(model, x, hidden_in=None):
    """Pure-JAX f32 reference matching the PyTorch forward exactly."""
    B, S = x.shape[0], x.shape[1]
    z = x.reshape(-1, *x.shape[2:]).astype(jnp.float32) / 255.0

    def conv(t, w_hwio, bias, stride):
        y = lax.conv_general_dilated(
            t, w_hwio, (stride, stride), "VALID",
            dimension_numbers=("NCHW", "HWIO", "NCHW"),
            precision=lax.Precision.HIGHEST)
        return jax.nn.relu(y + bias.reshape(1, -1, 1, 1))

    z = conv(z, model.w1, model.b1, 4)
    z = conv(z, model.w2, model.b2, 2)
    z = conv(z, model.w3, model.b3, 1)
    feat = z.reshape(B, S, model.D_conv_out)   # NCHW flatten (c, h, w), like .view()

    H = model.D_hidden
    if hidden_in is None:
        h0 = jnp.zeros((B, H), jnp.float32)
        c0 = jnp.zeros((B, H), jnp.float32)
    else:
        h0, c0 = hidden_in[0][0], hidden_in[1][0]

    wih, whh, bih, bhh = model.w_ih, model.w_hh, model.b_ih, model.b_hh

    def step(carry, x_t):
        h, c = carry
        zt = (jnp.dot(x_t, wih.T, precision=lax.Precision.HIGHEST) + bih
              + jnp.dot(h, whh.T, precision=lax.Precision.HIGHEST) + bhh)
        i = jax.nn.sigmoid(zt[:, 0:H])
        f = jax.nn.sigmoid(zt[:, H:2 * H])
        g = jnp.tanh(zt[:, 2 * H:3 * H])
        o = jax.nn.sigmoid(zt[:, 3 * H:4 * H])
        c = f * c + i * g
        h = o * jnp.tanh(c)
        return (h, c), h

    (hn, cn), ys = lax.scan(step, (h0, c0), feat.transpose(1, 0, 2))
    return ys.transpose(1, 0, 2), hn, cn


if __name__ == "__main__":
    key = jax.random.PRNGKey(0)
    k_x, k_p = jax.random.split(key)

    D_in = (4, 48, 48)          # (C, H, W); module requires spatial >= 36
    B, S, D_hidden = 2, 3, 128
    x = jax.random.uniform(k_x, (B, S, *D_in), jnp.float32, 0.0, 255.0)

    model = CNNLSTMPallas(D_in, D_hidden=D_hidden, key=k_p)
    y, hidden_in, (h_n, c_n) = model(x)
    y = jax.block_until_ready(y)

    assert y.shape == (B, S, D_hidden), y.shape
    assert h_n.shape == (1, B, D_hidden) and c_n.shape == (1, B, D_hidden)

    y_ref, hn_ref, cn_ref = _ref_forward(model, x)
    # bf16 matmul operands (f32 accumulation) -> slightly looser tolerance than f32
    assert jnp.allclose(y, y_ref, atol=2e-2, rtol=2e-2), float(jnp.abs(y - y_ref).max())
    assert jnp.allclose(h_n[0], hn_ref, atol=2e-2, rtol=2e-2)
    assert jnp.allclose(c_n[0], cn_ref, atol=2e-2, rtol=2e-2)

    print("KERNEL_OK")
</pallas_src>

<mosaic_0001>
module attributes {stable_mosaic.version = 11 : i64} {
  func.func @kernel(%arg0: i32, %arg1: memref<2304x64xbf16, #tpu.memory_space<vmem>>, %arg2: memref<4x64x128xbf16, #tpu.memory_space<vmem>>, %arg3: memref<1x128xf32, #tpu.memory_space<vmem>>, %arg4: memref<2304x128xbf16, #tpu.memory_space<vmem>>) attributes {dimension_semantics = [#tpu.dimension_semantics<parallel>], iteration_bounds = array<i64: 1>, scalar_prefetch = 0 : i64, scratch_operands = 0 : i64, tpu.core_type = #tpu.core_type<tc>, window_params = [{transform_indices = @transform_0, window_bounds = array<i64: 2304, 64>}, {pipeline_mode = #tpu.pipeline_mode<synchronous>, transform_indices = @transform_1, window_bounds = array<i64: 4, 64, 128>}, {pipeline_mode = #tpu.pipeline_mode<synchronous>, transform_indices = @transform_2, window_bounds = array<i64: 1, 128>}, {transform_indices = @transform_3, window_bounds = array<i64: 2304, 128>}]} {
    %cst = arith.constant 0.000000e+00 : f32
    %0 = vector.broadcast %cst : f32 to vector<2291x128xf32>
    %c0 = arith.constant 0 : index
    %c0_0 = arith.constant 0 : index
    %1 = vector.load %arg1[%c0, %c0_0] : memref<2304x64xbf16, #tpu.memory_space<vmem>>, vector<2291x64xbf16>
    %c0_1 = arith.constant 0 : index
    %c0_2 = arith.constant 0 : index
    %c0_3 = arith.constant 0 : index
    %2 = vector.load %arg2[%c0_1, %c0_2, %c0_3] : memref<4x64x128xbf16, #tpu.memory_space<vmem>>, vector<1x64x128xbf16>
    %3 = vector.shape_cast %2 : vector<1x64x128xbf16> to vector<64x128xbf16>
    %cst_4 = arith.constant dense<0.000000e+00> : vector<2291x128xf32>
    %4 = tpu.matmul %1, %3, %cst_4 {dimension_numbers = #tpu.dot_dimension_numbers<[1], [0], [0], [1], [0, 0, 1, 1], [], []>} : vector<2291x64xbf16>, vector<64x128xbf16>, vector<2291x128xf32> -> vector<2291x128xf32>
    %5 = arith.addf %0, %4 : vector<2291x128xf32>
    %c1 = arith.constant 1 : index
    %c0_5 = arith.constant 0 : index
    %6 = vector.load %arg1[%c1, %c0_5] : memref<2304x64xbf16, #tpu.memory_space<vmem>>, vector<2291x64xbf16>
    %c1_6 = arith.constant 1 : index
    %c0_7 = arith.constant 0 : index
    %c0_8 = arith.constant 0 : index
    %7 = vector.load %arg2[%c1_6, %c0_7, %c0_8] : memref<4x64x128xbf16, #tpu.memory_space<vmem>>, vector<1x64x128xbf16>
    %8 = vector.shape_cast %7 : vector<1x64x128xbf16> to vector<64x128xbf16>
    %cst_9 = arith.constant dense<0.000000e+00> : vector<2291x128xf32>
    %9 = tpu.matmul %6, %8, %cst_9 {dimension_numbers = #tpu.dot_dimension_numbers<[1], [0], [0], [1], [0, 0, 1, 1], [], []>} : vector<2291x64xbf16>, vector<64x128xbf16>, vector<2291x128xf32> -> vector<2291x128xf32>
    %10 = arith.addf %5, %9 : vector<2291x128xf32>
    %c12 = arith.constant 12 : index
    %c0_10 = arith.constant 0 : index
    %11 = vector.load %arg1[%c12, %c0_10] : memref<2304x64xbf16, #tpu.memory_space<vmem>>, vector<2291x64xbf16>
    %c2 = arith.constant 2 : index
    %c0_11 = arith.constant 0 : index
    %c0_12 = arith.constant 0 : index
    %12 = vector.load %arg2[%c2, %c0_11, %c0_12] : memref<4x64x128xbf16, #tpu.memory_space<vmem>>, vector<1x64x128xbf16>
    %13 = vector.shape_cast %12 : vector<1x64x128xbf16> to vector<64x128xbf16>
    %cst_13 = arith.constant dense<0.000000e+00> : vector<2291x128xf32>
    %14 = tpu.matmul %11, %13, %cst_13 {dimension_numbers = #tpu.dot_dimension_numbers<[1], [0], [0], [1], [0, 0, 1, 1], [], []>} : vector<2291x64xbf16>, vector<64x128xbf16>, vector<2291x128xf32> -> vector<2291x128xf32>
    %15 = arith.addf %10, %14 : vector<2291x128xf32>
    %c13 = arith.constant 13 : index
    %c0_14 = arith.constant 0 : index
    %16 = vector.load %arg1[%c13, %c0_14] : memref<2304x64xbf16, #tpu.memory_space<vmem>>, vector<2291x64xbf16>
    %c3 = arith.constant 3 : index
    %c0_15 = arith.constant 0 : index
    %c0_16 = arith.constant 0 : index
    %17 = vector.load %arg2[%c3, %c0_15, %c0_16] : memref<4x64x128xbf16, #tpu.memory_space<vmem>>, vector<1x64x128xbf16>
    %18 = vector.shape_cast %17 : vector<1x64x128xbf16> to vector<64x128xbf16>
    %cst_17 = arith.constant dense<0.000000e+00> : vector<2291x128xf32>
    %19 = tpu.matmul %16, %18, %cst_17 {dimension_numbers = #tpu.dot_dimension_numbers<[1], [0], [0], [1], [0, 0, 1, 1], [], []>} : vector<2291x64xbf16>, vector<64x128xbf16>, vector<2291x128xf32> -> vector<2291x128xf32>
    %20 = arith.addf %15, %19 : vector<2291x128xf32>
    %c0_18 = arith.constant 0 : index
    %c0_19 = arith.constant 0 : index
    %21 = vector.load %arg3[%c0_18, %c0_19] : memref<1x128xf32, #tpu.memory_space<vmem>>, vector<1x128xf32>
    %22 = vector.broadcast %21 : vector<1x128xf32> to vector<2291x128xf32>
    %23 = arith.addf %20, %22 : vector<2291x128xf32>
    %cst_20 = arith.constant 0.000000e+00 : f32
    %24 = vector.broadcast %cst_20 : f32 to vector<2291x128xf32>
    %25 = arith.maximumf %23, %24 : vector<2291x128xf32>
    %26 = arith.truncf %25 : vector<2291x128xf32> to vector<2291x128xbf16>
    %c0_21 = arith.constant 0 : index
    %c0_22 = arith.constant 0 : index
    %27 = vector.load %arg4[%c0_21, %c0_22] : memref<2304x128xbf16, #tpu.memory_space<vmem>>, vector<2291x128xbf16>
    tpu.vector_store %arg4[%c0_21, %c0_22], %26 {strides = array<i32>} : memref<2304x128xbf16, #tpu.memory_space<vmem>>, vector<2291x128xbf16>,
    %cst_23 = arith.constant 0.000000e+00 : bf16
    %28 = vector.broadcast %cst_23 : bf16 to vector<13x128xbf16>
    %c2291 = arith.constant 2291 : index
    %c0_24 = arith.constant 0 : index
    %29 = vector.load %arg4[%c2291, %c0_24] : memref<2304x128xbf16, #tpu.memory_space<vmem>>, vector<13x128xbf16>
    tpu.vector_store %arg4[%c2291, %c0_24], %28 {strides = array<i32>} : memref<2304x128xbf16, #tpu.memory_space<vmem>>, vector<13x128xbf16>,
    return
  }
  func.func @transform_0(%arg0: i32) -> (i32, i32) {
    %c0_i32 = arith.constant 0 : i32
    %c0_i32_0 = arith.constant 0 : i32
    return %arg0, %c0_i32 : i32, i32
  }
  func.func @transform_1(%arg0: i32) -> (i32, i32, i32) {
    %c0_i32 = arith.constant 0 : i32
    %c0_i32_0 = arith.constant 0 : i32
    %c0_i32_1 = arith.constant 0 : i32
    %c0_i32_2 = arith.constant 0 : i32
    return %c0_i32, %c0_i32_0, %c0_i32_1 : i32, i32, i32
  }
  func.func @transform_2(%arg0: i32) -> (i32, i32) {
    %c0_i32 = arith.constant 0 : i32
    %c0_i32_0 = arith.constant 0 : i32
    %c0_i32_1 = arith.constant 0 : i32
    return %c0_i32, %c0_i32_0 : i32, i32
  }
  func.func @transform_3(%arg0: i32) -> (i32, i32) {
    %c0_i32 = arith.constant 0 : i32
    %c0_i32_0 = arith.constant 0 : i32
    return %arg0, %c0_i32 : i32, i32
  }
}

</mosaic_0001>

<llo_original>
// kernel: tpu_custom_call.1
$region0: #{tpu_custom_call.1}
  #allocation0 [shape = 'u32[]', space=smem, size = 0x4, offset = 0x4, fixed_abs, tag = 'smem constant byte address 0x4 - core index']
  #allocation1 [shape = 'u32[144,128]{1,0:T(1,128)}', space=vmem, size = 0x12000, scoped, tag = 'internal scratch']
  %s0 = inlined_call_operand.vmem [shape: bf16[2304,64], index: 0, kind: input, shape index: {}]
  %s1 = inlined_call_operand.vmem [shape: bf16[4,64,128], index: 1, kind: input, shape index: {}]
  %s2 = inlined_call_operand.vmem [shape: f32[1,128], index: 2, kind: input, shape index: {}]
  %s3 = inlined_call_operand.hbm [shape: bf16[2304,128], index: 3, kind: output, shape index: {}]
  %s4 = sld [smem:[#allocation0]]
  $region22: #{tpu_custom_call.1} parent=0
    _
  %s6 = ssub.s32 1, %s4
  %s7 = scalar_select 0, %s6, %s4
  $region1: #{tpu_custom_call.1} parent=0
    #allocation2 [shape = 'u8[589824]{0}', space=vmem, size = 0x90000, scoped, tag = 'output window, operand 0, single buffered']
    #allocation3 [shape = 's32[1]{0}', space=sflag, size = 0x4, scoped, tag = 'scoped memory for tpu_custom_call.1']
    %8 = vsyncpa [#allocation3], 0
    // Predicated region
    $region2: #{tpu_custom_call.1} parent=1 // pred_check
      _
    $region3: #{tpu_custom_call.1} parent=1 // pred_check_branch
      %10 = sbr.rel (0) target = $region5
    $region4: #{tpu_custom_call.1} parent=1 // pred_region
      _
    $region5: #{tpu_custom_call.1} parent=1 // pred_fallthru
      _
    // Predicated region
    $region6: #{tpu_custom_call.1} parent=1 // pred_check
      _
    $region7: #{tpu_custom_call.1} parent=1 // pred_check_branch
      %12 = sbr.rel (0) target = $region9
    $region8: #{tpu_custom_call.1} parent=1 // pred_region
      _
    $region9: #{tpu_custom_call.1} parent=1 // pred_fallthru
      _
    // Predicated region
    $region10: #{tpu_custom_call.1} parent=1 // pred_check
      _
    $region11: #{tpu_custom_call.1} parent=1 // pred_check_branch
      %14 = sbr.rel (0) target = $region13
    $region12: #{tpu_custom_call.1} parent=1 // pred_region
      _
    $region13: #{tpu_custom_call.1} parent=1 // pred_fallthru
      _
    %v16 = vld [vmem:[%s0] sm:$0xf]
    %v17 = vld [vmem:[%s0 + $0x4] sm:$0xf]
    %v18 = vld [vmem:[%s0 + $0x8] sm:$0xf]
    %v19 = vld [vmem:[%s0 + $0xc] sm:$0xf]
    %v20 = vld [vmem:[%s0 + $0x10] sm:$0xf]
    %v21 = vld [vmem:[%s0 + $0x14] sm:$0xf]
    %v22 = vld [vmem:[%s0 + $0x18] sm:$0xf]
    %v23 = vld [vmem:[%s0 + $0x1c] sm:$0xf]
    %v24 = vld [vmem:[%s0 + $0x20] sm:$0xf]
    %v25 = vld [vmem:[%s0 + $0x24] sm:$0xf]
    %v26 = vld [vmem:[%s0 + $0x28] sm:$0xf]
    %v27 = vld [vmem:[%s0 + $0x2c] sm:$0xf]
    %v28 = vld [vmem:[%s0 + $0x30] sm:$0xf]
    %v29 = vld [vmem:[%s0 + $0x34] sm:$0xf]
    %v30 = vld [vmem:[%s0 + $0x38] sm:$0xf]
    %v31 = vld [vmem:[%s0 + $0x3c] sm:$0xf]
    %v32 = vld [vmem:[%s0 + $0x40] sm:$0xf]
    %v33 = vld [vmem:[%s0 + $0x44] sm:$0xf]
    %v34 = vld [vmem:[%s0 + $0x48] sm:$0xf]
    %v35 = vld [vmem:[%s0 + $0x4c] sm:$0xf]
    %v36 = vld [vmem:[%s0 + $0x50] sm:$0xf]
    %v37 = vld [vmem:[%s0 + $0x54] sm:$0xf]
    %v38 = vld [vmem:[%s0 + $0x58] sm:$0xf]
    %v39 = vld [vmem:[%s0 + $0x5c] sm:$0xf]
    %v40 = vld [vmem:[%s0 + $0x60] sm:$0xf]
    %v41 = vld [vmem:[%s0 + $0x64] sm:$0xf]
    %v42 = vld [vmem:[%s0 + $0x68] sm:$0xf]
    %v43 = vld [vmem:[%s0 + $0x6c] sm:$0xf]
    %v44 = vld [vmem:[%s0 + $0x70] sm:$0xf]
    %v45 = vld [vmem:[%s0 + $0x74] sm:$0xf]
    %v46 = vld [vmem:[%s0 + $0x78] sm:$0xf]
    %v47 = vld [vmem:[%s0 + $0x7c] sm:$0xf]
    %v48 = vld [vmem:[%s0 + $0x80] sm:$0xf]
    %v49 = vld [vmem:[%s0 + $0x84] sm:$0xf]
    %v50 = vld [vmem:[%s0 + $0x88] sm:$0xf]
    %v51 = vld [vmem:[%s0 + $0x8c] sm:$0xf]
    %v52 = vld [vmem:[%s0 + $0x90] sm:$0xf]
    %v53 = vld [vmem:[%s0 + $0x94] sm:$0xf]
    %v54 = vld [vmem:[%s0 + $0x98] sm:$0xf]
    %v55 = vld [vmem:[%s0 + $0x9c] sm:$0xf]
    %v56 = vld [vmem:[%s0 + $0xa0] sm:$0xf]
    %v57 = vld [vmem:[%s0 + $0xa4] sm:$0xf]
    %v58 = vld [vmem:[%s0 + $0xa8] sm:$0xf]
    %v59 = vld [vmem:[%s0 + $0xac] sm:$0xf]
    %v60 = vld [vmem:[%s0 + $0xb0] sm:$0xf]
    %v61 = vld [vmem:[%s0 + $0xb4] sm:$0xf]
    %v62 = vld [vmem:[%s0 + $0xb8] sm:$0xf]
    %v63 = vld [vmem:[%s0 + $0xbc] sm:$0xf]
    %v64 = vld [vmem:[%s0 + $0xc0] sm:$0xf]
    %v65 = vld [vmem:[%s0 + $0xc4] sm:$0xf]
    %v66 = vld [vmem:[%s0 + $0xc8] sm:$0xf]
    %v67 = vld [vmem:[%s0 + $0xcc] sm:$0xf]
    %v68 = vld [vmem:[%s0 + $0xd0] sm:$0xf]
    %v69 = vld [vmem:[%s0 + $0xd4] sm:$0xf]
    %v70 = vld [vmem:[%s0 + $0xd8] sm:$0xf]
    %v71 = vld [vmem:[%s0 + $0xdc] sm:$0xf]
    %v72 = vld [vmem:[%s0 + $0xe0] sm:$0xf]
    %v73 = vld [vmem:[%s0 + $0xe4] sm:$0xf]
    %v74 = vld [vmem:[%s0 + $0xe8] sm:$0xf]
    %v75 = vld [vmem:[%s0 + $0xec] sm:$0xf]
    %v76 = vld [vmem:[%s0 + $0xf0] sm:$0xf]
    %v77 = vld [vmem:[%s0 + $0xf4] sm:$0xf]
    %v78 = vld [vmem:[%s0 + $0xf8] sm:$0xf]
    %v79 = vld [vmem:[%s0 + $0xfc] sm:$0xf]
    %v80 = vld [vmem:[%s0 + $0x100] sm:$0xf]
    %v81 = vld [vmem:[%s0 + $0x104] sm:$0xf]
    %v82 = vld [vmem:[%s0 + $0x108] sm:$0xf]
    %v83 = vld [vmem:[%s0 + $0x10c] sm:$0xf]
    %v84 = vld [vmem:[%s0 + $0x110] sm:$0xf]
    %v85 = vld [vmem:[%s0 + $0x114] sm:$0xf]
    %v86 = vld [vmem:[%s0 + $0x118] sm:$0xf]
    %v87 = vld [vmem:[%s0 + $0x11c] sm:$0xf]
    %v88 = vld [vmem:[%s0 + $0x120] sm:$0xf]
    %v89 = vld [vmem:[%s0 + $0x124] sm:$0xf]
    %v90 = vld [vmem:[%s0 + $0x128] sm:$0xf]
    %v91 = vld [vmem:[%s0 + $0x12c] sm:$0xf]
    %v92 = vld [vmem:[%s0 + $0x130] sm:$0xf]
    %v93 = vld [vmem:[%s0 + $0x134] sm:$0xf]
    %v94 = vld [vmem:[%s0 + $0x138] sm:$0xf]
    %v95 = vld [vmem:[%s0 + $0x13c] sm:$0xf]
    %v96 = vld [vmem:[%s0 + $0x140] sm:$0xf]
    %v97 = vld [vmem:[%s0 + $0x144] sm:$0xf]
    %v98 = vld [vmem:[%s0 + $0x148] sm:$0xf]
    %v99 = vld [vmem:[%s0 + $0x14c] sm:$0xf]
    %v100 = vld [vmem:[%s0 + $0x150] sm:$0xf]
    %v101 = vld [vmem:[%s0 + $0x154] sm:$0xf]
    %v102 = vld [vmem:[%s0 + $0x158] sm:$0xf]
    %v103 = vld [vmem:[%s0 + $0x15c] sm:$0xf]
    %v104 = vld [vmem:[%s0 + $0x160] sm:$0xf]
    %v105 = vld [vmem:[%s0 + $0x164] sm:$0xf]
    %v106 = vld [vmem:[%s0 + $0x168] sm:$0xf]
    %v107 = vld [vmem:[%s0 + $0x16c] sm:$0xf]
    %v108 = vld [vmem:[%s0 + $0x170] sm:$0xf]
    %v109 = vld [vmem:[%s0 + $0x174] sm:$0xf]
    %v110 = vld [vmem:[%s0 + $0x178] sm:$0xf]
    %v111 = vld [vmem:[%s0 + $0x17c] sm:$0xf]
    %v112 = vld [vmem:[%s0 + $0x180] sm:$0xf]
    %v113 = vld [vmem:[%s0 + $0x184] sm:$0xf]
    %v114 = vld [vmem:[%s0 + $0x188] sm:$0xf]
    %v115 = vld [vmem:[%s0 + $0x18c] sm:$0xf]
    %v116 = vld [vmem:[%s0 + $0x190] sm:$0xf]
    %v117 = vld [vmem:[%s0 + $0x194] sm:$0xf]
    %v118 = vld [vmem:[%s0 + $0x198] sm:$0xf]
    %v119 = vld [vmem:[%s0 + $0x19c] sm:$0xf]
    %v120 = vld [vmem:[%s0 + $0x1a0] sm:$0xf]
    %v121 = vld [vmem:[%s0 + $0x1a4] sm:$0xf]
    %v122 = vld [vmem:[%s0 + $0x1a8] sm:$0xf]
    %v123 = vld [vmem:[%s0 + $0x1ac] sm:$0xf]
    %v124 = vld [vmem:[%s0 + $0x1b0] sm:$0xf]
    %v125 = vld [vmem:[%s0 + $0x1b4] sm:$0xf]
    %v126 = vld [vmem:[%s0 + $0x1b8] sm:$0xf]
    %v127 = vld [vmem:[%s0 + $0x1bc] sm:$0xf]
    %v128 = vld [vmem:[%s0 + $0x1c0] sm:$0xf]
    %v129 = vld [vmem:[%s0 + $0x1c4] sm:$0xf]
    %v130 = vld [vmem:[%s0 + $0x1c8] sm:$0xf]
    %v131 = vld [vmem:[%s0 + $0x1cc] sm:$0xf]
    %v132 = vld [vmem:[%s0 + $0x1d0] sm:$0xf]
    %v133 = vld [vmem:[%s0 + $0x1d4] sm:$0xf]
    %v134 = vld [vmem:[%s0 + $0x1d8] sm:$0xf]
    %v135 = vld [vmem:[%s0 + $0x1dc] sm:$0xf]
    %v136 = vld [vmem:[%s0 + $0x1e0] sm:$0xf]
    %v137 = vld [vmem:[%s0 + $0x1e4] sm:$0xf]
    %v138 = vld [vmem:[%s0 + $0x1e8] sm:$0xf]
    %v139 = vld [vmem:[%s0 + $0x1ec] sm:$0xf]
    %v140 = vld [vmem:[%s0 + $0x1f0] sm:$0xf]
    %v141 = vld [vmem:[%s0 + $0x1f4] sm:$0xf]
    %v142 = vld [vmem:[%s0 + $0x1f8] sm:$0xf]
    %v143 = vld [vmem:[%s0 + $0x1fc] sm:$0xf]
    %v144 = vld [vmem:[%s0 + $0x200] sm:$0xf]
    %v145 = vld [vmem:[%s0 + $0x204] sm:$0xf]
    %v146 = vld [vmem:[%s0 + $0x208] sm:$0xf]
    %v147 = vld [vmem:[%s0 + $0x20c] sm:$0xf]
    %v148 = vld [vmem:[%s0 + $0x210] sm:$0xf]
    %v149 = vld [vmem:[%s0 + $0x214] sm:$0xf]
    %v150 = vld [vmem:[%s0 + $0x218] sm:$0xf]
    %v151 = vld [vmem:[%s0 + $0x21c] sm:$0xf]
    %v152 = vld [vmem:[%s0 + $0x220] sm:$0xf]
    %v153 = vld [vmem:[%s0 + $0x224] sm:$0xf]
    %v154 = vld [vmem:[%s0 + $0x228] sm:$0xf]
    %v155 = vld [vmem:[%s0 + $0x22c] sm:$0xf]
    %v156 = vld [vmem:[%s0 + $0x230] sm:$0xf]
    %v157 = vld [vmem:[%s0 + $0x234] sm:$0xf]
    %v158 = vld [vmem:[%s0 + $0x238] sm:$0xf]
    %v159 = vld [vmem:[%s0 + $0x23c] sm:$0xf]
    %v160 = vld [vmem:[%s0 + $0x240] sm:$0xf]
    %v161 = vld [vmem:[%s0 + $0x244] sm:$0xf]
    %v162 = vld [vmem:[%s0 + $0x248] sm:$0xf]
    %v163 = vld [vmem:[%s0 + $0x24c] sm:$0xf]
    %v164 = vld [vmem:[%s0 + $0x250] sm:$0xf]
    %v165 = vld [vmem:[%s0 + $0x254] sm:$0xf]
    %v166 = vld [vmem:[%s0 + $0x258] sm:$0xf]
    %v167 = vld [vmem:[%s0 + $0x25c] sm:$0xf]
    %v168 = vld [vmem:[%s0 + $0x260] sm:$0xf]
    %v169 = vld [vmem:[%s0 + $0x264] sm:$0xf]
    %v170 = vld [vmem:[%s0 + $0x268] sm:$0xf]
    %v171 = vld [vmem:[%s0 + $0x26c] sm:$0xf]
    %v172 = vld [vmem:[%s0 + $0x270] sm:$0xf]
    %v173 = vld [vmem:[%s0 + $0x274] sm:$0xf]
    %v174 = vld [vmem:[%s0 + $0x278] sm:$0xf]
    %v175 = vld [vmem:[%s0 + $0x27c] sm:$0xf]
    %v176 = vld [vmem:[%s0 + $0x280] sm:$0xf]
    %v177 = vld [vmem:[%s0 + $0x284] sm:$0xf]
    %v178 = vld [vmem:[%s0 + $0x288] sm:$0xf]
    %v179 = vld [vmem:[%s0 + $0x28c] sm:$0xf]
    %v180 = vld [vmem:[%s0 + $0x290] sm:$0xf]
    %v181 = vld [vmem:[%s0 + $0x294] sm:$0xf]
    %v182 = vld [vmem:[%s0 + $0x298] sm:$0xf]
    %v183 = vld [vmem:[%s0 + $0x29c] sm:$0xf]
    %v184 = vld [vmem:[%s0 + $0x2a0] sm:$0xf]
    %v185 = vld [vmem:[%s0 + $0x2a4] sm:$0xf]
    %v186 = vld [vmem:[%s0 + $0x2a8] sm:$0xf]
    %v187 = vld [vmem:[%s0 + $0x2ac] sm:$0xf]
    %v188 = vld [vmem:[%s0 + $0x2b0] sm:$0xf]
    %v189 = vld [vmem:[%s0 + $0x2b4] sm:$0xf]
    %v190 = vld [vmem:[%s0 + $0x2b8] sm:$0xf]
    %v191 = vld [vmem:[%s0 + $0x2bc] sm:$0xf]
    %v192 = vld [vmem:[%s0 + $0x2c0] sm:$0xf]
    %v193 = vld [vmem:[%s0 + $0x2c4] sm:$0xf]
    %v194 = vld [vmem:[%s0 + $0x2c8] sm:$0xf]
    %v195 = vld [vmem:[%s0 + $0x2cc] sm:$0xf]
    %v196 = vld [vmem:[%s0 + $0x2d0] sm:$0xf]
    %v197 = vld [vmem:[%s0 + $0x2d4] sm:$0xf]
    %v198 = vld [vmem:[%s0 + $0x2d8] sm:$0xf]
    %v199 = vld [vmem:[%s0 + $0x2dc] sm:$0xf]
    %v200 = vld [vmem:[%s0 + $0x2e0] sm:$0xf]
    %v201 = vld [vmem:[%s0 + $0x2e4] sm:$0xf]
    %v202 = vld [vmem:[%s0 + $0x2e8] sm:$0xf]
    %v203 = vld [vmem:[%s0 + $0x2ec] sm:$0xf]
    %v204 = vld [vmem:[%s0 + $0x2f0] sm:$0xf]
    %v205 = vld [vmem:[%s0 + $0x2f4] sm:$0xf]
    %v206 = vld [vmem:[%s0 + $0x2f8] sm:$0xf]
    %v207 = vld [vmem:[%s0 + $0x2fc] sm:$0xf]
    %v208 = vld [vmem:[%s0 + $0x300] sm:$0xf]
    %v209 = vld [vmem:[%s0 + $0x304] sm:$0xf]
    %v210 = vld [vmem:[%s0 + $0x308] sm:$0xf]
    %v211 = vld [vmem:[%s0 + $0x30c] sm:$0xf]
    %v212 = vld [vmem:[%s0 + $0x310] sm:$0xf]
    %v213 = vld [vmem:[%s0 + $0x314] sm:$0xf]
    %v214 = vld [vmem:[%s0 + $0x318] sm:$0xf]
    %v215 = vld [vmem:[%s0 + $0x31c] sm:$0xf]
    %v216 = vld [vmem:[%s0 + $0x320] sm:$0xf]
    %v217 = vld [vmem:[%s0 + $0x324] sm:$0xf]
    %v218 = vld [vmem:[%s0 + $0x328] sm:$0xf]
    %v219 = vld [vmem:[%s0 + $0x32c] sm:$0xf]
    %v220 = vld [vmem:[%s0 + $0x330] sm:$0xf]
    %v221 = vld [vmem:[%s0 + $0x334] sm:$0xf]
    %v222 = vld [vmem:[%s0 + $0x338] sm:$0xf]
    %v223 = vld [vmem:[%s0 + $0x33c] sm:$0xf]
    %v224 = vld [vmem:[%s0 + $0x340] sm:$0xf]
    %v225 = vld [vmem:[%s0 + $0x344] sm:$0xf]
    %v226 = vld [vmem:[%s0 + $0x348] sm:$0xf]
    %v227 = vld [vmem:[%s0 + $0x34c] sm:$0xf]
    %v228 = vld [vmem:[%s0 + $0x350] sm:$0xf]
    %v229 = vld [vmem:[%s0 + $0x354] sm:$0xf]
    %v230 = vld [vmem:[%s0 + $0x358] sm:$0xf]
    %v231 = vld [vmem:[%s0 + $0x35c] sm:$0xf]
    %v232 = vld [vmem:[%s0 + $0x360] sm:$0xf]
    %v233 = vld [vmem:[%s0 + $0x364] sm:$0xf]
    %v234 = vld [vmem:[%s0 + $0x368] sm:$0xf]
    %v235 = vld [vmem:[%s0 + $0x36c] sm:$0xf]
    %v236 = vld [vmem:[%s0 + $0x370] sm:$0xf]
    %v237 = vld [vmem:[%s0 + $0x374] sm:$0xf]
    %v238 = vld [vmem:[%s0 + $0x378] sm:$0xf]
    %v239 = vld [vmem:[%s0 + $0x37c] sm:$0xf]
    %v240 = vld [vmem:[%s0 + $0x380] sm:$0xf]
    %v241 = vld [vmem:[%s0 + $0x384] sm:$0xf]
    %v242 = vld [vmem:[%s0 + $0x388] sm:$0xf]
    %v243 = vld [vmem:[%s0 + $0x38c] sm:$0xf]
    %v244 = vld [vmem:[%s0 + $0x390] sm:$0xf]
    %v245 = vld [vmem:[%s0 + $0x394] sm:$0xf]
    %v246 = vld [vmem:[%s0 + $0x398] sm:$0xf]
    %v247 = vld [vmem:[%s0 + $0x39c] sm:$0xf]
    %v248 = vld [vmem:[%s0 + $0x3a0] sm:$0xf]
    %v249 = vld [vmem:[%s0 + $0x3a4] sm:$0xf]
    %v250 = vld [vmem:[%s0 + $0x3a8] sm:$0xf]
    %v251 = vld [vmem:[%s0 + $0x3ac] sm:$0xf]
    %v252 = vld [vmem:[%s0 + $0x3b0] sm:$0xf]
    %v253 = vld [vmem:[%s0 + $0x3b4] sm:$0xf]
    %v254 = vld [vmem:[%s0 + $0x3b8] sm:$0xf]
    %v255 = vld [vmem:[%s0 + $0x3bc] sm:$0xf]
    %v256 = vld [vmem:[%s0 + $0x3c0] sm:$0xf]
    %v257 = vld [vmem:[%s0 + $0x3c4] sm:$0xf]
    %v258 = vld [vmem:[%s0 + $0x3c8] sm:$0xf]
    %v259 = vld [vmem:[%s0 + $0x3cc] sm:$0xf]
    %v260 = vld [vmem:[%s0 + $0x3d0] sm:$0xf]
    %v261 = vld [vmem:[%s0 + $0x3d4] sm:$0xf]
    %v262 = vld [vmem:[%s0 + $0x3d8] sm:$0xf]
    %v263 = vld [vmem:[%s0 + $0x3dc] sm:$0xf]
    %v264 = vld [vmem:[%s0 + $0x3e0] sm:$0xf]
    %v265 = vld [vmem:[%s0 + $0x3e4] sm:$0xf]
    %v266 = vld [vmem:[%s0 + $0x3e8] sm:$0xf]
    %v267 = vld [vmem:[%s0 + $0x3ec] sm:$0xf]
    %v268 = vld [vmem:[%s0 + $0x3f0] sm:$0xf]
    %v269 = vld [vmem:[%s0 + $0x3f4] sm:$0xf]
    %v270 = vld [vmem:[%s0 + $0x3f8] sm:$0xf]
    %v271 = vld [vmem:[%s0 + $0x3fc] sm:$0xf]
    %v272 = vld [vmem:[%s0 + $0x400] sm:$0xf]
    %v273 = vld [vmem:[%s0 + $0x404] sm:$0xf]
    %v274 = vld [vmem:[%s0 + $0x408] sm:$0xf]
    %v275 = vld [vmem:[%s0 + $0x40c] sm:$0xf]
    %v276 = vld [vmem:[%s0 + $0x410] sm:$0xf]
    %v277 = vld [vmem:[%s0 + $0x414] sm:$0xf]
    %v278 = vld [vmem:[%s0 + $0x418] sm:$0xf]
    %v279 = vld [vmem:[%s0 + $0x41c] sm:$0xf]
    %v280 = vld [vmem:[%s0 + $0x420] sm:$0xf]
    %v281 = vld [vmem:[%s0 + $0x424] sm:$0xf]
    %v282 = vld [vmem:[%s0 + $0x428] sm:$0xf]
    %v283 = vld [vmem:[%s0 + $0x42c] sm:$0xf]
    %v284 = vld [vmem:[%s0 + $0x430] sm:$0xf]
    %v285 = vld [vmem:[%s0 + $0x434] sm:$0xf]
    %v286 = vld [vmem:[%s0 + $0x438] sm:$0xf]
    %v287 = vld [vmem:[%s0 + $0x43c] sm:$0xf]
    %v288 = vld [vmem:[%s0 + $0x440] sm:$0xf]
    %v289 = vld [vmem:[%s0 + $0x444] sm:$0xf]
    %v290 = vld [vmem:[%s0 + $0x448] sm:$0xf]
    %v291 = vld [vmem:[%s0 + $0x44c] sm:$0xf]
    %v292 = vld [vmem:[%s0 + $0x450] sm:$0xf]
    %v293 = vld [vmem:[%s0 + $0x454] sm:$0xf]
    %v294 = vld [vmem:[%s0 + $0x458] sm:$0xf]
    %v295 = vld [vmem:[%s0 + $0x45c] sm:$0xf]
    %v296 = vld [vmem:[%s0 + $0x460] sm:$0xf]
    %v297 = vld [vmem:[%s0 + $0x464] sm:$0xf]
    %v298 = vld [vmem:[%s0 + $0x468] sm:$0xf]
    %v299 = vld [vmem:[%s0 + $0x46c] sm:$0xf]
    %v300 = vld [vmem:[%s0 + $0x470] sm:$0xf]
    %v301 = vld [vmem:[%s0 + $0x474] sm:$0xf]
    %v302 = vld [vmem:[%s0 + $0x478] sm:$0x3]
    %v303 = vld [vmem:[%s1] sm:$0xf]
    %v304 = vld [vmem:[%s1 + $0x4] sm:$0xf]
    %v305 = vld [vmem:[%s1 + $0x8] sm:$0xf]
    %v306 = vld [vmem:[%s1 + $0xc] sm:$0xf]
    %v307 = vld [vmem:[%s1 + $0x10] sm:$0xf]
    %v308 = vld [vmem:[%s1 + $0x14] sm:$0xf]
    %v309 = vld [vmem:[%s1 + $0x18] sm:$0xf]
    %v310 = vld [vmem:[%s1 + $0x1c] sm:$0xf]
    %s311 = scalar_lea.vmem %s1, 32
    %v312 = vld [vmem:[%s311] sm:$0xf]
    %v313 = vld [vmem:[%s311 + $0x4] sm:$0xf]
    %v314 = vld [vmem:[%s311 + $0x8] sm:$0xf]
    %v315 = vld [vmem:[%s311 + $0xc] sm:$0xf]
    %v316 = vld [vmem:[%s311 + $0x10] sm:$0xf]
    %v317 = vld [vmem:[%s311 + $0x14] sm:$0xf]
    %v318 = vld [vmem:[%s311 + $0x18] sm:$0xf]
    %v319 = vld [vmem:[%s311 + $0x1c] sm:$0xf]
    %v607 = vunpack.c.l.b16 %v16
    %v608 = vunpack.c.l.b16 %v17
    %v609 = vunpack.c.l.b16 %v18
    %v610 = vunpack.c.l.b16 %v19
    %v611 = vunpack.c.l.b16 %v20
    %v612 = vunpack.c.l.b16 %v21
    %v613 = vunpack.c.l.b16 %v22
    %v614 = vunpack.c.l.b16 %v23
    %v615 = vunpack.c.l.b16 %v24
    %v616 = vunpack.c.l.b16 %v25
    %v617 = vunpack.c.l.b16 %v26
    %v618 = vunpack.c.l.b16 %v27
    %v619 = vunpack.c.l.b16 %v28
    %v620 = vunpack.c.l.b16 %v29
    %v621 = vunpack.c.l.b16 %v30
    %v622 = vunpack.c.l.b16 %v31
    %v623 = vunpack.c.l.b16 %v32
    %v624 = vunpack.c.l.b16 %v33
    %v625 = vunpack.c.l.b16 %v34
    %v626 = vunpack.c.l.b16 %v35
    %v627 = vunpack.c.l.b16 %v36
    %v628 = vunpack.c.l.b16 %v37
    %v629 = vunpack.c.l.b16 %v38
    %v630 = vunpack.c.l.b16 %v39
    %v631 = vunpack.c.l.b16 %v40
    %v632 = vunpack.c.l.b16 %v41
    %v633 = vunpack.c.l.b16 %v42
    %v634 = vunpack.c.l.b16 %v43
    %v635 = vunpack.c.l.b16 %v44
    %v636 = vunpack.c.l.b16 %v45
    %v637 = vunpack.c.l.b16 %v46
    %v638 = vunpack.c.l.b16 %v47
    %v639 = vunpack.c.l.b16 %v48
    %v640 = vunpack.c.l.b16 %v49
    %v641 = vunpack.c.l.b16 %v50
    %v642 = vunpack.c.l.b16 %v51
    %v643 = vunpack.c.l.b16 %v52
    %v644 = vunpack.c.l.b16 %v53
    %v645 = vunpack.c.l.b16 %v54
    %v646 = vunpack.c.l.b16 %v55
    %v647 = vunpack.c.l.b16 %v56
    %v648 = vunpack.c.l.b16 %v57
    %v649 = vunpack.c.l.b16 %v58
    %v650 = vunpack.c.l.b16 %v59
    %v651 = vunpack.c.l.b16 %v60
    %v652 = vunpack.c.l.b16 %v61
    %v653 = vunpack.c.l.b16 %v62
    %v654 = vunpack.c.l.b16 %v63
    %v655 = vunpack.c.l.b16 %v64
    %v656 = vunpack.c.l.b16 %v65
    %v657 = vunpack.c.l.b16 %v66
    %v658 = vunpack.c.l.b16 %v67
    %v659 = vunpack.c.l.b16 %v68
    %v660 = vunpack.c.l.b16 %v69
    %v661 = vunpack.c.l.b16 %v70
    %v662 = vunpack.c.l.b16 %v71
    %v663 = vunpack.c.l.b16 %v72
    %v664 = vunpack.c.l.b16 %v73
    %v665 = vunpack.c.l.b16 %v74
    %v666 = vunpack.c.l.b16 %v75
    %v667 = vunpack.c.l.b16 %v76
    %v668 = vunpack.c.l.b16 %v77
    %v669 = vunpack.c.l.b16 %v78
    %v670 = vunpack.c.l.b16 %v79
    %v671 = vunpack.c.l.b16 %v80
    %v672 = vunpack.c.l.b16 %v81
    %v673 = vunpack.c.l.b16 %v82
    %v674 = vunpack.c.l.b16 %v83
    %v675 = vunpack.c.l.b16 %v84
    %v676 = vunpack.c.l.b16 %v85
    %v677 = vunpack.c.l.b16 %v86
    %v678 = vunpack.c.l.b16 %v87
    %v679 = vunpack.c.l.b16 %v88
    %v680 = vunpack.c.l.b16 %v89
    %v681 = vunpack.c.l.b16 %v90
    %v682 = vunpack.c.l.b16 %v91
    %v683 = vunpack.c.l.b16 %v92
    %v684 = vunpack.c.l.b16 %v93
    %v685 = vunpack.c.l.b16 %v94
    %v686 = vunpack.c.l.b16 %v95
    %v687 = vunpack.c.l.b16 %v96
    %v688 = vunpack.c.l.b16 %v97
    %v689 = vunpack.c.l.b16 %v98
    %v690 = vunpack.c.l.b16 %v99
    %v691 = vunpack.c.l.b16 %v100
    %v692 = vunpack.c.l.b16 %v101
    %v693 = vunpack.c.l.b16 %v102
    %v694 = vunpack.c.l.b16 %v103
    %v695 = vunpack.c.l.b16 %v104
    %v696 = vunpack.c.l.b16 %v105
    %v697 = vunpack.c.l.b16 %v106
    %v698 = vunpack.c.l.b16 %v107
    %v699 = vunpack.c.l.b16 %v108
    %v700 = vunpack.c.l.b16 %v109
    %v701 = vunpack.c.l.b16 %v110
    %v702 = vunpack.c.l.b16 %v111
    %v703 = vunpack.c.l.b16 %v112
    %v704 = vunpack.c.l.b16 %v113
    %v705 = vunpack.c.l.b16 %v114
    %v706 = vunpack.c.l.b16 %v115
    %v707 = vunpack.c.l.b16 %v116
    %v708 = vunpack.c.l.b16 %v117
    %v709 = vunpack.c.l.b16 %v118
    %v710 = vunpack.c.l.b16 %v119
    %v711 = vunpack.c.l.b16 %v120
    %v712 = vunpack.c.l.b16 %v121
    %v713 = vunpack.c.l.b16 %v122
    %v714 = vunpack.c.l.b16 %v123
    %v715 = vunpack.c.l.b16 %v124
    %v716 = vunpack.c.l.b16 %v125
    %v717 = vunpack.c.l.b16 %v126
    %v718 = vunpack.c.l.b16 %v127
    %v719 = vunpack.c.l.b16 %v128
    %v720 = vunpack.c.l.b16 %v129
    %v721 = vunpack.c.l.b16 %v130
    %v722 = vunpack.c.l.b16 %v131
    %v723 = vunpack.c.l.b16 %v132
    %v724 = vunpack.c.l.b16 %v133
    %v725 = vunpack.c.l.b16 %v134
    %v726 = vunpack.c.l.b16 %v135
    %v727 = vunpack.c.l.b16 %v136
    %v728 = vunpack.c.l.b16 %v137
    %v729 = vunpack.c.l.b16 %v138
    %v730 = vunpack.c.l.b16 %v139
    %v731 = vunpack.c.l.b16 %v140
    %v732 = vunpack.c.l.b16 %v141
    %v733 = vunpack.c.l.b16 %v142
    %v734 = vunpack.c.l.b16 %v143
    %v735 = vunpack.c.l.b16 %v144
    %v736 = vunpack.c.l.b16 %v145
    %v737 = vunpack.c.l.b16 %v146
    %v738 = vunpack.c.l.b16 %v147
    %v739 = vunpack.c.l.b16 %v148
    %v740 = vunpack.c.l.b16 %v149
    %v741 = vunpack.c.l.b16 %v150
    %v742 = vunpack.c.l.b16 %v151
    %v743 = vunpack.c.l.b16 %v152
    %v744 = vunpack.c.l.b16 %v153
    %v745 = vunpack.c.l.b16 %v154
    %v746 = vunpack.c.l.b16 %v155
    %v747 = vunpack.c.l.b16 %v156
    %v748 = vunpack.c.l.b16 %v157
    %v749 = vunpack.c.l.b16 %v158
    %v750 = vunpack.c.l.b16 %v159
    %v751 = vunpack.c.l.b16 %v160
    %v752 = vunpack.c.l.b16 %v161
    %v753 = vunpack.c.l.b16 %v162
    %v754 = vunpack.c.l.b16 %v163
    %v755 = vunpack.c.l.b16 %v164
    %v756 = vunpack.c.l.b16 %v165
    %v757 = vunpack.c.l.b16 %v166
    %v758 = vunpack.c.l.b16 %v167
    %v759 = vunpack.c.l.b16 %v168
    %v760 = vunpack.c.l.b16 %v169
    %v761 = vunpack.c.l.b16 %v170
    %v762 = vunpack.c.l.b16 %v171
    %v763 = vunpack.c.l.b16 %v172
    %v764 = vunpack.c.l.b16 %v173
    %v765 = vunpack.c.l.b16 %v174
    %v766 = vunpack.c.l.b16 %v175
    %v767 = vunpack.c.l.b16 %v176
    %v768 = vunpack.c.l.b16 %v177
    %v769 = vunpack.c.l.b16 %v178
    %v770 = vunpack.c.l.b16 %v179
    %v771 = vunpack.c.l.b16 %v180
    %v772 = vunpack.c.l.b16 %v181
    %v773 = vunpack.c.l.b16 %v182
    %v774 = vunpack.c.l.b16 %v183
    %v775 = vunpack.c.l.b16 %v184
    %v776 = vunpack.c.l.b16 %v185
    %v777 = vunpack.c.l.b16 %v186
    %v778 = vunpack.c.l.b16 %v187
    %v779 = vunpack.c.l.b16 %v188
    %v780 = vunpack.c.l.b16 %v189
    %v781 = vunpack.c.l.b16 %v190
    %v782 = vunpack.c.l.b16 %v191
    %v783 = vunpack.c.l.b16 %v192
    %v784 = vunpack.c.l.b16 %v193
    %v785 = vunpack.c.l.b16 %v194
    %v786 = vunpack.c.l.b16 %v195
    %v787 = vunpack.c.l.b16 %v196
    %v788 = vunpack.c.l.b16 %v197
    %v789 = vunpack.c.l.b16 %v198
    %v790 = vunpack.c.l.b16 %v199
    %v791 = vunpack.c.l.b16 %v200
    %v792 = vunpack.c.l.b16 %v201
    %v793 = vunpack.c.l.b16 %v202
    %v794 = vunpack.c.l.b16 %v203
    %v795 = vunpack.c.l.b16 %v204
    %v796 = vunpack.c.l.b16 %v205
    %v797 = vunpack.c.l.b16 %v206
    %v798 = vunpack.c.l.b16 %v207
    %v799 = vunpack.c.l.b16 %v208
    %v800 = vunpack.c.l.b16 %v209
    %v801 = vunpack.c.l.b16 %v210
    %v802 = vunpack.c.l.b16 %v211
    %v803 = vunpack.c.l.b16 %v212
    %v804 = vunpack.c.l.b16 %v213
    %v805 = vunpack.c.l.b16 %v214
    %v806 = vunpack.c.l.b16 %v215
    %v807 = vunpack.c.l.b16 %v216
    %v808 = vunpack.c.l.b16 %v217
    %v809 = vunpack.c.l.b16 %v218
    %v810 = vunpack.c.l.b16 %v219
    %v811 = vunpack.c.l.b16 %v220
    %v812 = vunpack.c.l.b16 %v221
    %v813 = vunpack.c.l.b16 %v222
    %v814 = vunpack.c.l.b16 %v223
    %v815 = vunpack.c.l.b16 %v224
    %v816 = vunpack.c.l.b16 %v225
    %v817 = vunpack.c.l.b16 %v226
    %v818 = vunpack.c.l.b16 %v227
    %v819 = vunpack.c.l.b16 %v228
    %v820 = vunpack.c.l.b16 %v229
    %v821 = vunpack.c.l.b16 %v230
    %v822 = vunpack.c.l.b16 %v231
    %v823 = vunpack.c.l.b16 %v232
    %v824 = vunpack.c.l.b16 %v233
    %v825 = vunpack.c.l.b16 %v234
    %v826 = vunpack.c.l.b16 %v235
    %v827 = vunpack.c.l.b16 %v236
    %v828 = vunpack.c.l.b16 %v237
    %v829 = vunpack.c.l.b16 %v238
    %v830 = vunpack.c.l.b16 %v239
    %v831 = vunpack.c.l.b16 %v240
    %v832 = vunpack.c.l.b16 %v241
    %v833 = vunpack.c.l.b16 %v242
    %v834 = vunpack.c.l.b16 %v243
    %v835 = vunpack.c.l.b16 %v244
    %v836 = vunpack.c.l.b16 %v245
    %v837 = vunpack.c.l.b16 %v246
    %v838 = vunpack.c.l.b16 %v247
    %v839 = vunpack.c.l.b16 %v248
    %v840 = vunpack.c.l.b16 %v249
    %v841 = vunpack.c.l.b16 %v250
    %v842 = vunpack.c.l.b16 %v251
    %v843 = vunpack.c.l.b16 %v252
    %v844 = vunpack.c.l.b16 %v253
    %v845 = vunpack.c.l.b16 %v254
    %v846 = vunpack.c.l.b16 %v255
    %v847 = vunpack.c.l.b16 %v256
    %v848 = vunpack.c.l.b16 %v257
    %v849 = vunpack.c.l.b16 %v258
    %v850 = vunpack.c.l.b16 %v259
    %v851 = vunpack.c.l.b16 %v260
    %v852 = vunpack.c.l.b16 %v261
    %v853 = vunpack.c.l.b16 %v262
    %v854 = vunpack.c.l.b16 %v263
    %v855 = vunpack.c.l.b16 %v264
    %v856 = vunpack.c.l.b16 %v265
    %v857 = vunpack.c.l.b16 %v266
    %v858 = vunpack.c.l.b16 %v267
    %v859 = vunpack.c.l.b16 %v268
    %v860 = vunpack.c.l.b16 %v269
    %v861 = vunpack.c.l.b16 %v270
    %v862 = vunpack.c.l.b16 %v271
    %v863 = vunpack.c.l.b16 %v272
    %v864 = vunpack.c.l.b16 %v273
    %v865 = vunpack.c.l.b16 %v274
    %v866 = vunpack.c.l.b16 %v275
    %v867 = vunpack.c.l.b16 %v276
    %v868 = vunpack.c.l.b16 %v277
    %v869 = vunpack.c.l.b16 %v278
    %v870 = vunpack.c.l.b16 %v279
    %v871 = vunpack.c.l.b16 %v280
    %v872 = vunpack.c.l.b16 %v281
    %v873 = vunpack.c.l.b16 %v282
    %v874 = vunpack.c.l.b16 %v283
    %v875 = vunpack.c.l.b16 %v284
    %v876 = vunpack.c.l.b16 %v285
    %v877 = vunpack.c.l.b16 %v286
    %v878 = vunpack.c.l.b16 %v287
    %v879 = vunpack.c.l.b16 %v288
    %v880 = vunpack.c.l.b16 %v289
    %v881 = vunpack.c.l.b16 %v290
    %v882 = vunpack.c.l.b16 %v291
    %v883 = vunpack.c.l.b16 %v292
    %v884 = vunpack.c.l.b16 %v293
    %v885 = vunpack.c.l.b16 %v294
    %v886 = vunpack.c.l.b16 %v295
    %v887 = vunpack.c.l.b16 %v296
    %v888 = vunpack.c.l.b16 %v297
    %v889 = vunpack.c.l.b16 %v298
    %v890 = vunpack.c.l.b16 %v299
    %v891 = vunpack.c.l.b16 %v300
    %v892 = vunpack.c.l.b16 %v301
    %v893 = vunpack.c.l.b16 %v302
    %v894 = vpack.c.b16 %v608, %v607
    %v895 = vpack.c.b16 %v610, %v609
    %v896 = vpack.c.b16 %v612, %v611
    %v897 = vpack.c.b16 %v614, %v613
    %v898 = vpack.c.b16 %v616, %v615
    %v899 = vpack.c.b16 %v618, %v617
    %v900 = vpack.c.b16 %v620, %v619
    %v901 = vpack.c.b16 %v622, %v621
    %v902 = vpack.c.b16 %v624, %v623
    %v903 = vpack.c.b16 %v626, %v625
    %v904 = vpack.c.b16 %v628, %v627
    %v905 = vpack.c.b16 %v630, %v629
    %v906 = vpack.c.b16 %v632, %v631
    %v907 = vpack.c.b16 %v634, %v633
    %v908 = vpack.c.b16 %v636, %v635
    %v909 = vpack.c.b16 %v638, %v637
    %v910 = vpack.c.b16 %v640, %v639
    %v911 = vpack.c.b16 %v642, %v641
    %v912 = vpack.c.b16 %v644, %v643
    %v913 = vpack.c.b16 %v646, %v645
    %v914 = vpack.c.b16 %v648, %v647
    %v915 = vpack.c.b16 %v650, %v649
    %v916 = vpack.c.b16 %v652, %v651
    %v917 = vpack.c.b16 %v654, %v653
    %v918 = vpack.c.b16 %v656, %v655
    %v919 = vpack.c.b16 %v658, %v657
    %v920 = vpack.c.b16 %v660, %v659
    %v921 = vpack.c.b16 %v662, %v661
    %v922 = vpack.c.b16 %v664, %v663
    %v923 = vpack.c.b16 %v666, %v665
    %v924 = vpack.c.b16 %v668, %v667
    %v925 = vpack.c.b16 %v670, %v669
    %v926 = vpack.c.b16 %v672, %v671
    %v927 = vpack.c.b16 %v674, %v673
    %v928 = vpack.c.b16 %v676, %v675
    %v929 = vpack.c.b16 %v678, %v677
    %v930 = vpack.c.b16 %v680, %v679
    %v931 = vpack.c.b16 %v682, %v681
    %v932 = vpack.c.b16 %v684, %v683
    %v933 = vpack.c.b16 %v686, %v685
    %v934 = vpack.c.b16 %v688, %v687
    %v935 = vpack.c.b16 %v690, %v689
    %v936 = vpack.c.b16 %v692, %v691
    %v937 = vpack.c.b16 %v694, %v693
    %v938 = vpack.c.b16 %v696, %v695
    %v939 = vpack.c.b16 %v698, %v697
    %v940 = vpack.c.b16 %v700, %v699
    %v941 = vpack.c.b16 %v702, %v701
    %v942 = vpack.c.b16 %v704, %v703
    %v943 = vpack.c.b16 %v706, %v705
    %v944 = vpack.c.b16 %v708, %v707
    %v945 = vpack.c.b16 %v710, %v709
    %v946 = vpack.c.b16 %v712, %v711
    %v947 = vpack.c.b16 %v714, %v713
    %v948 = vpack.c.b16 %v716, %v715
    %v949 = vpack.c.b16 %v718, %v717
    %v950 = vpack.c.b16 %v720, %v719
    %v951 = vpack.c.b16 %v722, %v721
    %v952 = vpack.c.b16 %v724, %v723
    %v953 = vpack.c.b16 %v726, %v725
    %v954 = vpack.c.b16 %v728, %v727
    %v955 = vpack.c.b16 %v730, %v729
    %v956 = vpack.c.b16 %v732, %v731
    %v957 = vpack.c.b16 %v734, %v733
    %v958 = vpack.c.b16 %v736, %v735
    %v959 = vpack.c.b16 %v738, %v737
    %v960 = vpack.c.b16 %v740, %v739
    %v961 = vpack.c.b16 %v742, %v741
    %v962 = vpack.c.b16 %v744, %v743
    %v963 = vpack.c.b16 %v746, %v745
    %v964 = vpack.c.b16 %v748, %v747
    %v965 = vpack.c.b16 %v750, %v749
    %v966 = vpack.c.b16 %v752, %v751
    %v967 = vpack.c.b16 %v754, %v753
    %v968 = vpack.c.b16 %v756, %v755
    %v969 = vpack.c.b16 %v758, %v757
    %v970 = vpack.c.b16 %v760, %v759
    %v971 = vpack.c.b16 %v762, %v761
    %v972 = vpack.c.b16 %v764, %v763
    %v973 = vpack.c.b16 %v766, %v765
    %v974 = vpack.c.b16 %v768, %v767
    %v975 = vpack.c.b16 %v770, %v769
    %v976 = vpack.c.b16 %v772, %v771
    %v977 = vpack.c.b16 %v774, %v773
    %v978 = vpack.c.b16 %v776, %v775
    %v979 = vpack.c.b16 %v778, %v777
    %v980 = vpack.c.b16 %v780, %v779
    %v981 = vpack.c.b16 %v782, %v781
    %v982 = vpack.c.b16 %v784, %v783
    %v983 = vpack.c.b16 %v786, %v785
    %v984 = vpack.c.b16 %v788, %v787
    %v985 = vpack.c.b16 %v790, %v789
    %v986 = vpack.c.b16 %v792, %v791
    %v987 = vpack.c.b16 %v794, %v793
    %v988 = vpack.c.b16 %v796, %v795
    %v989 = vpack.c.b16 %v798, %v797
    %v990 = vpack.c.b16 %v800, %v799
    %v991 = vpack.c.b16 %v802, %v801
    %v992 = vpack.c.b16 %v804, %v803
    %v993 = vpack.c.b16 %v806, %v805
    %v994 = vpack.c.b16 %v808, %v807
    %v995 = vpack.c.b16 %v810, %v809
    %v996 = vpack.c.b16 %v812, %v811
    %v997 = vpack.c.b16 %v814, %v813
    %v998 = vpack.c.b16 %v816, %v815
    %v999 = vpack.c.b16 %v818, %v817
    %v1000 = vpack.c.b16 %v820, %v819
    %v1001 = vpack.c.b16 %v822, %v821
    %v1002 = vpack.c.b16 %v824, %v823
    %v1003 = vpack.c.b16 %v826, %v825
    %v1004 = vpack.c.b16 %v828, %v827
    %v1005 = vpack.c.b16 %v830, %v829
    %v1006 = vpack.c.b16 %v832, %v831
    %v1007 = vpack.c.b16 %v834, %v833
    %v1008 = vpack.c.b16 %v836, %v835
    %v1009 = vpack.c.b16 %v838, %v837
    %v1010 = vpack.c.b16 %v840, %v839
    %v1011 = vpack.c.b16 %v842, %v841
    %v1012 = vpack.c.b16 %v844, %v843
    %v1013 = vpack.c.b16 %v846, %v845
    %v1014 = vpack.c.b16 %v848, %v847
    %v1015 = vpack.c.b16 %v850, %v849
    %v1016 = vpack.c.b16 %v852, %v851
    %v1017 = vpack.c.b16 %v854, %v853
    %v1018 = vpack.c.b16 %v856, %v855
    %v1019 = vpack.c.b16 %v858, %v857
    %v1020 = vpack.c.b16 %v860, %v859
    %v1021 = vpack.c.b16 %v862, %v861
    %v1022 = vpack.c.b16 %v864, %v863
    %v1023 = vpack.c.b16 %v866, %v865
    %v1024 = vpack.c.b16 %v868, %v867
    %v1025 = vpack.c.b16 %v870, %v869
    %v1026 = vpack.c.b16 %v872, %v871
    %v1027 = vpack.c.b16 %v874, %v873
    %v1028 = vpack.c.b16 %v876, %v875
    %v1029 = vpack.c.b16 %v878, %v877
    %v1030 = vpack.c.b16 %v880, %v879
    %v1031 = vpack.c.b16 %v882, %v881
    %v1032 = vpack.c.b16 %v884, %v883
    %v1033 = vpack.c.b16 %v886, %v885
    %v1034 = vpack.c.b16 %v888, %v887
    %v1035 = vpack.c.b16 %v890, %v889
    %v1036 = vpack.c.b16 %v892, %v891
    %v1037 = vpack.c.b16 %v893, %v893
    %vm1038 = vsmask.f32 7424
    %v1040 = vshrl.u32 %v894, 16
    %v1042 = vshll.u32 %v894, 16
    %v1044 = vrot.slane %v1042, 1
    %v1045 = vor.u32 %v1040, %v1044
    %v1047 = vshll.u32 %v895, 16
    %v1049 = vrot.slane %v1047, 1
    %v1050 = vsel %vm1038, %v1045, %v1049
    %v1051 = vshrl.u32 %v895, 16
    %v1053 = vor.u32 %v1051, %v1049
    %v1055 = vshll.u32 %v896, 16
    %v1057 = vrot.slane %v1055, 1
    %v1058 = vsel %vm1038, %v1053, %v1057
    %v1059 = vshrl.u32 %v896, 16
    %v1061 = vor.u32 %v1059, %v1057
    %v1063 = vshll.u32 %v897, 16
    %v1065 = vrot.slane %v1063, 1
    %v1066 = vsel %vm1038, %v1061, %v1065
    %v1067 = vshrl.u32 %v897, 16
    %v1069 = vor.u32 %v1067, %v1065
    %v1071 = vshll.u32 %v898, 16
    %v1073 = vrot.slane %v1071, 1
    %v1074 = vsel %vm1038, %v1069, %v1073
    %v1075 = vshrl.u32 %v898, 16
    %v1077 = vor.u32 %v1075, %v1073
    %v1079 = vshll.u32 %v899, 16
    %v1081 = vrot.slane %v1079, 1
    %v1082 = vsel %vm1038, %v1077, %v1081
    %v1083 = vshrl.u32 %v899, 16
    %v1085 = vor.u32 %v1083, %v1081
    %v1087 = vshll.u32 %v900, 16
    %v1089 = vrot.slane %v1087, 1
    %v1090 = vsel %vm1038, %v1085, %v1089
    %v1091 = vshrl.u32 %v900, 16
    %v1093 = vor.u32 %v1091, %v1089
    %v1095 = vshll.u32 %v901, 16
    %v1097 = vrot.slane %v1095, 1
    %v1098 = vsel %vm1038, %v1093, %v1097
    %v1099 = vshrl.u32 %v901, 16
    %v1101 = vor.u32 %v1099, %v1097
    %v1103 = vshll.u32 %v902, 16
    %v1105 = vrot.slane %v1103, 1
    %v1106 = vsel %vm1038, %v1101, %v1105
    %v1107 = vshrl.u32 %v902, 16
    %v1109 = vor.u32 %v1107, %v1105
    %v1111 = vshll.u32 %v903, 16
    %v1113 = vrot.slane %v1111, 1
    %v1114 = vsel %vm1038, %v1109, %v1113
    %v1115 = vshrl.u32 %v903, 16
    %v1117 = vor.u32 %v1115, %v1113
    %v1119 = vshll.u32 %v904, 16
    %v1121 = vrot.slane %v1119, 1
    %v1122 = vsel %vm1038, %v1117, %v1121
    %v1123 = vshrl.u32 %v904, 16
    %v1125 = vor.u32 %v1123, %v1121
    %v1127 = vshll.u32 %v905, 16
    %v1129 = vrot.slane %v1127, 1
    %v1130 = vsel %vm1038, %v1125, %v1129
    %v1131 = vshrl.u32 %v905, 16
    %v1133 = vor.u32 %v1131, %v1129
    %v1135 = vshll.u32 %v906, 16
    %v1137 = vrot.slane %v1135, 1
    %v1138 = vsel %vm1038, %v1133, %v1137
    %v1139 = vshrl.u32 %v906, 16
    %v1141 = vor.u32 %v1139, %v1137
    %v1143 = vshll.u32 %v907, 16
    %v1145 = vrot.slane %v1143, 1
    %v1146 = vsel %vm1038, %v1141, %v1145
    %v1147 = vshrl.u32 %v907, 16
    %v1149 = vor.u32 %v1147, %v1145
    %v1151 = vshll.u32 %v908, 16
    %v1153 = vrot.slane %v1151, 1
    %v1154 = vsel %vm1038, %v1149, %v1153
    %v1155 = vshrl.u32 %v908, 16
    %v1157 = vor.u32 %v1155, %v1153
    %v1159 = vshll.u32 %v909, 16
    %v1161 = vrot.slane %v1159, 1
    %v1162 = vsel %vm1038, %v1157, %v1161
    %v1163 = vshrl.u32 %v909, 16
    %v1165 = vor.u32 %v1163, %v1161
    %v1167 = vshll.u32 %v910, 16
    %v1169 = vrot.slane %v1167, 1
    %v1170 = vsel %vm1038, %v1165, %v1169
    %v1171 = vshrl.u32 %v910, 16
    %v1173 = vor.u32 %v1171, %v1169
    %v1175 = vshll.u32 %v911, 16
    %v1177 = vrot.slane %v1175, 1
    %v1178 = vsel %vm1038, %v1173, %v1177
    %v1179 = vshrl.u32 %v911, 16
    %v1181 = vor.u32 %v1179, %v1177
    %v1183 = vshll.u32 %v912, 16
    %v1185 = vrot.slane %v1183, 1
    %v1186 = vsel %vm1038, %v1181, %v1185
    %v1187 = vshrl.u32 %v912, 16
    %v1189 = vor.u32 %v1187, %v1185
    %v1191 = vshll.u32 %v913, 16
    %v1193 = vrot.slane %v1191, 1
    %v1194 = vsel %vm1038, %v1189, %v1193
    %v1195 = vshrl.u32 %v913, 16
    %v1197 = vor.u32 %v1195, %v1193
    %v1199 = vshll.u32 %v914, 16
    %v1201 = vrot.slane %v1199, 1
    %v1202 = vsel %vm1038, %v1197, %v1201
    %v1203 = vshrl.u32 %v914, 16
    %v1205 = vor.u32 %v1203, %v1201
    %v1207 = vshll.u32 %v915, 16
    %v1209 = vrot.slane %v1207, 1
    %v1210 = vsel %vm1038, %v1205, %v1209
    %v1211 = vshrl.u32 %v915, 16
    %v1213 = vor.u32 %v1211, %v1209
    %v1215 = vshll.u32 %v916, 16
    %v1217 = vrot.slane %v1215, 1
    %v1218 = vsel %vm1038, %v1213, %v1217
    %v1219 = vshrl.u32 %v916, 16
    %v1221 = vor.u32 %v1219, %v1217
    %v1223 = vshll.u32 %v917, 16
    %v1225 = vrot.slane %v1223, 1
    %v1226 = vsel %vm1038, %v1221, %v1225
    %v1227 = vshrl.u32 %v917, 16
    %v1229 = vor.u32 %v1227, %v1225
    %v1231 = vshll.u32 %v918, 16
    %v1233 = vrot.slane %v1231, 1
    %v1234 = vsel %vm1038, %v1229, %v1233
    %v1235 = vshrl.u32 %v918, 16
    %v1237 = vor.u32 %v1235, %v1233
    %v1239 = vshll.u32 %v919, 16
    %v1241 = vrot.slane %v1239, 1
    %v1242 = vsel %vm1038, %v1237, %v1241
    %v1243 = vshrl.u32 %v919, 16
    %v1245 = vor.u32 %v1243, %v1241
    %v1247 = vshll.u32 %v920, 16
    %v1249 = vrot.slane %v1247, 1
    %v1250 = vsel %vm1038, %v1245, %v1249
    %v1251 = vshrl.u32 %v920, 16
    %v1253 = vor.u32 %v1251, %v1249
    %v1255 = vshll.u32 %v921, 16
    %v1257 = vrot.slane %v1255, 1
    %v1258 = vsel %vm1038, %v1253, %v1257
    %v1259 = vshrl.u32 %v921, 16
    %v1261 = vor.u32 %v1259, %v1257
    %v1263 = vshll.u32 %v922, 16
    %v1265 = vrot.slane %v1263, 1
    %v1266 = vsel %vm1038, %v1261, %v1265
    %v1267 = vshrl.u32 %v922, 16
    %v1269 = vor.u32 %v1267, %v1265
    %v1271 = vshll.u32 %v923, 16
    %v1273 = vrot.slane %v1271, 1
    %v1274 = vsel %vm1038, %v1269, %v1273
    %v1275 = vshrl.u32 %v923, 16
    %v1277 = vor.u32 %v1275, %v1273
    %v1279 = vshll.u32 %v924, 16
    %v1281 = vrot.slane %v1279, 1
    %v1282 = vsel %vm1038, %v1277, %v1281
    %v1283 = vshrl.u32 %v924, 16
    %v1285 = vor.u32 %v1283, %v1281
    %v1287 = vshll.u32 %v925, 16
    %v1289 = vrot.slane %v1287, 1
    %v1290 = vsel %vm1038, %v1285, %v1289
    %v1291 = vshrl.u32 %v925, 16
    %v1293 = vor.u32 %v1291, %v1289
    %v1295 = vshll.u32 %v926, 16
    %v1297 = vrot.slane %v1295, 1
    %v1298 = vsel %vm1038, %v1293, %v1297
    %v1299 = vshrl.u32 %v926, 16
    %v1301 = vor.u32 %v1299, %v1297
    %v1303 = vshll.u32 %v927, 16
    %v1305 = vrot.slane %v1303, 1
    %v1306 = vsel %vm1038, %v1301, %v1305
    %v1307 = vshrl.u32 %v927, 16
    %v1309 = vor.u32 %v1307, %v1305
    %v1311 = vshll.u32 %v928, 16
    %v1313 = vrot.slane %v1311, 1
    %v1314 = vsel %vm1038, %v1309, %v1313
    %v1315 = vshrl.u32 %v928, 16
    %v1317 = vor.u32 %v1315, %v1313
    %v1319 = vshll.u32 %v929, 16
    %v1321 = vrot.slane %v1319, 1
    %v1322 = vsel %vm1038, %v1317, %v1321
    %v1323 = vshrl.u32 %v929, 16
    %v1325 = vor.u32 %v1323, %v1321
    %v1327 = vshll.u32 %v930, 16
    %v1329 = vrot.slane %v1327, 1
    %v1330 = vsel %vm1038, %v1325, %v1329
    %v1331 = vshrl.u32 %v930, 16
    %v1333 = vor.u32 %v1331, %v1329
    %v1335 = vshll.u32 %v931, 16
    %v1337 = vrot.slane %v1335, 1
    %v1338 = vsel %vm1038, %v1333, %v1337
    %v1339 = vshrl.u32 %v931, 16
    %v1341 = vor.u32 %v1339, %v1337
    %v1343 = vshll.u32 %v932, 16
    %v1345 = vrot.slane %v1343, 1
    %v1346 = vsel %vm1038, %v1341, %v1345
    %v1347 = vshrl.u32 %v932, 16
    %v1349 = vor.u32 %v1347, %v1345
    %v1351 = vshll.u32 %v933, 16
    %v1353 = vrot.slane %v1351, 1
    %v1354 = vsel %vm1038, %v1349, %v1353
    %v1355 = vshrl.u32 %v933, 16
    %v1357 = vor.u32 %v1355, %v1353
    %v1359 = vshll.u32 %v934, 16
    %v1361 = vrot.slane %v1359, 1
    %v1362 = vsel %vm1038, %v1357, %v1361
    %v1363 = vshrl.u32 %v934, 16
    %v1365 = vor.u32 %v1363, %v1361
    %v1367 = vshll.u32 %v935, 16
    %v1369 = vrot.slane %v1367, 1
    %v1370 = vsel %vm1038, %v1365, %v1369
    %v1371 = vshrl.u32 %v935, 16
    %v1373 = vor.u32 %v1371, %v1369
    %v1375 = vshll.u32 %v936, 16
    %v1377 = vrot.slane %v1375, 1
    %v1378 = vsel %vm1038, %v1373, %v1377
    %v1379 = vshrl.u32 %v936, 16
    %v1381 = vor.u32 %v1379, %v1377
    %v1383 = vshll.u32 %v937, 16
    %v1385 = vrot.slane %v1383, 1
    %v1386 = vsel %vm1038, %v1381, %v1385
    %v1387 = vshrl.u32 %v937, 16
    %v1389 = vor.u32 %v1387, %v1385
    %v1391 = vshll.u32 %v938, 16
    %v1393 = vrot.slane %v1391, 1
    %v1394 = vsel %vm1038, %v1389, %v1393
    %v1395 = vshrl.u32 %v938, 16
    %v1397 = vor.u32 %v1395, %v1393
    %v1399 = vshll.u32 %v939, 16
    %v1401 = vrot.slane %v1399, 1
    %v1402 = vsel %vm1038, %v1397, %v1401
    %v1403 = vshrl.u32 %v939, 16
    %v1405 = vor.u32 %v1403, %v1401
    %v1407 = vshll.u32 %v940, 16
    %v1409 = vrot.slane %v1407, 1
    %v1410 = vsel %vm1038, %v1405, %v1409
    %v1411 = vshrl.u32 %v940, 16
    %v1413 = vor.u32 %v1411, %v1409
    %v1415 = vshll.u32 %v941, 16
    %v1417 = vrot.slane %v1415, 1
    %v1418 = vsel %vm1038, %v1413, %v1417
    %v1419 = vshrl.u32 %v941, 16
    %v1421 = vor.u32 %v1419, %v1417
    %v1423 = vshll.u32 %v942, 16
    %v1425 = vrot.slane %v1423, 1
    %v1426 = vsel %vm1038, %v1421, %v1425
    %v1427 = vshrl.u32 %v942, 16
    %v1429 = vor.u32 %v1427, %v1425
    %v1431 = vshll.u32 %v943, 16
    %v1433 = vrot.slane %v1431, 1
    %v1434 = vsel %vm1038, %v1429, %v1433
    %v1435 = vshrl.u32 %v943, 16
    %v1437 = vor.u32 %v1435, %v1433
    %v1439 = vshll.u32 %v944, 16
    %v1441 = vrot.slane %v1439, 1
    %v1442 = vsel %vm1038, %v1437, %v1441
    %v1443 = vshrl.u32 %v944, 16
    %v1445 = vor.u32 %v1443, %v1441
    %v1447 = vshll.u32 %v945, 16
    %v1449 = vrot.slane %v1447, 1
    %v1450 = vsel %vm1038, %v1445, %v1449
    %v1451 = vshrl.u32 %v945, 16
    %v1453 = vor.u32 %v1451, %v1449
    %v1455 = vshll.u32 %v946, 16
    %v1457 = vrot.slane %v1455, 1
    %v1458 = vsel %vm1038, %v1453, %v1457
    %v1459 = vshrl.u32 %v946, 16
    %v1461 = vor.u32 %v1459, %v1457
    %v1463 = vshll.u32 %v947, 16
    %v1465 = vrot.slane %v1463, 1
    %v1466 = vsel %vm1038, %v1461, %v1465
    %v1467 = vshrl.u32 %v947, 16
    %v1469 = vor.u32 %v1467, %v1465
    %v1471 = vshll.u32 %v948, 16
    %v1473 = vrot.slane %v1471, 1
    %v1474 = vsel %vm1038, %v1469, %v1473
    %v1475 = vshrl.u32 %v948, 16
    %v1477 = vor.u32 %v1475, %v1473
    %v1479 = vshll.u32 %v949, 16
    %v1481 = vrot.slane %v1479, 1
    %v1482 = vsel %vm1038, %v1477, %v1481
    %v1483 = vshrl.u32 %v949, 16
    %v1485 = vor.u32 %v1483, %v1481
    %v1487 = vshll.u32 %v950, 16
    %v1489 = vrot.slane %v1487, 1
    %v1490 = vsel %vm1038, %v1485, %v1489
    %v1491 = vshrl.u32 %v950, 16
    %v1493 = vor.u32 %v1491, %v1489
    %v1495 = vshll.u32 %v951, 16
    %v1497 = vrot.slane %v1495, 1
    %v1498 = vsel %vm1038, %v1493, %v1497
    %v1499 = vshrl.u32 %v951, 16
    %v1501 = vor.u32 %v1499, %v1497
    %v1503 = vshll.u32 %v952, 16
    %v1505 = vrot.slane %v1503, 1
    %v1506 = vsel %vm1038, %v1501, %v1505
    %v1507 = vshrl.u32 %v952, 16
    %v1509 = vor.u32 %v1507, %v1505
    %v1511 = vshll.u32 %v953, 16
    %v1513 = vrot.slane %v1511, 1
    %v1514 = vsel %vm1038, %v1509, %v1513
    %v1515 = vshrl.u32 %v953, 16
    %v1517 = vor.u32 %v1515, %v1513
    %v1519 = vshll.u32 %v954, 16
    %v1521 = vrot.slane %v1519, 1
    %v1522 = vsel %vm1038, %v1517, %v1521
    %v1523 = vshrl.u32 %v954, 16
    %v1525 = vor.u32 %v1523, %v1521
    %v1527 = vshll.u32 %v955, 16
    %v1529 = vrot.slane %v1527, 1
    %v1530 = vsel %vm1038, %v1525, %v1529
    %v1531 = vshrl.u32 %v955, 16
    %v1533 = vor.u32 %v1531, %v1529
    %v1535 = vshll.u32 %v956, 16
    %v1537 = vrot.slane %v1535, 1
    %v1538 = vsel %vm1038, %v1533, %v1537
    %v1539 = vshrl.u32 %v956, 16
    %v1541 = vor.u32 %v1539, %v1537
    %v1543 = vshll.u32 %v957, 16
    %v1545 = vrot.slane %v1543, 1
    %v1546 = vsel %vm1038, %v1541, %v1545
    %v1547 = vshrl.u32 %v957, 16
    %v1549 = vor.u32 %v1547, %v1545
    %v1551 = vshll.u32 %v958, 16
    %v1553 = vrot.slane %v1551, 1
    %v1554 = vsel %vm1038, %v1549, %v1553
    %v1555 = vshrl.u32 %v958, 16
    %v1557 = vor.u32 %v1555, %v1553
    %v1559 = vshll.u32 %v959, 16
    %v1561 = vrot.slane %v1559, 1
    %v1562 = vsel %vm1038, %v1557, %v1561
    %v1563 = vshrl.u32 %v959, 16
    %v1565 = vor.u32 %v1563, %v1561
    %v1567 = vshll.u32 %v960, 16
    %v1569 = vrot.slane %v1567, 1
    %v1570 = vsel %vm1038, %v1565, %v1569
    %v1571 = vshrl.u32 %v960, 16
    %v1573 = vor.u32 %v1571, %v1569
    %v1575 = vshll.u32 %v961, 16
    %v1577 = vrot.slane %v1575, 1
    %v1578 = vsel %vm1038, %v1573, %v1577
    %v1579 = vshrl.u32 %v961, 16
    %v1581 = vor.u32 %v1579, %v1577
    %v1583 = vshll.u32 %v962, 16
    %v1585 = vrot.slane %v1583, 1
    %v1586 = vsel %vm1038, %v1581, %v1585
    %v1587 = vshrl.u32 %v962, 16
    %v1589 = vor.u32 %v1587, %v1585
    %v1591 = vshll.u32 %v963, 16
    %v1593 = vrot.slane %v1591, 1
    %v1594 = vsel %vm1038, %v1589, %v1593
    %v1595 = vshrl.u32 %v963, 16
    %v1597 = vor.u32 %v1595, %v1593
    %v1599 = vshll.u32 %v964, 16
    %v1601 = vrot.slane %v1599, 1
    %v1602 = vsel %vm1038, %v1597, %v1601
    %v1603 = vshrl.u32 %v964, 16
    %v1605 = vor.u32 %v1603, %v1601
    %v1607 = vshll.u32 %v965, 16
    %v1609 = vrot.slane %v1607, 1
    %v1610 = vsel %vm1038, %v1605, %v1609
    %v1611 = vshrl.u32 %v965, 16
    %v1613 = vor.u32 %v1611, %v1609
    %v1615 = vshll.u32 %v966, 16
    %v1617 = vrot.slane %v1615, 1
    %v1618 = vsel %vm1038, %v1613, %v1617
    %v1619 = vshrl.u32 %v966, 16
    %v1621 = vor.u32 %v1619, %v1617
    %v1623 = vshll.u32 %v967, 16
    %v1625 = vrot.slane %v1623, 1
    %v1626 = vsel %vm1038, %v1621, %v1625
    %v1627 = vshrl.u32 %v967, 16
    %v1629 = vor.u32 %v1627, %v1625
    %v1631 = vshll.u32 %v968, 16
    %v1633 = vrot.slane %v1631, 1
    %v1634 = vsel %vm1038, %v1629, %v1633
    %v1635 = vshrl.u32 %v968, 16
    %v1637 = vor.u32 %v1635, %v1633
    %v1639 = vshll.u32 %v969, 16
    %v1641 = vrot.slane %v1639, 1
    %v1642 = vsel %vm1038, %v1637, %v1641
    %v1643 = vshrl.u32 %v969, 16
    %v1645 = vor.u32 %v1643, %v1641
    %v1647 = vshll.u32 %v970, 16
    %v1649 = vrot.slane %v1647, 1
    %v1650 = vsel %vm1038, %v1645, %v1649
    %v1651 = vshrl.u32 %v970, 16
    %v1653 = vor.u32 %v1651, %v1649
    %v1655 = vshll.u32 %v971, 16
    %v1657 = vrot.slane %v1655, 1
    %v1658 = vsel %vm1038, %v1653, %v1657
    %v1659 = vshrl.u32 %v971, 16
    %v1661 = vor.u32 %v1659, %v1657
    %v1663 = vshll.u32 %v972, 16
    %v1665 = vrot.slane %v1663, 1
    %v1666 = vsel %vm1038, %v1661, %v1665
    %v1667 = vshrl.u32 %v972, 16
    %v1669 = vor.u32 %v1667, %v1665
    %v1671 = vshll.u32 %v973, 16
    %v1673 = vrot.slane %v1671, 1
    %v1674 = vsel %vm1038, %v1669, %v1673
    %v1675 = vshrl.u32 %v973, 16
    %v1677 = vor.u32 %v1675, %v1673
    %v1679 = vshll.u32 %v974, 16
    %v1681 = vrot.slane %v1679, 1
    %v1682 = vsel %vm1038, %v1677, %v1681
    %v1683 = vshrl.u32 %v974, 16
    %v1685 = vor.u32 %v1683, %v1681
    %v1687 = vshll.u32 %v975, 16
    %v1689 = vrot.slane %v1687, 1
    %v1690 = vsel %vm1038, %v1685, %v1689
    %v1691 = vshrl.u32 %v975, 16
    %v1693 = vor.u32 %v1691, %v1689
    %v1695 = vshll.u32 %v976, 16
    %v1697 = vrot.slane %v1695, 1
    %v1698 = vsel %vm1038, %v1693, %v1697
    %v1699 = vshrl.u32 %v976, 16
    %v1701 = vor.u32 %v1699, %v1697
    %v1703 = vshll.u32 %v977, 16
    %v1705 = vrot.slane %v1703, 1
    %v1706 = vsel %vm1038, %v1701, %v1705
    %v1707 = vshrl.u32 %v977, 16
    %v1709 = vor.u32 %v1707, %v1705
    %v1711 = vshll.u32 %v978, 16
    %v1713 = vrot.slane %v1711, 1
    %v1714 = vsel %vm1038, %v1709, %v1713
    %v1715 = vshrl.u32 %v978, 16
    %v1717 = vor.u32 %v1715, %v1713
    %v1719 = vshll.u32 %v979, 16
    %v1721 = vrot.slane %v1719, 1
    %v1722 = vsel %vm1038, %v1717, %v1721
    %v1723 = vshrl.u32 %v979, 16
    %v1725 = vor.u32 %v1723, %v1721
    %v1727 = vshll.u32 %v980, 16
    %v1729 = vrot.slane %v1727, 1
    %v1730 = vsel %vm1038, %v1725, %v1729
    %v1731 = vshrl.u32 %v980, 16
    %v1733 = vor.u32 %v1731, %v1729
    %v1735 = vshll.u32 %v981, 16
    %v1737 = vrot.slane %v1735, 1
    %v1738 = vsel %vm1038, %v1733, %v1737
    %v1739 = vshrl.u32 %v981, 16
    %v1741 = vor.u32 %v1739, %v1737
    %v1743 = vshll.u32 %v982, 16
    %v1745 = vrot.slane %v1743, 1
    %v1746 = vsel %vm1038, %v1741, %v1745
    %v1747 = vshrl.u32 %v982, 16
    %v1749 = vor.u32 %v1747, %v1745
    %v1751 = vshll.u32 %v983, 16
    %v1753 = vrot.slane %v1751, 1
    %v1754 = vsel %vm1038, %v1749, %v1753
    %v1755 = vshrl.u32 %v983, 16
    %v1757 = vor.u32 %v1755, %v1753
    %v1759 = vshll.u32 %v984, 16
    %v1761 = vrot.slane %v1759, 1
    %v1762 = vsel %vm1038, %v1757, %v1761
    %v1763 = vshrl.u32 %v984, 16
    %v1765 = vor.u32 %v1763, %v1761
    %v1767 = vshll.u32 %v985, 16
    %v1769 = vrot.slane %v1767, 1
    %v1770 = vsel %vm1038, %v1765, %v1769
    %v1771 = vshrl.u32 %v985, 16
    %v1773 = vor.u32 %v1771, %v1769
    %v1775 = vshll.u32 %v986, 16
    %v1777 = vrot.slane %v1775, 1
    %v1778 = vsel %vm1038, %v1773, %v1777
    %v1779 = vshrl.u32 %v986, 16
    %v1781 = vor.u32 %v1779, %v1777
    %v1783 = vshll.u32 %v987, 16
    %v1785 = vrot.slane %v1783, 1
    %v1786 = vsel %vm1038, %v1781, %v1785
    %v1787 = vshrl.u32 %v987, 16
    %v1789 = vor.u32 %v1787, %v1785
    %v1791 = vshll.u32 %v988, 16
    %v1793 = vrot.slane %v1791, 1
    %v1794 = vsel %vm1038, %v1789, %v1793
    %v1795 = vshrl.u32 %v988, 16
    %v1797 = vor.u32 %v1795, %v1793
    %v1799 = vshll.u32 %v989, 16
    %v1801 = vrot.slane %v1799, 1
    %v1802 = vsel %vm1038, %v1797, %v1801
    %v1803 = vshrl.u32 %v989, 16
    %v1805 = vor.u32 %v1803, %v1801
    %v1807 = vshll.u32 %v990, 16
    %v1809 = vrot.slane %v1807, 1
    %v1810 = vsel %vm1038, %v1805, %v1809
    %v1811 = vshrl.u32 %v990, 16
    %v1813 = vor.u32 %v1811, %v1809
    %v1815 = vshll.u32 %v991, 16
    %v1817 = vrot.slane %v1815, 1
    %v1818 = vsel %vm1038, %v1813, %v1817
    %v1819 = vshrl.u32 %v991, 16
    %v1821 = vor.u32 %v1819, %v1817
    %v1823 = vshll.u32 %v992, 16
    %v1825 = vrot.slane %v1823, 1
    %v1826 = vsel %vm1038, %v1821, %v1825
    %v1827 = vshrl.u32 %v992, 16
    %v1829 = vor.u32 %v1827, %v1825
    %v1831 = vshll.u32 %v993, 16
    %v1833 = vrot.slane %v1831, 1
    %v1834 = vsel %vm1038, %v1829, %v1833
    %v1835 = vshrl.u32 %v993, 16
    %v1837 = vor.u32 %v1835, %v1833
    %v1839 = vshll.u32 %v994, 16
    %v1841 = vrot.slane %v1839, 1
    %v1842 = vsel %vm1038, %v1837, %v1841
    %v1843 = vshrl.u32 %v994, 16
    %v1845 = vor.u32 %v1843, %v1841
    %v1847 = vshll.u32 %v995, 16
    %v1849 = vrot.slane %v1847, 1
    %v1850 = vsel %vm1038, %v1845, %v1849
    %v1851 = vshrl.u32 %v995, 16
    %v1853 = vor.u32 %v1851, %v1849
    %v1855 = vshll.u32 %v996, 16
    %v1857 = vrot.slane %v1855, 1
    %v1858 = vsel %vm1038, %v1853, %v1857
    %v1859 = vshrl.u32 %v996, 16
    %v1861 = vor.u32 %v1859, %v1857
    %v1863 = vshll.u32 %v997, 16
    %v1865 = vrot.slane %v1863, 1
    %v1866 = vsel %vm1038, %v1861, %v1865
    %v1867 = vshrl.u32 %v997, 16
    %v1869 = vor.u32 %v1867, %v1865
    %v1871 = vshll.u32 %v998, 16
    %v1873 = vrot.slane %v1871, 1
    %v1874 = vsel %vm1038, %v1869, %v1873
    %v1875 = vshrl.u32 %v998, 16
    %v1877 = vor.u32 %v1875, %v1873
    %v1879 = vshll.u32 %v999, 16
    %v1881 = vrot.slane %v1879, 1
    %v1882 = vsel %vm1038, %v1877, %v1881
    %v1883 = vshrl.u32 %v999, 16
    %v1885 = vor.u32 %v1883, %v1881
    %v1887 = vshll.u32 %v1000, 16
    %v1889 = vrot.slane %v1887, 1
    %v1890 = vsel %vm1038, %v1885, %v1889
    %v1891 = vshrl.u32 %v1000, 16
    %v1893 = vor.u32 %v1891, %v1889
    %v1895 = vshll.u32 %v1001, 16
    %v1897 = vrot.slane %v1895, 1
    %v1898 = vsel %vm1038, %v1893, %v1897
    %v1899 = vshrl.u32 %v1001, 16
    %v1901 = vor.u32 %v1899, %v1897
    %v1903 = vshll.u32 %v1002, 16
    %v1905 = vrot.slane %v1903, 1
    %v1906 = vsel %vm1038, %v1901, %v1905
    %v1907 = vshrl.u32 %v1002, 16
    %v1909 = vor.u32 %v1907, %v1905
    %v1911 = vshll.u32 %v1003, 16
    %v1913 = vrot.slane %v1911, 1
    %v1914 = vsel %vm1038, %v1909, %v1913
    %v1915 = vshrl.u32 %v1003, 16
    %v1917 = vor.u32 %v1915, %v1913
    %v1919 = vshll.u32 %v1004, 16
    %v1921 = vrot.slane %v1919, 1
    %v1922 = vsel %vm1038, %v1917, %v1921
    %v1923 = vshrl.u32 %v1004, 16
    %v1925 = vor.u32 %v1923, %v1921
    %v1927 = vshll.u32 %v1005, 16
    %v1929 = vrot.slane %v1927, 1
    %v1930 = vsel %vm1038, %v1925, %v1929
    %v1931 = vshrl.u32 %v1005, 16
    %v1933 = vor.u32 %v1931, %v1929
    %v1935 = vshll.u32 %v1006, 16
    %v1937 = vrot.slane %v1935, 1
    %v1938 = vsel %vm1038, %v1933, %v1937
    %v1939 = vshrl.u32 %v1006, 16
    %v1941 = vor.u32 %v1939, %v1937
    %v1943 = vshll.u32 %v1007, 16
    %v1945 = vrot.slane %v1943, 1
    %v1946 = vsel %vm1038, %v1941, %v1945
    %v1947 = vshrl.u32 %v1007, 16
    %v1949 = vor.u32 %v1947, %v1945
    %v1951 = vshll.u32 %v1008, 16
    %v1953 = vrot.slane %v1951, 1
    %v1954 = vsel %vm1038, %v1949, %v1953
    %v1955 = vshrl.u32 %v1008, 16
    %v1957 = vor.u32 %v1955, %v1953
    %v1959 = vshll.u32 %v1009, 16
    %v1961 = vrot.slane %v1959, 1
    %v1962 = vsel %vm1038, %v1957, %v1961
    %v1963 = vshrl.u32 %v1009, 16
    %v1965 = vor.u32 %v1963, %v1961
    %v1967 = vshll.u32 %v1010, 16
    %v1969 = vrot.slane %v1967, 1
    %v1970 = vsel %vm1038, %v1965, %v1969
    %v1971 = vshrl.u32 %v1010, 16
    %v1973 = vor.u32 %v1971, %v1969
    %v1975 = vshll.u32 %v1011, 16
    %v1977 = vrot.slane %v1975, 1
    %v1978 = vsel %vm1038, %v1973, %v1977
    %v1979 = vshrl.u32 %v1011, 16
    %v1981 = vor.u32 %v1979, %v1977
    %v1983 = vshll.u32 %v1012, 16
    %v1985 = vrot.slane %v1983, 1
    %v1986 = vsel %vm1038, %v1981, %v1985
    %v1987 = vshrl.u32 %v1012, 16
    %v1989 = vor.u32 %v1987, %v1985
    %v1991 = vshll.u32 %v1013, 16
    %v1993 = vrot.slane %v1991, 1
    %v1994 = vsel %vm1038, %v1989, %v1993
    %v1995 = vshrl.u32 %v1013, 16
    %v1997 = vor.u32 %v1995, %v1993
    %v1999 = vshll.u32 %v1014, 16
    %v2001 = vrot.slane %v1999, 1
    %v2002 = vsel %vm1038, %v1997, %v2001
    %v2003 = vshrl.u32 %v1014, 16
    %v2005 = vor.u32 %v2003, %v2001
    %v2007 = vshll.u32 %v1015, 16
    %v2009 = vrot.slane %v2007, 1
    %v2010 = vsel %vm1038, %v2005, %v2009
    %v2011 = vshrl.u32 %v1015, 16
    %v2013 = vor.u32 %v2011, %v2009
    %v2015 = vshll.u32 %v1016, 16
    %v2017 = vrot.slane %v2015, 1
    %v2018 = vsel %vm1038, %v2013, %v2017
    %v2019 = vshrl.u32 %v1016, 16
    %v2021 = vor.u32 %v2019, %v2017
    %v2023 = vshll.u32 %v1017, 16
    %v2025 = vrot.slane %v2023, 1
    %v2026 = vsel %vm1038, %v2021, %v2025
    %v2027 = vshrl.u32 %v1017, 16
    %v2029 = vor.u32 %v2027, %v2025
    %v2031 = vshll.u32 %v1018, 16
    %v2033 = vrot.slane %v2031, 1
    %v2034 = vsel %vm1038, %v2029, %v2033
    %v2035 = vshrl.u32 %v1018, 16
    %v2037 = vor.u32 %v2035, %v2033
    %v2039 = vshll.u32 %v1019, 16
    %v2041 = vrot.slane %v2039, 1
    %v2042 = vsel %vm1038, %v2037, %v2041
    %v2043 = vshrl.u32 %v1019, 16
    %v2045 = vor.u32 %v2043, %v2041
    %v2047 = vshll.u32 %v1020, 16
    %v2049 = vrot.slane %v2047, 1
    %v2050 = vsel %vm1038, %v2045, %v2049
    %v2051 = vshrl.u32 %v1020, 16
    %v2053 = vor.u32 %v2051, %v2049
    %v2055 = vshll.u32 %v1021, 16
    %v2057 = vrot.slane %v2055, 1
    %v2058 = vsel %vm1038, %v2053, %v2057
    %v2059 = vshrl.u32 %v1021, 16
    %v2061 = vor.u32 %v2059, %v2057
    %v2063 = vshll.u32 %v1022, 16
    %v2065 = vrot.slane %v2063, 1
    %v2066 = vsel %vm1038, %v2061, %v2065
    %v2067 = vshrl.u32 %v1022, 16
    %v2069 = vor.u32 %v2067, %v2065
    %v2071 = vshll.u32 %v1023, 16
    %v2073 = vrot.slane %v2071, 1
    %v2074 = vsel %vm1038, %v2069, %v2073
    %v2075 = vshrl.u32 %v1023, 16
    %v2077 = vor.u32 %v2075, %v2073
    %v2079 = vshll.u32 %v1024, 16
    %v2081 = vrot.slane %v2079, 1
    %v2082 = vsel %vm1038, %v2077, %v2081
    %v2083 = vshrl.u32 %v1024, 16
    %v2085 = vor.u32 %v2083, %v2081
    %v2087 = vshll.u32 %v1025, 16
    %v2089 = vrot.slane %v2087, 1
    %v2090 = vsel %vm1038, %v2085, %v2089
    %v2091 = vshrl.u32 %v1025, 16
    %v2093 = vor.u32 %v2091, %v2089
    %v2095 = vshll.u32 %v1026, 16
    %v2097 = vrot.slane %v2095, 1
    %v2098 = vsel %vm1038, %v2093, %v2097
    %v2099 = vshrl.u32 %v1026, 16
    %v2101 = vor.u32 %v2099, %v2097
    %v2103 = vshll.u32 %v1027, 16
    %v2105 = vrot.slane %v2103, 1
    %v2106 = vsel %vm1038, %v2101, %v2105
    %v2107 = vshrl.u32 %v1027, 16
    %v2109 = vor.u32 %v2107, %v2105
    %v2111 = vshll.u32 %v1028, 16
    %v2113 = vrot.slane %v2111, 1
    %v2114 = vsel %vm1038, %v2109, %v2113
    %v2115 = vshrl.u32 %v1028, 16
    %v2117 = vor.u32 %v2115, %v2113
    %v2119 = vshll.u32 %v1029, 16
    %v2121 = vrot.slane %v2119, 1
    %v2122 = vsel %vm1038, %v2117, %v2121
    %v2123 = vshrl.u32 %v1029, 16
    %v2125 = vor.u32 %v2123, %v2121
    %v2127 = vshll.u32 %v1030, 16
    %v2129 = vrot.slane %v2127, 1
    %v2130 = vsel %vm1038, %v2125, %v2129
    %v2131 = vshrl.u32 %v1030, 16
    %v2133 = vor.u32 %v2131, %v2129
    %v2135 = vshll.u32 %v1031, 16
    %v2137 = vrot.slane %v2135, 1
    %v2138 = vsel %vm1038, %v2133, %v2137
    %v2139 = vshrl.u32 %v1031, 16
    %v2141 = vor.u32 %v2139, %v2137
    %v2143 = vshll.u32 %v1032, 16
    %v2145 = vrot.slane %v2143, 1
    %v2146 = vsel %vm1038, %v2141, %v2145
    %v2147 = vshrl.u32 %v1032, 16
    %v2149 = vor.u32 %v2147, %v2145
    %v2151 = vshll.u32 %v1033, 16
    %v2153 = vrot.slane %v2151, 1
    %v2154 = vsel %vm1038, %v2149, %v2153
    %v2155 = vshrl.u32 %v1033, 16
    %v2157 = vor.u32 %v2155, %v2153
    %v2159 = vshll.u32 %v1034, 16
    %v2161 = vrot.slane %v2159, 1
    %v2162 = vsel %vm1038, %v2157, %v2161
    %v2163 = vshrl.u32 %v1034, 16
    %v2165 = vor.u32 %v2163, %v2161
    %v2167 = vshll.u32 %v1035, 16
    %v2169 = vrot.slane %v2167, 1
    %v2170 = vsel %vm1038, %v2165, %v2169
    %v2171 = vshrl.u32 %v1035, 16
    %v2173 = vor.u32 %v2171, %v2169
    %v2175 = vshll.u32 %v1036, 16
    %v2177 = vrot.slane %v2175, 1
    %v2178 = vsel %vm1038, %v2173, %v2177
    %v2179 = vshrl.u32 %v1036, 16
    %v2181 = vor.u32 %v2179, %v2177
    %v2183 = vshll.u32 %v1037, 16
    %v2185 = vrot.slane %v2183, 1
    %v2186 = vsel %vm1038, %v2181, %v2185
    %v2187 = vshrl.u32 %v1037, 16
    %v2189 = vor.u32 %v2187, %v2185
    %v2198 = vunpack.c.l.b16 %v312
    %v2199 = vunpack.c.l.b16 %v313
    %v2200 = vunpack.c.l.b16 %v314
    %v2201 = vunpack.c.l.b16 %v315
    %v2202 = vunpack.c.l.b16 %v316
    %v2203 = vunpack.c.l.b16 %v317
    %v2204 = vunpack.c.l.b16 %v318
    %v2205 = vunpack.c.l.b16 %v319
    %v2206 = vpack.c.b16 %v2199, %v2198
    %v2207 = vpack.c.b16 %v2201, %v2200
    %v2208 = vpack.c.b16 %v2203, %v2202
    %v2209 = vpack.c.b16 %v2205, %v2204
    %vm2214 = vcmask 523264
    %v2216 = vsel %vm2214, %v1050, 0
    %v2219 = vsel %vm2214, %v1058, 0
    %v2222 = vsel %vm2214, %v1066, 0
    %v2225 = vsel %vm2214, %v1074, 0
    %v2228 = vsel %vm2214, %v1082, 0
    %v2231 = vsel %vm2214, %v1090, 0
    %v2234 = vsel %vm2214, %v1098, 0
    %v2237 = vsel %vm2214, %v1106, 0
    %v2240 = vsel %vm2214, %v1114, 0
    %v2243 = vsel %vm2214, %v1122, 0
    %v2246 = vsel %vm2214, %v1130, 0
    %v2249 = vsel %vm2214, %v1138, 0
    %v2252 = vsel %vm2214, %v1146, 0
    %v2255 = vsel %vm2214, %v1154, 0
    %v2258 = vsel %vm2214, %v1162, 0
    %v2261 = vsel %vm2214, %v1170, 0
    %v2264 = vsel %vm2214, %v1178, 0
    %v2267 = vsel %vm2214, %v1186, 0
    %v2270 = vsel %vm2214, %v1194, 0
    %v2273 = vsel %vm2214, %v1202, 0
    %v2276 = vsel %vm2214, %v1210, 0
    %v2279 = vsel %vm2214, %v1218, 0
    %v2282 = vsel %vm2214, %v1226, 0
    %v2285 = vsel %vm2214, %v1234, 0
    %v2288 = vsel %vm2214, %v1242, 0
    %v2291 = vsel %vm2214, %v1250, 0
    %v2294 = vsel %vm2214, %v1258, 0
    %v2297 = vsel %vm2214, %v1266, 0
    %v2300 = vsel %vm2214, %v1274, 0
    %v2303 = vsel %vm2214, %v1282, 0
    %v2306 = vsel %vm2214, %v1290, 0
    %v2309 = vsel %vm2214, %v1298, 0
    %v2312 = vsel %vm2214, %v1306, 0
    %v2315 = vsel %vm2214, %v1314, 0
    %v2318 = vsel %vm2214, %v1322, 0
    %v2321 = vsel %vm2214, %v1330, 0
    %v2324 = vsel %vm2214, %v1338, 0
    %v2327 = vsel %vm2214, %v1346, 0
    %v2330 = vsel %vm2214, %v1354, 0
    %v2333 = vsel %vm2214, %v1362, 0
    %v2336 = vsel %vm2214, %v1370, 0
    %v2339 = vsel %vm2214, %v1378, 0
    %v2342 = vsel %vm2214, %v1386, 0
    %v2345 = vsel %vm2214, %v1394, 0
    %v2348 = vsel %vm2214, %v1402, 0
    %v2351 = vsel %vm2214, %v1410, 0
    %v2354 = vsel %vm2214, %v1418, 0
    %v2357 = vsel %vm2214, %v1426, 0
    %v2360 = vsel %vm2214, %v1434, 0
    %v2363 = vsel %vm2214, %v1442, 0
    %v2366 = vsel %vm2214, %v1450, 0
    %v2369 = vsel %vm2214, %v1458, 0
    %v2372 = vsel %vm2214, %v1466, 0
    %v2375 = vsel %vm2214, %v1474, 0
    %v2378 = vsel %vm2214, %v1482, 0
    %v2381 = vsel %vm2214, %v1490, 0
    %v2384 = vsel %vm2214, %v1498, 0
    %v2387 = vsel %vm2214, %v1506, 0
    %v2390 = vsel %vm2214, %v1514, 0
    %v2393 = vsel %vm2214, %v1522, 0
    %v2396 = vsel %vm2214, %v1530, 0
    %v2399 = vsel %vm2214, %v1538, 0
    %v2402 = vsel %vm2214, %v1546, 0
    %v2405 = vsel %vm2214, %v1554, 0
    %v2408 = vsel %vm2214, %v1562, 0
    %v2411 = vsel %vm2214, %v1570, 0
    %v2414 = vsel %vm2214, %v1578, 0
    %v2417 = vsel %vm2214, %v1586, 0
    %v2420 = vsel %vm2214, %v1594, 0
    %v2423 = vsel %vm2214, %v1602, 0
    %v2426 = vsel %vm2214, %v1610, 0
    %v2429 = vsel %vm2214, %v1618, 0
    %v2432 = vsel %vm2214, %v1626, 0
    %v2435 = vsel %vm2214, %v1634, 0
    %v2438 = vsel %vm2214, %v1642, 0
    %v2441 = vsel %vm2214, %v1650, 0
    %v2444 = vsel %vm2214, %v1658, 0
    %v2447 = vsel %vm2214, %v1666, 0
    %v2450 = vsel %vm2214, %v1674, 0
    %v2453 = vsel %vm2214, %v1682, 0
    %v2456 = vsel %vm2214, %v1690, 0
    %v2459 = vsel %vm2214, %v1698, 0
    %v2462 = vsel %vm2214, %v1706, 0
    %v2465 = vsel %vm2214, %v1714, 0
    %v2468 = vsel %vm2214, %v1722, 0
    %v2471 = vsel %vm2214, %v1730, 0
    %v2474 = vsel %vm2214, %v1738, 0
    %v2477 = vsel %vm2214, %v1746, 0
    %v2480 = vsel %vm2214, %v1754, 0
    %v2483 = vsel %vm2214, %v1762, 0
    %v2486 = vsel %vm2214, %v1770, 0
    %v2489 = vsel %vm2214, %v1778, 0
    %v2492 = vsel %vm2214, %v1786, 0
    %v2495 = vsel %vm2214, %v1794, 0
    %v2498 = vsel %vm2214, %v1802, 0
    %v2501 = vsel %vm2214, %v1810, 0
    %v2504 = vsel %vm2214, %v1818, 0
    %v2507 = vsel %vm2214, %v1826, 0
    %v2510 = vsel %vm2214, %v1834, 0
    %v2513 = vsel %vm2214, %v1842, 0
    %v2516 = vsel %vm2214, %v1850, 0
    %v2519 = vsel %vm2214, %v1858, 0
    %v2522 = vsel %vm2214, %v1866, 0
    %v2525 = vsel %vm2214, %v1874, 0
    %v2528 = vsel %vm2214, %v1882, 0
    %v2531 = vsel %vm2214, %v1890, 0
    %v2534 = vsel %vm2214, %v1898, 0
    %v2537 = vsel %vm2214, %v1906, 0
    %v2540 = vsel %vm2214, %v1914, 0
    %v2543 = vsel %vm2214, %v1922, 0
    %v2546 = vsel %vm2214, %v1930, 0
    %v2549 = vsel %vm2214, %v1938, 0
    %v2552 = vsel %vm2214, %v1946, 0
    %v2555 = vsel %vm2214, %v1954, 0
    %v2558 = vsel %vm2214, %v1962, 0
    %v2561 = vsel %vm2214, %v1970, 0
    %v2564 = vsel %vm2214, %v1978, 0
    %v2567 = vsel %vm2214, %v1986, 0
    %v2570 = vsel %vm2214, %v1994, 0
    %v2573 = vsel %vm2214, %v2002, 0
    %v2576 = vsel %vm2214, %v2010, 0
    %v2579 = vsel %vm2214, %v2018, 0
    %v2582 = vsel %vm2214, %v2026, 0
    %v2585 = vsel %vm2214, %v2034, 0
    %v2588 = vsel %vm2214, %v2042, 0
    %v2591 = vsel %vm2214, %v2050, 0
    %v2594 = vsel %vm2214, %v2058, 0
    %v2597 = vsel %vm2214, %v2066, 0
    %v2600 = vsel %vm2214, %v2074, 0
    %v2603 = vsel %vm2214, %v2082, 0
    %v2606 = vsel %vm2214, %v2090, 0
    %v2609 = vsel %vm2214, %v2098, 0
    %v2612 = vsel %vm2214, %v2106, 0
    %v2615 = vsel %vm2214, %v2114, 0
    %v2618 = vsel %vm2214, %v2122, 0
    %v2621 = vsel %vm2214, %v2130, 0
    %v2624 = vsel %vm2214, %v2138, 0
    %v2627 = vsel %vm2214, %v2146, 0
    %v2630 = vsel %vm2214, %v2154, 0
    %v2633 = vsel %vm2214, %v2162, 0
    %v2636 = vsel %vm2214, %v2170, 0
    %v2639 = vsel %vm2214, %v2178, 0
    %v2642 = vsel %vm2214, %v2186, 0
    %v2645 = vsel %vm2214, %v2189, 0
    %2647 = vmatprep.subr.bf16.mxu0 0
    %2648 = vmatpush1.bf16.msra.mxu0 %v2206
    %2649 = vmatprep.subr.bf16.mxu0 0
    %2650 = vmatpush1.bf16.msra.mxu0 %v2207
    %2651 = vmatprep.subr.bf16.mxu0 0
    %2652 = vmatpush1.bf16.msra.mxu0 %v2208
    %2653 = vmatprep.subr.bf16.mxu0 0
    %2654 = vmatpush1.bf16.msra.mxu0 %v2209
    %2655 = vmatprep.subr.bf16.mxu0 0
    %2656 = vmatpush1.bf16.msra.mxu0 0
    %2657 = vmatprep.subr.bf16.mxu0 0
    %2658 = vmatpush1.bf16.msra.mxu0 0
    %2659 = vmatprep.subr.bf16.mxu0 0
    %2660 = vmatpush1.bf16.msra.mxu0 0
    %2661 = vmatprep.subr.bf16.mxu0 0
    %2662 = vmatpush1.bf16.msra.mxu0 0
    %2663 = vmatprep.subr.bf16.mxu0 0
    %2664 = vmatpush1.bf16.msra.mxu0 0
    %2665 = vmatprep.subr.bf16.mxu0 0
    %2666 = vmatpush1.bf16.msra.mxu0 0
    %2667 = vmatprep.subr.bf16.mxu0 0
    %2668 = vmatpush1.bf16.msra.mxu0 0
    %2669 = vmatprep.subr.bf16.mxu0 0
    %2670 = vmatpush1.bf16.msra.mxu0 0
    %2671 = vmatprep.subr.bf16.mxu0 0
    %2672 = vmatpush1.bf16.msra.mxu0 0
    %2673 = vmatprep.subr.bf16.mxu0 0
    %2674 = vmatpush1.bf16.msra.mxu0 0
    %2675 = vmatprep.subr.bf16.mxu0 0
    %2676 = vmatpush1.bf16.msra.mxu0 0
    %2677 = vmatprep.subr.bf16.mxu0 0
    %2678 = vmatpush1.bf16.msra.mxu0 0
    %2679 = vmatprep.mubr.bf16.mxu0 0
    %2680 = vmatmul.mubr.bf16.gmra.mrb[0].mxu0 %v2216
    %v2681 = vpop.f32.mrb[0].mxu0
    %v2682 = vadd.f32 0.0, %v2681
    %v2683 = vpop.f32.mrb[0].mxu0
    %v2684 = vpop.f32.mrb[0].mxu0
    %v2685 = vadd.f32 0.0, %v2684
    %v2686 = vpop.f32.mrb[0].mxu0
    %2687 = vmatprep.mubr.bf16.mxu0 0
    %2688 = vmatmul.mubr.bf16.gmra.mrb[0].mxu0 %v2219
    %v2689 = vpop.f32.mrb[0].mxu0
    %v2690 = vadd.f32 0.0, %v2689
    %v2691 = vpop.f32.mrb[0].mxu0
    %v2692 = vpop.f32.mrb[0].mxu0
    %v2693 = vadd.f32 0.0, %v2692
    %v2694 = vpop.f32.mrb[0].mxu0
    %2695 = vmatprep.mubr.bf16.mxu0 0
    %2696 = vmatmul.mubr.bf16.gmra.mrb[0].mxu0 %v2222
    %v2697 = vpop.f32.mrb[0].mxu0
    %v2698 = vadd.f32 0.0, %v2697
    %v2699 = vpop.f32.mrb[0].mxu0
    %v2700 = vpop.f32.mrb[0].mxu0
    %v2701 = vadd.f32 0.0, %v2700
    %v2702 = vpop.f32.mrb[0].mxu0
    %2703 = vmatprep.mubr.bf16.mxu0 0
    %2704 = vmatmul.mubr.bf16.gmra.mrb[0].mxu0 %v2225
    %v2705 = vpop.f32.mrb[0].mxu0
    %v2706 = vadd.f32 0.0, %v2705
    %v2707 = vpop.f32.mrb[0].mxu0
    %v2708 = vpop.f32.mrb[0].mxu0
    %v2709 = vadd.f32 0.0, %v2708
    %v2710 = vpop.f32.mrb[0].mxu0
    %2711 = vmatprep.mubr.bf16.mxu0 0
    %2712 = vmatmul.mubr.bf16.gmra.mrb[0].mxu0 %v2228
    %v2713 = vpop.f32.mrb[0].mxu0
    %v2714 = vadd.f32 0.0, %v2713
    %v2715 = vpop.f32.mrb[0].mxu0
    %v2716 = vpop.f32.mrb[0].mxu0
    %v2717 = vadd.f32 0.0, %v2716
    %v2718 = vpop.f32.mrb[0].mxu0
    %2719 = vmatprep.mubr.bf16.mxu0 0
    %2720 = vmatmul.mubr.bf16.gmra.mrb[0].mxu0 %v2231
    %v2721 = vpop.f32.mrb[0].mxu0
    %v2722 = vadd.f32 0.0, %v2721
    %v2723 = vpop.f32.mrb[0].mxu0
    %v2724 = vpop.f32.mrb[0].mxu0
    %v2725 = vadd.f32 0.0, %v2724
    %v2726 = vpop.f32.mrb[0].mxu0
    %2727 = vmatprep.mubr.bf16.mxu0 0
    %2728 = vmatmul.mubr.bf16.gmra.mrb[0].mxu0 %v2234
    %v2729 = vpop.f32.mrb[0].mxu0
    %v2730 = vadd.f32 0.0, %v2729
    %v2731 = vpop.f32.mrb[0].mxu0
    %v2732 = vpop.f32.mrb[0].mxu0
    %v2733 = vadd.f32 0.0, %v2732
    %v2734 = vpop.f32.mrb[0].mxu0
    %2735 = vmatprep.mubr.bf16.mxu0 0
    %2736 = vmatmul.mubr.bf16.gmra.mrb[0].mxu0 %v2237
    %v2737 = vpop.f32.mrb[0].mxu0
    %v2738 = vadd.f32 0.0, %v2737
    %v2739 = vpop.f32.mrb[0].mxu0
    %v2740 = vpop.f32.mrb[0].mxu0
    %v2741 = vadd.f32 0.0, %v2740
    %v2742 = vpop.f32.mrb[0].mxu0
    %2743 = vmatprep.mubr.bf16.mxu0 0
    %2744 = vmatmul.mubr.bf16.gmra.mrb[0].mxu0 %v2240
    %v2745 = vpop.f32.mrb[0].mxu0
    %v2746 = vadd.f32 0.0, %v2745
    %v2747 = vpop.f32.mrb[0].mxu0
    %v2748 = vpop.f32.mrb[0].mxu0
    %v2749 = vadd.f32 0.0, %v2748
    %v2750 = vpop.f32.mrb[0].mxu0
    %2751 = vmatprep.mubr.bf16.mxu0 0
    %2752 = vmatmul.mubr.bf16.gmra.mrb[0].mxu0 %v2243
    %v2753 = vpop.f32.mrb[0].mxu0
    %v2754 = vadd.f32 0.0, %v2753
    %v2755 = vpop.f32.mrb[0].mxu0
    %v2756 = vpop.f32.mrb[0].mxu0
    %v2757 = vadd.f32 0.0, %v2756
    %v2758 = vpop.f32.mrb[0].mxu0
    %2759 = vmatprep.mubr.bf16.mxu0 0
    %2760 = vmatmul.mubr.bf16.gmra.mrb[0].mxu0 %v2246
    %v2761 = vpop.f32.mrb[0].mxu0
    %v2762 = vadd.f32 0.0, %v2761
    %v2763 = vpop.f32.mrb[0].mxu0
    %v2764 = vpop.f32.mrb[0].mxu0
    %v2765 = vadd.f32 0.0, %v2764
    %v2766 = vpop.f32.mrb[0].mxu0
    %2767 = vmatprep.mubr.bf16.mxu0 0
    %2768 = vmatmul.mubr.bf16.gmra.mrb[0].mxu0 %v2249
    %v2769 = vpop.f32.mrb[0].mxu0
    %v2770 = vadd.f32 0.0, %v2769
    %v2771 = vpop.f32.mrb[0].mxu0
    %v2772 = vpop.f32.mrb[0].mxu0
    %v2773 = vadd.f32 0.0, %v2772
    %v2774 = vpop.f32.mrb[0].mxu0
    %2775 = vmatprep.mubr.bf16.mxu0 0
    %2776 = vmatmul.mubr.bf16.gmra.mrb[0].mxu0 %v2252
    %v2777 = vpop.f32.mrb[0].mxu0
    %v2778 = vadd.f32 0.0, %v2777
    %v2779 = vpop.f32.mrb[0].mxu0
    %v2780 = vpop.f32.mrb[0].mxu0
    %v2781 = vadd.f32 0.0, %v2780
    %v2782 = vpop.f32.mrb[0].mxu0
    %2783 = vmatprep.mubr.bf16.mxu0 0
    %2784 = vmatmul.mubr.bf16.gmra.mrb[0].mxu0 %v2255
    %v2785 = vpop.f32.mrb[0].mxu0
    %v2786 = vadd.f32 0.0, %v2785
    %v2787 = vpop.f32.mrb[0].mxu0
    %v2788 = vpop.f32.mrb[0].mxu0
    %v2789 = vadd.f32 0.0, %v2788
    %v2790 = vpop.f32.mrb[0].mxu0
    %2791 = vmatprep.mubr.bf16.mxu0 0
    %2792 = vmatmul.mubr.bf16.gmra.mrb[0].mxu0 %v2258
    %v2793 = vpop.f32.mrb[0].mxu0
    %v2794 = vadd.f32 0.0, %v2793
    %v2795 = vpop.f32.mrb[0].mxu0
    %v2796 = vpop.f32.mrb[0].mxu0
    %v2797 = vadd.f32 0.0, %v2796
    %v2798 = vpop.f32.mrb[0].mxu0
    %2799 = vmatprep.mubr.bf16.mxu0 0
    %2800 = vmatmul.mubr.bf16.gmra.mrb[0].mxu0 %v2261
    %v2801 = vpop.f32.mrb[0].mxu0
    %v2802 = vadd.f32 0.0, %v2801
    %v2803 = vpop.f32.mrb[0].mxu0
    %v2804 = vpop.f32.mrb[0].mxu0
    %v2805 = vadd.f32 0.0, %v2804
    %v2806 = vpop.f32.mrb[0].mxu0
    %2807 = vmatprep.mubr.bf16.mxu0 0
    %2808 = vmatmul.mubr.bf16.gmra.mrb[0].mxu0 %v2264
    %v2809 = vpop.f32.mrb[0].mxu0
    %v2810 = vadd.f32 0.0, %v2809
    %v2811 = vpop.f32.mrb[0].mxu0
    %v2812 = vpop.f32.mrb[0].mxu0
    %v2813 = vadd.f32 0.0, %v2812
    %v2814 = vpop.f32.mrb[0].mxu0
    %2815 = vmatprep.mubr.bf16.mxu0 0
    %2816 = vmatmul.mubr.bf16.gmra.mrb[0].mxu0 %v2267
    %v2817 = vpop.f32.mrb[0].mxu0
    %v2818 = vadd.f32 0.0, %v2817
    %v2819 = vpop.f32.mrb[0].mxu0
    %v2820 = vpop.f32.mrb[0].mxu0
    %v2821 = vadd.f32 0.0, %v2820
    %v2822 = vpop.f32.mrb[0].mxu0
    %2823 = vmatprep.mubr.bf16.mxu0 0
    %2824 = vmatmul.mubr.bf16.gmra.mrb[0].mxu0 %v2270
    %v2825 = vpop.f32.mrb[0].mxu0
    %v2826 = vadd.f32 0.0, %v2825
    %v2827 = vpop.f32.mrb[0].mxu0
    %v2828 = vpop.f32.mrb[0].mxu0
    %v2829 = vadd.f32 0.0, %v2828
    %v2830 = vpop.f32.mrb[0].mxu0
    %2831 = vmatprep.mubr.bf16.mxu0 0
    %2832 = vmatmul.mubr.bf16.gmra.mrb[0].mxu0 %v2273
    %v2833 = vpop.f32.mrb[0].mxu0
    %v2834 = vadd.f32 0.0, %v2833
    %v2835 = vpop.f32.mrb[0].mxu0
    %v2836 = vpop.f32.mrb[0].mxu0
    %v2837 = vadd.f32 0.0, %v2836
    %v2838 = vpop.f32.mrb[0].mxu0
    %2839 = vmatprep.mubr.bf16.mxu0 0
    %2840 = vmatmul.mubr.bf16.gmra.mrb[0].mxu0 %v2276
    %v2841 = vpop.f32.mrb[0].mxu0
    %v2842 = vadd.f32 0.0, %v2841
    %v2843 = vpop.f32.mrb[0].mxu0
    %v2844 = vpop.f32.mrb[0].mxu0
    %v2845 = vadd.f32 0.0, %v2844
    %v2846 = vpop.f32.mrb[0].mxu0
    %2847 = vmatprep.mubr.bf16.mxu0 0
    %2848 = vmatmul.mubr.bf16.gmra.mrb[0].mxu0 %v2279
    %v2849 = vpop.f32.mrb[0].mxu0
    %v2850 = vadd.f32 0.0, %v2849
    %v2851 = vpop.f32.mrb[0].mxu0
    %v2852 = vpop.f32.mrb[0].mxu0
    %v2853 = vadd.f32 0.0, %v2852
    %v2854 = vpop.f32.mrb[0].mxu0
    %2855 = vmatprep.mubr.bf16.mxu0 0
    %2856 = vmatmul.mubr.bf16.gmra.mrb[0].mxu0 %v2282
    %v2857 = vpop.f32.mrb[0].mxu0
    %v2858 = vadd.f32 0.0, %v2857
    %v2859 = vpop.f32.mrb[0].mxu0
    %v2860 = vpop.f32.mrb[0].mxu0
    %v2861 = vadd.f32 0.0, %v2860
    %v2862 = vpop.f32.mrb[0].mxu0
    %2863 = vmatprep.mubr.bf16.mxu0 0
    %2864 = vmatmul.mubr.bf16.gmra.mrb[0].mxu0 %v2285
    %v2865 = vpop.f32.mrb[0].mxu0
    %v2866 = vadd.f32 0.0, %v2865
    %v2867 = vpop.f32.mrb[0].mxu0
    %v2868 = vpop.f32.mrb[0].mxu0
    %v2869 = vadd.f32 0.0, %v2868
    %v2870 = vpop.f32.mrb[0].mxu0
    %2871 = vmatprep.mubr.bf16.mxu0 0
    %2872 = vmatmul.mubr.bf16.gmra.mrb[0].mxu0 %v2288
    %v2873 = vpop.f32.mrb[0].mxu0
    %v2874 = vadd.f32 0.0, %v2873
    %v2875 = vpop.f32.mrb[0].mxu0
    %v2876 = vpop.f32.mrb[0].mxu0
    %v2877 = vadd.f32 0.0, %v2876
    %v2878 = vpop.f32.mrb[0].mxu0
    %2879 = vmatprep.mubr.bf16.mxu0 0
    %2880 = vmatmul.mubr.bf16.gmra.mrb[0].mxu0 %v2291
    %v2881 = vpop.f32.mrb[0].mxu0
    %v2882 = vadd.f32 0.0, %v2881
    %v2883 = vpop.f32.mrb[0].mxu0
    %v2884 = vpop.f32.mrb[0].mxu0
    %v2885 = vadd.f32 0.0, %v2884
    %v2886 = vpop.f32.mrb[0].mxu0
    %2887 = vmatprep.mubr.bf16.mxu0 0
    %2888 = vmatmul.mubr.bf16.gmra.mrb[0].mxu0 %v2294
    %v2889 = vpop.f32.mrb[0].mxu0
    %v2890 = vadd.f32 0.0, %v2889
    %v2891 = vpop.f32.mrb[0].mxu0
    %v2892 = vpop.f32.mrb[0].mxu0
    %v2893 = vadd.f32 0.0, %v2892
    %v2894 = vpop.f32.mrb[0].mxu0
    %2895 = vmatprep.mubr.bf16.mxu0 0
    %2896 = vmatmul.mubr.bf16.gmra.mrb[0].mxu0 %v2297
    %v2897 = vpop.f32.mrb[0].mxu0
    %v2898 = vadd.f32 0.0, %v2897
    %v2899 = vpop.f32.mrb[0].mxu0
    %v2900 = vpop.f32.mrb[0].mxu0
    %v2901 = vadd.f32 0.0, %v2900
    %v2902 = vpop.f32.mrb[0].mxu0
    %2903 = vmatprep.mubr.bf16.mxu0 0
    %2904 = vmatmul.mubr.bf16.gmra.mrb[0].mxu0 %v2300
    %v2905 = vpop.f32.mrb[0].mxu0
    %v2906 = vadd.f32 0.0, %v2905
    %v2907 = vpop.f32.mrb[0].mxu0
    %v2908 = vpop.f32.mrb[0].mxu0
    %v2909 = vadd.f32 0.0, %v2908
    %v2910 = vpop.f32.mrb[0].mxu0
    %2911 = vmatprep.mubr.bf16.mxu0 0
    %2912 = vmatmul.mubr.bf16.gmra.mrb[0].mxu0 %v2303
    %v2913 = vpop.f32.mrb[0].mxu0
    %v2914 = vadd.f32 0.0, %v2913
    %v2915 = vpop.f32.mrb[0].mxu0
    %v2916 = vpop.f32.mrb[0].mxu0
    %v2917 = vadd.f32 0.0, %v2916
    %v2918 = vpop.f32.mrb[0].mxu0
    %2919 = vmatprep.mubr.bf16.mxu0 0
    %2920 = vmatmul.mubr.bf16.gmra.mrb[0].mxu0 %v2306
    %v2921 = vpop.f32.mrb[0].mxu0
    %v2922 = vadd.f32 0.0, %v2921
    %v2923 = vpop.f32.mrb[0].mxu0
    %v2924 = vpop.f32.mrb[0].mxu0
    %v2925 = vadd.f32 0.0, %v2924
    %v2926 = vpop.f32.mrb[0].mxu0
    %2927 = vmatprep.mubr.bf16.mxu0 0
    %2928 = vmatmul.mubr.bf16.gmra.mrb[0].mxu0 %v2309
    %v2929 = vpop.f32.mrb[0].mxu0
    %v2930 = vadd.f32 0.0, %v2929
    %v2931 = vpop.f32.mrb[0].mxu0
    %v2932 = vpop.f32.mrb[0].mxu0
    %v2933 = vadd.f32 0.0, %v2932
    %v2934 = vpop.f32.mrb[0].mxu0
    %2935 = vmatprep.mubr.bf16.mxu0 0
    %2936 = vmatmul.mubr.bf16.gmra.mrb[0].mxu0 %v2312
    %v2937 = vpop.f32.mrb[0].mxu0
    %v2938 = vadd.f32 0.0, %v2937
    %v2939 = vpop.f32.mrb[0].mxu0
    %v2940 = vpop.f32.mrb[0].mxu0
    %v2941 = vadd.f32 0.0, %v2940
    %v2942 = vpop.f32.mrb[0].mxu0
    %2943 = vmatprep.mubr.bf16.mxu0 0
    %2944 = vmatmul.mubr.bf16.gmra.mrb[0].mxu0 %v2315
    %v2945 = vpop.f32.mrb[0].mxu0
    %v2946 = vadd.f32 0.0, %v2945
    %v2947 = vpop.f32.mrb[0].mxu0
    %v2948 = vpop.f32.mrb[0].mxu0
    %v2949 = vadd.f32 0.0, %v2948
    %v2950 = vpop.f32.mrb[0].mxu0
    %2951 = vmatprep.mubr.bf16.mxu0 0
    %2952 = vmatmul.mubr.bf16.gmra.mrb[0].mxu0 %v2318
    %v2953 = vpop.f32.mrb[0].mxu0
    %v2954 = vadd.f32 0.0, %v2953
    %v2955 = vpop.f32.mrb[0].mxu0
    %v2956 = vpop.f32.mrb[0].mxu0
    %v2957 = vadd.f32 0.0, %v2956
    %v2958 = vpop.f32.mrb[0].mxu0
    %2959 = vmatprep.mubr.bf16.mxu0 0
    %2960 = vmatmul.mubr.bf16.gmra.mrb[0].mxu0 %v2321
    %v2961 = vpop.f32.mrb[0].mxu0
    %v2962 = vadd.f32 0.0, %v2961
    %v2963 = vpop.f32.mrb[0].mxu0
    %v2964 = vpop.f32.mrb[0].mxu0
    %v2965 = vadd.f32 0.0, %v2964
    %v2966 = vpop.f32.mrb[0].mxu0
    %2967 = vmatprep.mubr.bf16.mxu0 0
    %2968 = vmatmul.mubr.bf16.gmra.mrb[0].mxu0 %v2324
    %v2969 = vpop.f32.mrb[0].mxu0
    %v2970 = vadd.f32 0.0, %v2969
    %v2971 = vpop.f32.mrb[0].mxu0
    %v2972 = vpop.f32.mrb[0].mxu0
    %v2973 = vadd.f32 0.0, %v2972
    %v2974 = vpop.f32.mrb[0].mxu0
    %2975 = vmatprep.mubr.bf16.mxu0 0
    %2976 = vmatmul.mubr.bf16.gmra.mrb[0].mxu0 %v2327
    %v2977 = vpop.f32.mrb[0].mxu0
    %v2978 = vadd.f32 0.0, %v2977
    %v2979 = vpop.f32.mrb[0].mxu0
    %v2980 = vpop.f32.mrb[0].mxu0
    %v2981 = vadd.f32 0.0, %v2980
    %v2982 = vpop.f32.mrb[0].mxu0
    %2983 = vmatprep.mubr.bf16.mxu0 0
    %2984 = vmatmul.mubr.bf16.gmra.mrb[0].mxu0 %v2330
    %v2985 = vpop.f32.mrb[0].mxu0
    %v2986 = vadd.f32 0.0, %v2985
    %v2987 = vpop.f32.mrb[0].mxu0
    %v2988 = vpop.f32.mrb[0].mxu0
    %v2989 = vadd.f32 0.0, %v2988
    %v2990 = vpop.f32.mrb[0].mxu0
    %2991 = vmatprep.mubr.bf16.mxu0 0
    %2992 = vmatmul.mubr.bf16.gmra.mrb[0].mxu0 %v2333
    %v2993 = vpop.f32.mrb[0].mxu0
    %v2994 = vadd.f32 0.0, %v2993
    %v2995 = vpop.f32.mrb[0].mxu0
    %v2996 = vpop.f32.mrb[0].mxu0
    %v2997 = vadd.f32 0.0, %v2996
    %v2998 = vpop.f32.mrb[0].mxu0
    %2999 = vmatprep.mubr.bf16.mxu0 0
    %3000 = vmatmul.mubr.bf16.gmra.mrb[0].mxu0 %v2336
    %v3001 = vpop.f32.mrb[0].mxu0
    %v3002 = vadd.f32 0.0, %v3001
    %v3003 = vpop.f32.mrb[0].mxu0
    %v3004 = vpop.f32.mrb[0].mxu0
    %v3005 = vadd.f32 0.0, %v3004
    %v3006 = vpop.f32.mrb[0].mxu0
    %3007 = vmatprep.mubr.bf16.mxu0 0
    %3008 = vmatmul.mubr.bf16.gmra.mrb[0].mxu0 %v2339
    %v3009 = vpop.f32.mrb[0].mxu0
    %v3010 = vadd.f32 0.0, %v3009
    %v3011 = vpop.f32.mrb[0].mxu0
    %v3012 = vpop.f32.mrb[0].mxu0
    %v3013 = vadd.f32 0.0, %v3012
    %v3014 = vpop.f32.mrb[0].mxu0
    %3015 = vmatprep.mubr.bf16.mxu0 0
    %3016 = vmatmul.mubr.bf16.gmra.mrb[0].mxu0 %v2342
    %v3017 = vpop.f32.mrb[0].mxu0
    %v3018 = vadd.f32 0.0, %v3017
    %v3019 = vpop.f32.mrb[0].mxu0
    %v3020 = vpop.f32.mrb[0].mxu0
    %v3021 = vadd.f32 0.0, %v3020
    %v3022 = vpop.f32.mrb[0].mxu0
    %3023 = vmatprep.mubr.bf16.mxu0 0
    %3024 = vmatmul.mubr.bf16.gmra.mrb[0].mxu0 %v2345
    %v3025 = vpop.f32.mrb[0].mxu0
    %v3026 = vadd.f32 0.0, %v3025
    %v3027 = vpop.f32.mrb[0].mxu0
    %v3028 = vpop.f32.mrb[0].mxu0
    %v3029 = vadd.f32 0.0, %v3028
    %v3030 = vpop.f32.mrb[0].mxu0
    %3031 = vmatprep.mubr.bf16.mxu0 0
    %3032 = vmatmul.mubr.bf16.gmra.mrb[0].mxu0 %v2348
    %v3033 = vpop.f32.mrb[0].mxu0
    %v3034 = vadd.f32 0.0, %v3033
    %v3035 = vpop.f32.mrb[0].mxu0
    %v3036 = vpop.f32.mrb[0].mxu0
    %v3037 = vadd.f32 0.0, %v3036
    %v3038 = vpop.f32.mrb[0].mxu0
    %3039 = vmatprep.mubr.bf16.mxu0 0
    %3040 = vmatmul.mubr.bf16.gmra.mrb[0].mxu0 %v2351
    %v3041 = vpop.f32.mrb[0].mxu0
    %v3042 = vadd.f32 0.0, %v3041
    %v3043 = vpop.f32.mrb[0].mxu0
    %v3044 = vpop.f32.mrb[0].mxu0
    %v3045 = vadd.f32 0.0, %v3044
    %v3046 = vpop.f32.mrb[0].mxu0
    %3047 = vmatprep.mubr.bf16.mxu0 0
    %3048 = vmatmul.mubr.bf16.gmra.mrb[0].mxu0 %v2354
    %v3049 = vpop.f32.mrb[0].mxu0
    %v3050 = vadd.f32 0.0, %v3049
    %v3051 = vpop.f32.mrb[0].mxu0
    %v3052 = vpop.f32.mrb[0].mxu0
    %v3053 = vadd.f32 0.0, %v3052
    %v3054 = vpop.f32.mrb[0].mxu0
    %3055 = vmatprep.mubr.bf16.mxu0 0
    %3056 = vmatmul.mubr.bf16.gmra.mrb[0].mxu0 %v2357
    %v3057 = vpop.f32.mrb[0].mxu0
    %v3058 = vadd.f32 0.0, %v3057
    %v3059 = vpop.f32.mrb[0].mxu0
    %v3060 = vpop.f32.mrb[0].mxu0
    %v3061 = vadd.f32 0.0, %v3060
    %v3062 = vpop.f32.mrb[0].mxu0
    %3063 = vmatprep.mubr.bf16.mxu0 0
    %3064 = vmatmul.mubr.bf16.gmra.mrb[0].mxu0 %v2360
    %v3065 = vpop.f32.mrb[0].mxu0
    %v3066 = vadd.f32 0.0, %v3065
    %v3067 = vpop.f32.mrb[0].mxu0
    %v3068 = vpop.f32.mrb[0].mxu0
    %v3069 = vadd.f32 0.0, %v3068
    %v3070 = vpop.f32.mrb[0].mxu0
    %3071 = vmatprep.mubr.bf16.mxu0 0
    %3072 = vmatmul.mubr.bf16.gmra.mrb[0].mxu0 %v2363
    %v3073 = vpop.f32.mrb[0].mxu0
    %v3074 = vadd.f32 0.0, %v3073
    %v3075 = vpop.f32.mrb[0].mxu0
    %v3076 = vpop.f32.mrb[0].mxu0
    %v3077 = vadd.f32 0.0, %v3076
    %v3078 = vpop.f32.mrb[0].mxu0
    %3079 = vmatprep.mubr.bf16.mxu0 0
    %3080 = vmatmul.mubr.bf16.gmra.mrb[0].mxu0 %v2366
    %v3081 = vpop.f32.mrb[0].mxu0
    %v3082 = vadd.f32 0.0, %v3081
    %v3083 = vpop.f32.mrb[0].mxu0
    %v3084 = vpop.f32.mrb[0].mxu0
    %v3085 = vadd.f32 0.0, %v3084
    %v3086 = vpop.f32.mrb[0].mxu0
    %3087 = vmatprep.mubr.bf16.mxu0 0
    %3088 = vmatmul.mubr.bf16.gmra.mrb[0].mxu0 %v2369
    %v3089 = vpop.f32.mrb[0].mxu0
    %v3090 = vadd.f32 0.0, %v3089
    %v3091 = vpop.f32.mrb[0].mxu0
    %v3092 = vpop.f32.mrb[0].mxu0
    %v3093 = vadd.f32 0.0, %v3092
    %v3094 = vpop.f32.mrb[0].mxu0
    %3095 = vmatprep.mubr.bf16.mxu0 0
    %3096 = vmatmul.mubr.bf16.gmra.mrb[0].mxu0 %v2372
    %v3097 = vpop.f32.mrb[0].mxu0
    %v3098 = vadd.f32 0.0, %v3097
    %v3099 = vpop.f32.mrb[0].mxu0
    %v3100 = vpop.f32.mrb[0].mxu0
    %v3101 = vadd.f32 0.0, %v3100
    %v3102 = vpop.f32.mrb[0].mxu0
    %3103 = vmatprep.mubr.bf16.mxu0 0
    %3104 = vmatmul.mubr.bf16.gmra.mrb[0].mxu0 %v2375
    %v3105 = vpop.f32.mrb[0].mxu0
    %v3106 = vadd.f32 0.0, %v3105
    %v3107 = vpop.f32.mrb[0].mxu0
    %v3108 = vpop.f32.mrb[0].mxu0
    %v3109 = vadd.f32 0.0, %v3108
    %v3110 = vpop.f32.mrb[0].mxu0
    %3111 = vmatprep.mubr.bf16.mxu0 0
    %3112 = vmatmul.mubr.bf16.gmra.mrb[0].mxu0 %v2378
    %v3113 = vpop.f32.mrb[0].mxu0
    %v3114 = vadd.f32 0.0, %v3113
    %v3115 = vpop.f32.mrb[0].mxu0
    %v3116 = vpop.f32.mrb[0].mxu0
    %v3117 = vadd.f32 0.0, %v3116
    %v3118 = vpop.f32.mrb[0].mxu0
    %3119 = vmatprep.mubr.bf16.mxu0 0
    %3120 = vmatmul.mubr.bf16.gmra.mrb[0].mxu0 %v2381
    %v3121 = vpop.f32.mrb[0].mxu0
    %v3122 = vadd.f32 0.0, %v3121
    %v3123 = vpop.f32.mrb[0].mxu0
    %v3124 = vpop.f32.mrb[0].mxu0
    %v3125 = vadd.f32 0.0, %v3124
    %v3126 = vpop.f32.mrb[0].mxu0
    %3127 = vmatprep.mubr.bf16.mxu0 0
    %3128 = vmatmul.mubr.bf16.gmra.mrb[0].mxu0 %v2384
    %v3129 = vpop.f32.mrb[0].mxu0
    %v3130 = vadd.f32 0.0, %v3129
    %v3131 = vpop.f32.mrb[0].mxu0
    %v3132 = vpop.f32.mrb[0].mxu0
    %v3133 = vadd.f32 0.0, %v3132
    %v3134 = vpop.f32.mrb[0].mxu0
    %3135 = vmatprep.mubr.bf16.mxu0 0
    %3136 = vmatmul.mubr.bf16.gmra.mrb[0].mxu0 %v2387
    %v3137 = vpop.f32.mrb[0].mxu0
    %v3138 = vadd.f32 0.0, %v3137
    %v3139 = vpop.f32.mrb[0].mxu0
    %v3140 = vpop.f32.mrb[0].mxu0
    %v3141 = vadd.f32 0.0, %v3140
    %v3142 = vpop.f32.mrb[0].mxu0
    %3143 = vmatprep.mubr.bf16.mxu0 0
    %3144 = vmatmul.mubr.bf16.gmra.mrb[0].mxu0 %v2390
    %v3145 = vpop.f32.mrb[0].mxu0
    %v3146 = vadd.f32 0.0, %v3145
    %v3147 = vpop.f32.mrb[0].mxu0
    %v3148 = vpop.f32.mrb[0].mxu0
    %v3149 = vadd.f32 0.0, %v3148
    %v3150 = vpop.f32.mrb[0].mxu0
    %3151 = vmatprep.mubr.bf16.mxu0 0
    %3152 = vmatmul.mubr.bf16.gmra.mrb[0].mxu0 %v2393
    %v3153 = vpop.f32.mrb[0].mxu0
    %v3154 = vadd.f32 0.0, %v3153
    %v3155 = vpop.f32.mrb[0].mxu0
    %v3156 = vpop.f32.mrb[0].mxu0
    %v3157 = vadd.f32 0.0, %v3156
    %v3158 = vpop.f32.mrb[0].mxu0
    %3159 = vmatprep.mubr.bf16.mxu0 0
    %3160 = vmatmul.mubr.bf16.gmra.mrb[0].mxu0 %v2396
    %v3161 = vpop.f32.mrb[0].mxu0
    %v3162 = vadd.f32 0.0, %v3161
    %v3163 = vpop.f32.mrb[0].mxu0
    %v3164 = vpop.f32.mrb[0].mxu0
    %v3165 = vadd.f32 0.0, %v3164
    %v3166 = vpop.f32.mrb[0].mxu0
    %3167 = vmatprep.mubr.bf16.mxu0 0
    %3168 = vmatmul.mubr.bf16.gmra.mrb[0].mxu0 %v2399
    %v3169 = vpop.f32.mrb[0].mxu0
    %v3170 = vadd.f32 0.0, %v3169
    %v3171 = vpop.f32.mrb[0].mxu0
    %v3172 = vpop.f32.mrb[0].mxu0
    %v3173 = vadd.f32 0.0, %v3172
    %v3174 = vpop.f32.mrb[0].mxu0
    %3175 = vmatprep.mubr.bf16.mxu0 0
    %3176 = vmatmul.mubr.bf16.gmra.mrb[0].mxu0 %v2402
    %v3177 = vpop.f32.mrb[0].mxu0
    %v3178 = vadd.f32 0.0, %v3177
    %v3179 = vpop.f32.mrb[0].mxu0
    %v3180 = vpop.f32.mrb[0].mxu0
    %v3181 = vadd.f32 0.0, %v3180
    %v3182 = vpop.f32.mrb[0].mxu0
    %3183 = vmatprep.mubr.bf16.mxu0 0
    %3184 = vmatmul.mubr.bf16.gmra.mrb[0].mxu0 %v2405
    %v3185 = vpop.f32.mrb[0].mxu0
    %v3186 = vadd.f32 0.0, %v3185
    %v3187 = vpop.f32.mrb[0].mxu0
    %v3188 = vpop.f32.mrb[0].mxu0
    %v3189 = vadd.f32 0.0, %v3188
    %v3190 = vpop.f32.mrb[0].mxu0
    %3191 = vmatprep.mubr.bf16.mxu0 0
    %3192 = vmatmul.mubr.bf16.gmra.mrb[0].mxu0 %v2408
    %v3193 = vpop.f32.mrb[0].mxu0
    %v3194 = vadd.f32 0.0, %v3193
    %v3195 = vpop.f32.mrb[0].mxu0
    %v3196 = vpop.f32.mrb[0].mxu0
    %v3197 = vadd.f32 0.0, %v3196
    %v3198 = vpop.f32.mrb[0].mxu0
    %3199 = vmatprep.mubr.bf16.mxu0 0
    %3200 = vmatmul.mubr.bf16.gmra.mrb[0].mxu0 %v2411
    %v3201 = vpop.f32.mrb[0].mxu0
    %v3202 = vadd.f32 0.0, %v3201
    %v3203 = vpop.f32.mrb[0].mxu0
    %v3204 = vpop.f32.mrb[0].mxu0
    %v3205 = vadd.f32 0.0, %v3204
    %v3206 = vpop.f32.mrb[0].mxu0
    %3207 = vmatprep.mubr.bf16.mxu0 0
    %3208 = vmatmul.mubr.bf16.gmra.mrb[0].mxu0 %v2414
    %v3209 = vpop.f32.mrb[0].mxu0
    %v3210 = vadd.f32 0.0, %v3209
    %v3211 = vpop.f32.mrb[0].mxu0
    %v3212 = vpop.f32.mrb[0].mxu0
    %v3213 = vadd.f32 0.0, %v3212
    %v3214 = vpop.f32.mrb[0].mxu0
    %3215 = vmatprep.mubr.bf16.mxu0 0
    %3216 = vmatmul.mubr.bf16.gmra.mrb[0].mxu0 %v2417
    %v3217 = vpop.f32.mrb[0].mxu0
    %v3218 = vadd.f32 0.0, %v3217
    %v3219 = vpop.f32.mrb[0].mxu0
    %v3220 = vpop.f32.mrb[0].mxu0
    %v3221 = vadd.f32 0.0, %v3220
    %v3222 = vpop.f32.mrb[0].mxu0
    %3223 = vmatprep.mubr.bf16.mxu0 0
    %3224 = vmatmul.mubr.bf16.gmra.mrb[0].mxu0 %v2420
    %v3225 = vpop.f32.mrb[0].mxu0
    %v3226 = vadd.f32 0.0, %v3225
    %v3227 = vpop.f32.mrb[0].mxu0
    %v3228 = vpop.f32.mrb[0].mxu0
    %v3229 = vadd.f32 0.0, %v3228
    %v3230 = vpop.f32.mrb[0].mxu0
    %3231 = vmatprep.mubr.bf16.mxu0 0
    %3232 = vmatmul.mubr.bf16.gmra.mrb[0].mxu0 %v2423
    %v3233 = vpop.f32.mrb[0].mxu0
    %v3234 = vadd.f32 0.0, %v3233
    %v3235 = vpop.f32.mrb[0].mxu0
    %v3236 = vpop.f32.mrb[0].mxu0
    %v3237 = vadd.f32 0.0, %v3236
    %v3238 = vpop.f32.mrb[0].mxu0
    %3239 = vmatprep.mubr.bf16.mxu0 0
    %3240 = vmatmul.mubr.bf16.gmra.mrb[0].mxu0 %v2426
    %v3241 = vpop.f32.mrb[0].mxu0
    %v3242 = vadd.f32 0.0, %v3241
    %v3243 = vpop.f32.mrb[0].mxu0
    %v3244 = vpop.f32.mrb[0].mxu0
    %v3245 = vadd.f32 0.0, %v3244
    %v3246 = vpop.f32.mrb[0].mxu0
    %3247 = vmatprep.mubr.bf16.mxu0 0
    %3248 = vmatmul.mubr.bf16.gmra.mrb[0].mxu0 %v2429
    %v3249 = vpop.f32.mrb[0].mxu0
    %v3250 = vadd.f32 0.0, %v3249
    %v3251 = vpop.f32.mrb[0].mxu0
    %v3252 = vpop.f32.mrb[0].mxu0
    %v3253 = vadd.f32 0.0, %v3252
    %v3254 = vpop.f32.mrb[0].mxu0
    %3255 = vmatprep.mubr.bf16.mxu0 0
    %3256 = vmatmul.mubr.bf16.gmra.mrb[0].mxu0 %v2432
    %v3257 = vpop.f32.mrb[0].mxu0
    %v3258 = vadd.f32 0.0, %v3257
    %v3259 = vpop.f32.mrb[0].mxu0
    %v3260 = vpop.f32.mrb[0].mxu0
    %v3261 = vadd.f32 0.0, %v3260
    %v3262 = vpop.f32.mrb[0].mxu0
    %3263 = vmatprep.mubr.bf16.mxu0 0
    %3264 = vmatmul.mubr.bf16.gmra.mrb[0].mxu0 %v2435
    %v3265 = vpop.f32.mrb[0].mxu0
    %v3266 = vadd.f32 0.0, %v3265
    %v3267 = vpop.f32.mrb[0].mxu0
    %v3268 = vpop.f32.mrb[0].mxu0
    %v3269 = vadd.f32 0.0, %v3268
    %v3270 = vpop.f32.mrb[0].mxu0
    %3271 = vmatprep.mubr.bf16.mxu0 0
    %3272 = vmatmul.mubr.bf16.gmra.mrb[0].mxu0 %v2438
    %v3273 = vpop.f32.mrb[0].mxu0
    %v3274 = vadd.f32 0.0, %v3273
    %v3275 = vpop.f32.mrb[0].mxu0
    %v3276 = vpop.f32.mrb[0].mxu0
    %v3277 = vadd.f32 0.0, %v3276
    %v3278 = vpop.f32.mrb[0].mxu0
    %3279 = vmatprep.mubr.bf16.mxu0 0
    %3280 = vmatmul.mubr.bf16.gmra.mrb[0].mxu0 %v2441
    %v3281 = vpop.f32.mrb[0].mxu0
    %v3282 = vadd.f32 0.0, %v3281
    %v3283 = vpop.f32.mrb[0].mxu0
    %v3284 = vpop.f32.mrb[0].mxu0
    %v3285 = vadd.f32 0.0, %v3284
    %v3286 = vpop.f32.mrb[0].mxu0
    %3287 = vmatprep.mubr.bf16.mxu0 0
    %3288 = vmatmul.mubr.bf16.gmra.mrb[0].mxu0 %v2444
    %v3289 = vpop.f32.mrb[0].mxu0
    %v3290 = vadd.f32 0.0, %v3289
    %v3291 = vpop.f32.mrb[0].mxu0
    %v3292 = vpop.f32.mrb[0].mxu0
    %v3293 = vadd.f32 0.0, %v3292
    %v3294 = vpop.f32.mrb[0].mxu0
    %3295 = vmatprep.mubr.bf16.mxu0 0
    %3296 = vmatmul.mubr.bf16.gmra.mrb[0].mxu0 %v2447
    %v3297 = vpop.f32.mrb[0].mxu0
    %v3298 = vadd.f32 0.0, %v3297
    %v3299 = vpop.f32.mrb[0].mxu0
    %v3300 = vpop.f32.mrb[0].mxu0
    %v3301 = vadd.f32 0.0, %v3300
    %v3302 = vpop.f32.mrb[0].mxu0
    %3303 = vmatprep.mubr.bf16.mxu0 0
    %3304 = vmatmul.mubr.bf16.gmra.mrb[0].mxu0 %v2450
    %v3305 = vpop.f32.mrb[0].mxu0
    %v3306 = vadd.f32 0.0, %v3305
    %v3307 = vpop.f32.mrb[0].mxu0
    %v3308 = vpop.f32.mrb[0].mxu0
    %v3309 = vadd.f32 0.0, %v3308
    %v3310 = vpop.f32.mrb[0].mxu0
    %3311 = vmatprep.mubr.bf16.mxu0 0
    %3312 = vmatmul.mubr.bf16.gmra.mrb[0].mxu0 %v2453
    %v3313 = vpop.f32.mrb[0].mxu0
    %v3314 = vadd.f32 0.0, %v3313
    %v3315 = vpop.f32.mrb[0].mxu0
    %v3316 = vpop.f32.mrb[0].mxu0
    %v3317 = vadd.f32 0.0, %v3316
    %v3318 = vpop.f32.mrb[0].mxu0
    %3319 = vmatprep.mubr.bf16.mxu0 0
    %3320 = vmatmul.mubr.bf16.gmra.mrb[0].mxu0 %v2456
    %v3321 = vpop.f32.mrb[0].mxu0
    %v3322 = vadd.f32 0.0, %v3321
    %v3323 = vpop.f32.mrb[0].mxu0
    %v3324 = vpop.f32.mrb[0].mxu0
    %v3325 = vadd.f32 0.0, %v3324
    %v3326 = vpop.f32.mrb[0].mxu0
    %3327 = vmatprep.mubr.bf16.mxu0 0
    %3328 = vmatmul.mubr.bf16.gmra.mrb[0].mxu0 %v2459
    %v3329 = vpop.f32.mrb[0].mxu0
    %v3330 = vadd.f32 0.0, %v3329
    %v3331 = vpop.f32.mrb[0].mxu0
    %v3332 = vpop.f32.mrb[0].mxu0
    %v3333 = vadd.f32 0.0, %v3332
    %v3334 = vpop.f32.mrb[0].mxu0
    %3335 = vmatprep.mubr.bf16.mxu0 0
    %3336 = vmatmul.mubr.bf16.gmra.mrb[0].mxu0 %v2462
    %v3337 = vpop.f32.mrb[0].mxu0
    %v3338 = vadd.f32 0.0, %v3337
    %v3339 = vpop.f32.mrb[0].mxu0
    %v3340 = vpop.f32.mrb[0].mxu0
    %v3341 = vadd.f32 0.0, %v3340
    %v3342 = vpop.f32.mrb[0].mxu0
    %3343 = vmatprep.mubr.bf16.mxu0 0
    %3344 = vmatmul.mubr.bf16.gmra.mrb[0].mxu0 %v2465
    %v3345 = vpop.f32.mrb[0].mxu0
    %v3346 = vadd.f32 0.0, %v3345
    %v3347 = vpop.f32.mrb[0].mxu0
    %v3348 = vpop.f32.mrb[0].mxu0
    %v3349 = vadd.f32 0.0, %v3348
    %v3350 = vpop.f32.mrb[0].mxu0
    %3351 = vmatprep.mubr.bf16.mxu0 0
    %3352 = vmatmul.mubr.bf16.gmra.mrb[0].mxu0 %v2468
    %v3353 = vpop.f32.mrb[0].mxu0
    %v3354 = vadd.f32 0.0, %v3353
    %v3355 = vpop.f32.mrb[0].mxu0
    %v3356 = vpop.f32.mrb[0].mxu0
    %v3357 = vadd.f32 0.0, %v3356
    %v3358 = vpop.f32.mrb[0].mxu0
    %3359 = vmatprep.mubr.bf16.mxu0 0
    %3360 = vmatmul.mubr.bf16.gmra.mrb[0].mxu0 %v2471
    %v3361 = vpop.f32.mrb[0].mxu0
    %v3362 = vadd.f32 0.0, %v3361
    %v3363 = vpop.f32.mrb[0].mxu0
    %v3364 = vpop.f32.mrb[0].mxu0
    %v3365 = vadd.f32 0.0, %v3364
    %v3366 = vpop.f32.mrb[0].mxu0
    %3367 = vmatprep.mubr.bf16.mxu0 0
    %3368 = vmatmul.mubr.bf16.gmra.mrb[0].mxu0 %v2474
    %v3369 = vpop.f32.mrb[0].mxu0
    %v3370 = vadd.f32 0.0, %v3369
    %v3371 = vpop.f32.mrb[0].mxu0
    %v3372 = vpop.f32.mrb[0].mxu0
    %v3373 = vadd.f32 0.0, %v3372
    %v3374 = vpop.f32.mrb[0].mxu0
    %3375 = vmatprep.mubr.bf16.mxu0 0
    %3376 = vmatmul.mubr.bf16.gmra.mrb[0].mxu0 %v2477
    %v3377 = vpop.f32.mrb[0].mxu0
    %v3378 = vadd.f32 0.0, %v3377
    %v3379 = vpop.f32.mrb[0].mxu0
    %v3380 = vpop.f32.mrb[0].mxu0
    %v3381 = vadd.f32 0.0, %v3380
    %v3382 = vpop.f32.mrb[0].mxu0
    %3383 = vmatprep.mubr.bf16.mxu0 0
    %3384 = vmatmul.mubr.bf16.gmra.mrb[0].mxu0 %v2480
    %v3385 = vpop.f32.mrb[0].mxu0
    %v3386 = vadd.f32 0.0, %v3385
    %v3387 = vpop.f32.mrb[0].mxu0
    %v3388 = vpop.f32.mrb[0].mxu0
    %v3389 = vadd.f32 0.0, %v3388
    %v3390 = vpop.f32.mrb[0].mxu0
    %3391 = vmatprep.mubr.bf16.mxu0 0
    %3392 = vmatmul.mubr.bf16.gmra.mrb[0].mxu0 %v2483
    %v3393 = vpop.f32.mrb[0].mxu0
    %v3394 = vadd.f32 0.0, %v3393
    %v3395 = vpop.f32.mrb[0].mxu0
    %v3396 = vpop.f32.mrb[0].mxu0
    %v3397 = vadd.f32 0.0, %v3396
    %v3398 = vpop.f32.mrb[0].mxu0
    %3399 = vmatprep.mubr.bf16.mxu0 0
    %3400 = vmatmul.mubr.bf16.gmra.mrb[0].mxu0 %v2486
    %v3401 = vpop.f32.mrb[0].mxu0
    %v3402 = vadd.f32 0.0, %v3401
    %v3403 = vpop.f32.mrb[0].mxu0
    %v3404 = vpop.f32.mrb[0].mxu0
    %v3405 = vadd.f32 0.0, %v3404
    %v3406 = vpop.f32.mrb[0].mxu0
    %3407 = vmatprep.mubr.bf16.mxu0 0
    %3408 = vmatmul.mubr.bf16.gmra.mrb[0].mxu0 %v2489
    %v3409 = vpop.f32.mrb[0].mxu0
    %v3410 = vadd.f32 0.0, %v3409
    %v3411 = vpop.f32.mrb[0].mxu0
    %v3412 = vpop.f32.mrb[0].mxu0
    %v3413 = vadd.f32 0.0, %v3412
    %v3414 = vpop.f32.mrb[0].mxu0
    %3415 = vmatprep.mubr.bf16.mxu0 0
    %3416 = vmatmul.mubr.bf16.gmra.mrb[0].mxu0 %v2492
    %v3417 = vpop.f32.mrb[0].mxu0
    %v3418 = vadd.f32 0.0, %v3417
    %v3419 = vpop.f32.mrb[0].mxu0
    %v3420 = vpop.f32.mrb[0].mxu0
    %v3421 = vadd.f32 0.0, %v3420
    %v3422 = vpop.f32.mrb[0].mxu0
    %3423 = vmatprep.mubr.bf16.mxu0 0
    %3424 = vmatmul.mubr.bf16.gmra.mrb[0].mxu0 %v2495
    %v3425 = vpop.f32.mrb[0].mxu0
    %v3426 = vadd.f32 0.0, %v3425
    %v3427 = vpop.f32.mrb[0].mxu0
    %v3428 = vpop.f32.mrb[0].mxu0
    %v3429 = vadd.f32 0.0, %v3428
    %v3430 = vpop.f32.mrb[0].mxu0
    %3431 = vmatprep.mubr.bf16.mxu0 0
    %3432 = vmatmul.mubr.bf16.gmra.mrb[0].mxu0 %v2498
    %v3433 = vpop.f32.mrb[0].mxu0
    %v3434 = vadd.f32 0.0, %v3433
    %v3435 = vpop.f32.mrb[0].mxu0
    %v3436 = vpop.f32.mrb[0].mxu0
    %v3437 = vadd.f32 0.0, %v3436
    %v3438 = vpop.f32.mrb[0].mxu0
    %3439 = vmatprep.mubr.bf16.mxu0 0
    %3440 = vmatmul.mubr.bf16.gmra.mrb[0].mxu0 %v2501
    %v3441 = vpop.f32.mrb[0].mxu0
    %v3442 = vadd.f32 0.0, %v3441
    %v3443 = vpop.f32.mrb[0].mxu0
    %v3444 = vpop.f32.mrb[0].mxu0
    %v3445 = vadd.f32 0.0, %v3444
    %v3446 = vpop.f32.mrb[0].mxu0
    %3447 = vmatprep.mubr.bf16.mxu0 0
    %3448 = vmatmul.mubr.bf16.gmra.mrb[0].mxu0 %v2504
    %v3449 = vpop.f32.mrb[0].mxu0
    %v3450 = vadd.f32 0.0, %v3449
    %v3451 = vpop.f32.mrb[0].mxu0
    %v3452 = vpop.f32.mrb[0].mxu0
    %v3453 = vadd.f32 0.0, %v3452
    %v3454 = vpop.f32.mrb[0].mxu0
    %3455 = vmatprep.mubr.bf16.mxu0 0
    %3456 = vmatmul.mubr.bf16.gmra.mrb[0].mxu0 %v2507
    %v3457 = vpop.f32.mrb[0].mxu0
    %v3458 = vadd.f32 0.0, %v3457
    %v3459 = vpop.f32.mrb[0].mxu0
    %v3460 = vpop.f32.mrb[0].mxu0
    %v3461 = vadd.f32 0.0, %v3460
    %v3462 = vpop.f32.mrb[0].mxu0
    %3463 = vmatprep.mubr.bf16.mxu0 0
    %3464 = vmatmul.mubr.bf16.gmra.mrb[0].mxu0 %v2510
    %v3465 = vpop.f32.mrb[0].mxu0
    %v3466 = vadd.f32 0.0, %v3465
    %v3467 = vpop.f32.mrb[0].mxu0
    %v3468 = vpop.f32.mrb[0].mxu0
    %v3469 = vadd.f32 0.0, %v3468
    %v3470 = vpop.f32.mrb[0].mxu0
    %3471 = vmatprep.mubr.bf16.mxu0 0
    %3472 = vmatmul.mubr.bf16.gmra.mrb[0].mxu0 %v2513
    %v3473 = vpop.f32.mrb[0].mxu0
    %v3474 = vadd.f32 0.0, %v3473
    %v3475 = vpop.f32.mrb[0].mxu0
    %v3476 = vpop.f32.mrb[0].mxu0
    %v3477 = vadd.f32 0.0, %v3476
    %v3478 = vpop.f32.mrb[0].mxu0
    %3479 = vmatprep.mubr.bf16.mxu0 0
    %3480 = vmatmul.mubr.bf16.gmra.mrb[0].mxu0 %v2516
    %v3481 = vpop.f32.mrb[0].mxu0
    %v3482 = vadd.f32 0.0, %v3481
    %v3483 = vpop.f32.mrb[0].mxu0
    %v3484 = vpop.f32.mrb[0].mxu0
    %v3485 = vadd.f32 0.0, %v3484
    %v3486 = vpop.f32.mrb[0].mxu0
    %3487 = vmatprep.mubr.bf16.mxu0 0
    %3488 = vmatmul.mubr.bf16.gmra.mrb[0].mxu0 %v2519
    %v3489 = vpop.f32.mrb[0].mxu0
    %v3490 = vadd.f32 0.0, %v3489
    %v3491 = vpop.f32.mrb[0].mxu0
    %v3492 = vpop.f32.mrb[0].mxu0
    %v3493 = vadd.f32 0.0, %v3492
    %v3494 = vpop.f32.mrb[0].mxu0
    %3495 = vmatprep.mubr.bf16.mxu0 0
    %3496 = vmatmul.mubr.bf16.gmra.mrb[0].mxu0 %v2522
    %v3497 = vpop.f32.mrb[0].mxu0
    %v3498 = vadd.f32 0.0, %v3497
    %v3499 = vpop.f32.mrb[0].mxu0
    %v3500 = vpop.f32.mrb[0].mxu0
    %v3501 = vadd.f32 0.0, %v3500
    %v3502 = vpop.f32.mrb[0].mxu0
    %3503 = vmatprep.mubr.bf16.mxu0 0
    %3504 = vmatmul.mubr.bf16.gmra.mrb[0].mxu0 %v2525
    %v3505 = vpop.f32.mrb[0].mxu0
    %v3506 = vadd.f32 0.0, %v3505
    %v3507 = vpop.f32.mrb[0].mxu0
    %v3508 = vpop.f32.mrb[0].mxu0
    %v3509 = vadd.f32 0.0, %v3508
    %v3510 = vpop.f32.mrb[0].mxu0
    %3511 = vmatprep.mubr.bf16.mxu0 0
    %3512 = vmatmul.mubr.bf16.gmra.mrb[0].mxu0 %v2528
    %v3513 = vpop.f32.mrb[0].mxu0
    %v3514 = vadd.f32 0.0, %v3513
    %v3515 = vpop.f32.mrb[0].mxu0
    %v3516 = vpop.f32.mrb[0].mxu0
    %v3517 = vadd.f32 0.0, %v3516
    %v3518 = vpop.f32.mrb[0].mxu0
    %3519 = vmatprep.mubr.bf16.mxu0 0
    %3520 = vmatmul.mubr.bf16.gmra.mrb[0].mxu0 %v2531
    %v3521 = vpop.f32.mrb[0].mxu0
    %v3522 = vadd.f32 0.0, %v3521
    %v3523 = vpop.f32.mrb[0].mxu0
    %v3524 = vpop.f32.mrb[0].mxu0
    %v3525 = vadd.f32 0.0, %v3524
    %v3526 = vpop.f32.mrb[0].mxu0
    %3527 = vmatprep.mubr.bf16.mxu0 0
    %3528 = vmatmul.mubr.bf16.gmra.mrb[0].mxu0 %v2534
    %v3529 = vpop.f32.mrb[0].mxu0
    %v3530 = vadd.f32 0.0, %v3529
    %v3531 = vpop.f32.mrb[0].mxu0
    %v3532 = vpop.f32.mrb[0].mxu0
    %v3533 = vadd.f32 0.0, %v3532
    %v3534 = vpop.f32.mrb[0].mxu0
    %3535 = vmatprep.mubr.bf16.mxu0 0
    %3536 = vmatmul.mubr.bf16.gmra.mrb[0].mxu0 %v2537
    %v3537 = vpop.f32.mrb[0].mxu0
    %v3538 = vadd.f32 0.0, %v3537
    %v3539 = vpop.f32.mrb[0].mxu0
    %v3540 = vpop.f32.mrb[0].mxu0
    %v3541 = vadd.f32 0.0, %v3540
    %v3542 = vpop.f32.mrb[0].mxu0
    %3543 = vmatprep.mubr.bf16.mxu0 0
    %3544 = vmatmul.mubr.bf16.gmra.mrb[0].mxu0 %v2540
    %v3545 = vpop.f32.mrb[0].mxu0
    %v3546 = vadd.f32 0.0, %v3545
    %v3547 = vpop.f32.mrb[0].mxu0
    %v3548 = vpop.f32.mrb[0].mxu0
    %v3549 = vadd.f32 0.0, %v3548
    %v3550 = vpop.f32.mrb[0].mxu0
    %3551 = vmatprep.mubr.bf16.mxu0 0
    %3552 = vmatmul.mubr.bf16.gmra.mrb[0].mxu0 %v2543
    %v3553 = vpop.f32.mrb[0].mxu0
    %v3554 = vadd.f32 0.0, %v3553
    %v3555 = vpop.f32.mrb[0].mxu0
    %v3556 = vpop.f32.mrb[0].mxu0
    %v3557 = vadd.f32 0.0, %v3556
    %v3558 = vpop.f32.mrb[0].mxu0
    %3559 = vmatprep.mubr.bf16.mxu0 0
    %3560 = vmatmul.mubr.bf16.gmra.mrb[0].mxu0 %v2546
    %v3561 = vpop.f32.mrb[0].mxu0
    %v3562 = vadd.f32 0.0, %v3561
    %v3563 = vpop.f32.mrb[0].mxu0
    %v3564 = vpop.f32.mrb[0].mxu0
    %v3565 = vadd.f32 0.0, %v3564
    %v3566 = vpop.f32.mrb[0].mxu0
    %3567 = vmatprep.mubr.bf16.mxu0 0
    %3568 = vmatmul.mubr.bf16.gmra.mrb[0].mxu0 %v2549
    %v3569 = vpop.f32.mrb[0].mxu0
    %v3570 = vadd.f32 0.0, %v3569
    %v3571 = vpop.f32.mrb[0].mxu0
    %v3572 = vpop.f32.mrb[0].mxu0
    %v3573 = vadd.f32 0.0, %v3572
    %v3574 = vpop.f32.mrb[0].mxu0
    %3575 = vmatprep.mubr.bf16.mxu0 0
    %3576 = vmatmul.mubr.bf16.gmra.mrb[0].mxu0 %v2552
    %v3577 = vpop.f32.mrb[0].mxu0
    %v3578 = vadd.f32 0.0, %v3577
    %v3579 = vpop.f32.mrb[0].mxu0
    %v3580 = vpop.f32.mrb[0].mxu0
    %v3581 = vadd.f32 0.0, %v3580
    %v3582 = vpop.f32.mrb[0].mxu0
    %3583 = vmatprep.mubr.bf16.mxu0 0
    %3584 = vmatmul.mubr.bf16.gmra.mrb[0].mxu0 %v2555
    %v3585 = vpop.f32.mrb[0].mxu0
    %v3586 = vadd.f32 0.0, %v3585
    %v3587 = vpop.f32.mrb[0].mxu0
    %v3588 = vpop.f32.mrb[0].mxu0
    %v3589 = vadd.f32 0.0, %v3588
    %v3590 = vpop.f32.mrb[0].mxu0
    %3591 = vmatprep.mubr.bf16.mxu0 0
    %3592 = vmatmul.mubr.bf16.gmra.mrb[0].mxu0 %v2558
    %v3593 = vpop.f32.mrb[0].mxu0
    %v3594 = vadd.f32 0.0, %v3593
    %v3595 = vpop.f32.mrb[0].mxu0
    %v3596 = vpop.f32.mrb[0].mxu0
    %v3597 = vadd.f32 0.0, %v3596
    %v3598 = vpop.f32.mrb[0].mxu0
    %3599 = vmatprep.mubr.bf16.mxu0 0
    %3600 = vmatmul.mubr.bf16.gmra.mrb[0].mxu0 %v2561
    %v3601 = vpop.f32.mrb[0].mxu0
    %v3602 = vadd.f32 0.0, %v3601
    %v3603 = vpop.f32.mrb[0].mxu0
    %v3604 = vpop.f32.mrb[0].mxu0
    %v3605 = vadd.f32 0.0, %v3604
    %v3606 = vpop.f32.mrb[0].mxu0
    %3607 = vmatprep.mubr.bf16.mxu0 0
    %3608 = vmatmul.mubr.bf16.gmra.mrb[0].mxu0 %v2564
    %v3609 = vpop.f32.mrb[0].mxu0
    %v3610 = vadd.f32 0.0, %v3609
    %v3611 = vpop.f32.mrb[0].mxu0
    %v3612 = vpop.f32.mrb[0].mxu0
    %v3613 = vadd.f32 0.0, %v3612
    %v3614 = vpop.f32.mrb[0].mxu0
    %3615 = vmatprep.mubr.bf16.mxu0 0
    %3616 = vmatmul.mubr.bf16.gmra.mrb[0].mxu0 %v2567
    %v3617 = vpop.f32.mrb[0].mxu0
    %v3618 = vadd.f32 0.0, %v3617
    %v3619 = vpop.f32.mrb[0].mxu0
    %v3620 = vpop.f32.mrb[0].mxu0
    %v3621 = vadd.f32 0.0, %v3620
    %v3622 = vpop.f32.mrb[0].mxu0
    %3623 = vmatprep.mubr.bf16.mxu0 0
    %3624 = vmatmul.mubr.bf16.gmra.mrb[0].mxu0 %v2570
    %v3625 = vpop.f32.mrb[0].mxu0
    %v3626 = vadd.f32 0.0, %v3625
    %v3627 = vpop.f32.mrb[0].mxu0
    %v3628 = vpop.f32.mrb[0].mxu0
    %v3629 = vadd.f32 0.0, %v3628
    %v3630 = vpop.f32.mrb[0].mxu0
    %3631 = vmatprep.mubr.bf16.mxu0 0
    %3632 = vmatmul.mubr.bf16.gmra.mrb[0].mxu0 %v2573
    %v3633 = vpop.f32.mrb[0].mxu0
    %v3634 = vadd.f32 0.0, %v3633
    %v3635 = vpop.f32.mrb[0].mxu0
    %v3636 = vpop.f32.mrb[0].mxu0
    %v3637 = vadd.f32 0.0, %v3636
    %v3638 = vpop.f32.mrb[0].mxu0
    %3639 = vmatprep.mubr.bf16.mxu0 0
    %3640 = vmatmul.mubr.bf16.gmra.mrb[0].mxu0 %v2576
    %v3641 = vpop.f32.mrb[0].mxu0
    %v3642 = vadd.f32 0.0, %v3641
    %v3643 = vpop.f32.mrb[0].mxu0
    %v3644 = vpop.f32.mrb[0].mxu0
    %v3645 = vadd.f32 0.0, %v3644
    %v3646 = vpop.f32.mrb[0].mxu0
    %3647 = vmatprep.mubr.bf16.mxu0 0
    %3648 = vmatmul.mubr.bf16.gmra.mrb[0].mxu0 %v2579
    %v3649 = vpop.f32.mrb[0].mxu0
    %v3650 = vadd.f32 0.0, %v3649
    %v3651 = vpop.f32.mrb[0].mxu0
    %v3652 = vpop.f32.mrb[0].mxu0
    %v3653 = vadd.f32 0.0, %v3652
    %v3654 = vpop.f32.mrb[0].mxu0
    %3655 = vmatprep.mubr.bf16.mxu0 0
    %3656 = vmatmul.mubr.bf16.gmra.mrb[0].mxu0 %v2582
    %v3657 = vpop.f32.mrb[0].mxu0
    %v3658 = vadd.f32 0.0, %v3657
    %v3659 = vpop.f32.mrb[0].mxu0
    %v3660 = vpop.f32.mrb[0].mxu0
    %v3661 = vadd.f32 0.0, %v3660
    %v3662 = vpop.f32.mrb[0].mxu0
    %3663 = vmatprep.mubr.bf16.mxu0 0
    %3664 = vmatmul.mubr.bf16.gmra.mrb[0].mxu0 %v2585
    %v3665 = vpop.f32.mrb[0].mxu0
    %v3666 = vadd.f32 0.0, %v3665
    %v3667 = vpop.f32.mrb[0].mxu0
    %v3668 = vpop.f32.mrb[0].mxu0
    %v3669 = vadd.f32 0.0, %v3668
    %v3670 = vpop.f32.mrb[0].mxu0
    %3671 = vmatprep.mubr.bf16.mxu0 0
    %3672 = vmatmul.mubr.bf16.gmra.mrb[0].mxu0 %v2588
    %v3673 = vpop.f32.mrb[0].mxu0
    %v3674 = vadd.f32 0.0, %v3673
    %v3675 = vpop.f32.mrb[0].mxu0
    %v3676 = vpop.f32.mrb[0].mxu0
    %v3677 = vadd.f32 0.0, %v3676
    %v3678 = vpop.f32.mrb[0].mxu0
    %3679 = vmatprep.mubr.bf16.mxu0 0
    %3680 = vmatmul.mubr.bf16.gmra.mrb[0].mxu0 %v2591
    %v3681 = vpop.f32.mrb[0].mxu0
    %v3682 = vadd.f32 0.0, %v3681
    %v3683 = vpop.f32.mrb[0].mxu0
    %v3684 = vpop.f32.mrb[0].mxu0
    %v3685 = vadd.f32 0.0, %v3684
    %v3686 = vpop.f32.mrb[0].mxu0
    %3687 = vmatprep.mubr.bf16.mxu0 0
    %3688 = vmatmul.mubr.bf16.gmra.mrb[0].mxu0 %v2594
    %v3689 = vpop.f32.mrb[0].mxu0
    %v3690 = vadd.f32 0.0, %v3689
    %v3691 = vpop.f32.mrb[0].mxu0
    %v3692 = vpop.f32.mrb[0].mxu0
    %v3693 = vadd.f32 0.0, %v3692
    %v3694 = vpop.f32.mrb[0].mxu0
    %3695 = vmatprep.mubr.bf16.mxu0 0
    %3696 = vmatmul.mubr.bf16.gmra.mrb[0].mxu0 %v2597
    %v3697 = vpop.f32.mrb[0].mxu0
    %v3698 = vadd.f32 0.0, %v3697
    %v3699 = vpop.f32.mrb[0].mxu0
    %v3700 = vpop.f32.mrb[0].mxu0
    %v3701 = vadd.f32 0.0, %v3700
    %v3702 = vpop.f32.mrb[0].mxu0
    %3703 = vmatprep.mubr.bf16.mxu0 0
    %3704 = vmatmul.mubr.bf16.gmra.mrb[0].mxu0 %v2600
    %v3705 = vpop.f32.mrb[0].mxu0
    %v3706 = vadd.f32 0.0, %v3705
    %v3707 = vpop.f32.mrb[0].mxu0
    %v3708 = vpop.f32.mrb[0].mxu0
    %v3709 = vadd.f32 0.0, %v3708
    %v3710 = vpop.f32.mrb[0].mxu0
    %3711 = vmatprep.mubr.bf16.mxu0 0
    %3712 = vmatmul.mubr.bf16.gmra.mrb[0].mxu0 %v2603
    %v3713 = vpop.f32.mrb[0].mxu0
    %v3714 = vadd.f32 0.0, %v3713
    %v3715 = vpop.f32.mrb[0].mxu0
    %v3716 = vpop.f32.mrb[0].mxu0
    %v3717 = vadd.f32 0.0, %v3716
    %v3718 = vpop.f32.mrb[0].mxu0
    %3719 = vmatprep.mubr.bf16.mxu0 0
    %3720 = vmatmul.mubr.bf16.gmra.mrb[0].mxu0 %v2606
    %v3721 = vpop.f32.mrb[0].mxu0
    %v3722 = vadd.f32 0.0, %v3721
    %v3723 = vpop.f32.mrb[0].mxu0
    %v3724 = vpop.f32.mrb[0].mxu0
    %v3725 = vadd.f32 0.0, %v3724
    %v3726 = vpop.f32.mrb[0].mxu0
    %3727 = vmatprep.mubr.bf16.mxu0 0
    %3728 = vmatmul.mubr.bf16.gmra.mrb[0].mxu0 %v2609
    %v3729 = vpop.f32.mrb[0].mxu0
    %v3730 = vadd.f32 0.0, %v3729
    %v3731 = vpop.f32.mrb[0].mxu0
    %v3732 = vpop.f32.mrb[0].mxu0
    %v3733 = vadd.f32 0.0, %v3732
    %v3734 = vpop.f32.mrb[0].mxu0
    %3735 = vmatprep.mubr.bf16.mxu0 0
    %3736 = vmatmul.mubr.bf16.gmra.mrb[0].mxu0 %v2612
    %v3737 = vpop.f32.mrb[0].mxu0
    %v3738 = vadd.f32 0.0, %v3737
    %v3739 = vpop.f32.mrb[0].mxu0
    %v3740 = vpop.f32.mrb[0].mxu0
    %v3741 = vadd.f32 0.0, %v3740
    %v3742 = vpop.f32.mrb[0].mxu0
    %3743 = vmatprep.mubr.bf16.mxu0 0
    %3744 = vmatmul.mubr.bf16.gmra.mrb[0].mxu0 %v2615
    %v3745 = vpop.f32.mrb[0].mxu0
    %v3746 = vadd.f32 0.0, %v3745
    %v3747 = vpop.f32.mrb[0].mxu0
    %v3748 = vpop.f32.mrb[0].mxu0
    %v3749 = vadd.f32 0.0, %v3748
    %v3750 = vpop.f32.mrb[0].mxu0
    %3751 = vmatprep.mubr.bf16.mxu0 0
    %3752 = vmatmul.mubr.bf16.gmra.mrb[0].mxu0 %v2618
    %v3753 = vpop.f32.mrb[0].mxu0
    %v3754 = vadd.f32 0.0, %v3753
    %v3755 = vpop.f32.mrb[0].mxu0
    %v3756 = vpop.f32.mrb[0].mxu0
    %v3757 = vadd.f32 0.0, %v3756
    %v3758 = vpop.f32.mrb[0].mxu0
    %3759 = vmatprep.mubr.bf16.mxu0 0
    %3760 = vmatmul.mubr.bf16.gmra.mrb[0].mxu0 %v2621
    %v3761 = vpop.f32.mrb[0].mxu0
    %v3762 = vadd.f32 0.0, %v3761
    %v3763 = vpop.f32.mrb[0].mxu0
    %v3764 = vpop.f32.mrb[0].mxu0
    %v3765 = vadd.f32 0.0, %v3764
    %v3766 = vpop.f32.mrb[0].mxu0
    %3767 = vmatprep.mubr.bf16.mxu0 0
    %3768 = vmatmul.mubr.bf16.gmra.mrb[0].mxu0 %v2624
    %v3769 = vpop.f32.mrb[0].mxu0
    %v3770 = vadd.f32 0.0, %v3769
    %v3771 = vpop.f32.mrb[0].mxu0
    %v3772 = vpop.f32.mrb[0].mxu0
    %v3773 = vadd.f32 0.0, %v3772
    %v3774 = vpop.f32.mrb[0].mxu0
    %3775 = vmatprep.mubr.bf16.mxu0 0
    %3776 = vmatmul.mubr.bf16.gmra.mrb[0].mxu0 %v2627
    %v3777 = vpop.f32.mrb[0].mxu0
    %v3778 = vadd.f32 0.0, %v3777
    %v3779 = vpop.f32.mrb[0].mxu0
    %v3780 = vpop.f32.mrb[0].mxu0
    %v3781 = vadd.f32 0.0, %v3780
    %v3782 = vpop.f32.mrb[0].mxu0
    %3783 = vmatprep.mubr.bf16.mxu0 0
    %3784 = vmatmul.mubr.bf16.gmra.mrb[0].mxu0 %v2630
    %v3785 = vpop.f32.mrb[0].mxu0
    %v3786 = vadd.f32 0.0, %v3785
    %v3787 = vpop.f32.mrb[0].mxu0
    %v3788 = vpop.f32.mrb[0].mxu0
    %v3789 = vadd.f32 0.0, %v3788
    %v3790 = vpop.f32.mrb[0].mxu0
    %3791 = vmatprep.mubr.bf16.mxu0 0
    %3792 = vmatmul.mubr.bf16.gmra.mrb[0].mxu0 %v2633
    %v3793 = vpop.f32.mrb[0].mxu0
    %v3794 = vadd.f32 0.0, %v3793
    %v3795 = vpop.f32.mrb[0].mxu0
    %v3796 = vpop.f32.mrb[0].mxu0
    %v3797 = vadd.f32 0.0, %v3796
    %v3798 = vpop.f32.mrb[0].mxu0
    %3799 = vmatprep.mubr.bf16.mxu0 0
    %3800 = vmatmul.mubr.bf16.gmra.mrb[0].mxu0 %v2636
    %v3801 = vpop.f32.mrb[0].mxu0
    %v3802 = vadd.f32 0.0, %v3801
    %v3803 = vpop.f32.mrb[0].mxu0
    %v3804 = vpop.f32.mrb[0].mxu0
    %v3805 = vadd.f32 0.0, %v3804
    %v3806 = vpop.f32.mrb[0].mxu0
    %3807 = vmatprep.mubr.bf16.mxu0 0
    %3808 = vmatmul.mubr.bf16.gmra.mrb[0].mxu0 %v2639
    %v3809 = vpop.f32.mrb[0].mxu0
    %v3810 = vadd.f32 0.0, %v3809
    %v3811 = vpop.f32.mrb[0].mxu0
    %v3812 = vpop.f32.mrb[0].mxu0
    %v3813 = vadd.f32 0.0, %v3812
    %v3814 = vpop.f32.mrb[0].mxu0
    %3815 = vmatprep.mubr.bf16.mxu0 0
    %3816 = vmatmul.mubr.bf16.gmra.mrb[0].mxu0 %v2642
    %v3817 = vpop.f32.mrb[0].mxu0
    %v3818 = vadd.f32 0.0, %v3817
    %v3819 = vpop.f32.mrb[0].mxu0
    %v3820 = vpop.f32.mrb[0].mxu0
    %v3821 = vadd.f32 0.0, %v3820
    %v3822 = vpop.f32.mrb[0].mxu0
    %3823 = vmatprep.mubr.bf16.mxu0 0
    %3824 = vmatmul.mubr.bf16.gmra.mrb[0].mxu0 %v2645
    %v3825 = vpop.f32.mrb[0].mxu0
    %v3826 = vadd.f32 0.0, %v3825
    %v3827 = vpop.f32.mrb[0].mxu0
    %v3828 = vpop.f32.mrb[0].mxu0
    %v3829 = vpop.f32.mrb[0].mxu0
    %3830 = vdwg.mxu0
    %v3839 = vunpack.c.l.b16 %v303
    %v3840 = vunpack.c.l.b16 %v304
    %v3841 = vunpack.c.l.b16 %v305
    %v3842 = vunpack.c.l.b16 %v306
    %v3843 = vunpack.c.l.b16 %v307
    %v3844 = vunpack.c.l.b16 %v308
    %v3845 = vunpack.c.l.b16 %v309
    %v3846 = vunpack.c.l.b16 %v310
    %v3847 = vpack.c.b16 %v3840, %v3839
    %v3848 = vpack.c.b16 %v3842, %v3841
    %v3849 = vpack.c.b16 %v3844, %v3843
    %v3850 = vpack.c.b16 %v3846, %v3845
    %v3855 = vsel %vm2214, %v894, 0
    %v3857 = vsel %vm2214, %v895, 0
    %v3859 = vsel %vm2214, %v896, 0
    %v3861 = vsel %vm2214, %v897, 0
    %v3863 = vsel %vm2214, %v898, 0
    %v3865 = vsel %vm2214, %v899, 0
    %v3867 = vsel %vm2214, %v900, 0
    %v3869 = vsel %vm2214, %v901, 0
    %v3871 = vsel %vm2214, %v902, 0
    %v3873 = vsel %vm2214, %v903, 0
    %v3875 = vsel %vm2214, %v904, 0
    %v3877 = vsel %vm2214, %v905, 0
    %v3879 = vsel %vm2214, %v906, 0
    %v3881 = vsel %vm2214, %v907, 0
    %v3883 = vsel %vm2214, %v908, 0
    %v3885 = vsel %vm2214, %v909, 0
    %v3887 = vsel %vm2214, %v910, 0
    %v3889 = vsel %vm2214, %v911, 0
    %v3891 = vsel %vm2214, %v912, 0
    %v3893 = vsel %vm2214, %v913, 0
    %v3895 = vsel %vm2214, %v914, 0
    %v3897 = vsel %vm2214, %v915, 0
    %v3899 = vsel %vm2214, %v916, 0
    %v3901 = vsel %vm2214, %v917, 0
    %v3903 = vsel %vm2214, %v918, 0
    %v3905 = vsel %vm2214, %v919, 0
    %v3907 = vsel %vm2214, %v920, 0
    %v3909 = vsel %vm2214, %v921, 0
    %v3911 = vsel %vm2214, %v922, 0
    %v3913 = vsel %vm2214, %v923, 0
    %v3915 = vsel %vm2214, %v924, 0
    %v3917 = vsel %vm2214, %v925, 0
    %v3919 = vsel %vm2214, %v926, 0
    %v3921 = vsel %vm2214, %v927, 0
    %v3923 = vsel %vm2214, %v928, 0
    %v3925 = vsel %vm2214, %v929, 0
    %v3927 = vsel %vm2214, %v930, 0
    %v3929 = vsel %vm2214, %v931, 0
    %v3931 = vsel %vm2214, %v932, 0
    %v3933 = vsel %vm2214, %v933, 0
    %v3935 = vsel %vm2214, %v934, 0
    %v3937 = vsel %vm2214, %v935, 0
    %v3939 = vsel %vm2214, %v936, 0
    %v3941 = vsel %vm2214, %v937, 0
    %v3943 = vsel %vm2214, %v938, 0
    %v3945 = vsel %vm2214, %v939, 0
    %v3947 = vsel %vm2214, %v940, 0
    %v3949 = vsel %vm2214, %v941, 0
    %v3951 = vsel %vm2214, %v942, 0
    %v3953 = vsel %vm2214, %v943, 0
    %v3955 = vsel %vm2214, %v944, 0
    %v3957 = vsel %vm2214, %v945, 0
    %v3959 = vsel %vm2214, %v946, 0
    %v3961 = vsel %vm2214, %v947, 0
    %v3963 = vsel %vm2214, %v948, 0
    %v3965 = vsel %vm2214, %v949, 0
    %v3967 = vsel %vm2214, %v950, 0
    %v3969 = vsel %vm2214, %v951, 0
    %v3971 = vsel %vm2214, %v952, 0
    %v3973 = vsel %vm2214, %v953, 0
    %v3975 = vsel %vm2214, %v954, 0
    %v3977 = vsel %vm2214, %v955, 0
    %v3979 = vsel %vm2214, %v956, 0
    %v3981 = vsel %vm2214, %v957, 0
    %v3983 = vsel %vm2214, %v958, 0
    %v3985 = vsel %vm2214, %v959, 0
    %v3987 = vsel %vm2214, %v960, 0
    %v3989 = vsel %vm2214, %v961, 0
    %v3991 = vsel %vm2214, %v962, 0
    %v3993 = vsel %vm2214, %v963, 0
    %v3995 = vsel %vm2214, %v964, 0
    %v3997 = vsel %vm2214, %v965, 0
    %v3999 = vsel %vm2214, %v966, 0
    %v4001 = vsel %vm2214, %v967, 0
    %v4003 = vsel %vm2214, %v968, 0
    %v4005 = vsel %vm2214, %v969, 0
    %v4007 = vsel %vm2214, %v970, 0
    %v4009 = vsel %vm2214, %v971, 0
    %v4011 = vsel %vm2214, %v972, 0
    %v4013 = vsel %vm2214, %v973, 0
    %v4015 = vsel %vm2214, %v974, 0
    %v4017 = vsel %vm2214, %v975, 0
    %v4019 = vsel %vm2214, %v976, 0
    %v4021 = vsel %vm2214, %v977, 0
    %v4023 = vsel %vm2214, %v978, 0
    %v4025 = vsel %vm2214, %v979, 0
    %v4027 = vsel %vm2214, %v980, 0
    %v4029 = vsel %vm2214, %v981, 0
    %v4031 = vsel %vm2214, %v982, 0
    %v4033 = vsel %vm2214, %v983, 0
    %v4035 = vsel %vm2214, %v984, 0
    %v4037 = vsel %vm2214, %v985, 0
    %v4039 = vsel %vm2214, %v986, 0
    %v4041 = vsel %vm2214, %v987, 0
    %v4043 = vsel %vm2214, %v988, 0
    %v4045 = vsel %vm2214, %v989, 0
    %v4047 = vsel %vm2214, %v990, 0
    %v4049 = vsel %vm2214, %v991, 0
    %v4051 = vsel %vm2214, %v992, 0
    %v4053 = vsel %vm2214, %v993, 0
    %v4055 = vsel %vm2214, %v994, 0
    %v4057 = vsel %vm2214, %v995, 0
    %v4059 = vsel %vm2214, %v996, 0
    %v4061 = vsel %vm2214, %v997, 0
    %v4063 = vsel %vm2214, %v998, 0
    %v4065 = vsel %vm2214, %v999, 0
    %v4067 = vsel %vm2214, %v1000, 0
    %v4069 = vsel %vm2214, %v1001, 0
    %v4071 = vsel %vm2214, %v1002, 0
    %v4073 = vsel %vm2214, %v1003, 0
    %v4075 = vsel %vm2214, %v1004, 0
    %v4077 = vsel %vm2214, %v1005, 0
    %v4079 = vsel %vm2214, %v1006, 0
    %v4081 = vsel %vm2214, %v1007, 0
    %v4083 = vsel %vm2214, %v1008, 0
    %v4085 = vsel %vm2214, %v1009, 0
    %v4087 = vsel %vm2214, %v1010, 0
    %v4089 = vsel %vm2214, %v1011, 0
    %v4091 = vsel %vm2214, %v1012, 0
    %v4093 = vsel %vm2214, %v1013, 0
    %v4095 = vsel %vm2214, %v1014, 0
    %v4097 = vsel %vm2214, %v1015, 0
    %v4099 = vsel %vm2214, %v1016, 0
    %v4101 = vsel %vm2214, %v1017, 0
    %v4103 = vsel %vm2214, %v1018, 0
    %v4105 = vsel %vm2214, %v1019, 0
    %v4107 = vsel %vm2214, %v1020, 0
    %v4109 = vsel %vm2214, %v1021, 0
    %v4111 = vsel %vm2214, %v1022, 0
    %v4113 = vsel %vm2214, %v1023, 0
    %v4115 = vsel %vm2214, %v1024, 0
    %v4117 = vsel %vm2214, %v1025, 0
    %v4119 = vsel %vm2214, %v1026, 0
    %v4121 = vsel %vm2214, %v1027, 0
    %v4123 = vsel %vm2214, %v1028, 0
    %v4125 = vsel %vm2214, %v1029, 0
    %v4127 = vsel %vm2214, %v1030, 0
    %v4129 = vsel %vm2214, %v1031, 0
    %v4131 = vsel %vm2214, %v1032, 0
    %v4133 = vsel %vm2214, %v1033, 0
    %v4135 = vsel %vm2214, %v1034, 0
    %v4137 = vsel %vm2214, %v1035, 0
    %v4139 = vsel %vm2214, %v1036, 0
    %v4141 = vsel %vm2214, %v1037, 0
    %4143 = vmatprep.subr.bf16.mxu0 0
    %4144 = vmatpush1.bf16.msra.mxu0 %v3847
    %4145 = vmatprep.subr.bf16.mxu0 0
    %4146 = vmatpush1.bf16.msra.mxu0 %v3848
    %4147 = vmatprep.subr.bf16.mxu0 0
    %4148 = vmatpush1.bf16.msra.mxu0 %v3849
    %4149 = vmatprep.subr.bf16.mxu0 0
    %4150 = vmatpush1.bf16.msra.mxu0 %v3850
    %4151 = vmatprep.subr.bf16.mxu0 0
    %4152 = vmatpush1.bf16.msra.mxu0 0
    %4153 = vmatprep.subr.bf16.mxu0 0
    %4154 = vmatpush1.bf16.msra.mxu0 0
    %4155 = vmatprep.subr.bf16.mxu0 0
    %4156 = vmatpush1.bf16.msra.mxu0 0
    %4157 = vmatprep.subr.bf16.mxu0 0
    %4158 = vmatpush1.bf16.msra.mxu0 0
    %4159 = vmatprep.subr.bf16.mxu0 0
    %4160 = vmatpush1.bf16.msra.mxu0 0
    %4161 = vmatprep.subr.bf16.mxu0 0
    %4162 = vmatpush1.bf16.msra.mxu0 0
    %4163 = vmatprep.subr.bf16.mxu0 0
    %4164 = vmatpush1.bf16.msra.mxu0 0
    %4165 = vmatprep.subr.bf16.mxu0 0
    %4166 = vmatpush1.bf16.msra.mxu0 0
    %4167 = vmatprep.subr.bf16.mxu0 0
    %4168 = vmatpush1.bf16.msra.mxu0 0
    %4169 = vmatprep.subr.bf16.mxu0 0
    %4170 = vmatpush1.bf16.msra.mxu0 0
    %4171 = vmatprep.subr.bf16.mxu0 0
    %4172 = vmatpush1.bf16.msra.mxu0 0
    %4173 = vmatprep.subr.bf16.mxu0 0
    %4174 = vmatpush1.bf16.msra.mxu0 0
    %4175 = vmatprep.mubr.bf16.mxu0 0
    %4176 = vmatmul.mubr.bf16.gmra.mrb[0].mxu0 %v3855
    %v4177 = vpop.f32.mrb[0].mxu0
    %v4178 = vadd.f32 %v2682, %v4177
    %v4179 = vpop.f32.mrb[0].mxu0
    %v4180 = vpop.f32.mrb[0].mxu0
    %v4181 = vadd.f32 %v2685, %v4180
    %v4182 = vpop.f32.mrb[0].mxu0
    %4183 = vmatprep.mubr.bf16.mxu0 0
    %4184 = vmatmul.mubr.bf16.gmra.mrb[0].mxu0 %v3857
    %v4185 = vpop.f32.mrb[0].mxu0
    %v4186 = vadd.f32 %v2690, %v4185
    %v4187 = vpop.f32.mrb[0].mxu0
    %v4188 = vpop.f32.mrb[0].mxu0
    %v4189 = vadd.f32 %v2693, %v4188
    %v4190 = vpop.f32.mrb[0].mxu0
    %4191 = vmatprep.mubr.bf16.mxu0 0
    %4192 = vmatmul.mubr.bf16.gmra.mrb[0].mxu0 %v3859
    %v4193 = vpop.f32.mrb[0].mxu0
    %v4194 = vadd.f32 %v2698, %v4193
    %v4195 = vpop.f32.mrb[0].mxu0
    %v4196 = vpop.f32.mrb[0].mxu0
    %v4197 = vadd.f32 %v2701, %v4196
    %v4198 = vpop.f32.mrb[0].mxu0
    %4199 = vmatprep.mubr.bf16.mxu0 0
    %4200 = vmatmul.mubr.bf16.gmra.mrb[0].mxu0 %v3861
    %v4201 = vpop.f32.mrb[0].mxu0
    %v4202 = vadd.f32 %v2706, %v4201
    %v4203 = vpop.f32.mrb[0].mxu0
    %v4204 = vpop.f32.mrb[0].mxu0
    %v4205 = vadd.f32 %v2709, %v4204
    %v4206 = vpop.f32.mrb[0].mxu0
    %4207 = vmatprep.mubr.bf16.mxu0 0
    %4208 = vmatmul.mubr.bf16.gmra.mrb[0].mxu0 %v3863
    %v4209 = vpop.f32.mrb[0].mxu0
    %v4210 = vadd.f32 %v2714, %v4209
    %v4211 = vpop.f32.mrb[0].mxu0
    %v4212 = vpop.f32.mrb[0].mxu0
    %v4213 = vadd.f32 %v2717, %v4212
    %v4214 = vpop.f32.mrb[0].mxu0
    %4215 = vmatprep.mubr.bf16.mxu0 0
    %4216 = vmatmul.mubr.bf16.gmra.mrb[0].mxu0 %v3865
    %v4217 = vpop.f32.mrb[0].mxu0
    %v4218 = vadd.f32 %v2722, %v4217
    %v4219 = vpop.f32.mrb[0].mxu0
    %v4220 = vpop.f32.mrb[0].mxu0
    %v4221 = vadd.f32 %v2725, %v4220
    %v4222 = vpop.f32.mrb[0].mxu0
    %4223 = vmatprep.mubr.bf16.mxu0 0
    %4224 = vmatmul.mubr.bf16.gmra.mrb[0].mxu0 %v3867
    %v4225 = vpop.f32.mrb[0].mxu0
    %v4226 = vadd.f32 %v2730, %v4225
    %v4227 = vpop.f32.mrb[0].mxu0
    %v4228 = vpop.f32.mrb[0].mxu0
    %v4229 = vadd.f32 %v2733, %v4228
    %v4230 = vpop.f32.mrb[0].mxu0
    %4231 = vmatprep.mubr.bf16.mxu0 0
    %4232 = vmatmul.mubr.bf16.gmra.mrb[0].mxu0 %v3869
    %v4233 = vpop.f32.mrb[0].mxu0
    %v4234 = vadd.f32 %v2738, %v4233
    %v4235 = vpop.f32.mrb[0].mxu0
    %v4236 = vpop.f32.mrb[0].mxu0
    %v4237 = vadd.f32 %v2741, %v4236
    %v4238 = vpop.f32.mrb[0].mxu0
    %4239 = vmatprep.mubr.bf16.mxu0 0
    %4240 = vmatmul.mubr.bf16.gmra.mrb[0].mxu0 %v3871
    %v4241 = vpop.f32.mrb[0].mxu0
    %v4242 = vadd.f32 %v2746, %v4241
    %v4243 = vpop.f32.mrb[0].mxu0
    %v4244 = vpop.f32.mrb[0].mxu0
    %v4245 = vadd.f32 %v2749, %v4244
    %v4246 = vpop.f32.mrb[0].mxu0
    %4247 = vmatprep.mubr.bf16.mxu0 0
    %4248 = vmatmul.mubr.bf16.gmra.mrb[0].mxu0 %v3873
    %v4249 = vpop.f32.mrb[0].mxu0
    %v4250 = vadd.f32 %v2754, %v4249
    %v4251 = vpop.f32.mrb[0].mxu0
    %v4252 = vpop.f32.mrb[0].mxu0
    %v4253 = vadd.f32 %v2757, %v4252
    %v4254 = vpop.f32.mrb[0].mxu0
    %4255 = vmatprep.mubr.bf16.mxu0 0
    %4256 = vmatmul.mubr.bf16.gmra.mrb[0].mxu0 %v3875
    %v4257 = vpop.f32.mrb[0].mxu0
    %v4258 = vadd.f32 %v2762, %v4257
    %v4259 = vpop.f32.mrb[0].mxu0
    %v4260 = vpop.f32.mrb[0].mxu0
    %v4261 = vadd.f32 %v2765, %v4260
    %v4262 = vpop.f32.mrb[0].mxu0
    %4263 = vmatprep.mubr.bf16.mxu0 0
    %4264 = vmatmul.mubr.bf16.gmra.mrb[0].mxu0 %v3877
    %v4265 = vpop.f32.mrb[0].mxu0
    %v4266 = vadd.f32 %v2770, %v4265
    %v4267 = vpop.f32.mrb[0].mxu0
    %v4268 = vpop.f32.mrb[0].mxu0
    %v4269 = vadd.f32 %v2773, %v4268
    %v4270 = vpop.f32.mrb[0].mxu0
    %4271 = vmatprep.mubr.bf16.mxu0 0
    %4272 = vmatmul.mubr.bf16.gmra.mrb[0].mxu0 %v3879
    %v4273 = vpop.f32.mrb[0].mxu0
    %v4274 = vadd.f32 %v2778, %v4273
    %v4275 = vpop.f32.mrb[0].mxu0
    %v4276 = vpop.f32.mrb[0].mxu0
    %v4277 = vadd.f32 %v2781, %v4276
    %v4278 = vpop.f32.mrb[0].mxu0
    %4279 = vmatprep.mubr.bf16.mxu0 0
    %4280 = vmatmul.mubr.bf16.gmra.mrb[0].mxu0 %v3881
    %v4281 = vpop.f32.mrb[0].mxu0
    %v4282 = vadd.f32 %v2786, %v4281
    %v4283 = vpop.f32.mrb[0].mxu0
    %v4284 = vpop.f32.mrb[0].mxu0
    %v4285 = vadd.f32 %v2789, %v4284
    %v4286 = vpop.f32.mrb[0].mxu0
    %4287 = vmatprep.mubr.bf16.mxu0 0
    %4288 = vmatmul.mubr.bf16.gmra.mrb[0].mxu0 %v3883
    %v4289 = vpop.f32.mrb[0].mxu0
    %v4290 = vadd.f32 %v2794, %v4289
    %v4291 = vpop.f32.mrb[0].mxu0
    %v4292 = vpop.f32.mrb[0].mxu0
    %v4293 = vadd.f32 %v2797, %v4292
    %v4294 = vpop.f32.mrb[0].mxu0
    %4295 = vmatprep.mubr.bf16.mxu0 0
    %4296 = vmatmul.mubr.bf16.gmra.mrb[0].mxu0 %v3885
    %v4297 = vpop.f32.mrb[0].mxu0
    %v4298 = vadd.f32 %v2802, %v4297
    %v4299 = vpop.f32.mrb[0].mxu0
    %v4300 = vpop.f32.mrb[0].mxu0
    %v4301 = vadd.f32 %v2805, %v4300
    %v4302 = vpop.f32.mrb[0].mxu0
    %4303 = vmatprep.mubr.bf16.mxu0 0
    %4304 = vmatmul.mubr.bf16.gmra.mrb[0].mxu0 %v3887
    %v4305 = vpop.f32.mrb[0].mxu0
    %v4306 = vadd.f32 %v2810, %v4305
    %v4307 = vpop.f32.mrb[0].mxu0
    %v4308 = vpop.f32.mrb[0].mxu0
    %v4309 = vadd.f32 %v2813, %v4308
    %v4310 = vpop.f32.mrb[0].mxu0
    %4311 = vmatprep.mubr.bf16.mxu0 0
    %4312 = vmatmul.mubr.bf16.gmra.mrb[0].mxu0 %v3889
    %v4313 = vpop.f32.mrb[0].mxu0
    %v4314 = vadd.f32 %v2818, %v4313
    %v4315 = vpop.f32.mrb[0].mxu0
    %v4316 = vpop.f32.mrb[0].mxu0
    %v4317 = vadd.f32 %v2821, %v4316
    %v4318 = vpop.f32.mrb[0].mxu0
    %4319 = vmatprep.mubr.bf16.mxu0 0
    %4320 = vmatmul.mubr.bf16.gmra.mrb[0].mxu0 %v3891
    %v4321 = vpop.f32.mrb[0].mxu0
    %v4322 = vadd.f32 %v2826, %v4321
    %v4323 = vpop.f32.mrb[0].mxu0
    %v4324 = vpop.f32.mrb[0].mxu0
    %v4325 = vadd.f32 %v2829, %v4324
    %v4326 = vpop.f32.mrb[0].mxu0
    %4327 = vmatprep.mubr.bf16.mxu0 0
    %4328 = vmatmul.mubr.bf16.gmra.mrb[0].mxu0 %v3893
    %v4329 = vpop.f32.mrb[0].mxu0
    %v4330 = vadd.f32 %v2834, %v4329
    %v4331 = vpop.f32.mrb[0].mxu0
    %v4332 = vpop.f32.mrb[0].mxu0
    %v4333 = vadd.f32 %v2837, %v4332
    %v4334 = vpop.f32.mrb[0].mxu0
    %4335 = vmatprep.mubr.bf16.mxu0 0
    %4336 = vmatmul.mubr.bf16.gmra.mrb[0].mxu0 %v3895
    %v4337 = vpop.f32.mrb[0].mxu0
    %v4338 = vadd.f32 %v2842, %v4337
    %v4339 = vpop.f32.mrb[0].mxu0
    %v4340 = vpop.f32.mrb[0].mxu0
    %v4341 = vadd.f32 %v2845, %v4340
    %v4342 = vpop.f32.mrb[0].mxu0
    %4343 = vmatprep.mubr.bf16.mxu0 0
    %4344 = vmatmul.mubr.bf16.gmra.mrb[0].mxu0 %v3897
    %v4345 = vpop.f32.mrb[0].mxu0
    %v4346 = vadd.f32 %v2850, %v4345
    %v4347 = vpop.f32.mrb[0].mxu0
    %v4348 = vpop.f32.mrb[0].mxu0
    %v4349 = vadd.f32 %v2853, %v4348
    %v4350 = vpop.f32.mrb[0].mxu0
    %4351 = vmatprep.mubr.bf16.mxu0 0
    %4352 = vmatmul.mubr.bf16.gmra.mrb[0].mxu0 %v3899
    %v4353 = vpop.f32.mrb[0].mxu0
    %v4354 = vadd.f32 %v2858, %v4353
    %v4355 = vpop.f32.mrb[0].mxu0
    %v4356 = vpop.f32.mrb[0].mxu0
    %v4357 = vadd.f32 %v2861, %v4356
    %v4358 = vpop.f32.mrb[0].mxu0
    %4359 = vmatprep.mubr.bf16.mxu0 0
    %4360 = vmatmul.mubr.bf16.gmra.mrb[0].mxu0 %v3901
    %v4361 = vpop.f32.mrb[0].mxu0
    %v4362 = vadd.f32 %v2866, %v4361
    %v4363 = vpop.f32.mrb[0].mxu0
    %v4364 = vpop.f32.mrb[0].mxu0
    %v4365 = vadd.f32 %v2869, %v4364
    %v4366 = vpop.f32.mrb[0].mxu0
    %4367 = vmatprep.mubr.bf16.mxu0 0
    %4368 = vmatmul.mubr.bf16.gmra.mrb[0].mxu0 %v3903
    %v4369 = vpop.f32.mrb[0].mxu0
    %v4370 = vadd.f32 %v2874, %v4369
    %v4371 = vpop.f32.mrb[0].mxu0
    %v4372 = vpop.f32.mrb[0].mxu0
    %v4373 = vadd.f32 %v2877, %v4372
    %v4374 = vpop.f32.mrb[0].mxu0
    %4375 = vmatprep.mubr.bf16.mxu0 0
    %4376 = vmatmul.mubr.bf16.gmra.mrb[0].mxu0 %v3905
    %v4377 = vpop.f32.mrb[0].mxu0
    %v4378 = vadd.f32 %v2882, %v4377
    %v4379 = vpop.f32.mrb[0].mxu0
    %v4380 = vpop.f32.mrb[0].mxu0
    %v4381 = vadd.f32 %v2885, %v4380
    %v4382 = vpop.f32.mrb[0].mxu0
    %4383 = vmatprep.mubr.bf16.mxu0 0
    %4384 = vmatmul.mubr.bf16.gmra.mrb[0].mxu0 %v3907
    %v4385 = vpop.f32.mrb[0].mxu0
    %v4386 = vadd.f32 %v2890, %v4385
    %v4387 = vpop.f32.mrb[0].mxu0
    %v4388 = vpop.f32.mrb[0].mxu0
    %v4389 = vadd.f32 %v2893, %v4388
    %v4390 = vpop.f32.mrb[0].mxu0
    %4391 = vmatprep.mubr.bf16.mxu0 0
    %4392 = vmatmul.mubr.bf16.gmra.mrb[0].mxu0 %v3909
    %v4393 = vpop.f32.mrb[0].mxu0
    %v4394 = vadd.f32 %v2898, %v4393
    %v4395 = vpop.f32.mrb[0].mxu0
    %v4396 = vpop.f32.mrb[0].mxu0
    %v4397 = vadd.f32 %v2901, %v4396
    %v4398 = vpop.f32.mrb[0].mxu0
    %4399 = vmatprep.mubr.bf16.mxu0 0
    %4400 = vmatmul.mubr.bf16.gmra.mrb[0].mxu0 %v3911
    %v4401 = vpop.f32.mrb[0].mxu0
    %v4402 = vadd.f32 %v2906, %v4401
    %v4403 = vpop.f32.mrb[0].mxu0
    %v4404 = vpop.f32.mrb[0].mxu0
    %v4405 = vadd.f32 %v2909, %v4404
    %v4406 = vpop.f32.mrb[0].mxu0
    %4407 = vmatprep.mubr.bf16.mxu0 0
    %4408 = vmatmul.mubr.bf16.gmra.mrb[0].mxu0 %v3913
    %v4409 = vpop.f32.mrb[0].mxu0
    %v4410 = vadd.f32 %v2914, %v4409
    %v4411 = vpop.f32.mrb[0].mxu0
    %v4412 = vpop.f32.mrb[0].mxu0
    %v4413 = vadd.f32 %v2917, %v4412
    %v4414 = vpop.f32.mrb[0].mxu0
    %4415 = vmatprep.mubr.bf16.mxu0 0
    %4416 = vmatmul.mubr.bf16.gmra.mrb[0].mxu0 %v3915
    %v4417 = vpop.f32.mrb[0].mxu0
    %v4418 = vadd.f32 %v2922, %v4417
    %v4419 = vpop.f32.mrb[0].mxu0
    %v4420 = vpop.f32.mrb[0].mxu0
    %v4421 = vadd.f32 %v2925, %v4420
    %v4422 = vpop.f32.mrb[0].mxu0
    %4423 = vmatprep.mubr.bf16.mxu0 0
    %4424 = vmatmul.mubr.bf16.gmra.mrb[0].mxu0 %v3917
    %v4425 = vpop.f32.mrb[0].mxu0
    %v4426 = vadd.f32 %v2930, %v4425
    %v4427 = vpop.f32.mrb[0].mxu0
    %v4428 = vpop.f32.mrb[0].mxu0
    %v4429 = vadd.f32 %v2933, %v4428
    %v4430 = vpop.f32.mrb[0].mxu0
    %4431 = vmatprep.mubr.bf16.mxu0 0
    %4432 = vmatmul.mubr.bf16.gmra.mrb[0].mxu0 %v3919
    %v4433 = vpop.f32.mrb[0].mxu0
    %v4434 = vadd.f32 %v2938, %v4433
    %v4435 = vpop.f32.mrb[0].mxu0
    %v4436 = vpop.f32.mrb[0].mxu0
    %v4437 = vadd.f32 %v2941, %v4436
    %v4438 = vpop.f32.mrb[0].mxu0
    %4439 = vmatprep.mubr.bf16.mxu0 0
    %4440 = vmatmul.mubr.bf16.gmra.mrb[0].mxu0 %v3921
    %v4441 = vpop.f32.mrb[0].mxu0
    %v4442 = vadd.f32 %v2946, %v4441
    %v4443 = vpop.f32.mrb[0].mxu0
    %v4444 = vpop.f32.mrb[0].mxu0
    %v4445 = vadd.f32 %v2949, %v4444
    %v4446 = vpop.f32.mrb[0].mxu0
    %4447 = vmatprep.mubr.bf16.mxu0 0
    %4448 = vmatmul.mubr.bf16.gmra.mrb[0].mxu0 %v3923
    %v4449 = vpop.f32.mrb[0].mxu0
    %v4450 = vadd.f32 %v2954, %v4449
    %v4451 = vpop.f32.mrb[0].mxu0
    %v4452 = vpop.f32.mrb[0].mxu0
    %v4453 = vadd.f32 %v2957, %v4452
    %v4454 = vpop.f32.mrb[0].mxu0
    %4455 = vmatprep.mubr.bf16.mxu0 0
    %4456 = vmatmul.mubr.bf16.gmra.mrb[0].mxu0 %v3925
    %v4457 = vpop.f32.mrb[0].mxu0
    %v4458 = vadd.f32 %v2962, %v4457
    %v4459 = vpop.f32.mrb[0].mxu0
    %v4460 = vpop.f32.mrb[0].mxu0
    %v4461 = vadd.f32 %v2965, %v4460
    %v4462 = vpop.f32.mrb[0].mxu0
    %4463 = vmatprep.mubr.bf16.mxu0 0
    %4464 = vmatmul.mubr.bf16.gmra.mrb[0].mxu0 %v3927
    %v4465 = vpop.f32.mrb[0].mxu0
    %v4466 = vadd.f32 %v2970, %v4465
    %v4467 = vpop.f32.mrb[0].mxu0
    %v4468 = vpop.f32.mrb[0].mxu0
    %v4469 = vadd.f32 %v2973, %v4468
    %v4470 = vpop.f32.mrb[0].mxu0
    %4471 = vmatprep.mubr.bf16.mxu0 0
    %4472 = vmatmul.mubr.bf16.gmra.mrb[0].mxu0 %v3929
    %v4473 = vpop.f32.mrb[0].mxu0
    %v4474 = vadd.f32 %v2978, %v4473
    %v4475 = vpop.f32.mrb[0].mxu0
    %v4476 = vpop.f32.mrb[0].mxu0
    %v4477 = vadd.f32 %v2981, %v4476
    %v4478 = vpop.f32.mrb[0].mxu0
    %4479 = vmatprep.mubr.bf16.mxu0 0
    %4480 = vmatmul.mubr.bf16.gmra.mrb[0].mxu0 %v3931
    %v4481 = vpop.f32.mrb[0].mxu0
    %v4482 = vadd.f32 %v2986, %v4481
    %v4483 = vpop.f32.mrb[0].mxu0
    %v4484 = vpop.f32.mrb[0].mxu0
    %v4485 = vadd.f32 %v2989, %v4484
    %v4486 = vpop.f32.mrb[0].mxu0
    %4487 = vmatprep.mubr.bf16.mxu0 0
    %4488 = vmatmul.mubr.bf16.gmra.mrb[0].mxu0 %v3933
    %v4489 = vpop.f32.mrb[0].mxu0
    %v4490 = vadd.f32 %v2994, %v4489
    %v4491 = vpop.f32.mrb[0].mxu0
    %v4492 = vpop.f32.mrb[0].mxu0
    %v4493 = vadd.f32 %v2997, %v4492
    %v4494 = vpop.f32.mrb[0].mxu0
    %4495 = vmatprep.mubr.bf16.mxu0 0
    %4496 = vmatmul.mubr.bf16.gmra.mrb[0].mxu0 %v3935
    %v4497 = vpop.f32.mrb[0].mxu0
    %v4498 = vadd.f32 %v3002, %v4497
    %v4499 = vpop.f32.mrb[0].mxu0
    %v4500 = vpop.f32.mrb[0].mxu0
    %v4501 = vadd.f32 %v3005, %v4500
    %v4502 = vpop.f32.mrb[0].mxu0
    %4503 = vmatprep.mubr.bf16.mxu0 0
    %4504 = vmatmul.mubr.bf16.gmra.mrb[0].mxu0 %v3937
    %v4505 = vpop.f32.mrb[0].mxu0
    %v4506 = vadd.f32 %v3010, %v4505
    %v4507 = vpop.f32.mrb[0].mxu0
    %v4508 = vpop.f32.mrb[0].mxu0
    %v4509 = vadd.f32 %v3013, %v4508
    %v4510 = vpop.f32.mrb[0].mxu0
    %4511 = vmatprep.mubr.bf16.mxu0 0
    %4512 = vmatmul.mubr.bf16.gmra.mrb[0].mxu0 %v3939
    %v4513 = vpop.f32.mrb[0].mxu0
    %v4514 = vadd.f32 %v3018, %v4513
    %v4515 = vpop.f32.mrb[0].mxu0
    %v4516 = vpop.f32.mrb[0].mxu0
    %v4517 = vadd.f32 %v3021, %v4516
    %v4518 = vpop.f32.mrb[0].mxu0
    %4519 = vmatprep.mubr.bf16.mxu0 0
    %4520 = vmatmul.mubr.bf16.gmra.mrb[0].mxu0 %v3941
    %v4521 = vpop.f32.mrb[0].mxu0
    %v4522 = vadd.f32 %v3026, %v4521
    %v4523 = vpop.f32.mrb[0].mxu0
    %v4524 = vpop.f32.mrb[0].mxu0
    %v4525 = vadd.f32 %v3029, %v4524
    %v4526 = vpop.f32.mrb[0].mxu0
    %4527 = vmatprep.mubr.bf16.mxu0 0
    %4528 = vmatmul.mubr.bf16.gmra.mrb[0].mxu0 %v3943
    %v4529 = vpop.f32.mrb[0].mxu0
    %v4530 = vadd.f32 %v3034, %v4529
    %v4531 = vpop.f32.mrb[0].mxu0
    %v4532 = vpop.f32.mrb[0].mxu0
    %v4533 = vadd.f32 %v3037, %v4532
    %v4534 = vpop.f32.mrb[0].mxu0
    %4535 = vmatprep.mubr.bf16.mxu0 0
    %4536 = vmatmul.mubr.bf16.gmra.mrb[0].mxu0 %v3945
    %v4537 = vpop.f32.mrb[0].mxu0
    %v4538 = vadd.f32 %v3042, %v4537
    %v4539 = vpop.f32.mrb[0].mxu0
    %v4540 = vpop.f32.mrb[0].mxu0
    %v4541 = vadd.f32 %v3045, %v4540
    %v4542 = vpop.f32.mrb[0].mxu0
    %4543 = vmatprep.mubr.bf16.mxu0 0
    %4544 = vmatmul.mubr.bf16.gmra.mrb[0].mxu0 %v3947
    %v4545 = vpop.f32.mrb[0].mxu0
    %v4546 = vadd.f32 %v3050, %v4545
    %v4547 = vpop.f32.mrb[0].mxu0
    %v4548 = vpop.f32.mrb[0].mxu0
    %v4549 = vadd.f32 %v3053, %v4548
    %v4550 = vpop.f32.mrb[0].mxu0
    %4551 = vmatprep.mubr.bf16.mxu0 0
    %4552 = vmatmul.mubr.bf16.gmra.mrb[0].mxu0 %v3949
    %v4553 = vpop.f32.mrb[0].mxu0
    %v4554 = vadd.f32 %v3058, %v4553
    %v4555 = vpop.f32.mrb[0].mxu0
    %v4556 = vpop.f32.mrb[0].mxu0
    %v4557 = vadd.f32 %v3061, %v4556
    %v4558 = vpop.f32.mrb[0].mxu0
    %4559 = vmatprep.mubr.bf16.mxu0 0
    %4560 = vmatmul.mubr.bf16.gmra.mrb[0].mxu0 %v3951
    %v4561 = vpop.f32.mrb[0].mxu0
    %v4562 = vadd.f32 %v3066, %v4561
    %v4563 = vpop.f32.mrb[0].mxu0
    %v4564 = vpop.f32.mrb[0].mxu0
    %v4565 = vadd.f32 %v3069, %v4564
    %v4566 = vpop.f32.mrb[0].mxu0
    %4567 = vmatprep.mubr.bf16.mxu0 0
    %4568 = vmatmul.mubr.bf16.gmra.mrb[0].mxu0 %v3953
    %v4569 = vpop.f32.mrb[0].mxu0
    %v4570 = vadd.f32 %v3074, %v4569
    %v4571 = vpop.f32.mrb[0].mxu0
    %v4572 = vpop.f32.mrb[0].mxu0
    %v4573 = vadd.f32 %v3077, %v4572
    %v4574 = vpop.f32.mrb[0].mxu0
    %4575 = vmatprep.mubr.bf16.mxu0 0
    %4576 = vmatmul.mubr.bf16.gmra.mrb[0].mxu0 %v3955
    %v4577 = vpop.f32.mrb[0].mxu0
    %v4578 = vadd.f32 %v3082, %v4577
    %v4579 = vpop.f32.mrb[0].mxu0
    %v4580 = vpop.f32.mrb[0].mxu0
    %v4581 = vadd.f32 %v3085, %v4580
    %v4582 = vpop.f32.mrb[0].mxu0
    %4583 = vmatprep.mubr.bf16.mxu0 0
    %4584 = vmatmul.mubr.bf16.gmra.mrb[0].mxu0 %v3957
    %v4585 = vpop.f32.mrb[0].mxu0
    %v4586 = vadd.f32 %v3090, %v4585
    %v4587 = vpop.f32.mrb[0].mxu0
    %v4588 = vpop.f32.mrb[0].mxu0
    %v4589 = vadd.f32 %v3093, %v4588
    %v4590 = vpop.f32.mrb[0].mxu0
    %4591 = vmatprep.mubr.bf16.mxu0 0
    %4592 = vmatmul.mubr.bf16.gmra.mrb[0].mxu0 %v3959
    %v4593 = vpop.f32.mrb[0].mxu0
    %v4594 = vadd.f32 %v3098, %v4593
    %v4595 = vpop.f32.mrb[0].mxu0
    %v4596 = vpop.f32.mrb[0].mxu0
    %v4597 = vadd.f32 %v3101, %v4596
    %v4598 = vpop.f32.mrb[0].mxu0
    %4599 = vmatprep.mubr.bf16.mxu0 0
    %4600 = vmatmul.mubr.bf16.gmra.mrb[0].mxu0 %v3961
    %v4601 = vpop.f32.mrb[0].mxu0
    %v4602 = vadd.f32 %v3106, %v4601
    %v4603 = vpop.f32.mrb[0].mxu0
    %v4604 = vpop.f32.mrb[0].mxu0
    %v4605 = vadd.f32 %v3109, %v4604
    %v4606 = vpop.f32.mrb[0].mxu0
    %4607 = vmatprep.mubr.bf16.mxu0 0
    %4608 = vmatmul.mubr.bf16.gmra.mrb[0].mxu0 %v3963
    %v4609 = vpop.f32.mrb[0].mxu0
    %v4610 = vadd.f32 %v3114, %v4609
    %v4611 = vpop.f32.mrb[0].mxu0
    %v4612 = vpop.f32.mrb[0].mxu0
    %v4613 = vadd.f32 %v3117, %v4612
    %v4614 = vpop.f32.mrb[0].mxu0
    %4615 = vmatprep.mubr.bf16.mxu0 0
    %4616 = vmatmul.mubr.bf16.gmra.mrb[0].mxu0 %v3965
    %v4617 = vpop.f32.mrb[0].mxu0
    %v4618 = vadd.f32 %v3122, %v4617
    %v4619 = vpop.f32.mrb[0].mxu0
    %v4620 = vpop.f32.mrb[0].mxu0
    %v4621 = vadd.f32 %v3125, %v4620
    %v4622 = vpop.f32.mrb[0].mxu0
    %4623 = vmatprep.mubr.bf16.mxu0 0
    %4624 = vmatmul.mubr.bf16.gmra.mrb[0].mxu0 %v3967
    %v4625 = vpop.f32.mrb[0].mxu0
    %v4626 = vadd.f32 %v3130, %v4625
    %v4627 = vpop.f32.mrb[0].mxu0
    %v4628 = vpop.f32.mrb[0].mxu0
    %v4629 = vadd.f32 %v3133, %v4628
    %v4630 = vpop.f32.mrb[0].mxu0
    %4631 = vmatprep.mubr.bf16.mxu0 0
    %4632 = vmatmul.mubr.bf16.gmra.mrb[0].mxu0 %v3969
    %v4633 = vpop.f32.mrb[0].mxu0
    %v4634 = vadd.f32 %v3138, %v4633
    %v4635 = vpop.f32.mrb[0].mxu0
    %v4636 = vpop.f32.mrb[0].mxu0
    %v4637 = vadd.f32 %v3141, %v4636
    %v4638 = vpop.f32.mrb[0].mxu0
    %4639 = vmatprep.mubr.bf16.mxu0 0
    %4640 = vmatmul.mubr.bf16.gmra.mrb[0].mxu0 %v3971
    %v4641 = vpop.f32.mrb[0].mxu0
    %v4642 = vadd.f32 %v3146, %v4641
    %v4643 = vpop.f32.mrb[0].mxu0
    %v4644 = vpop.f32.mrb[0].mxu0
    %v4645 = vadd.f32 %v3149, %v4644
    %v4646 = vpop.f32.mrb[0].mxu0
    %4647 = vmatprep.mubr.bf16.mxu0 0
    %4648 = vmatmul.mubr.bf16.gmra.mrb[0].mxu0 %v3973
    %v4649 = vpop.f32.mrb[0].mxu0
    %v4650 = vadd.f32 %v3154, %v4649
    %v4651 = vpop.f32.mrb[0].mxu0
    %v4652 = vpop.f32.mrb[0].mxu0
    %v4653 = vadd.f32 %v3157, %v4652
    %v4654 = vpop.f32.mrb[0].mxu0
    %4655 = vmatprep.mubr.bf16.mxu0 0
    %4656 = vmatmul.mubr.bf16.gmra.mrb[0].mxu0 %v3975
    %v4657 = vpop.f32.mrb[0].mxu0
    %v4658 = vadd.f32 %v3162, %v4657
    %v4659 = vpop.f32.mrb[0].mxu0
    %v4660 = vpop.f32.mrb[0].mxu0
    %v4661 = vadd.f32 %v3165, %v4660
    %v4662 = vpop.f32.mrb[0].mxu0
    %4663 = vmatprep.mubr.bf16.mxu0 0
    %4664 = vmatmul.mubr.bf16.gmra.mrb[0].mxu0 %v3977
    %v4665 = vpop.f32.mrb[0].mxu0
    %v4666 = vadd.f32 %v3170, %v4665
    %v4667 = vpop.f32.mrb[0].mxu0
    %v4668 = vpop.f32.mrb[0].mxu0
    %v4669 = vadd.f32 %v3173, %v4668
    %v4670 = vpop.f32.mrb[0].mxu0
    %4671 = vmatprep.mubr.bf16.mxu0 0
    %4672 = vmatmul.mubr.bf16.gmra.mrb[0].mxu0 %v3979
    %v4673 = vpop.f32.mrb[0].mxu0
    %v4674 = vadd.f32 %v3178, %v4673
    %v4675 = vpop.f32.mrb[0].mxu0
    %v4676 = vpop.f32.mrb[0].mxu0
    %v4677 = vadd.f32 %v3181, %v4676
    %v4678 = vpop.f32.mrb[0].mxu0
    %4679 = vmatprep.mubr.bf16.mxu0 0
    %4680 = vmatmul.mubr.bf16.gmra.mrb[0].mxu0 %v3981
    %v4681 = vpop.f32.mrb[0].mxu0
    %v4682 = vadd.f32 %v3186, %v4681
    %v4683 = vpop.f32.mrb[0].mxu0
    %v4684 = vpop.f32.mrb[0].mxu0
    %v4685 = vadd.f32 %v3189, %v4684
    %v4686 = vpop.f32.mrb[0].mxu0
    %4687 = vmatprep.mubr.bf16.mxu0 0
    %4688 = vmatmul.mubr.bf16.gmra.mrb[0].mxu0 %v3983
    %v4689 = vpop.f32.mrb[0].mxu0
    %v4690 = vadd.f32 %v3194, %v4689
    %v4691 = vpop.f32.mrb[0].mxu0
    %v4692 = vpop.f32.mrb[0].mxu0
    %v4693 = vadd.f32 %v3197, %v4692
    %v4694 = vpop.f32.mrb[0].mxu0
    %4695 = vmatprep.mubr.bf16.mxu0 0
    %4696 = vmatmul.mubr.bf16.gmra.mrb[0].mxu0 %v3985
    %v4697 = vpop.f32.mrb[0].mxu0
    %v4698 = vadd.f32 %v3202, %v4697
    %v4699 = vpop.f32.mrb[0].mxu0
    %v4700 = vpop.f32.mrb[0].mxu0
    %v4701 = vadd.f32 %v3205, %v4700
    %v4702 = vpop.f32.mrb[0].mxu0
    %4703 = vmatprep.mubr.bf16.mxu0 0
    %4704 = vmatmul.mubr.bf16.gmra.mrb[0].mxu0 %v3987
    %v4705 = vpop.f32.mrb[0].mxu0
    %v4706 = vadd.f32 %v3210, %v4705
    %v4707 = vpop.f32.mrb[0].mxu0
    %v4708 = vpop.f32.mrb[0].mxu0
    %v4709 = vadd.f32 %v3213, %v4708
    %v4710 = vpop.f32.mrb[0].mxu0
    %4711 = vmatprep.mubr.bf16.mxu0 0
    %4712 = vmatmul.mubr.bf16.gmra.mrb[0].mxu0 %v3989
    %v4713 = vpop.f32.mrb[0].mxu0
    %v4714 = vadd.f32 %v3218, %v4713
    %v4715 = vpop.f32.mrb[0].mxu0
    %v4716 = vpop.f32.mrb[0].mxu0
    %v4717 = vadd.f32 %v3221, %v4716
    %v4718 = vpop.f32.mrb[0].mxu0
    %4719 = vmatprep.mubr.bf16.mxu0 0
    %4720 = vmatmul.mubr.bf16.gmra.mrb[0].mxu0 %v3991
    %v4721 = vpop.f32.mrb[0].mxu0
    %v4722 = vadd.f32 %v3226, %v4721
    %v4723 = vpop.f32.mrb[0].mxu0
    %v4724 = vpop.f32.mrb[0].mxu0
    %v4725 = vadd.f32 %v3229, %v4724
    %v4726 = vpop.f32.mrb[0].mxu0
    %4727 = vmatprep.mubr.bf16.mxu0 0
    %4728 = vmatmul.mubr.bf16.gmra.mrb[0].mxu0 %v3993
    %v4729 = vpop.f32.mrb[0].mxu0
    %v4730 = vadd.f32 %v3234, %v4729
    %v4731 = vpop.f32.mrb[0].mxu0
    %v4732 = vpop.f32.mrb[0].mxu0
    %v4733 = vadd.f32 %v3237, %v4732
    %v4734 = vpop.f32.mrb[0].mxu0
    %4735 = vmatprep.mubr.bf16.mxu0 0
    %4736 = vmatmul.mubr.bf16.gmra.mrb[0].mxu0 %v3995
    %v4737 = vpop.f32.mrb[0].mxu0
    %v4738 = vadd.f32 %v3242, %v4737
    %v4739 = vpop.f32.mrb[0].mxu0
    %v4740 = vpop.f32.mrb[0].mxu0
    %v4741 = vadd.f32 %v3245, %v4740
    %v4742 = vpop.f32.mrb[0].mxu0
    %4743 = vmatprep.mubr.bf16.mxu0 0
    %4744 = vmatmul.mubr.bf16.gmra.mrb[0].mxu0 %v3997
    %v4745 = vpop.f32.mrb[0].mxu0
    %v4746 = vadd.f32 %v3250, %v4745
    %v4747 = vpop.f32.mrb[0].mxu0
    %v4748 = vpop.f32.mrb[0].mxu0
    %v4749 = vadd.f32 %v3253, %v4748
    %v4750 = vpop.f32.mrb[0].mxu0
    %4751 = vmatprep.mubr.bf16.mxu0 0
    %4752 = vmatmul.mubr.bf16.gmra.mrb[0].mxu0 %v3999
    %v4753 = vpop.f32.mrb[0].mxu0
    %v4754 = vadd.f32 %v3258, %v4753
    %v4755 = vpop.f32.mrb[0].mxu0
    %v4756 = vpop.f32.mrb[0].mxu0
    %v4757 = vadd.f32 %v3261, %v4756
    %v4758 = vpop.f32.mrb[0].mxu0
    %4759 = vmatprep.mubr.bf16.mxu0 0
    %4760 = vmatmul.mubr.bf16.gmra.mrb[0].mxu0 %v4001
    %v4761 = vpop.f32.mrb[0].mxu0
    %v4762 = vadd.f32 %v3266, %v4761
    %v4763 = vpop.f32.mrb[0].mxu0
    %v4764 = vpop.f32.mrb[0].mxu0
    %v4765 = vadd.f32 %v3269, %v4764
    %v4766 = vpop.f32.mrb[0].mxu0
    %4767 = vmatprep.mubr.bf16.mxu0 0
    %4768 = vmatmul.mubr.bf16.gmra.mrb[0].mxu0 %v4003
    %v4769 = vpop.f32.mrb[0].mxu0
    %v4770 = vadd.f32 %v3274, %v4769
    %v4771 = vpop.f32.mrb[0].mxu0
    %v4772 = vpop.f32.mrb[0].mxu0
    %v4773 = vadd.f32 %v3277, %v4772
    %v4774 = vpop.f32.mrb[0].mxu0
    %4775 = vmatprep.mubr.bf16.mxu0 0
    %4776 = vmatmul.mubr.bf16.gmra.mrb[0].mxu0 %v4005
    %v4777 = vpop.f32.mrb[0].mxu0
    %v4778 = vadd.f32 %v3282, %v4777
    %v4779 = vpop.f32.mrb[0].mxu0
    %v4780 = vpop.f32.mrb[0].mxu0
    %v4781 = vadd.f32 %v3285, %v4780
    %v4782 = vpop.f32.mrb[0].mxu0
    %4783 = vmatprep.mubr.bf16.mxu0 0
    %4784 = vmatmul.mubr.bf16.gmra.mrb[0].mxu0 %v4007
    %v4785 = vpop.f32.mrb[0].mxu0
    %v4786 = vadd.f32 %v3290, %v4785
    %v4787 = vpop.f32.mrb[0].mxu0
    %v4788 = vpop.f32.mrb[0].mxu0
    %v4789 = vadd.f32 %v3293, %v4788
    %v4790 = vpop.f32.mrb[0].mxu0
    %4791 = vmatprep.mubr.bf16.mxu0 0
    %4792 = vmatmul.mubr.bf16.gmra.mrb[0].mxu0 %v4009
    %v4793 = vpop.f32.mrb[0].mxu0
    %v4794 = vadd.f32 %v3298, %v4793
    %v4795 = vpop.f32.mrb[0].mxu0
    %v4796 = vpop.f32.mrb[0].mxu0
    %v4797 = vadd.f32 %v3301, %v4796
    %v4798 = vpop.f32.mrb[0].mxu0
    %4799 = vmatprep.mubr.bf16.mxu0 0
    %4800 = vmatmul.mubr.bf16.gmra.mrb[0].mxu0 %v4011
    %v4801 = vpop.f32.mrb[0].mxu0
    %v4802 = vadd.f32 %v3306, %v4801
    %v4803 = vpop.f32.mrb[0].mxu0
    %v4804 = vpop.f32.mrb[0].mxu0
    %v4805 = vadd.f32 %v3309, %v4804
    %v4806 = vpop.f32.mrb[0].mxu0
    %4807 = vmatprep.mubr.bf16.mxu0 0
    %4808 = vmatmul.mubr.bf16.gmra.mrb[0].mxu0 %v4013
    %v4809 = vpop.f32.mrb[0].mxu0
    %v4810 = vadd.f32 %v3314, %v4809
    %v4811 = vpop.f32.mrb[0].mxu0
    %v4812 = vpop.f32.mrb[0].mxu0
    %v4813 = vadd.f32 %v3317, %v4812
    %v4814 = vpop.f32.mrb[0].mxu0
    %4815 = vmatprep.mubr.bf16.mxu0 0
    %4816 = vmatmul.mubr.bf16.gmra.mrb[0].mxu0 %v4015
    %v4817 = vpop.f32.mrb[0].mxu0
    %v4818 = vadd.f32 %v3322, %v4817
    %v4819 = vpop.f32.mrb[0].mxu0
    %v4820 = vpop.f32.mrb[0].mxu0
    %v4821 = vadd.f32 %v3325, %v4820
    %v4822 = vpop.f32.mrb[0].mxu0
    %4823 = vmatprep.mubr.bf16.mxu0 0
    %4824 = vmatmul.mubr.bf16.gmra.mrb[0].mxu0 %v4017
    %v4825 = vpop.f32.mrb[0].mxu0
    %v4826 = vadd.f32 %v3330, %v4825
    %v4827 = vpop.f32.mrb[0].mxu0
    %v4828 = vpop.f32.mrb[0].mxu0
    %v4829 = vadd.f32 %v3333, %v4828
    %v4830 = vpop.f32.mrb[0].mxu0
    %4831 = vmatprep.mubr.bf16.mxu0 0
    %4832 = vmatmul.mubr.bf16.gmra.mrb[0].mxu0 %v4019
    %v4833 = vpop.f32.mrb[0].mxu0
    %v4834 = vadd.f32 %v3338, %v4833
    %v4835 = vpop.f32.mrb[0].mxu0
    %v4836 = vpop.f32.mrb[0].mxu0
    %v4837 = vadd.f32 %v3341, %v4836
    %v4838 = vpop.f32.mrb[0].mxu0
    %4839 = vmatprep.mubr.bf16.mxu0 0
    %4840 = vmatmul.mubr.bf16.gmra.mrb[0].mxu0 %v4021
    %v4841 = vpop.f32.mrb[0].mxu0
    %v4842 = vadd.f32 %v3346, %v4841
    %v4843 = vpop.f32.mrb[0].mxu0
    %v4844 = vpop.f32.mrb[0].mxu0
    %v4845 = vadd.f32 %v3349, %v4844
    %v4846 = vpop.f32.mrb[0].mxu0
    %4847 = vmatprep.mubr.bf16.mxu0 0
    %4848 = vmatmul.mubr.bf16.gmra.mrb[0].mxu0 %v4023
    %v4849 = vpop.f32.mrb[0].mxu0
    %v4850 = vadd.f32 %v3354, %v4849
    %v4851 = vpop.f32.mrb[0].mxu0
    %v4852 = vpop.f32.mrb[0].mxu0
    %v4853 = vadd.f32 %v3357, %v4852
    %v4854 = vpop.f32.mrb[0].mxu0
    %4855 = vmatprep.mubr.bf16.mxu0 0
    %4856 = vmatmul.mubr.bf16.gmra.mrb[0].mxu0 %v4025
    %v4857 = vpop.f32.mrb[0].mxu0
    %v4858 = vadd.f32 %v3362, %v4857
    %v4859 = vpop.f32.mrb[0].mxu0
    %v4860 = vpop.f32.mrb[0].mxu0
    %v4861 = vadd.f32 %v3365, %v4860
    %v4862 = vpop.f32.mrb[0].mxu0
    %4863 = vmatprep.mubr.bf16.mxu0 0
    %4864 = vmatmul.mubr.bf16.gmra.mrb[0].mxu0 %v4027
    %v4865 = vpop.f32.mrb[0].mxu0
    %v4866 = vadd.f32 %v3370, %v4865
    %v4867 = vpop.f32.mrb[0].mxu0
    %v4868 = vpop.f32.mrb[0].mxu0
    %v4869 = vadd.f32 %v3373, %v4868
    %v4870 = vpop.f32.mrb[0].mxu0
    %4871 = vmatprep.mubr.bf16.mxu0 0
    %4872 = vmatmul.mubr.bf16.gmra.mrb[0].mxu0 %v4029
    %v4873 = vpop.f32.mrb[0].mxu0
    %v4874 = vadd.f32 %v3378, %v4873
    %v4875 = vpop.f32.mrb[0].mxu0
    %v4876 = vpop.f32.mrb[0].mxu0
    %v4877 = vadd.f32 %v3381, %v4876
    %v4878 = vpop.f32.mrb[0].mxu0
    %4879 = vmatprep.mubr.bf16.mxu0 0
    %4880 = vmatmul.mubr.bf16.gmra.mrb[0].mxu0 %v4031
    %v4881 = vpop.f32.mrb[0].mxu0
    %v4882 = vadd.f32 %v3386, %v4881
    %v4883 = vpop.f32.mrb[0].mxu0
    %v4884 = vpop.f32.mrb[0].mxu0
    %v4885 = vadd.f32 %v3389, %v4884
    %v4886 = vpop.f32.mrb[0].mxu0
    %4887 = vmatprep.mubr.bf16.mxu0 0
    %4888 = vmatmul.mubr.bf16.gmra.mrb[0].mxu0 %v4033
    %v4889 = vpop.f32.mrb[0].mxu0
    %v4890 = vadd.f32 %v3394, %v4889
    %v4891 = vpop.f32.mrb[0].mxu0
    %v4892 = vpop.f32.mrb[0].mxu0
    %v4893 = vadd.f32 %v3397, %v4892
    %v4894 = vpop.f32.mrb[0].mxu0
    %4895 = vmatprep.mubr.bf16.mxu0 0
    %4896 = vmatmul.mubr.bf16.gmra.mrb[0].mxu0 %v4035
    %v4897 = vpop.f32.mrb[0].mxu0
    %v4898 = vadd.f32 %v3402, %v4897
    %v4899 = vpop.f32.mrb[0].mxu0
    %v4900 = vpop.f32.mrb[0].mxu0
    %v4901 = vadd.f32 %v3405, %v4900
    %v4902 = vpop.f32.mrb[0].mxu0
    %4903 = vmatprep.mubr.bf16.mxu0 0
    %4904 = vmatmul.mubr.bf16.gmra.mrb[0].mxu0 %v4037
    %v4905 = vpop.f32.mrb[0].mxu0
    %v4906 = vadd.f32 %v3410, %v4905
    %v4907 = vpop.f32.mrb[0].mxu0
    %v4908 = vpop.f32.mrb[0].mxu0
    %v4909 = vadd.f32 %v3413, %v4908
    %v4910 = vpop.f32.mrb[0].mxu0
    %4911 = vmatprep.mubr.bf16.mxu0 0
    %4912 = vmatmul.mubr.bf16.gmra.mrb[0].mxu0 %v4039
    %v4913 = vpop.f32.mrb[0].mxu0
    %v4914 = vadd.f32 %v3418, %v4913
    %v4915 = vpop.f32.mrb[0].mxu0
    %v4916 = vpop.f32.mrb[0].mxu0
    %v4917 = vadd.f32 %v3421, %v4916
    %v4918 = vpop.f32.mrb[0].mxu0
    %4919 = vmatprep.mubr.bf16.mxu0 0
    %4920 = vmatmul.mubr.bf16.gmra.mrb[0].mxu0 %v4041
    %v4921 = vpop.f32.mrb[0].mxu0
    %v4922 = vadd.f32 %v3426, %v4921
    %v4923 = vpop.f32.mrb[0].mxu0
    %v4924 = vpop.f32.mrb[0].mxu0
    %v4925 = vadd.f32 %v3429, %v4924
    %v4926 = vpop.f32.mrb[0].mxu0
    %4927 = vmatprep.mubr.bf16.mxu0 0
    %4928 = vmatmul.mubr.bf16.gmra.mrb[0].mxu0 %v4043
    %v4929 = vpop.f32.mrb[0].mxu0
    %v4930 = vadd.f32 %v3434, %v4929
    %v4931 = vpop.f32.mrb[0].mxu0
    %v4932 = vpop.f32.mrb[0].mxu0
    %v4933 = vadd.f32 %v3437, %v4932
    %v4934 = vpop.f32.mrb[0].mxu0
    %4935 = vmatprep.mubr.bf16.mxu0 0
    %4936 = vmatmul.mubr.bf16.gmra.mrb[0].mxu0 %v4045
    %v4937 = vpop.f32.mrb[0].mxu0
    %v4938 = vadd.f32 %v3442, %v4937
    %v4939 = vpop.f32.mrb[0].mxu0
    %v4940 = vpop.f32.mrb[0].mxu0
    %v4941 = vadd.f32 %v3445, %v4940
    %v4942 = vpop.f32.mrb[0].mxu0
    %4943 = vmatprep.mubr.bf16.mxu0 0
    %4944 = vmatmul.mubr.bf16.gmra.mrb[0].mxu0 %v4047
    %v4945 = vpop.f32.mrb[0].mxu0
    %v4946 = vadd.f32 %v3450, %v4945
    %v4947 = vpop.f32.mrb[0].mxu0
    %v4948 = vpop.f32.mrb[0].mxu0
    %v4949 = vadd.f32 %v3453, %v4948
    %v4950 = vpop.f32.mrb[0].mxu0
    %4951 = vmatprep.mubr.bf16.mxu0 0
    %4952 = vmatmul.mubr.bf16.gmra.mrb[0].mxu0 %v4049
    %v4953 = vpop.f32.mrb[0].mxu0
    %v4954 = vadd.f32 %v3458, %v4953
    %v4955 = vpop.f32.mrb[0].mxu0
    %v4956 = vpop.f32.mrb[0].mxu0
    %v4957 = vadd.f32 %v3461, %v4956
    %v4958 = vpop.f32.mrb[0].mxu0
    %4959 = vmatprep.mubr.bf16.mxu0 0
    %4960 = vmatmul.mubr.bf16.gmra.mrb[0].mxu0 %v4051
    %v4961 = vpop.f32.mrb[0].mxu0
    %v4962 = vadd.f32 %v3466, %v4961
    %v4963 = vpop.f32.mrb[0].mxu0
    %v4964 = vpop.f32.mrb[0].mxu0
    %v4965 = vadd.f32 %v3469, %v4964
    %v4966 = vpop.f32.mrb[0].mxu0
    %4967 = vmatprep.mubr.bf16.mxu0 0
    %4968 = vmatmul.mubr.bf16.gmra.mrb[0].mxu0 %v4053
    %v4969 = vpop.f32.mrb[0].mxu0
    %v4970 = vadd.f32 %v3474, %v4969
    %v4971 = vpop.f32.mrb[0].mxu0
    %v4972 = vpop.f32.mrb[0].mxu0
    %v4973 = vadd.f32 %v3477, %v4972
    %v4974 = vpop.f32.mrb[0].mxu0
    %4975 = vmatprep.mubr.bf16.mxu0 0
    %4976 = vmatmul.mubr.bf16.gmra.mrb[0].mxu0 %v4055
    %v4977 = vpop.f32.mrb[0].mxu0
    %v4978 = vadd.f32 %v3482, %v4977
    %v4979 = vpop.f32.mrb[0].mxu0
    %v4980 = vpop.f32.mrb[0].mxu0
    %v4981 = vadd.f32 %v3485, %v4980
    %v4982 = vpop.f32.mrb[0].mxu0
    %4983 = vmatprep.mubr.bf16.mxu0 0
    %4984 = vmatmul.mubr.bf16.gmra.mrb[0].mxu0 %v4057
    %v4985 = vpop.f32.mrb[0].mxu0
    %v4986 = vadd.f32 %v3490, %v4985
    %v4987 = vpop.f32.mrb[0].mxu0
    %v4988 = vpop.f32.mrb[0].mxu0
    %v4989 = vadd.f32 %v3493, %v4988
    %v4990 = vpop.f32.mrb[0].mxu0
    %4991 = vmatprep.mubr.bf16.mxu0 0
    %4992 = vmatmul.mubr.bf16.gmra.mrb[0].mxu0 %v4059
    %v4993 = vpop.f32.mrb[0].mxu0
    %v4994 = vadd.f32 %v3498, %v4993
    %v4995 = vpop.f32.mrb[0].mxu0
    %v4996 = vpop.f32.mrb[0].mxu0
    %v4997 = vadd.f32 %v3501, %v4996
    %v4998 = vpop.f32.mrb[0].mxu0
    %4999 = vmatprep.mubr.bf16.mxu0 0
    %5000 = vmatmul.mubr.bf16.gmra.mrb[0].mxu0 %v4061
    %v5001 = vpop.f32.mrb[0].mxu0
    %v5002 = vadd.f32 %v3506, %v5001
    %v5003 = vpop.f32.mrb[0].mxu0
    %v5004 = vpop.f32.mrb[0].mxu0
    %v5005 = vadd.f32 %v3509, %v5004
    %v5006 = vpop.f32.mrb[0].mxu0
    %5007 = vmatprep.mubr.bf16.mxu0 0
    %5008 = vmatmul.mubr.bf16.gmra.mrb[0].mxu0 %v4063
    %v5009 = vpop.f32.mrb[0].mxu0
    %v5010 = vadd.f32 %v3514, %v5009
    %v5011 = vpop.f32.mrb[0].mxu0
    %v5012 = vpop.f32.mrb[0].mxu0
    %v5013 = vadd.f32 %v3517, %v5012
    %v5014 = vpop.f32.mrb[0].mxu0
    %5015 = vmatprep.mubr.bf16.mxu0 0
    %5016 = vmatmul.mubr.bf16.gmra.mrb[0].mxu0 %v4065
    %v5017 = vpop.f32.mrb[0].mxu0
    %v5018 = vadd.f32 %v3522, %v5017
    %v5019 = vpop.f32.mrb[0].mxu0
    %v5020 = vpop.f32.mrb[0].mxu0
    %v5021 = vadd.f32 %v3525, %v5020
    %v5022 = vpop.f32.mrb[0].mxu0
    %5023 = vmatprep.mubr.bf16.mxu0 0
    %5024 = vmatmul.mubr.bf16.gmra.mrb[0].mxu0 %v4067
    %v5025 = vpop.f32.mrb[0].mxu0
    %v5026 = vadd.f32 %v3530, %v5025
    %v5027 = vpop.f32.mrb[0].mxu0
    %v5028 = vpop.f32.mrb[0].mxu0
    %v5029 = vadd.f32 %v3533, %v5028
    %v5030 = vpop.f32.mrb[0].mxu0
    %5031 = vmatprep.mubr.bf16.mxu0 0
    %5032 = vmatmul.mubr.bf16.gmra.mrb[0].mxu0 %v4069
    %v5033 = vpop.f32.mrb[0].mxu0
    %v5034 = vadd.f32 %v3538, %v5033
    %v5035 = vpop.f32.mrb[0].mxu0
    %v5036 = vpop.f32.mrb[0].mxu0
    %v5037 = vadd.f32 %v3541, %v5036
    %v5038 = vpop.f32.mrb[0].mxu0
    %5039 = vmatprep.mubr.bf16.mxu0 0
    %5040 = vmatmul.mubr.bf16.gmra.mrb[0].mxu0 %v4071
    %v5041 = vpop.f32.mrb[0].mxu0
    %v5042 = vadd.f32 %v3546, %v5041
    %v5043 = vpop.f32.mrb[0].mxu0
    %v5044 = vpop.f32.mrb[0].mxu0
    %v5045 = vadd.f32 %v3549, %v5044
    %v5046 = vpop.f32.mrb[0].mxu0
    %5047 = vmatprep.mubr.bf16.mxu0 0
    %5048 = vmatmul.mubr.bf16.gmra.mrb[0].mxu0 %v4073
    %v5049 = vpop.f32.mrb[0].mxu0
    %v5050 = vadd.f32 %v3554, %v5049
    %v5051 = vpop.f32.mrb[0].mxu0
    %v5052 = vpop.f32.mrb[0].mxu0
    %v5053 = vadd.f32 %v3557, %v5052
    %v5054 = vpop.f32.mrb[0].mxu0
    %5055 = vmatprep.mubr.bf16.mxu0 0
    %5056 = vmatmul.mubr.bf16.gmra.mrb[0].mxu0 %v4075
    %v5057 = vpop.f32.mrb[0].mxu0
    %v5058 = vadd.f32 %v3562, %v5057
    %v5059 = vpop.f32.mrb[0].mxu0
    %v5060 = vpop.f32.mrb[0].mxu0
    %v5061 = vadd.f32 %v3565, %v5060
    %v5062 = vpop.f32.mrb[0].mxu0
    %5063 = vmatprep.mubr.bf16.mxu0 0
    %5064 = vmatmul.mubr.bf16.gmra.mrb[0].mxu0 %v4077
    %v5065 = vpop.f32.mrb[0].mxu0
    %v5066 = vadd.f32 %v3570, %v5065
    %v5067 = vpop.f32.mrb[0].mxu0
    %v5068 = vpop.f32.mrb[0].mxu0
    %v5069 = vadd.f32 %v3573, %v5068
    %v5070 = vpop.f32.mrb[0].mxu0
    %5071 = vmatprep.mubr.bf16.mxu0 0
    %5072 = vmatmul.mubr.bf16.gmra.mrb[0].mxu0 %v4079
    %v5073 = vpop.f32.mrb[0].mxu0
    %v5074 = vadd.f32 %v3578, %v5073
    %v5075 = vpop.f32.mrb[0].mxu0
    %v5076 = vpop.f32.mrb[0].mxu0
    %v5077 = vadd.f32 %v3581, %v5076
    %v5078 = vpop.f32.mrb[0].mxu0
    %5079 = vmatprep.mubr.bf16.mxu0 0
    %5080 = vmatmul.mubr.bf16.gmra.mrb[0].mxu0 %v4081
    %v5081 = vpop.f32.mrb[0].mxu0
    %v5082 = vadd.f32 %v3586, %v5081
    %v5083 = vpop.f32.mrb[0].mxu0
    %v5084 = vpop.f32.mrb[0].mxu0
    %v5085 = vadd.f32 %v3589, %v5084
    %v5086 = vpop.f32.mrb[0].mxu0
    %5087 = vmatprep.mubr.bf16.mxu0 0
    %5088 = vmatmul.mubr.bf16.gmra.mrb[0].mxu0 %v4083
    %v5089 = vpop.f32.mrb[0].mxu0
    %v5090 = vadd.f32 %v3594, %v5089
    %v5091 = vpop.f32.mrb[0].mxu0
    %v5092 = vpop.f32.mrb[0].mxu0
    %v5093 = vadd.f32 %v3597, %v5092
    %v5094 = vpop.f32.mrb[0].mxu0
    %5095 = vmatprep.mubr.bf16.mxu0 0
    %5096 = vmatmul.mubr.bf16.gmra.mrb[0].mxu0 %v4085
    %v5097 = vpop.f32.mrb[0].mxu0
    %v5098 = vadd.f32 %v3602, %v5097
    %v5099 = vpop.f32.mrb[0].mxu0
    %v5100 = vpop.f32.mrb[0].mxu0
    %v5101 = vadd.f32 %v3605, %v5100
    %v5102 = vpop.f32.mrb[0].mxu0
    %5103 = vmatprep.mubr.bf16.mxu0 0
    %5104 = vmatmul.mubr.bf16.gmra.mrb[0].mxu0 %v4087
    %v5105 = vpop.f32.mrb[0].mxu0
    %v5106 = vadd.f32 %v3610, %v5105
    %v5107 = vpop.f32.mrb[0].mxu0
    %v5108 = vpop.f32.mrb[0].mxu0
    %v5109 = vadd.f32 %v3613, %v5108
    %v5110 = vpop.f32.mrb[0].mxu0
    %5111 = vmatprep.mubr.bf16.mxu0 0
    %5112 = vmatmul.mubr.bf16.gmra.mrb[0].mxu0 %v4089
    %v5113 = vpop.f32.mrb[0].mxu0
    %v5114 = vadd.f32 %v3618, %v5113
    %v5115 = vpop.f32.mrb[0].mxu0
    %v5116 = vpop.f32.mrb[0].mxu0
    %v5117 = vadd.f32 %v3621, %v5116
    %v5118 = vpop.f32.mrb[0].mxu0
    %5119 = vmatprep.mubr.bf16.mxu0 0
    %5120 = vmatmul.mubr.bf16.gmra.mrb[0].mxu0 %v4091
    %v5121 = vpop.f32.mrb[0].mxu0
    %v5122 = vadd.f32 %v3626, %v5121
    %v5123 = vpop.f32.mrb[0].mxu0
    %v5124 = vpop.f32.mrb[0].mxu0
    %v5125 = vadd.f32 %v3629, %v5124
    %v5126 = vpop.f32.mrb[0].mxu0
    %5127 = vmatprep.mubr.bf16.mxu0 0
    %5128 = vmatmul.mubr.bf16.gmra.mrb[0].mxu0 %v4093
    %v5129 = vpop.f32.mrb[0].mxu0
    %v5130 = vadd.f32 %v3634, %v5129
    %v5131 = vpop.f32.mrb[0].mxu0
    %v5132 = vpop.f32.mrb[0].mxu0
    %v5133 = vadd.f32 %v3637, %v5132
    %v5134 = vpop.f32.mrb[0].mxu0
    %5135 = vmatprep.mubr.bf16.mxu0 0
    %5136 = vmatmul.mubr.bf16.gmra.mrb[0].mxu0 %v4095
    %v5137 = vpop.f32.mrb[0].mxu0
    %v5138 = vadd.f32 %v3642, %v5137
    %v5139 = vpop.f32.mrb[0].mxu0
    %v5140 = vpop.f32.mrb[0].mxu0
    %v5141 = vadd.f32 %v3645, %v5140
    %v5142 = vpop.f32.mrb[0].mxu0
    %5143 = vmatprep.mubr.bf16.mxu0 0
    %5144 = vmatmul.mubr.bf16.gmra.mrb[0].mxu0 %v4097
    %v5145 = vpop.f32.mrb[0].mxu0
    %v5146 = vadd.f32 %v3650, %v5145
    %v5147 = vpop.f32.mrb[0].mxu0
    %v5148 = vpop.f32.mrb[0].mxu0
    %v5149 = vadd.f32 %v3653, %v5148
    %v5150 = vpop.f32.mrb[0].mxu0
    %5151 = vmatprep.mubr.bf16.mxu0 0
    %5152 = vmatmul.mubr.bf16.gmra.mrb[0].mxu0 %v4099
    %v5153 = vpop.f32.mrb[0].mxu0
    %v5154 = vadd.f32 %v3658, %v5153
    %v5155 = vpop.f32.mrb[0].mxu0
    %v5156 = vpop.f32.mrb[0].mxu0
    %v5157 = vadd.f32 %v3661, %v5156
    %v5158 = vpop.f32.mrb[0].mxu0
    %5159 = vmatprep.mubr.bf16.mxu0 0
    %5160 = vmatmul.mubr.bf16.gmra.mrb[0].mxu0 %v4101
    %v5161 = vpop.f32.mrb[0].mxu0
    %v5162 = vadd.f32 %v3666, %v5161
    %v5163 = vpop.f32.mrb[0].mxu0
    %v5164 = vpop.f32.mrb[0].mxu0
    %v5165 = vadd.f32 %v3669, %v5164
    %v5166 = vpop.f32.mrb[0].mxu0
    %5167 = vmatprep.mubr.bf16.mxu0 0
    %5168 = vmatmul.mubr.bf16.gmra.mrb[0].mxu0 %v4103
    %v5169 = vpop.f32.mrb[0].mxu0
    %v5170 = vadd.f32 %v3674, %v5169
    %v5171 = vpop.f32.mrb[0].mxu0
    %v5172 = vpop.f32.mrb[0].mxu0
    %v5173 = vadd.f32 %v3677, %v5172
    %v5174 = vpop.f32.mrb[0].mxu0
    %5175 = vmatprep.mubr.bf16.mxu0 0
    %5176 = vmatmul.mubr.bf16.gmra.mrb[0].mxu0 %v4105
    %v5177 = vpop.f32.mrb[0].mxu0
    %v5178 = vadd.f32 %v3682, %v5177
    %v5179 = vpop.f32.mrb[0].mxu0
    %v5180 = vpop.f32.mrb[0].mxu0
    %v5181 = vadd.f32 %v3685, %v5180
    %v5182 = vpop.f32.mrb[0].mxu0
    %5183 = vmatprep.mubr.bf16.mxu0 0
    %5184 = vmatmul.mubr.bf16.gmra.mrb[0].mxu0 %v4107
    %v5185 = vpop.f32.mrb[0].mxu0
    %v5186 = vadd.f32 %v3690, %v5185
    %v5187 = vpop.f32.mrb[0].mxu0
    %v5188 = vpop.f32.mrb[0].mxu0
    %v5189 = vadd.f32 %v3693, %v5188
    %v5190 = vpop.f32.mrb[0].mxu0
    %5191 = vmatprep.mubr.bf16.mxu0 0
    %5192 = vmatmul.mubr.bf16.gmra.mrb[0].mxu0 %v4109
    %v5193 = vpop.f32.mrb[0].mxu0
    %v5194 = vadd.f32 %v3698, %v5193
    %v5195 = vpop.f32.mrb[0].mxu0
    %v5196 = vpop.f32.mrb[0].mxu0
    %v5197 = vadd.f32 %v3701, %v5196
    %v5198 = vpop.f32.mrb[0].mxu0
    %5199 = vmatprep.mubr.bf16.mxu0 0
    %5200 = vmatmul.mubr.bf16.gmra.mrb[0].mxu0 %v4111
    %v5201 = vpop.f32.mrb[0].mxu0
    %v5202 = vadd.f32 %v3706, %v5201
    %v5203 = vpop.f32.mrb[0].mxu0
    %v5204 = vpop.f32.mrb[0].mxu0
    %v5205 = vadd.f32 %v3709, %v5204
    %v5206 = vpop.f32.mrb[0].mxu0
    %5207 = vmatprep.mubr.bf16.mxu0 0
    %5208 = vmatmul.mubr.bf16.gmra.mrb[0].mxu0 %v4113
    %v5209 = vpop.f32.mrb[0].mxu0
    %v5210 = vadd.f32 %v3714, %v5209
    %v5211 = vpop.f32.mrb[0].mxu0
    %v5212 = vpop.f32.mrb[0].mxu0
    %v5213 = vadd.f32 %v3717, %v5212
    %v5214 = vpop.f32.mrb[0].mxu0
    %5215 = vmatprep.mubr.bf16.mxu0 0
    %5216 = vmatmul.mubr.bf16.gmra.mrb[0].mxu0 %v4115
    %v5217 = vpop.f32.mrb[0].mxu0
    %v5218 = vadd.f32 %v3722, %v5217
    %v5219 = vpop.f32.mrb[0].mxu0
    %v5220 = vpop.f32.mrb[0].mxu0
    %v5221 = vadd.f32 %v3725, %v5220
    %v5222 = vpop.f32.mrb[0].mxu0
    %5223 = vmatprep.mubr.bf16.mxu0 0
    %5224 = vmatmul.mubr.bf16.gmra.mrb[0].mxu0 %v4117
    %v5225 = vpop.f32.mrb[0].mxu0
    %v5226 = vadd.f32 %v3730, %v5225
    %v5227 = vpop.f32.mrb[0].mxu0
    %v5228 = vpop.f32.mrb[0].mxu0
    %v5229 = vadd.f32 %v3733, %v5228
    %v5230 = vpop.f32.mrb[0].mxu0
    %5231 = vmatprep.mubr.bf16.mxu0 0
    %5232 = vmatmul.mubr.bf16.gmra.mrb[0].mxu0 %v4119
    %v5233 = vpop.f32.mrb[0].mxu0
    %v5234 = vadd.f32 %v3738, %v5233
    %v5235 = vpop.f32.mrb[0].mxu0
    %v5236 = vpop.f32.mrb[0].mxu0
    %v5237 = vadd.f32 %v3741, %v5236
    %v5238 = vpop.f32.mrb[0].mxu0
    %5239 = vmatprep.mubr.bf16.mxu0 0
    %5240 = vmatmul.mubr.bf16.gmra.mrb[0].mxu0 %v4121
    %v5241 = vpop.f32.mrb[0].mxu0
    %v5242 = vadd.f32 %v3746, %v5241
    %v5243 = vpop.f32.mrb[0].mxu0
    %v5244 = vpop.f32.mrb[0].mxu0
    %v5245 = vadd.f32 %v3749, %v5244
    %v5246 = vpop.f32.mrb[0].mxu0
    %5247 = vmatprep.mubr.bf16.mxu0 0
    %5248 = vmatmul.mubr.bf16.gmra.mrb[0].mxu0 %v4123
    %v5249 = vpop.f32.mrb[0].mxu0
    %v5250 = vadd.f32 %v3754, %v5249
    %v5251 = vpop.f32.mrb[0].mxu0
    %v5252 = vpop.f32.mrb[0].mxu0
    %v5253 = vadd.f32 %v3757, %v5252
    %v5254 = vpop.f32.mrb[0].mxu0
    %5255 = vmatprep.mubr.bf16.mxu0 0
    %5256 = vmatmul.mubr.bf16.gmra.mrb[0].mxu0 %v4125
    %v5257 = vpop.f32.mrb[0].mxu0
    %v5258 = vadd.f32 %v3762, %v5257
    %v5259 = vpop.f32.mrb[0].mxu0
    %v5260 = vpop.f32.mrb[0].mxu0
    %v5261 = vadd.f32 %v3765, %v5260
    %v5262 = vpop.f32.mrb[0].mxu0
    %5263 = vmatprep.mubr.bf16.mxu0 0
    %5264 = vmatmul.mubr.bf16.gmra.mrb[0].mxu0 %v4127
    %v5265 = vpop.f32.mrb[0].mxu0
    %v5266 = vadd.f32 %v3770, %v5265
    %v5267 = vpop.f32.mrb[0].mxu0
    %v5268 = vpop.f32.mrb[0].mxu0
    %v5269 = vadd.f32 %v3773, %v5268
    %v5270 = vpop.f32.mrb[0].mxu0
    %5271 = vmatprep.mubr.bf16.mxu0 0
    %5272 = vmatmul.mubr.bf16.gmra.mrb[0].mxu0 %v4129
    %v5273 = vpop.f32.mrb[0].mxu0
    %v5274 = vadd.f32 %v3778, %v5273
    %v5275 = vpop.f32.mrb[0].mxu0
    %v5276 = vpop.f32.mrb[0].mxu0
    %v5277 = vadd.f32 %v3781, %v5276
    %v5278 = vpop.f32.mrb[0].mxu0
    %5279 = vmatprep.mubr.bf16.mxu0 0
    %5280 = vmatmul.mubr.bf16.gmra.mrb[0].mxu0 %v4131
    %v5281 = vpop.f32.mrb[0].mxu0
    %v5282 = vadd.f32 %v3786, %v5281
    %v5283 = vpop.f32.mrb[0].mxu0
    %v5284 = vpop.f32.mrb[0].mxu0
    %v5285 = vadd.f32 %v3789, %v5284
    %v5286 = vpop.f32.mrb[0].mxu0
    %5287 = vmatprep.mubr.bf16.mxu0 0
    %5288 = vmatmul.mubr.bf16.gmra.mrb[0].mxu0 %v4133
    %v5289 = vpop.f32.mrb[0].mxu0
    %v5290 = vadd.f32 %v3794, %v5289
    %v5291 = vpop.f32.mrb[0].mxu0
    %v5292 = vpop.f32.mrb[0].mxu0
    %v5293 = vadd.f32 %v3797, %v5292
    %v5294 = vpop.f32.mrb[0].mxu0
    %5295 = vmatprep.mubr.bf16.mxu0 0
    %5296 = vmatmul.mubr.bf16.gmra.mrb[0].mxu0 %v4135
    %v5297 = vpop.f32.mrb[0].mxu0
    %v5298 = vadd.f32 %v3802, %v5297
    %v5299 = vpop.f32.mrb[0].mxu0
    %v5300 = vpop.f32.mrb[0].mxu0
    %v5301 = vadd.f32 %v3805, %v5300
    %v5302 = vpop.f32.mrb[0].mxu0
    %5303 = vmatprep.mubr.bf16.mxu0 0
    %5304 = vmatmul.mubr.bf16.gmra.mrb[0].mxu0 %v4137
    %v5305 = vpop.f32.mrb[0].mxu0
    %v5306 = vadd.f32 %v3810, %v5305
    %v5307 = vpop.f32.mrb[0].mxu0
    %v5308 = vpop.f32.mrb[0].mxu0
    %v5309 = vadd.f32 %v3813, %v5308
    %v5310 = vpop.f32.mrb[0].mxu0
    %5311 = vmatprep.mubr.bf16.mxu0 0
    %5312 = vmatmul.mubr.bf16.gmra.mrb[0].mxu0 %v4139
    %v5313 = vpop.f32.mrb[0].mxu0
    %v5314 = vadd.f32 %v3818, %v5313
    %v5315 = vpop.f32.mrb[0].mxu0
    %v5316 = vpop.f32.mrb[0].mxu0
    %v5317 = vadd.f32 %v3821, %v5316
    %v5318 = vpop.f32.mrb[0].mxu0
    %5319 = vmatprep.mubr.bf16.mxu0 0
    %5320 = vmatmul.mubr.bf16.gmra.mrb[0].mxu0 %v4141
    %v5321 = vpop.f32.mrb[0].mxu0
    %v5322 = vadd.f32 %v3826, %v5321
    %v5323 = vpop.f32.mrb[0].mxu0
    %v5324 = vpop.f32.mrb[0].mxu0
    %v5325 = vpop.f32.mrb[0].mxu0
    %5326 = vdwg.mxu0
    %v5327 = vld [vmem:[%s0 + $0x4] sm:$0xc]
    %v5328 = vld [vmem:[%s0 + $0x8] sm:$0xf]
    %v5329 = vld [vmem:[%s0 + $0xc] sm:$0xf]
    %v5330 = vld [vmem:[%s0 + $0x10] sm:$0xf]
    %v5331 = vld [vmem:[%s0 + $0x14] sm:$0xf]
    %v5332 = vld [vmem:[%s0 + $0x18] sm:$0xf]
    %v5333 = vld [vmem:[%s0 + $0x1c] sm:$0xf]
    %v5334 = vld [vmem:[%s0 + $0x20] sm:$0xf]
    %v5335 = vld [vmem:[%s0 + $0x24] sm:$0xf]
    %v5336 = vld [vmem:[%s0 + $0x28] sm:$0xf]
    %v5337 = vld [vmem:[%s0 + $0x2c] sm:$0xf]
    %v5338 = vld [vmem:[%s0 + $0x30] sm:$0xf]
    %v5339 = vld [vmem:[%s0 + $0x34] sm:$0xf]
    %v5340 = vld [vmem:[%s0 + $0x38] sm:$0xf]
    %v5341 = vld [vmem:[%s0 + $0x3c] sm:$0xf]
    %v5342 = vld [vmem:[%s0 + $0x40] sm:$0xf]
    %v5343 = vld [vmem:[%s0 + $0x44] sm:$0xf]
    %v5344 = vld [vmem:[%s0 + $0x48] sm:$0xf]
    %v5345 = vld [vmem:[%s0 + $0x4c] sm:$0xf]
    %v5346 = vld [vmem:[%s0 + $0x50] sm:$0xf]
    %v5347 = vld [vmem:[%s0 + $0x54] sm:$0xf]
    %v5348 = vld [vmem:[%s0 + $0x58] sm:$0xf]
    %v5349 = vld [vmem:[%s0 + $0x5c] sm:$0xf]
    %v5350 = vld [vmem:[%s0 + $0x60] sm:$0xf]
    %v5351 = vld [vmem:[%s0 + $0x64] sm:$0xf]
    %v5352 = vld [vmem:[%s0 + $0x68] sm:$0xf]
    %v5353 = vld [vmem:[%s0 + $0x6c] sm:$0xf]
    %v5354 = vld [vmem:[%s0 + $0x70] sm:$0xf]
    %v5355 = vld [vmem:[%s0 + $0x74] sm:$0xf]
    %v5356 = vld [vmem:[%s0 + $0x78] sm:$0xf]
    %v5357 = vld [vmem:[%s0 + $0x7c] sm:$0xf]
    %v5358 = vld [vmem:[%s0 + $0x80] sm:$0xf]
    %v5359 = vld [vmem:[%s0 + $0x84] sm:$0xf]
    %v5360 = vld [vmem:[%s0 + $0x88] sm:$0xf]
    %v5361 = vld [vmem:[%s0 + $0x8c] sm:$0xf]
    %v5362 = vld [vmem:[%s0 + $0x90] sm:$0xf]
    %v5363 = vld [vmem:[%s0 + $0x94] sm:$0xf]
    %v5364 = vld [vmem:[%s0 + $0x98] sm:$0xf]
    %v5365 = vld [vmem:[%s0 + $0x9c] sm:$0xf]
    %v5366 = vld [vmem:[%s0 + $0xa0] sm:$0xf]
    %v5367 = vld [vmem:[%s0 + $0xa4] sm:$0xf]
    %v5368 = vld [vmem:[%s0 + $0xa8] sm:$0xf]
    %v5369 = vld [vmem:[%s0 + $0xac] sm:$0xf]
    %v5370 = vld [vmem:[%s0 + $0xb0] sm:$0xf]
    %v5371 = vld [vmem:[%s0 + $0xb4] sm:$0xf]
    %v5372 = vld [vmem:[%s0 + $0xb8] sm:$0xf]
    %v5373 = vld [vmem:[%s0 + $0xbc] sm:$0xf]
    %v5374 = vld [vmem:[%s0 + $0xc0] sm:$0xf]
    %v5375 = vld [vmem:[%s0 + $0xc4] sm:$0xf]
    %v5376 = vld [vmem:[%s0 + $0xc8] sm:$0xf]
    %v5377 = vld [vmem:[%s0 + $0xcc] sm:$0xf]
    %v5378 = vld [vmem:[%s0 + $0xd0] sm:$0xf]
    %v5379 = vld [vmem:[%s0 + $0xd4] sm:$0xf]
    %v5380 = vld [vmem:[%s0 + $0xd8] sm:$0xf]
    %v5381 = vld [vmem:[%s0 + $0xdc] sm:$0xf]
    %v5382 = vld [vmem:[%s0 + $0xe0] sm:$0xf]
    %v5383 = vld [vmem:[%s0 + $0xe4] sm:$0xf]
    %v5384 = vld [vmem:[%s0 + $0xe8] sm:$0xf]
    %v5385 = vld [vmem:[%s0 + $0xec] sm:$0xf]
    %v5386 = vld [vmem:[%s0 + $0xf0] sm:$0xf]
    %v5387 = vld [vmem:[%s0 + $0xf4] sm:$0xf]
    %v5388 = vld [vmem:[%s0 + $0xf8] sm:$0xf]
    %v5389 = vld [vmem:[%s0 + $0xfc] sm:$0xf]
    %v5390 = vld [vmem:[%s0 + $0x100] sm:$0xf]
    %v5391 = vld [vmem:[%s0 + $0x104] sm:$0xf]
    %v5392 = vld [vmem:[%s0 + $0x108] sm:$0xf]
    %v5393 = vld [vmem:[%s0 + $0x10c] sm:$0xf]
    %v5394 = vld [vmem:[%s0 + $0x110] sm:$0xf]
    %v5395 = vld [vmem:[%s0 + $0x114] sm:$0xf]
    %v5396 = vld [vmem:[%s0 + $0x118] sm:$0xf]
    %v5397 = vld [vmem:[%s0 + $0x11c] sm:$0xf]
    %v5398 = vld [vmem:[%s0 + $0x120] sm:$0xf]
    %v5399 = vld [vmem:[%s0 + $0x124] sm:$0xf]
    %v5400 = vld [vmem:[%s0 + $0x128] sm:$0xf]
    %v5401 = vld [vmem:[%s0 + $0x12c] sm:$0xf]
    %v5402 = vld [vmem:[%s0 + $0x130] sm:$0xf]
    %v5403 = vld [vmem:[%s0 + $0x134] sm:$0xf]
    %v5404 = vld [vmem:[%s0 + $0x138] sm:$0xf]
    %v5405 = vld [vmem:[%s0 + $0x13c] sm:$0xf]
    %v5406 = vld [vmem:[%s0 + $0x140] sm:$0xf]
    %v5407 = vld [vmem:[%s0 + $0x144] sm:$0xf]
    %v5408 = vld [vmem:[%s0 + $0x148] sm:$0xf]
    %v5409 = vld [vmem:[%s0 + $0x14c] sm:$0xf]
    %v5410 = vld [vmem:[%s0 + $0x150] sm:$0xf]
    %v5411 = vld [vmem:[%s0 + $0x154] sm:$0xf]
    %v5412 = vld [vmem:[%s0 + $0x158] sm:$0xf]
    %v5413 = vld [vmem:[%s0 + $0x15c] sm:$0xf]
    %v5414 = vld [vmem:[%s0 + $0x160] sm:$0xf]
    %v5415 = vld [vmem:[%s0 + $0x164] sm:$0xf]
    %v5416 = vld [vmem:[%s0 + $0x168] sm:$0xf]
    %v5417 = vld [vmem:[%s0 + $0x16c] sm:$0xf]
    %v5418 = vld [vmem:[%s0 + $0x170] sm:$0xf]
    %v5419 = vld [vmem:[%s0 + $0x174] sm:$0xf]
    %v5420 = vld [vmem:[%s0 + $0x178] sm:$0xf]
    %v5421 = vld [vmem:[%s0 + $0x17c] sm:$0xf]
    %v5422 = vld [vmem:[%s0 + $0x180] sm:$0xf]
    %v5423 = vld [vmem:[%s0 + $0x184] sm:$0xf]
    %v5424 = vld [vmem:[%s0 + $0x188] sm:$0xf]
    %v5425 = vld [vmem:[%s0 + $0x18c] sm:$0xf]
    %v5426 = vld [vmem:[%s0 + $0x190] sm:$0xf]
    %v5427 = vld [vmem:[%s0 + $0x194] sm:$0xf]
    %v5428 = vld [vmem:[%s0 + $0x198] sm:$0xf]
    %v5429 = vld [vmem:[%s0 + $0x19c] sm:$0xf]
    %v5430 = vld [vmem:[%s0 + $0x1a0] sm:$0xf]
    %v5431 = vld [vmem:[%s0 + $0x1a4] sm:$0xf]
    %v5432 = vld [vmem:[%s0 + $0x1a8] sm:$0xf]
    %v5433 = vld [vmem:[%s0 + $0x1ac] sm:$0xf]
    %v5434 = vld [vmem:[%s0 + $0x1b0] sm:$0xf]
    %v5435 = vld [vmem:[%s0 + $0x1b4] sm:$0xf]
    %v5436 = vld [vmem:[%s0 + $0x1b8] sm:$0xf]
    %v5437 = vld [vmem:[%s0 + $0x1bc] sm:$0xf]
    %v5438 = vld [vmem:[%s0 + $0x1c0] sm:$0xf]
    %v5439 = vld [vmem:[%s0 + $0x1c4] sm:$0xf]
    %v5440 = vld [vmem:[%s0 + $0x1c8] sm:$0xf]
    %v5441 = vld [vmem:[%s0 + $0x1cc] sm:$0xf]
    %v5442 = vld [vmem:[%s0 + $0x1d0] sm:$0xf]
    %v5443 = vld [vmem:[%s0 + $0x1d4] sm:$0xf]
    %v5444 = vld [vmem:[%s0 + $0x1d8] sm:$0xf]
    %v5445 = vld [vmem:[%s0 + $0x1dc] sm:$0xf]
    %v5446 = vld [vmem:[%s0 + $0x1e0] sm:$0xf]
    %v5447 = vld [vmem:[%s0 + $0x1e4] sm:$0xf]
    %v5448 = vld [vmem:[%s0 + $0x1e8] sm:$0xf]
    %v5449 = vld [vmem:[%s0 + $0x1ec] sm:$0xf]
    %v5450 = vld [vmem:[%s0 + $0x1f0] sm:$0xf]
    %v5451 = vld [vmem:[%s0 + $0x1f4] sm:$0xf]
    %v5452 = vld [vmem:[%s0 + $0x1f8] sm:$0xf]
    %v5453 = vld [vmem:[%s0 + $0x1fc] sm:$0xf]
    %v5454 = vld [vmem:[%s0 + $0x200] sm:$0xf]
    %v5455 = vld [vmem:[%s0 + $0x204] sm:$0xf]
    %v5456 = vld [vmem:[%s0 + $0x208] sm:$0xf]
    %v5457 = vld [vmem:[%s0 + $0x20c] sm:$0xf]
    %v5458 = vld [vmem:[%s0 + $0x210] sm:$0xf]
    %v5459 = vld [vmem:[%s0 + $0x214] sm:$0xf]
    %v5460 = vld [vmem:[%s0 + $0x218] sm:$0xf]
    %v5461 = vld [vmem:[%s0 + $0x21c] sm:$0xf]
    %v5462 = vld [vmem:[%s0 + $0x220] sm:$0xf]
    %v5463 = vld [vmem:[%s0 + $0x224] sm:$0xf]
    %v5464 = vld [vmem:[%s0 + $0x228] sm:$0xf]
    %v5465 = vld [vmem:[%s0 + $0x22c] sm:$0xf]
    %v5466 = vld [vmem:[%s0 + $0x230] sm:$0xf]
    %v5467 = vld [vmem:[%s0 + $0x234] sm:$0xf]
    %v5468 = vld [vmem:[%s0 + $0x238] sm:$0xf]
    %v5469 = vld [vmem:[%s0 + $0x23c] sm:$0xf]
    %v5470 = vld [vmem:[%s0 + $0x240] sm:$0xf]
    %v5471 = vld [vmem:[%s0 + $0x244] sm:$0xf]
    %v5472 = vld [vmem:[%s0 + $0x248] sm:$0xf]
    %v5473 = vld [vmem:[%s0 + $0x24c] sm:$0xf]
    %v5474 = vld [vmem:[%s0 + $0x250] sm:$0xf]
    %v5475 = vld [vmem:[%s0 + $0x254] sm:$0xf]
    %v5476 = vld [vmem:[%s0 + $0x258] sm:$0xf]
    %v5477 = vld [vmem:[%s0 + $0x25c] sm:$0xf]
    %v5478 = vld [vmem:[%s0 + $0x260] sm:$0xf]
    %v5479 = vld [vmem:[%s0 + $0x264] sm:$0xf]
    %v5480 = vld [vmem:[%s0 + $0x268] sm:$0xf]
    %v5481 = vld [vmem:[%s0 + $0x26c] sm:$0xf]
    %v5482 = vld [vmem:[%s0 + $0x270] sm:$0xf]
    %v5483 = vld [vmem:[%s0 + $0x274] sm:$0xf]
    %v5484 = vld [vmem:[%s0 + $0x278] sm:$0xf]
    %v5485 = vld [vmem:[%s0 + $0x27c] sm:$0xf]
    %v5486 = vld [vmem:[%s0 + $0x280] sm:$0xf]
    %v5487 = vld [vmem:[%s0 + $0x284] sm:$0xf]
    %v5488 = vld [vmem:[%s0 + $0x288] sm:$0xf]
    %v5489 = vld [vmem:[%s0 + $0x28c] sm:$0xf]
    %v5490 = vld [vmem:[%s0 + $0x290] sm:$0xf]
    %v5491 = vld [vmem:[%s0 + $0x294] sm:$0xf]
    %v5492 = vld [vmem:[%s0 + $0x298] sm:$0xf]
    %v5493 = vld [vmem:[%s0 + $0x29c] sm:$0xf]
    %v5494 = vld [vmem:[%s0 + $0x2a0] sm:$0xf]
    %v5495 = vld [vmem:[%s0 + $0x2a4] sm:$0xf]
    %v5496 = vld [vmem:[%s0 + $0x2a8] sm:$0xf]
    %v5497 = vld [vmem:[%s0 + $0x2ac] sm:$0xf]
    %v5498 = vld [vmem:[%s0 + $0x2b0] sm:$0xf]
    %v5499 = vld [vmem:[%s0 + $0x2b4] sm:$0xf]
    %v5500 = vld [vmem:[%s0 + $0x2b8] sm:$0xf]
    %v5501 = vld [vmem:[%s0 + $0x2bc] sm:$0xf]
    %v5502 = vld [vmem:[%s0 + $0x2c0] sm:$0xf]
    %v5503 = vld [vmem:[%s0 + $0x2c4] sm:$0xf]
    %v5504 = vld [vmem:[%s0 + $0x2c8] sm:$0xf]
    %v5505 = vld [vmem:[%s0 + $0x2cc] sm:$0xf]
    %v5506 = vld [vmem:[%s0 + $0x2d0] sm:$0xf]
    %v5507 = vld [vmem:[%s0 + $0x2d4] sm:$0xf]
    %v5508 = vld [vmem:[%s0 + $0x2d8] sm:$0xf]
    %v5509 = vld [vmem:[%s0 + $0x2dc] sm:$0xf]
    %v5510 = vld [vmem:[%s0 + $0x2e0] sm:$0xf]
    %v5511 = vld [vmem:[%s0 + $0x2e4] sm:$0xf]
    %v5512 = vld [vmem:[%s0 + $0x2e8] sm:$0xf]
    %v5513 = vld [vmem:[%s0 + $0x2ec] sm:$0xf]
    %v5514 = vld [vmem:[%s0 + $0x2f0] sm:$0xf]
    %v5515 = vld [vmem:[%s0 + $0x2f4] sm:$0xf]
    %v5516 = vld [vmem:[%s0 + $0x2f8] sm:$0xf]
    %v5517 = vld [vmem:[%s0 + $0x2fc] sm:$0xf]
    %v5518 = vld [vmem:[%s0 + $0x300] sm:$0xf]
    %v5519 = vld [vmem:[%s0 + $0x304] sm:$0xf]
    %v5520 = vld [vmem:[%s0 + $0x308] sm:$0xf]
    %v5521 = vld [vmem:[%s0 + $0x30c] sm:$0xf]
    %v5522 = vld [vmem:[%s0 + $0x310] sm:$0xf]
    %v5523 = vld [vmem:[%s0 + $0x314] sm:$0xf]
    %v5524 = vld [vmem:[%s0 + $0x318] sm:$0xf]
    %v5525 = vld [vmem:[%s0 + $0x31c] sm:$0xf]
    %v5526 = vld [vmem:[%s0 + $0x320] sm:$0xf]
    %v5527 = vld [vmem:[%s0 + $0x324] sm:$0xf]
    %v5528 = vld [vmem:[%s0 + $0x328] sm:$0xf]
    %v5529 = vld [vmem:[%s0 + $0x32c] sm:$0xf]
    %v5530 = vld [vmem:[%s0 + $0x330] sm:$0xf]
    %v5531 = vld [vmem:[%s0 + $0x334] sm:$0xf]
    %v5532 = vld [vmem:[%s0 + $0x338] sm:$0xf]
    %v5533 = vld [vmem:[%s0 + $0x33c] sm:$0xf]
    %v5534 = vld [vmem:[%s0 + $0x340] sm:$0xf]
    %v5535 = vld [vmem:[%s0 + $0x344] sm:$0xf]
    %v5536 = vld [vmem:[%s0 + $0x348] sm:$0xf]
    %v5537 = vld [vmem:[%s0 + $0x34c] sm:$0xf]
    %v5538 = vld [vmem:[%s0 + $0x350] sm:$0xf]
    %v5539 = vld [vmem:[%s0 + $0x354] sm:$0xf]
    %v5540 = vld [vmem:[%s0 + $0x358] sm:$0xf]
    %v5541 = vld [vmem:[%s0 + $0x35c] sm:$0xf]
    %v5542 = vld [vmem:[%s0 + $0x360] sm:$0xf]
    %v5543 = vld [vmem:[%s0 + $0x364] sm:$0xf]
    %v5544 = vld [vmem:[%s0 + $0x368] sm:$0xf]
    %v5545 = vld [vmem:[%s0 + $0x36c] sm:$0xf]
    %v5546 = vld [vmem:[%s0 + $0x370] sm:$0xf]
    %v5547 = vld [vmem:[%s0 + $0x374] sm:$0xf]
    %v5548 = vld [vmem:[%s0 + $0x378] sm:$0xf]
    %v5549 = vld [vmem:[%s0 + $0x37c] sm:$0xf]
    %v5550 = vld [vmem:[%s0 + $0x380] sm:$0xf]
    %v5551 = vld [vmem:[%s0 + $0x384] sm:$0xf]
    %v5552 = vld [vmem:[%s0 + $0x388] sm:$0xf]
    %v5553 = vld [vmem:[%s0 + $0x38c] sm:$0xf]
    %v5554 = vld [vmem:[%s0 + $0x390] sm:$0xf]
    %v5555 = vld [vmem:[%s0 + $0x394] sm:$0xf]
    %v5556 = vld [vmem:[%s0 + $0x398] sm:$0xf]
    %v5557 = vld [vmem:[%s0 + $0x39c] sm:$0xf]
    %v5558 = vld [vmem:[%s0 + $0x3a0] sm:$0xf]
    %v5559 = vld [vmem:[%s0 + $0x3a4] sm:$0xf]
    %v5560 = vld [vmem:[%s0 + $0x3a8] sm:$0xf]
    %v5561 = vld [vmem:[%s0 + $0x3ac] sm:$0xf]
    %v5562 = vld [vmem:[%s0 + $0x3b0] sm:$0xf]
    %v5563 = vld [vmem:[%s0 + $0x3b4] sm:$0xf]
    %v5564 = vld [vmem:[%s0 + $0x3b8] sm:$0xf]
    %v5565 = vld [vmem:[%s0 + $0x3bc] sm:$0xf]
    %v5566 = vld [vmem:[%s0 + $0x3c0] sm:$0xf]
    %v5567 = vld [vmem:[%s0 + $0x3c4] sm:$0xf]
    %v5568 = vld [vmem:[%s0 + $0x3c8] sm:$0xf]
    %v5569 = vld [vmem:[%s0 + $0x3cc] sm:$0xf]
    %v5570 = vld [vmem:[%s0 + $0x3d0] sm:$0xf]
    %v5571 = vld [vmem:[%s0 + $0x3d4] sm:$0xf]
    %v5572 = vld [vmem:[%s0 + $0x3d8] sm:$0xf]
    %v5573 = vld [vmem:[%s0 + $0x3dc] sm:$0xf]
    %v5574 = vld [vmem:[%s0 + $0x3e0] sm:$0xf]
    %v5575 = vld [vmem:[%s0 + $0x3e4] sm:$0xf]
    %v5576 = vld [vmem:[%s0 + $0x3e8] sm:$0xf]
    %v5577 = vld [vmem:[%s0 + $0x3ec] sm:$0xf]
    %v5578 = vld [vmem:[%s0 + $0x3f0] sm:$0xf]
    %v5579 = vld [vmem:[%s0 + $0x3f4] sm:$0xf]
    %v5580 = vld [vmem:[%s0 + $0x3f8] sm:$0xf]
    %v5581 = vld [vmem:[%s0 + $0x3fc] sm:$0xf]
    %v5582 = vld [vmem:[%s0 + $0x400] sm:$0xf]
    %v5583 = vld [vmem:[%s0 + $0x404] sm:$0xf]
    %v5584 = vld [vmem:[%s0 + $0x408] sm:$0xf]
    %v5585 = vld [vmem:[%s0 + $0x40c] sm:$0xf]
    %v5586 = vld [vmem:[%s0 + $0x410] sm:$0xf]
    %v5587 = vld [vmem:[%s0 + $0x414] sm:$0xf]
    %v5588 = vld [vmem:[%s0 + $0x418] sm:$0xf]
    %v5589 = vld [vmem:[%s0 + $0x41c] sm:$0xf]
    %v5590 = vld [vmem:[%s0 + $0x420] sm:$0xf]
    %v5591 = vld [vmem:[%s0 + $0x424] sm:$0xf]
    %v5592 = vld [vmem:[%s0 + $0x428] sm:$0xf]
    %v5593 = vld [vmem:[%s0 + $0x42c] sm:$0xf]
    %v5594 = vld [vmem:[%s0 + $0x430] sm:$0xf]
    %v5595 = vld [vmem:[%s0 + $0x434] sm:$0xf]
    %v5596 = vld [vmem:[%s0 + $0x438] sm:$0xf]
    %v5597 = vld [vmem:[%s0 + $0x43c] sm:$0xf]
    %v5598 = vld [vmem:[%s0 + $0x440] sm:$0xf]
    %v5599 = vld [vmem:[%s0 + $0x444] sm:$0xf]
    %v5600 = vld [vmem:[%s0 + $0x448] sm:$0xf]
    %v5601 = vld [vmem:[%s0 + $0x44c] sm:$0xf]
    %v5602 = vld [vmem:[%s0 + $0x450] sm:$0xf]
    %v5603 = vld [vmem:[%s0 + $0x454] sm:$0xf]
    %v5604 = vld [vmem:[%s0 + $0x458] sm:$0xf]
    %v5605 = vld [vmem:[%s0 + $0x45c] sm:$0xf]
    %v5606 = vld [vmem:[%s0 + $0x460] sm:$0xf]
    %v5607 = vld [vmem:[%s0 + $0x464] sm:$0xf]
    %v5608 = vld [vmem:[%s0 + $0x468] sm:$0xf]
    %v5609 = vld [vmem:[%s0 + $0x46c] sm:$0xf]
    %v5610 = vld [vmem:[%s0 + $0x470] sm:$0xf]
    %v5611 = vld [vmem:[%s0 + $0x474] sm:$0xf]
    %v5612 = vld [vmem:[%s0 + $0x478] sm:$0xf]
    %v5613 = vld [vmem:[%s0 + $0x47c] sm:$0xf]
    %s5614 = scalar_lea.vmem %s1, 64
    %v5615 = vld [vmem:[%s5614] sm:$0xf]
    %v5616 = vld [vmem:[%s5614 + $0x4] sm:$0xf]
    %v5617 = vld [vmem:[%s5614 + $0x8] sm:$0xf]
    %v5618 = vld [vmem:[%s5614 + $0xc] sm:$0xf]
    %v5619 = vld [vmem:[%s5614 + $0x10] sm:$0xf]
    %v5620 = vld [vmem:[%s5614 + $0x14] sm:$0xf]
    %v5621 = vld [vmem:[%s5614 + $0x18] sm:$0xf]
    %v5622 = vld [vmem:[%s5614 + $0x1c] sm:$0xf]
    %v5910 = vunpack.c.l.b16 %v5327
    %v5911 = vunpack.c.l.b16 %v5328
    %v5912 = vunpack.c.l.b16 %v5329
    %v5913 = vunpack.c.l.b16 %v5330
    %v5914 = vunpack.c.l.b16 %v5331
    %v5915 = vunpack.c.l.b16 %v5332
    %v5916 = vunpack.c.l.b16 %v5333
    %v5917 = vunpack.c.l.b16 %v5334
    %v5918 = vunpack.c.l.b16 %v5335
    %v5919 = vunpack.c.l.b16 %v5336
    %v5920 = vunpack.c.l.b16 %v5337
    %v5921 = vunpack.c.l.b16 %v5338
    %v5922 = vunpack.c.l.b16 %v5339
    %v5923 = vunpack.c.l.b16 %v5340
    %v5924 = vunpack.c.l.b16 %v5341
    %v5925 = vunpack.c.l.b16 %v5342
    %v5926 = vunpack.c.l.b16 %v5343
    %v5927 = vunpack.c.l.b16 %v5344
    %v5928 = vunpack.c.l.b16 %v5345
    %v5929 = vunpack.c.l.b16 %v5346
    %v5930 = vunpack.c.l.b16 %v5347
    %v5931 = vunpack.c.l.b16 %v5348
    %v5932 = vunpack.c.l.b16 %v5349
    %v5933 = vunpack.c.l.b16 %v5350
    %v5934 = vunpack.c.l.b16 %v5351
    %v5935 = vunpack.c.l.b16 %v5352
    %v5936 = vunpack.c.l.b16 %v5353
    %v5937 = vunpack.c.l.b16 %v5354
    %v5938 = vunpack.c.l.b16 %v5355
    %v5939 = vunpack.c.l.b16 %v5356
    %v5940 = vunpack.c.l.b16 %v5357
    %v5941 = vunpack.c.l.b16 %v5358
    %v5942 = vunpack.c.l.b16 %v5359
    %v5943 = vunpack.c.l.b16 %v5360
    %v5944 = vunpack.c.l.b16 %v5361
    %v5945 = vunpack.c.l.b16 %v5362
    %v5946 = vunpack.c.l.b16 %v5363
    %v5947 = vunpack.c.l.b16 %v5364
    %v5948 = vunpack.c.l.b16 %v5365
    %v5949 = vunpack.c.l.b16 %v5366
    %v5950 = vunpack.c.l.b16 %v5367
    %v5951 = vunpack.c.l.b16 %v5368
    %v5952 = vunpack.c.l.b16 %v5369
    %v5953 = vunpack.c.l.b16 %v5370
    %v5954 = vunpack.c.l.b16 %v5371
    %v5955 = vunpack.c.l.b16 %v5372
    %v5956 = vunpack.c.l.b16 %v5373
    %v5957 = vunpack.c.l.b16 %v5374
    %v5958 = vunpack.c.l.b16 %v5375
    %v5959 = vunpack.c.l.b16 %v5376
    %v5960 = vunpack.c.l.b16 %v5377
    %v5961 = vunpack.c.l.b16 %v5378
    %v5962 = vunpack.c.l.b16 %v5379
    %v5963 = vunpack.c.l.b16 %v5380
    %v5964 = vunpack.c.l.b16 %v5381
    %v5965 = vunpack.c.l.b16 %v5382
    %v5966 = vunpack.c.l.b16 %v5383
    %v5967 = vunpack.c.l.b16 %v5384
    %v5968 = vunpack.c.l.b16 %v5385
    %v5969 = vunpack.c.l.b16 %v5386
    %v5970 = vunpack.c.l.b16 %v5387
    %v5971 = vunpack.c.l.b16 %v5388
    %v5972 = vunpack.c.l.b16 %v5389
    %v5973 = vunpack.c.l.b16 %v5390
    %v5974 = vunpack.c.l.b16 %v5391
    %v5975 = vunpack.c.l.b16 %v5392
    %v5976 = vunpack.c.l.b16 %v5393
    %v5977 = vunpack.c.l.b16 %v5394
    %v5978 = vunpack.c.l.b16 %v5395
    %v5979 = vunpack.c.l.b16 %v5396
    %v5980 = vunpack.c.l.b16 %v5397
    %v5981 = vunpack.c.l.b16 %v5398
    %v5982 = vunpack.c.l.b16 %v5399
    %v5983 = vunpack.c.l.b16 %v5400
    %v5984 = vunpack.c.l.b16 %v5401
    %v5985 = vunpack.c.l.b16 %v5402
    %v5986 = vunpack.c.l.b16 %v5403
    %v5987 = vunpack.c.l.b16 %v5404
    %v5988 = vunpack.c.l.b16 %v5405
    %v5989 = vunpack.c.l.b16 %v5406
    %v5990 = vunpack.c.l.b16 %v5407
    %v5991 = vunpack.c.l.b16 %v5408
    %v5992 = vunpack.c.l.b16 %v5409
    %v5993 = vunpack.c.l.b16 %v5410
    %v5994 = vunpack.c.l.b16 %v5411
    %v5995 = vunpack.c.l.b16 %v5412
    %v5996 = vunpack.c.l.b16 %v5413
    %v5997 = vunpack.c.l.b16 %v5414
    %v5998 = vunpack.c.l.b16 %v5415
    %v5999 = vunpack.c.l.b16 %v5416
    %v6000 = vunpack.c.l.b16 %v5417
    %v6001 = vunpack.c.l.b16 %v5418
    %v6002 = vunpack.c.l.b16 %v5419
    %v6003 = vunpack.c.l.b16 %v5420
    %v6004 = vunpack.c.l.b16 %v5421
    %v6005 = vunpack.c.l.b16 %v5422
    %v6006 = vunpack.c.l.b16 %v5423
    %v6007 = vunpack.c.l.b16 %v5424
    %v6008 = vunpack.c.l.b16 %v5425
    %v6009 = vunpack.c.l.b16 %v5426
    %v6010 = vunpack.c.l.b16 %v5427
    %v6011 = vunpack.c.l.b16 %v5428
    %v6012 = vunpack.c.l.b16 %v5429
    %v6013 = vunpack.c.l.b16 %v5430
    %v6014 = vunpack.c.l.b16 %v5431
    %v6015 = vunpack.c.l.b16 %v5432
    %v6016 = vunpack.c.l.b16 %v5433
    %v6017 = vunpack.c.l.b16 %v5434
    %v6018 = vunpack.c.l.b16 %v5435
    %v6019 = vunpack.c.l.b16 %v5436
    %v6020 = vunpack.c.l.b16 %v5437
    %v6021 = vunpack.c.l.b16 %v5438
    %v6022 = vunpack.c.l.b16 %v5439
    %v6023 = vunpack.c.l.b16 %v5440
    %v6024 = vunpack.c.l.b16 %v5441
    %v6025 = vunpack.c.l.b16 %v5442
    %v6026 = vunpack.c.l.b16 %v5443
    %v6027 = vunpack.c.l.b16 %v5444
    %v6028 = vunpack.c.l.b16 %v5445
    %v6029 = vunpack.c.l.b16 %v5446
    %v6030 = vunpack.c.l.b16 %v5447
    %v6031 = vunpack.c.l.b16 %v5448
    %v6032 = vunpack.c.l.b16 %v5449
    %v6033 = vunpack.c.l.b16 %v5450
    %v6034 = vunpack.c.l.b16 %v5451
    %v6035 = vunpack.c.l.b16 %v5452
    %v6036 = vunpack.c.l.b16 %v5453
    %v6037 = vunpack.c.l.b16 %v5454
    %v6038 = vunpack.c.l.b16 %v5455
    %v6039 = vunpack.c.l.b16 %v5456
    %v6040 = vunpack.c.l.b16 %v5457
    %v6041 = vunpack.c.l.b16 %v5458
    %v6042 = vunpack.c.l.b16 %v5459
    %v6043 = vunpack.c.l.b16 %v5460
    %v6044 = vunpack.c.l.b16 %v5461
    %v6045 = vunpack.c.l.b16 %v5462
    %v6046 = vunpack.c.l.b16 %v5463
    %v6047 = vunpack.c.l.b16 %v5464
    %v6048 = vunpack.c.l.b16 %v5465
    %v6049 = vunpack.c.l.b16 %v5466
    %v6050 = vunpack.c.l.b16 %v5467
    %v6051 = vunpack.c.l.b16 %v5468
    %v6052 = vunpack.c.l.b16 %v5469
    %v6053 = vunpack.c.l.b16 %v5470
    %v6054 = vunpack.c.l.b16 %v5471
    %v6055 = vunpack.c.l.b16 %v5472
    %v6056 = vunpack.c.l.b16 %v5473
    %v6057 = vunpack.c.l.b16 %v5474
    %v6058 = vunpack.c.l.b16 %v5475
    %v6059 = vunpack.c.l.b16 %v5476
    %v6060 = vunpack.c.l.b16 %v5477
    %v6061 = vunpack.c.l.b16 %v5478
    %v6062 = vunpack.c.l.b16 %v5479
    %v6063 = vunpack.c.l.b16 %v5480
    %v6064 = vunpack.c.l.b16 %v5481
    %v6065 = vunpack.c.l.b16 %v5482
    %v6066 = vunpack.c.l.b16 %v5483
    %v6067 = vunpack.c.l.b16 %v5484
    %v6068 = vunpack.c.l.b16 %v5485
    %v6069 = vunpack.c.l.b16 %v5486
    %v6070 = vunpack.c.l.b16 %v5487
    %v6071 = vunpack.c.l.b16 %v5488
    %v6072 = vunpack.c.l.b16 %v5489
    %v6073 = vunpack.c.l.b16 %v5490
    %v6074 = vunpack.c.l.b16 %v5491
    %v6075 = vunpack.c.l.b16 %v5492
    %v6076 = vunpack.c.l.b16 %v5493
    %v6077 = vunpack.c.l.b16 %v5494
    %v6078 = vunpack.c.l.b16 %v5495
    %v6079 = vunpack.c.l.b16 %v5496
    %v6080 = vunpack.c.l.b16 %v5497
    %v6081 = vunpack.c.l.b16 %v5498
    %v6082 = vunpack.c.l.b16 %v5499
    %v6083 = vunpack.c.l.b16 %v5500
    %v6084 = vunpack.c.l.b16 %v5501
    %v6085 = vunpack.c.l.b16 %v5502
    %v6086 = vunpack.c.l.b16 %v5503
    %v6087 = vunpack.c.l.b16 %v5504
    %v6088 = vunpack.c.l.b16 %v5505
    %v6089 = vunpack.c.l.b16 %v5506
    %v6090 = vunpack.c.l.b16 %v5507
    %v6091 = vunpack.c.l.b16 %v5508
    %v6092 = vunpack.c.l.b16 %v5509
    %v6093 = vunpack.c.l.b16 %v5510
    %v6094 = vunpack.c.l.b16 %v5511
    %v6095 = vunpack.c.l.b16 %v5512
    %v6096 = vunpack.c.l.b16 %v5513
    %v6097 = vunpack.c.l.b16 %v5514
    %v6098 = vunpack.c.l.b16 %v5515
    %v6099 = vunpack.c.l.b16 %v5516
    %v6100 = vunpack.c.l.b16 %v5517
    %v6101 = vunpack.c.l.b16 %v5518
    %v6102 = vunpack.c.l.b16 %v5519
    %v6103 = vunpack.c.l.b16 %v5520
    %v6104 = vunpack.c.l.b16 %v5521
    %v6105 = vunpack.c.l.b16 %v5522
    %v6106 = vunpack.c.l.b16 %v5523
    %v6107 = vunpack.c.l.b16 %v5524
    %v6108 = vunpack.c.l.b16 %v5525
    %v6109 = vunpack.c.l.b16 %v5526
    %v6110 = vunpack.c.l.b16 %v5527
    %v6111 = vunpack.c.l.b16 %v5528
    %v6112 = vunpack.c.l.b16 %v5529
    %v6113 = vunpack.c.l.b16 %v5530
    %v6114 = vunpack.c.l.b16 %v5531
    %v6115 = vunpack.c.l.b16 %v5532
    %v6116 = vunpack.c.l.b16 %v5533
    %v6117 = vunpack.c.l.b16 %v5534
    %v6118 = vunpack.c.l.b16 %v5535
    %v6119 = vunpack.c.l.b16 %v5536
    %v6120 = vunpack.c.l.b16 %v5537
    %v6121 = vunpack.c.l.b16 %v5538
    %v6122 = vunpack.c.l.b16 %v5539
    %v6123 = vunpack.c.l.b16 %v5540
    %v6124 = vunpack.c.l.b16 %v5541
    %v6125 = vunpack.c.l.b16 %v5542
    %v6126 = vunpack.c.l.b16 %v5543
    %v6127 = vunpack.c.l.b16 %v5544
    %v6128 = vunpack.c.l.b16 %v5545
    %v6129 = vunpack.c.l.b16 %v5546
    %v6130 = vunpack.c.l.b16 %v5547
    %v6131 = vunpack.c.l.b16 %v5548
    %v6132 = vunpack.c.l.b16 %v5549
    %v6133 = vunpack.c.l.b16 %v5550
    %v6134 = vunpack.c.l.b16 %v5551
    %v6135 = vunpack.c.l.b16 %v5552
    %v6136 = vunpack.c.l.b16 %v5553
    %v6137 = vunpack.c.l.b16 %v5554
    %v6138 = vunpack.c.l.b16 %v5555
    %v6139 = vunpack.c.l.b16 %v5556
    %v6140 = vunpack.c.l.b16 %v5557
    %v6141 = vunpack.c.l.b16 %v5558
    %v6142 = vunpack.c.l.b16 %v5559
    %v6143 = vunpack.c.l.b16 %v5560
    %v6144 = vunpack.c.l.b16 %v5561
    %v6145 = vunpack.c.l.b16 %v5562
    %v6146 = vunpack.c.l.b16 %v5563
    %v6147 = vunpack.c.l.b16 %v5564
    %v6148 = vunpack.c.l.b16 %v5565
    %v6149 = vunpack.c.l.b16 %v5566
    %v6150 = vunpack.c.l.b16 %v5567
    %v6151 = vunpack.c.l.b16 %v5568
    %v6152 = vunpack.c.l.b16 %v5569
    %v6153 = vunpack.c.l.b16 %v5570
    %v6154 = vunpack.c.l.b16 %v5571
    %v6155 = vunpack.c.l.b16 %v5572
    %v6156 = vunpack.c.l.b16 %v5573
    %v6157 = vunpack.c.l.b16 %v5574
    %v6158 = vunpack.c.l.b16 %v5575
    %v6159 = vunpack.c.l.b16 %v5576
    %v6160 = vunpack.c.l.b16 %v5577
    %v6161 = vunpack.c.l.b16 %v5578
    %v6162 = vunpack.c.l.b16 %v5579
    %v6163 = vunpack.c.l.b16 %v5580
    %v6164 = vunpack.c.l.b16 %v5581
    %v6165 = vunpack.c.l.b16 %v5582
    %v6166 = vunpack.c.l.b16 %v5583
    %v6167 = vunpack.c.l.b16 %v5584
    %v6168 = vunpack.c.l.b16 %v5585
    %v6169 = vunpack.c.l.b16 %v5586
    %v6170 = vunpack.c.l.b16 %v5587
    %v6171 = vunpack.c.l.b16 %v5588
    %v6172 = vunpack.c.l.b16 %v5589
    %v6173 = vunpack.c.l.b16 %v5590
    %v6174 = vunpack.c.l.b16 %v5591
    %v6175 = vunpack.c.l.b16 %v5592
    %v6176 = vunpack.c.l.b16 %v5593
    %v6177 = vunpack.c.l.b16 %v5594
    %v6178 = vunpack.c.l.b16 %v5595
    %v6179 = vunpack.c.l.b16 %v5596
    %v6180 = vunpack.c.l.b16 %v5597
    %v6181 = vunpack.c.l.b16 %v5598
    %v6182 = vunpack.c.l.b16 %v5599
    %v6183 = vunpack.c.l.b16 %v5600
    %v6184 = vunpack.c.l.b16 %v5601
    %v6185 = vunpack.c.l.b16 %v5602
    %v6186 = vunpack.c.l.b16 %v5603
    %v6187 = vunpack.c.l.b16 %v5604
    %v6188 = vunpack.c.l.b16 %v5605
    %v6189 = vunpack.c.l.b16 %v5606
    %v6190 = vunpack.c.l.b16 %v5607
    %v6191 = vunpack.c.l.b16 %v5608
    %v6192 = vunpack.c.l.b16 %v5609
    %v6193 = vunpack.c.l.b16 %v5610
    %v6194 = vunpack.c.l.b16 %v5611
    %v6195 = vunpack.c.l.b16 %v5612
    %v6196 = vunpack.c.l.b16 %v5613
    %v6197 = vpack.c.b16 %v5911, %v5910
    %v6198 = vpack.c.b16 %v5913, %v5912
    %v6199 = vpack.c.b16 %v5915, %v5914
    %v6200 = vpack.c.b16 %v5917, %v5916
    %v6201 = vpack.c.b16 %v5919, %v5918
    %v6202 = vpack.c.b16 %v5921, %v5920
    %v6203 = vpack.c.b16 %v5923, %v5922
    %v6204 = vpack.c.b16 %v5925, %v5924
    %v6205 = vpack.c.b16 %v5927, %v5926
    %v6206 = vpack.c.b16 %v5929, %v5928
    %v6207 = vpack.c.b16 %v5931, %v5930
    %v6208 = vpack.c.b16 %v5933, %v5932
    %v6209 = vpack.c.b16 %v5935, %v5934
    %v6210 = vpack.c.b16 %v5937, %v5936
    %v6211 = vpack.c.b16 %v5939, %v5938
    %v6212 = vpack.c.b16 %v5941, %v5940
    %v6213 = vpack.c.b16 %v5943, %v5942
    %v6214 = vpack.c.b16 %v5945, %v5944
    %v6215 = vpack.c.b16 %v5947, %v5946
    %v6216 = vpack.c.b16 %v5949, %v5948
    %v6217 = vpack.c.b16 %v5951, %v5950
    %v6218 = vpack.c.b16 %v5953, %v5952
    %v6219 = vpack.c.b16 %v5955, %v5954
    %v6220 = vpack.c.b16 %v5957, %v5956
    %v6221 = vpack.c.b16 %v5959, %v5958
    %v6222 = vpack.c.b16 %v5961, %v5960
    %v6223 = vpack.c.b16 %v5963, %v5962
    %v6224 = vpack.c.b16 %v5965, %v5964
    %v6225 = vpack.c.b16 %v5967, %v5966
    %v6226 = vpack.c.b16 %v5969, %v5968
    %v6227 = vpack.c.b16 %v5971, %v5970
    %v6228 = vpack.c.b16 %v5973, %v5972
    %v6229 = vpack.c.b16 %v5975, %v5974
    %v6230 = vpack.c.b16 %v5977, %v5976
    %v6231 = vpack.c.b16 %v5979, %v5978
    %v6232 = vpack.c.b16 %v5981, %v5980
    %v6233 = vpack.c.b16 %v5983, %v5982
    %v6234 = vpack.c.b16 %v5985, %v5984
    %v6235 = vpack.c.b16 %v5987, %v5986
    %v6236 = vpack.c.b16 %v5989, %v5988
    %v6237 = vpack.c.b16 %v5991, %v5990
    %v6238 = vpack.c.b16 %v5993, %v5992
    %v6239 = vpack.c.b16 %v5995, %v5994
    %v6240 = vpack.c.b16 %v5997, %v5996
    %v6241 = vpack.c.b16 %v5999, %v5998
    %v6242 = vpack.c.b16 %v6001, %v6000
    %v6243 = vpack.c.b16 %v6003, %v6002
    %v6244 = vpack.c.b16 %v6005, %v6004
    %v6245 = vpack.c.b16 %v6007, %v6006
    %v6246 = vpack.c.b16 %v6009, %v6008
    %v6247 = vpack.c.b16 %v6011, %v6010
    %v6248 = vpack.c.b16 %v6013, %v6012
    %v6249 = vpack.c.b16 %v6015, %v6014
    %v6250 = vpack.c.b16 %v6017, %v6016
    %v6251 = vpack.c.b16 %v6019, %v6018
    %v6252 = vpack.c.b16 %v6021, %v6020
    %v6253 = vpack.c.b16 %v6023, %v6022
    %v6254 = vpack.c.b16 %v6025, %v6024
    %v6255 = vpack.c.b16 %v6027, %v6026
    %v6256 = vpack.c.b16 %v6029, %v6028
    %v6257 = vpack.c.b16 %v6031, %v6030
    %v6258 = vpack.c.b16 %v6033, %v6032
    %v6259 = vpack.c.b16 %v6035, %v6034
    %v6260 = vpack.c.b16 %v6037, %v6036
    %v6261 = vpack.c.b16 %v6039, %v6038
    %v6262 = vpack.c.b16 %v6041, %v6040
    %v6263 = vpack.c.b16 %v6043, %v6042
    %v6264 = vpack.c.b16 %v6045, %v6044
    %v6265 = vpack.c.b16 %v6047, %v6046
    %v6266 = vpack.c.b16 %v6049, %v6048
    %v6267 = vpack.c.b16 %v6051, %v6050
    %v6268 = vpack.c.b16 %v6053, %v6052
    %v6269 = vpack.c.b16 %v6055, %v6054
    %v6270 = vpack.c.b16 %v6057, %v6056
    %v6271 = vpack.c.b16 %v6059, %v6058
    %v6272 = vpack.c.b16 %v6061, %v6060
    %v6273 = vpack.c.b16 %v6063, %v6062
    %v6274 = vpack.c.b16 %v6065, %v6064
    %v6275 = vpack.c.b16 %v6067, %v6066
    %v6276 = vpack.c.b16 %v6069, %v6068
    %v6277 = vpack.c.b16 %v6071, %v6070
    %v6278 = vpack.c.b16 %v6073, %v6072
    %v6279 = vpack.c.b16 %v6075, %v6074
    %v6280 = vpack.c.b16 %v6077, %v6076
    %v6281 = vpack.c.b16 %v6079, %v6078
    %v6282 = vpack.c.b16 %v6081, %v6080
    %v6283 = vpack.c.b16 %v6083, %v6082
    %v6284 = vpack.c.b16 %v6085, %v6084
    %v6285 = vpack.c.b16 %v6087, %v6086
    %v6286 = vpack.c.b16 %v6089, %v6088
    %v6287 = vpack.c.b16 %v6091, %v6090
    %v6288 = vpack.c.b16 %v6093, %v6092
    %v6289 = vpack.c.b16 %v6095, %v6094
    %v6290 = vpack.c.b16 %v6097, %v6096
    %v6291 = vpack.c.b16 %v6099, %v6098
    %v6292 = vpack.c.b16 %v6101, %v6100
    %v6293 = vpack.c.b16 %v6103, %v6102
    %v6294 = vpack.c.b16 %v6105, %v6104
    %v6295 = vpack.c.b16 %v6107, %v6106
    %v6296 = vpack.c.b16 %v6109, %v6108
    %v6297 = vpack.c.b16 %v6111, %v6110
    %v6298 = vpack.c.b16 %v6113, %v6112
    %v6299 = vpack.c.b16 %v6115, %v6114
    %v6300 = vpack.c.b16 %v6117, %v6116
    %v6301 = vpack.c.b16 %v6119, %v6118
    %v6302 = vpack.c.b16 %v6121, %v6120
    %v6303 = vpack.c.b16 %v6123, %v6122
    %v6304 = vpack.c.b16 %v6125, %v6124
    %v6305 = vpack.c.b16 %v6127, %v6126
    %v6306 = vpack.c.b16 %v6129, %v6128
    %v6307 = vpack.c.b16 %v6131, %v6130
    %v6308 = vpack.c.b16 %v6133, %v6132
    %v6309 = vpack.c.b16 %v6135, %v6134
    %v6310 = vpack.c.b16 %v6137, %v6136
    %v6311 = vpack.c.b16 %v6139, %v6138
    %v6312 = vpack.c.b16 %v6141, %v6140
    %v6313 = vpack.c.b16 %v6143, %v6142
    %v6314 = vpack.c.b16 %v6145, %v6144
    %v6315 = vpack.c.b16 %v6147, %v6146
    %v6316 = vpack.c.b16 %v6149, %v6148
    %v6317 = vpack.c.b16 %v6151, %v6150
    %v6318 = vpack.c.b16 %v6153, %v6152
    %v6319 = vpack.c.b16 %v6155, %v6154
    %v6320 = vpack.c.b16 %v6157, %v6156
    %v6321 = vpack.c.b16 %v6159, %v6158
    %v6322 = vpack.c.b16 %v6161, %v6160
    %v6323 = vpack.c.b16 %v6163, %v6162
    %v6324 = vpack.c.b16 %v6165, %v6164
    %v6325 = vpack.c.b16 %v6167, %v6166
    %v6326 = vpack.c.b16 %v6169, %v6168
    %v6327 = vpack.c.b16 %v6171, %v6170
    %v6328 = vpack.c.b16 %v6173, %v6172
    %v6329 = vpack.c.b16 %v6175, %v6174
    %v6330 = vpack.c.b16 %v6177, %v6176
    %v6331 = vpack.c.b16 %v6179, %v6178
    %v6332 = vpack.c.b16 %v6181, %v6180
    %v6333 = vpack.c.b16 %v6183, %v6182
    %v6334 = vpack.c.b16 %v6185, %v6184
    %v6335 = vpack.c.b16 %v6187, %v6186
    %v6336 = vpack.c.b16 %v6189, %v6188
    %v6337 = vpack.c.b16 %v6191, %v6190
    %v6338 = vpack.c.b16 %v6193, %v6192
    %v6339 = vpack.c.b16 %v6195, %v6194
    %v6340 = vpack.c.b16 %v6196, %v6196
    %vm6341 = vcmask 1045504
    %v6342 = vrot.slane %v6197, 2
    %v6343 = vrot.slane %v6198, 2
    %v6344 = vsel %vm6341, %v6342, %v6343
    %v6345 = vrot.slane %v6199, 2
    %v6346 = vsel %vm6341, %v6343, %v6345
    %v6347 = vrot.slane %v6200, 2
    %v6348 = vsel %vm6341, %v6345, %v6347
    %v6349 = vrot.slane %v6201, 2
    %v6350 = vsel %vm6341, %v6347, %v6349
    %v6351 = vrot.slane %v6202, 2
    %v6352 = vsel %vm6341, %v6349, %v6351
    %v6353 = vrot.slane %v6203, 2
    %v6354 = vsel %vm6341, %v6351, %v6353
    %v6355 = vrot.slane %v6204, 2
    %v6356 = vsel %vm6341, %v6353, %v6355
    %v6357 = vrot.slane %v6205, 2
    %v6358 = vsel %vm6341, %v6355, %v6357
    %v6359 = vrot.slane %v6206, 2
    %v6360 = vsel %vm6341, %v6357, %v6359
    %v6361 = vrot.slane %v6207, 2
    %v6362 = vsel %vm6341, %v6359, %v6361
    %v6363 = vrot.slane %v6208, 2
    %v6364 = vsel %vm6341, %v6361, %v6363
    %v6365 = vrot.slane %v6209, 2
    %v6366 = vsel %vm6341, %v6363, %v6365
    %v6367 = vrot.slane %v6210, 2
    %v6368 = vsel %vm6341, %v6365, %v6367
    %v6369 = vrot.slane %v6211, 2
    %v6370 = vsel %vm6341, %v6367, %v6369
    %v6371 = vrot.slane %v6212, 2
    %v6372 = vsel %vm6341, %v6369, %v6371
    %v6373 = vrot.slane %v6213, 2
    %v6374 = vsel %vm6341, %v6371, %v6373
    %v6375 = vrot.slane %v6214, 2
    %v6376 = vsel %vm6341, %v6373, %v6375
    %v6377 = vrot.slane %v6215, 2
    %v6378 = vsel %vm6341, %v6375, %v6377
    %v6379 = vrot.slane %v6216, 2
    %v6380 = vsel %vm6341, %v6377, %v6379
    %v6381 = vrot.slane %v6217, 2
    %v6382 = vsel %vm6341, %v6379, %v6381
    %v6383 = vrot.slane %v6218, 2
    %v6384 = vsel %vm6341, %v6381, %v6383
    %v6385 = vrot.slane %v6219, 2
    %v6386 = vsel %vm6341, %v6383, %v6385
    %v6387 = vrot.slane %v6220, 2
    %v6388 = vsel %vm6341, %v6385, %v6387
    %v6389 = vrot.slane %v6221, 2
    %v6390 = vsel %vm6341, %v6387, %v6389
    %v6391 = vrot.slane %v6222, 2
    %v6392 = vsel %vm6341, %v6389, %v6391
    %v6393 = vrot.slane %v6223, 2
    %v6394 = vsel %vm6341, %v6391, %v6393
    %v6395 = vrot.slane %v6224, 2
    %v6396 = vsel %vm6341, %v6393, %v6395
    %v6397 = vrot.slane %v6225, 2
    %v6398 = vsel %vm6341, %v6395, %v6397
    %v6399 = vrot.slane %v6226, 2
    %v6400 = vsel %vm6341, %v6397, %v6399
    %v6401 = vrot.slane %v6227, 2
    %v6402 = vsel %vm6341, %v6399, %v6401
    %v6403 = vrot.slane %v6228, 2
    %v6404 = vsel %vm6341, %v6401, %v6403
    %v6405 = vrot.slane %v6229, 2
    %v6406 = vsel %vm6341, %v6403, %v6405
    %v6407 = vrot.slane %v6230, 2
    %v6408 = vsel %vm6341, %v6405, %v6407
    %v6409 = vrot.slane %v6231, 2
    %v6410 = vsel %vm6341, %v6407, %v6409
    %v6411 = vrot.slane %v6232, 2
    %v6412 = vsel %vm6341, %v6409, %v6411
    %v6413 = vrot.slane %v6233, 2
    %v6414 = vsel %vm6341, %v6411, %v6413
    %v6415 = vrot.slane %v6234, 2
    %v6416 = vsel %vm6341, %v6413, %v6415
    %v6417 = vrot.slane %v6235, 2
    %v6418 = vsel %vm6341, %v6415, %v6417
    %v6419 = vrot.slane %v6236, 2
    %v6420 = vsel %vm6341, %v6417, %v6419
    %v6421 = vrot.slane %v6237, 2
    %v6422 = vsel %vm6341, %v6419, %v6421
    %v6423 = vrot.slane %v6238, 2
    %v6424 = vsel %vm6341, %v6421, %v6423
    %v6425 = vrot.slane %v6239, 2
    %v6426 = vsel %vm6341, %v6423, %v6425
    %v6427 = vrot.slane %v6240, 2
    %v6428 = vsel %vm6341, %v6425, %v6427
    %v6429 = vrot.slane %v6241, 2
    %v6430 = vsel %vm6341, %v6427, %v6429
    %v6431 = vrot.slane %v6242, 2
    %v6432 = vsel %vm6341, %v6429, %v6431
    %v6433 = vrot.slane %v6243, 2
    %v6434 = vsel %vm6341, %v6431, %v6433
    %v6435 = vrot.slane %v6244, 2
    %v6436 = vsel %vm6341, %v6433, %v6435
    %v6437 = vrot.slane %v6245, 2
    %v6438 = vsel %vm6341, %v6435, %v6437
    %v6439 = vrot.slane %v6246, 2
    %v6440 = vsel %vm6341, %v6437, %v6439
    %v6441 = vrot.slane %v6247, 2
    %v6442 = vsel %vm6341, %v6439, %v6441
    %v6443 = vrot.slane %v6248, 2
    %v6444 = vsel %vm6341, %v6441, %v6443
    %v6445 = vrot.slane %v6249, 2
    %v6446 = vsel %vm6341, %v6443, %v6445
    %v6447 = vrot.slane %v6250, 2
    %v6448 = vsel %vm6341, %v6445, %v6447
    %v6449 = vrot.slane %v6251, 2
    %v6450 = vsel %vm6341, %v6447, %v6449
    %v6451 = vrot.slane %v6252, 2
    %v6452 = vsel %vm6341, %v6449, %v6451
    %v6453 = vrot.slane %v6253, 2
    %v6454 = vsel %vm6341, %v6451, %v6453
    %v6455 = vrot.slane %v6254, 2
    %v6456 = vsel %vm6341, %v6453, %v6455
    %v6457 = vrot.slane %v6255, 2
    %v6458 = vsel %vm6341, %v6455, %v6457
    %v6459 = vrot.slane %v6256, 2
    %v6460 = vsel %vm6341, %v6457, %v6459
    %v6461 = vrot.slane %v6257, 2
    %v6462 = vsel %vm6341, %v6459, %v6461
    %v6463 = vrot.slane %v6258, 2
    %v6464 = vsel %vm6341, %v6461, %v6463
    %v6465 = vrot.slane %v6259, 2
    %v6466 = vsel %vm6341, %v6463, %v6465
    %v6467 = vrot.slane %v6260, 2
    %v6468 = vsel %vm6341, %v6465, %v6467
    %v6469 = vrot.slane %v6261, 2
    %v6470 = vsel %vm6341, %v6467, %v6469
    %v6471 = vrot.slane %v6262, 2
    %v6472 = vsel %vm6341, %v6469, %v6471
    %v6473 = vrot.slane %v6263, 2
    %v6474 = vsel %vm6341, %v6471, %v6473
    %v6475 = vrot.slane %v6264, 2
    %v6476 = vsel %vm6341, %v6473, %v6475
    %v6477 = vrot.slane %v6265, 2
    %v6478 = vsel %vm6341, %v6475, %v6477
    %v6479 = vrot.slane %v6266, 2
    %v6480 = vsel %vm6341, %v6477, %v6479
    %v6481 = vrot.slane %v6267, 2
    %v6482 = vsel %vm6341, %v6479, %v6481
    %v6483 = vrot.slane %v6268, 2
    %v6484 = vsel %vm6341, %v6481, %v6483
    %v6485 = vrot.slane %v6269, 2
    %v6486 = vsel %vm6341, %v6483, %v6485
    %v6487 = vrot.slane %v6270, 2
    %v6488 = vsel %vm6341, %v6485, %v6487
    %v6489 = vrot.slane %v6271, 2
    %v6490 = vsel %vm6341, %v6487, %v6489
    %v6491 = vrot.slane %v6272, 2
    %v6492 = vsel %vm6341, %v6489, %v6491
    %v6493 = vrot.slane %v6273, 2
    %v6494 = vsel %vm6341, %v6491, %v6493
    %v6495 = vrot.slane %v6274, 2
    %v6496 = vsel %vm6341, %v6493, %v6495
    %v6497 = vrot.slane %v6275, 2
    %v6498 = vsel %vm6341, %v6495, %v6497
    %v6499 = vrot.slane %v6276, 2
    %v6500 = vsel %vm6341, %v6497, %v6499
    %v6501 = vrot.slane %v6277, 2
    %v6502 = vsel %vm6341, %v6499, %v6501
    %v6503 = vrot.slane %v6278, 2
    %v6504 = vsel %vm6341, %v6501, %v6503
    %v6505 = vrot.slane %v6279, 2
    %v6506 = vsel %vm6341, %v6503, %v6505
    %v6507 = vrot.slane %v6280, 2
    %v6508 = vsel %vm6341, %v6505, %v6507
    %v6509 = vrot.slane %v6281, 2
    %v6510 = vsel %vm6341, %v6507, %v6509
    %v6511 = vrot.slane %v6282, 2
    %v6512 = vsel %vm6341, %v6509, %v6511
    %v6513 = vrot.slane %v6283, 2
    %v6514 = vsel %vm6341, %v6511, %v6513
    %v6515 = vrot.slane %v6284, 2
    %v6516 = vsel %vm6341, %v6513, %v6515
    %v6517 = vrot.slane %v6285, 2
    %v6518 = vsel %vm6341, %v6515, %v6517
    %v6519 = vrot.slane %v6286, 2
    %v6520 = vsel %vm6341, %v6517, %v6519
    %v6521 = vrot.slane %v6287, 2
    %v6522 = vsel %vm6341, %v6519, %v6521
    %v6523 = vrot.slane %v6288, 2
    %v6524 = vsel %vm6341, %v6521, %v6523
    %v6525 = vrot.slane %v6289, 2
    %v6526 = vsel %vm6341, %v6523, %v6525
    %v6527 = vrot.slane %v6290, 2
    %v6528 = vsel %vm6341, %v6525, %v6527
    %v6529 = vrot.slane %v6291, 2
    %v6530 = vsel %vm6341, %v6527, %v6529
    %v6531 = vrot.slane %v6292, 2
    %v6532 = vsel %vm6341, %v6529, %v6531
    %v6533 = vrot.slane %v6293, 2
    %v6534 = vsel %vm6341, %v6531, %v6533
    %v6535 = vrot.slane %v6294, 2
    %v6536 = vsel %vm6341, %v6533, %v6535
    %v6537 = vrot.slane %v6295, 2
    %v6538 = vsel %vm6341, %v6535, %v6537
    %v6539 = vrot.slane %v6296, 2
    %v6540 = vsel %vm6341, %v6537, %v6539
    %v6541 = vrot.slane %v6297, 2
    %v6542 = vsel %vm6341, %v6539, %v6541
    %v6543 = vrot.slane %v6298, 2
    %v6544 = vsel %vm6341, %v6541, %v6543
    %v6545 = vrot.slane %v6299, 2
    %v6546 = vsel %vm6341, %v6543, %v6545
    %v6547 = vrot.slane %v6300, 2
    %v6548 = vsel %vm6341, %v6545, %v6547
    %v6549 = vrot.slane %v6301, 2
    %v6550 = vsel %vm6341, %v6547, %v6549
    %v6551 = vrot.slane %v6302, 2
    %v6552 = vsel %vm6341, %v6549, %v6551
    %v6553 = vrot.slane %v6303, 2
    %v6554 = vsel %vm6341, %v6551, %v6553
    %v6555 = vrot.slane %v6304, 2
    %v6556 = vsel %vm6341, %v6553, %v6555
    %v6557 = vrot.slane %v6305, 2
    %v6558 = vsel %vm6341, %v6555, %v6557
    %v6559 = vrot.slane %v6306, 2
    %v6560 = vsel %vm6341, %v6557, %v6559
    %v6561 = vrot.slane %v6307, 2
    %v6562 = vsel %vm6341, %v6559, %v6561
    %v6563 = vrot.slane %v6308, 2
    %v6564 = vsel %vm6341, %v6561, %v6563
    %v6565 = vrot.slane %v6309, 2
    %v6566 = vsel %vm6341, %v6563, %v6565
    %v6567 = vrot.slane %v6310, 2
    %v6568 = vsel %vm6341, %v6565, %v6567
    %v6569 = vrot.slane %v6311, 2
    %v6570 = vsel %vm6341, %v6567, %v6569
    %v6571 = vrot.slane %v6312, 2
    %v6572 = vsel %vm6341, %v6569, %v6571
    %v6573 = vrot.slane %v6313, 2
    %v6574 = vsel %vm6341, %v6571, %v6573
    %v6575 = vrot.slane %v6314, 2
    %v6576 = vsel %vm6341, %v6573, %v6575
    %v6577 = vrot.slane %v6315, 2
    %v6578 = vsel %vm6341, %v6575, %v6577
    %v6579 = vrot.slane %v6316, 2
    %v6580 = vsel %vm6341, %v6577, %v6579
    %v6581 = vrot.slane %v6317, 2
    %v6582 = vsel %vm6341, %v6579, %v6581
    %v6583 = vrot.slane %v6318, 2
    %v6584 = vsel %vm6341, %v6581, %v6583
    %v6585 = vrot.slane %v6319, 2
    %v6586 = vsel %vm6341, %v6583, %v6585
    %v6587 = vrot.slane %v6320, 2
    %v6588 = vsel %vm6341, %v6585, %v6587
    %v6589 = vrot.slane %v6321, 2
    %v6590 = vsel %vm6341, %v6587, %v6589
    %v6591 = vrot.slane %v6322, 2
    %v6592 = vsel %vm6341, %v6589, %v6591
    %v6593 = vrot.slane %v6323, 2
    %v6594 = vsel %vm6341, %v6591, %v6593
    %v6595 = vrot.slane %v6324, 2
    %v6596 = vsel %vm6341, %v6593, %v6595
    %v6597 = vrot.slane %v6325, 2
    %v6598 = vsel %vm6341, %v6595, %v6597
    %v6599 = vrot.slane %v6326, 2
    %v6600 = vsel %vm6341, %v6597, %v6599
    %v6601 = vrot.slane %v6327, 2
    %v6602 = vsel %vm6341, %v6599, %v6601
    %v6603 = vrot.slane %v6328, 2
    %v6604 = vsel %vm6341, %v6601, %v6603
    %v6605 = vrot.slane %v6329, 2
    %v6606 = vsel %vm6341, %v6603, %v6605
    %v6607 = vrot.slane %v6330, 2
    %v6608 = vsel %vm6341, %v6605, %v6607
    %v6609 = vrot.slane %v6331, 2
    %v6610 = vsel %vm6341, %v6607, %v6609
    %v6611 = vrot.slane %v6332, 2
    %v6612 = vsel %vm6341, %v6609, %v6611
    %v6613 = vrot.slane %v6333, 2
    %v6614 = vsel %vm6341, %v6611, %v6613
    %v6615 = vrot.slane %v6334, 2
    %v6616 = vsel %vm6341, %v6613, %v6615
    %v6617 = vrot.slane %v6335, 2
    %v6618 = vsel %vm6341, %v6615, %v6617
    %v6619 = vrot.slane %v6336, 2
    %v6620 = vsel %vm6341, %v6617, %v6619
    %v6621 = vrot.slane %v6337, 2
    %v6622 = vsel %vm6341, %v6619, %v6621
    %v6623 = vrot.slane %v6338, 2
    %v6624 = vsel %vm6341, %v6621, %v6623
    %v6625 = vrot.slane %v6339, 2
    %v6626 = vsel %vm6341, %v6623, %v6625
    %v6627 = vrot.slane %v6340, 2
    %v6628 = vsel %vm6341, %v6625, %v6627
    %v6637 = vunpack.c.l.b16 %v5615
    %v6638 = vunpack.c.l.b16 %v5616
    %v6639 = vunpack.c.l.b16 %v5617
    %v6640 = vunpack.c.l.b16 %v5618
    %v6641 = vunpack.c.l.b16 %v5619
    %v6642 = vunpack.c.l.b16 %v5620
    %v6643 = vunpack.c.l.b16 %v5621
    %v6644 = vunpack.c.l.b16 %v5622
    %v6645 = vpack.c.b16 %v6638, %v6637
    %v6646 = vpack.c.b16 %v6640, %v6639
    %v6647 = vpack.c.b16 %v6642, %v6641
    %v6648 = vpack.c.b16 %v6644, %v6643
    %v6654 = vsel %vm2214, %v6344, 0
    %v6657 = vsel %vm2214, %v6346, 0
    %v6660 = vsel %vm2214, %v6348, 0
    %v6663 = vsel %vm2214, %v6350, 0
    %v6666 = vsel %vm2214, %v6352, 0
    %v6669 = vsel %vm2214, %v6354, 0
    %v6672 = vsel %vm2214, %v6356, 0
    %v6675 = vsel %vm2214, %v6358, 0
    %v6678 = vsel %vm2214, %v6360, 0
    %v6681 = vsel %vm2214, %v6362, 0
    %v6684 = vsel %vm2214, %v6364, 0
    %v6687 = vsel %vm2214, %v6366, 0
    %v6690 = vsel %vm2214, %v6368, 0
    %v6693 = vsel %vm2214, %v6370, 0
    %v6696 = vsel %vm2214, %v6372, 0
    %v6699 = vsel %vm2214, %v6374, 0
    %v6702 = vsel %vm2214, %v6376, 0
    %v6705 = vsel %vm2214, %v6378, 0
    %v6708 = vsel %vm2214, %v6380, 0
    %v6711 = vsel %vm2214, %v6382, 0
    %v6714 = vsel %vm2214, %v6384, 0
    %v6717 = vsel %vm2214, %v6386, 0
    %v6720 = vsel %vm2214, %v6388, 0
    %v6723 = vsel %vm2214, %v6390, 0
    %v6726 = vsel %vm2214, %v6392, 0
    %v6729 = vsel %vm2214, %v6394, 0
    %v6732 = vsel %vm2214, %v6396, 0
    %v6735 = vsel %vm2214, %v6398, 0
    %v6738 = vsel %vm2214, %v6400, 0
    %v6741 = vsel %vm2214, %v6402, 0
    %v6744 = vsel %vm2214, %v6404, 0
    %v6747 = vsel %vm2214, %v6406, 0
    %v6750 = vsel %vm2214, %v6408, 0
    %v6753 = vsel %vm2214, %v6410, 0
    %v6756 = vsel %vm2214, %v6412, 0
    %v6759 = vsel %vm2214, %v6414, 0
    %v6762 = vsel %vm2214, %v6416, 0
    %v6765 = vsel %vm2214, %v6418, 0
    %v6768 = vsel %vm2214, %v6420, 0
    %v6771 = vsel %vm2214, %v6422, 0
    %v6774 = vsel %vm2214, %v6424, 0
    %v6777 = vsel %vm2214, %v6426, 0
    %v6780 = vsel %vm2214, %v6428, 0
    %v6783 = vsel %vm2214, %v6430, 0
    %v6786 = vsel %vm2214, %v6432, 0
    %v6789 = vsel %vm2214, %v6434, 0
    %v6792 = vsel %vm2214, %v6436, 0
    %v6795 = vsel %vm2214, %v6438, 0
    %v6798 = vsel %vm2214, %v6440, 0
    %v6801 = vsel %vm2214, %v6442, 0
    %v6804 = vsel %vm2214, %v6444, 0
    %v6807 = vsel %vm2214, %v6446, 0
    %v6810 = vsel %vm2214, %v6448, 0
    %v6813 = vsel %vm2214, %v6450, 0
    %v6816 = vsel %vm2214, %v6452, 0
    %v6819 = vsel %vm2214, %v6454, 0
    %v6822 = vsel %vm2214, %v6456, 0
    %v6825 = vsel %vm2214, %v6458, 0
    %v6828 = vsel %vm2214, %v6460, 0
    %v6831 = vsel %vm2214, %v6462, 0
    %v6834 = vsel %vm2214, %v6464, 0
    %v6837 = vsel %vm2214, %v6466, 0
    %v6840 = vsel %vm2214, %v6468, 0
    %v6843 = vsel %vm2214, %v6470, 0
    %v6846 = vsel %vm2214, %v6472, 0
    %v6849 = vsel %vm2214, %v6474, 0
    %v6852 = vsel %vm2214, %v6476, 0
    %v6855 = vsel %vm2214, %v6478, 0
    %v6858 = vsel %vm2214, %v6480, 0
    %v6861 = vsel %vm2214, %v6482, 0
    %v6864 = vsel %vm2214, %v6484, 0
    %v6867 = vsel %vm2214, %v6486, 0
    %v6870 = vsel %vm2214, %v6488, 0
    %v6873 = vsel %vm2214, %v6490, 0
    %v6876 = vsel %vm2214, %v6492, 0
    %v6879 = vsel %vm2214, %v6494, 0
    %v6882 = vsel %vm2214, %v6496, 0
    %v6885 = vsel %vm2214, %v6498, 0
    %v6888 = vsel %vm2214, %v6500, 0
    %v6891 = vsel %vm2214, %v6502, 0
    %v6894 = vsel %vm2214, %v6504, 0
    %v6897 = vsel %vm2214, %v6506, 0
    %v6900 = vsel %vm2214, %v6508, 0
    %v6903 = vsel %vm2214, %v6510, 0
    %v6906 = vsel %vm2214, %v6512, 0
    %v6909 = vsel %vm2214, %v6514, 0
    %v6912 = vsel %vm2214, %v6516, 0
    %v6915 = vsel %vm2214, %v6518, 0
    %v6918 = vsel %vm2214, %v6520, 0
    %v6921 = vsel %vm2214, %v6522, 0
    %v6924 = vsel %vm2214, %v6524, 0
    %v6927 = vsel %vm2214, %v6526, 0
    %v6930 = vsel %vm2214, %v6528, 0
    %v6933 = vsel %vm2214, %v6530, 0
    %v6936 = vsel %vm2214, %v6532, 0
    %v6939 = vsel %vm2214, %v6534, 0
    %v6942 = vsel %vm2214, %v6536, 0
    %v6945 = vsel %vm2214, %v6538, 0
    %v6948 = vsel %vm2214, %v6540, 0
    %v6951 = vsel %vm2214, %v6542, 0
    %v6954 = vsel %vm2214, %v6544, 0
    %v6957 = vsel %vm2214, %v6546, 0
    %v6960 = vsel %vm2214, %v6548, 0
    %v6963 = vsel %vm2214, %v6550, 0
    %v6966 = vsel %vm2214, %v6552, 0
    %v6969 = vsel %vm2214, %v6554, 0
    %v6972 = vsel %vm2214, %v6556, 0
    %v6975 = vsel %vm2214, %v6558, 0
    %v6978 = vsel %vm2214, %v6560, 0
    %v6981 = vsel %vm2214, %v6562, 0
    %v6984 = vsel %vm2214, %v6564, 0
    %v6987 = vsel %vm2214, %v6566, 0
    %v6990 = vsel %vm2214, %v6568, 0
    %v6993 = vsel %vm2214, %v6570, 0
    %v6996 = vsel %vm2214, %v6572, 0
    %v6999 = vsel %vm2214, %v6574, 0
    %v7002 = vsel %vm2214, %v6576, 0
    %v7005 = vsel %vm2214, %v6578, 0
    %v7008 = vsel %vm2214, %v6580, 0
    %v7011 = vsel %vm2214, %v6582, 0
    %v7014 = vsel %vm2214, %v6584, 0
    %v7017 = vsel %vm2214, %v6586, 0
    %v7020 = vsel %vm2214, %v6588, 0
    %v7023 = vsel %vm2214, %v6590, 0
    %v7026 = vsel %vm2214, %v6592, 0
    %v7029 = vsel %vm2214, %v6594, 0
    %v7032 = vsel %vm2214, %v6596, 0
    %v7035 = vsel %vm2214, %v6598, 0
    %v7038 = vsel %vm2214, %v6600, 0
    %v7041 = vsel %vm2214, %v6602, 0
    %v7044 = vsel %vm2214, %v6604, 0
    %v7047 = vsel %vm2214, %v6606, 0
    %v7050 = vsel %vm2214, %v6608, 0
    %v7053 = vsel %vm2214, %v6610, 0
    %v7056 = vsel %vm2214, %v6612, 0
    %v7059 = vsel %vm2214, %v6614, 0
    %v7062 = vsel %vm2214, %v6616, 0
    %v7065 = vsel %vm2214, %v6618, 0
    %v7068 = vsel %vm2214, %v6620, 0
    %v7071 = vsel %vm2214, %v6622, 0
    %v7074 = vsel %vm2214, %v6624, 0
    %v7077 = vsel %vm2214, %v6626, 0
    %v7080 = vsel %vm2214, %v6628, 0
    %v7083 = vsel %vm2214, %v6627, 0
    %7085 = vmatprep.subr.bf16.mxu0 0
    %7086 = vmatpush1.bf16.msra.mxu0 %v6645
    %7087 = vmatprep.subr.bf16.mxu0 0
    %7088 = vmatpush1.bf16.msra.mxu0 %v6646
    %7089 = vmatprep.subr.bf16.mxu0 0
    %7090 = vmatpush1.bf16.msra.mxu0 %v6647
    %7091 = vmatprep.subr.bf16.mxu0 0
    %7092 = vmatpush1.bf16.msra.mxu0 %v6648
    %7093 = vmatprep.subr.bf16.mxu0 0
    %7094 = vmatpush1.bf16.msra.mxu0 0
    %7095 = vmatprep.subr.bf16.mxu0 0
    %7096 = vmatpush1.bf16.msra.mxu0 0
    %7097 = vmatprep.subr.bf16.mxu0 0
    %7098 = vmatpush1.bf16.msra.mxu0 0
    %7099 = vmatprep.subr.bf16.mxu0 0
    %7100 = vmatpush1.bf16.msra.mxu0 0
    %7101 = vmatprep.subr.bf16.mxu0 0
    %7102 = vmatpush1.bf16.msra.mxu0 0
    %7103 = vmatprep.subr.bf16.mxu0 0
    %7104 = vmatpush1.bf16.msra.mxu0 0
    %7105 = vmatprep.subr.bf16.mxu0 0
    %7106 = vmatpush1.bf16.msra.mxu0 0
    %7107 = vmatprep.subr.bf16.mxu0 0
    %7108 = vmatpush1.bf16.msra.mxu0 0
    %7109 = vmatprep.subr.bf16.mxu0 0
    %7110 = vmatpush1.bf16.msra.mxu0 0
    %7111 = vmatprep.subr.bf16.mxu0 0
    %7112 = vmatpush1.bf16.msra.mxu0 0
    %7113 = vmatprep.subr.bf16.mxu0 0
    %7114 = vmatpush1.bf16.msra.mxu0 0
    %7115 = vmatprep.subr.bf16.mxu0 0
    %7116 = vmatpush1.bf16.msra.mxu0 0
    %7117 = vmatprep.mubr.bf16.mxu0 0
    %7118 = vmatmul.mubr.bf16.gmra.mrb[0].mxu0 %v6654
    %v7119 = vpop.f32.mrb[0].mxu0
    %v7120 = vadd.f32 0.0, %v7119
    %v7121 = vpop.f32.mrb[0].mxu0
    %v7122 = vpop.f32.mrb[0].mxu0
    %v7123 = vadd.f32 0.0, %v7122
    %v7124 = vpop.f32.mrb[0].mxu0
    %7125 = vmatprep.mubr.bf16.mxu0 0
    %7126 = vmatmul.mubr.bf16.gmra.mrb[0].mxu0 %v6657
    %v7127 = vpop.f32.mrb[0].mxu0
    %v7128 = vadd.f32 0.0, %v7127
    %v7129 = vpop.f32.mrb[0].mxu0
    %v7130 = vpop.f32.mrb[0].mxu0
    %v7131 = vadd.f32 0.0, %v7130
    %v7132 = vpop.f32.mrb[0].mxu0
    %7133 = vmatprep.mubr.bf16.mxu0 0
    %7134 = vmatmul.mubr.bf16.gmra.mrb[0].mxu0 %v6660
    %v7135 = vpop.f32.mrb[0].mxu0
    %v7136 = vadd.f32 0.0, %v7135
    %v7137 = vpop.f32.mrb[0].mxu0
    %v7138 = vpop.f32.mrb[0].mxu0
    %v7139 = vadd.f32 0.0, %v7138
    %v7140 = vpop.f32.mrb[0].mxu0
    %7141 = vmatprep.mubr.bf16.mxu0 0
    %7142 = vmatmul.mubr.bf16.gmra.mrb[0].mxu0 %v6663
    %v7143 = vpop.f32.mrb[0].mxu0
    %v7144 = vadd.f32 0.0, %v7143
    %v7145 = vpop.f32.mrb[0].mxu0
    %v7146 = vpop.f32.mrb[0].mxu0
    %v7147 = vadd.f32 0.0, %v7146
    %v7148 = vpop.f32.mrb[0].mxu0
    %7149 = vmatprep.mubr.bf16.mxu0 0
    %7150 = vmatmul.mubr.bf16.gmra.mrb[0].mxu0 %v6666
    %v7151 = vpop.f32.mrb[0].mxu0
    %v7152 = vadd.f32 0.0, %v7151
    %v7153 = vpop.f32.mrb[0].mxu0
    %v7154 = vpop.f32.mrb[0].mxu0
    %v7155 = vadd.f32 0.0, %v7154
    %v7156 = vpop.f32.mrb[0].mxu0
    %7157 = vmatprep.mubr.bf16.mxu0 0
    %7158 = vmatmul.mubr.bf16.gmra.mrb[0].mxu0 %v6669
    %v7159 = vpop.f32.mrb[0].mxu0
    %v7160 = vadd.f32 0.0, %v7159
    %v7161 = vpop.f32.mrb[0].mxu0
    %v7162 = vpop.f32.mrb[0].mxu0
    %v7163 = vadd.f32 0.0, %v7162
    %v7164 = vpop.f32.mrb[0].mxu0
    %7165 = vmatprep.mubr.bf16.mxu0 0
    %7166 = vmatmul.mubr.bf16.gmra.mrb[0].mxu0 %v6672
    %v7167 = vpop.f32.mrb[0].mxu0
    %v7168 = vadd.f32 0.0, %v7167
    %v7169 = vpop.f32.mrb[0].mxu0
    %v7170 = vpop.f32.mrb[0].mxu0
    %v7171 = vadd.f32 0.0, %v7170
    %v7172 = vpop.f32.mrb[0].mxu0
    %7173 = vmatprep.mubr.bf16.mxu0 0
    %7174 = vmatmul.mubr.bf16.gmra.mrb[0].mxu0 %v6675
    %v7175 = vpop.f32.mrb[0].mxu0
    %v7176 = vadd.f32 0.0, %v7175
    %v7177 = vpop.f32.mrb[0].mxu0
    %v7178 = vpop.f32.mrb[0].mxu0
    %v7179 = vadd.f32 0.0, %v7178
    %v7180 = vpop.f32.mrb[0].mxu0
    %7181 = vmatprep.mubr.bf16.mxu0 0
    %7182 = vmatmul.mubr.bf16.gmra.mrb[0].mxu0 %v6678
    %v7183 = vpop.f32.mrb[0].mxu0
    %v7184 = vadd.f32 0.0, %v7183
    %v7185 = vpop.f32.mrb[0].mxu0
    %v7186 = vpop.f32.mrb[0].mxu0
    %v7187 = vadd.f32 0.0, %v7186
    %v7188 = vpop.f32.mrb[0].mxu0
    %7189 = vmatprep.mubr.bf16.mxu0 0
    %7190 = vmatmul.mubr.bf16.gmra.mrb[0].mxu0 %v6681
    %v7191 = vpop.f32.mrb[0].mxu0
    %v7192 = vadd.f32 0.0, %v7191
    %v7193 = vpop.f32.mrb[0].mxu0
    %v7194 = vpop.f32.mrb[0].mxu0
    %v7195 = vadd.f32 0.0, %v7194
    %v7196 = vpop.f32.mrb[0].mxu0
    %7197 = vmatprep.mubr.bf16.mxu0 0
    %7198 = vmatmul.mubr.bf16.gmra.mrb[0].mxu0 %v6684
    %v7199 = vpop.f32.mrb[0].mxu0
    %v7200 = vadd.f32 0.0, %v7199
    %v7201 = vpop.f32.mrb[0].mxu0
    %v7202 = vpop.f32.mrb[0].mxu0
    %v7203 = vadd.f32 0.0, %v7202
    %v7204 = vpop.f32.mrb[0].mxu0
    %7205 = vmatprep.mubr.bf16.mxu0 0
    %7206 = vmatmul.mubr.bf16.gmra.mrb[0].mxu0 %v6687
    %v7207 = vpop.f32.mrb[0].mxu0
    %v7208 = vadd.f32 0.0, %v7207
    %v7209 = vpop.f32.mrb[0].mxu0
    %v7210 = vpop.f32.mrb[0].mxu0
    %v7211 = vadd.f32 0.0, %v7210
    %v7212 = vpop.f32.mrb[0].mxu0
    %7213 = vmatprep.mubr.bf16.mxu0 0
    %7214 = vmatmul.mubr.bf16.gmra.mrb[0].mxu0 %v6690
    %v7215 = vpop.f32.mrb[0].mxu0
    %v7216 = vadd.f32 0.0, %v7215
    %v7217 = vpop.f32.mrb[0].mxu0
    %v7218 = vpop.f32.mrb[0].mxu0
    %v7219 = vadd.f32 0.0, %v7218
    %v7220 = vpop.f32.mrb[0].mxu0
    %7221 = vmatprep.mubr.bf16.mxu0 0
    %7222 = vmatmul.mubr.bf16.gmra.mrb[0].mxu0 %v6693
    %v7223 = vpop.f32.mrb[0].mxu0
    %v7224 = vadd.f32 0.0, %v7223
    %v7225 = vpop.f32.mrb[0].mxu0
    %v7226 = vpop.f32.mrb[0].mxu0
    %v7227 = vadd.f32 0.0, %v7226
    %v7228 = vpop.f32.mrb[0].mxu0
    %7229 = vmatprep.mubr.bf16.mxu0 0
    %7230 = vmatmul.mubr.bf16.gmra.mrb[0].mxu0 %v6696
    %v7231 = vpop.f32.mrb[0].mxu0
    %v7232 = vadd.f32 0.0, %v7231
    %v7233 = vpop.f32.mrb[0].mxu0
    %v7234 = vpop.f32.mrb[0].mxu0
    %v7235 = vadd.f32 0.0, %v7234
    %v7236 = vpop.f32.mrb[0].mxu0
    %7237 = vmatprep.mubr.bf16.mxu0 0
    %7238 = vmatmul.mubr.bf16.gmra.mrb[0].mxu0 %v6699
    %v7239 = vpop.f32.mrb[0].mxu0
    %v7240 = vadd.f32 0.0, %v7239
    %v7241 = vpop.f32.mrb[0].mxu0
    %v7242 = vpop.f32.mrb[0].mxu0
    %v7243 = vadd.f32 0.0, %v7242
    %v7244 = vpop.f32.mrb[0].mxu0
    %7245 = vmatprep.mubr.bf16.mxu0 0
    %7246 = vmatmul.mubr.bf16.gmra.mrb[0].mxu0 %v6702
    %v7247 = vpop.f32.mrb[0].mxu0
    %v7248 = vadd.f32 0.0, %v7247
    %v7249 = vpop.f32.mrb[0].mxu0
    %v7250 = vpop.f32.mrb[0].mxu0
    %v7251 = vadd.f32 0.0, %v7250
    %v7252 = vpop.f32.mrb[0].mxu0
    %7253 = vmatprep.mubr.bf16.mxu0 0
    %7254 = vmatmul.mubr.bf16.gmra.mrb[0].mxu0 %v6705
    %v7255 = vpop.f32.mrb[0].mxu0
    %v7256 = vadd.f32 0.0, %v7255
    %v7257 = vpop.f32.mrb[0].mxu0
    %v7258 = vpop.f32.mrb[0].mxu0
    %v7259 = vadd.f32 0.0, %v7258
    %v7260 = vpop.f32.mrb[0].mxu0
    %7261 = vmatprep.mubr.bf16.mxu0 0
    %7262 = vmatmul.mubr.bf16.gmra.mrb[0].mxu0 %v6708
    %v7263 = vpop.f32.mrb[0].mxu0
    %v7264 = vadd.f32 0.0, %v7263
    %v7265 = vpop.f32.mrb[0].mxu0
    %v7266 = vpop.f32.mrb[0].mxu0
    %v7267 = vadd.f32 0.0, %v7266
    %v7268 = vpop.f32.mrb[0].mxu0
    %7269 = vmatprep.mubr.bf16.mxu0 0
    %7270 = vmatmul.mubr.bf16.gmra.mrb[0].mxu0 %v6711
    %v7271 = vpop.f32.mrb[0].mxu0
    %v7272 = vadd.f32 0.0, %v7271
    %v7273 = vpop.f32.mrb[0].mxu0
    %v7274 = vpop.f32.mrb[0].mxu0
    %v7275 = vadd.f32 0.0, %v7274
    %v7276 = vpop.f32.mrb[0].mxu0
    %7277 = vmatprep.mubr.bf16.mxu0 0
    %7278 = vmatmul.mubr.bf16.gmra.mrb[0].mxu0 %v6714
    %v7279 = vpop.f32.mrb[0].mxu0
    %v7280 = vadd.f32 0.0, %v7279
    %v7281 = vpop.f32.mrb[0].mxu0
    %v7282 = vpop.f32.mrb[0].mxu0
    %v7283 = vadd.f32 0.0, %v7282
    %v7284 = vpop.f32.mrb[0].mxu0
    %7285 = vmatprep.mubr.bf16.mxu0 0
    %7286 = vmatmul.mubr.bf16.gmra.mrb[0].mxu0 %v6717
    %v7287 = vpop.f32.mrb[0].mxu0
    %v7288 = vadd.f32 0.0, %v7287
    %v7289 = vpop.f32.mrb[0].mxu0
    %v7290 = vpop.f32.mrb[0].mxu0
    %v7291 = vadd.f32 0.0, %v7290
    %v7292 = vpop.f32.mrb[0].mxu0
    %7293 = vmatprep.mubr.bf16.mxu0 0
    %7294 = vmatmul.mubr.bf16.gmra.mrb[0].mxu0 %v6720
    %v7295 = vpop.f32.mrb[0].mxu0
    %v7296 = vadd.f32 0.0, %v7295
    %v7297 = vpop.f32.mrb[0].mxu0
    %v7298 = vpop.f32.mrb[0].mxu0
    %v7299 = vadd.f32 0.0, %v7298
    %v7300 = vpop.f32.mrb[0].mxu0
    %7301 = vmatprep.mubr.bf16.mxu0 0
    %7302 = vmatmul.mubr.bf16.gmra.mrb[0].mxu0 %v6723
    %v7303 = vpop.f32.mrb[0].mxu0
    %v7304 = vadd.f32 0.0, %v7303
    %v7305 = vpop.f32.mrb[0].mxu0
    %v7306 = vpop.f32.mrb[0].mxu0
    %v7307 = vadd.f32 0.0, %v7306
    %v7308 = vpop.f32.mrb[0].mxu0
    %7309 = vmatprep.mubr.bf16.mxu0 0
    %7310 = vmatmul.mubr.bf16.gmra.mrb[0].mxu0 %v6726
    %v7311 = vpop.f32.mrb[0].mxu0
    %v7312 = vadd.f32 0.0, %v7311
    %v7313 = vpop.f32.mrb[0].mxu0
    %v7314 = vpop.f32.mrb[0].mxu0
    %v7315 = vadd.f32 0.0, %v7314
    %v7316 = vpop.f32.mrb[0].mxu0
    %7317 = vmatprep.mubr.bf16.mxu0 0
    %7318 = vmatmul.mubr.bf16.gmra.mrb[0].mxu0 %v6729
    %v7319 = vpop.f32.mrb[0].mxu0
    %v7320 = vadd.f32 0.0, %v7319
    %v7321 = vpop.f32.mrb[0].mxu0
    %v7322 = vpop.f32.mrb[0].mxu0
    %v7323 = vadd.f32 0.0, %v7322
    %v7324 = vpop.f32.mrb[0].mxu0
    %7325 = vmatprep.mubr.bf16.mxu0 0
    %7326 = vmatmul.mubr.bf16.gmra.mrb[0].mxu0 %v6732
    %v7327 = vpop.f32.mrb[0].mxu0
    %v7328 = vadd.f32 0.0, %v7327
    %v7329 = vpop.f32.mrb[0].mxu0
    %v7330 = vpop.f32.mrb[0].mxu0
    %v7331 = vadd.f32 0.0, %v7330
    %v7332 = vpop.f32.mrb[0].mxu0
    %7333 = vmatprep.mubr.bf16.mxu0 0
    %7334 = vmatmul.mubr.bf16.gmra.mrb[0].mxu0 %v6735
    %v7335 = vpop.f32.mrb[0].mxu0
    %v7336 = vadd.f32 0.0, %v7335
    %v7337 = vpop.f32.mrb[0].mxu0
    %v7338 = vpop.f32.mrb[0].mxu0
    %v7339 = vadd.f32 0.0, %v7338
    %v7340 = vpop.f32.mrb[0].mxu0
    %7341 = vmatprep.mubr.bf16.mxu0 0
    %7342 = vmatmul.mubr.bf16.gmra.mrb[0].mxu0 %v6738
    %v7343 = vpop.f32.mrb[0].mxu0
    %v7344 = vadd.f32 0.0, %v7343
    %v7345 = vpop.f32.mrb[0].mxu0
    %v7346 = vpop.f32.mrb[0].mxu0
    %v7347 = vadd.f32 0.0, %v7346
    %v7348 = vpop.f32.mrb[0].mxu0
    %7349 = vmatprep.mubr.bf16.mxu0 0
    %7350 = vmatmul.mubr.bf16.gmra.mrb[0].mxu0 %v6741
    %v7351 = vpop.f32.mrb[0].mxu0
    %v7352 = vadd.f32 0.0, %v7351
    %v7353 = vpop.f32.mrb[0].mxu0
    %v7354 = vpop.f32.mrb[0].mxu0
    %v7355 = vadd.f32 0.0, %v7354
    %v7356 = vpop.f32.mrb[0].mxu0
    %7357 = vmatprep.mubr.bf16.mxu0 0
    %7358 = vmatmul.mubr.bf16.gmra.mrb[0].mxu0 %v6744
    %v7359 = vpop.f32.mrb[0].mxu0
    %v7360 = vadd.f32 0.0, %v7359
    %v7361 = vpop.f32.mrb[0].mxu0
    %v7362 = vpop.f32.mrb[0].mxu0
    %v7363 = vadd.f32 0.0, %v7362
    %v7364 = vpop.f32.mrb[0].mxu0
    %7365 = vmatprep.mubr.bf16.mxu0 0
    %7366 = vmatmul.mubr.bf16.gmra.mrb[0].mxu0 %v6747
    %v7367 = vpop.f32.mrb[0].mxu0
    %v7368 = vadd.f32 0.0, %v7367
    %v7369 = vpop.f32.mrb[0].mxu0
    %v7370 = vpop.f32.mrb[0].mxu0
    %v7371 = vadd.f32 0.0, %v7370
    %v7372 = vpop.f32.mrb[0].mxu0
    %7373 = vmatprep.mubr.bf16.mxu0 0
    %7374 = vmatmul.mubr.bf16.gmra.mrb[0].mxu0 %v6750
    %v7375 = vpop.f32.mrb[0].mxu0
    %v7376 = vadd.f32 0.0, %v7375
    %v7377 = vpop.f32.mrb[0].mxu0
    %v7378 = vpop.f32.mrb[0].mxu0
    %v7379 = vadd.f32 0.0, %v7378
    %v7380 = vpop.f32.mrb[0].mxu0
    %7381 = vmatprep.mubr.bf16.mxu0 0
    %7382 = vmatmul.mubr.bf16.gmra.mrb[0].mxu0 %v6753
    %v7383 = vpop.f32.mrb[0].mxu0
    %v7384 = vadd.f32 0.0, %v7383
    %v7385 = vpop.f32.mrb[0].mxu0
    %v7386 = vpop.f32.mrb[0].mxu0
    %v7387 = vadd.f32 0.0, %v7386
    %v7388 = vpop.f32.mrb[0].mxu0
    %7389 = vmatprep.mubr.bf16.mxu0 0
    %7390 = vmatmul.mubr.bf16.gmra.mrb[0].mxu0 %v6756
    %v7391 = vpop.f32.mrb[0].mxu0
    %v7392 = vadd.f32 0.0, %v7391
    %v7393 = vpop.f32.mrb[0].mxu0
    %v7394 = vpop.f32.mrb[0].mxu0
    %v7395 = vadd.f32 0.0, %v7394
    %v7396 = vpop.f32.mrb[0].mxu0
    %7397 = vmatprep.mubr.bf16.mxu0 0
    %7398 = vmatmul.mubr.bf16.gmra.mrb[0].mxu0 %v6759
    %v7399 = vpop.f32.mrb[0].mxu0
    %v7400 = vadd.f32 0.0, %v7399
    %v7401 = vpop.f32.mrb[0].mxu0
    %v7402 = vpop.f32.mrb[0].mxu0
    %v7403 = vadd.f32 0.0, %v7402
    %v7404 = vpop.f32.mrb[0].mxu0
    %7405 = vmatprep.mubr.bf16.mxu0 0
    %7406 = vmatmul.mubr.bf16.gmra.mrb[0].mxu0 %v6762
    %v7407 = vpop.f32.mrb[0].mxu0
    %v7408 = vadd.f32 0.0, %v7407
    %v7409 = vpop.f32.mrb[0].mxu0
    %v7410 = vpop.f32.mrb[0].mxu0
    %v7411 = vadd.f32 0.0, %v7410
    %v7412 = vpop.f32.mrb[0].mxu0
    %7413 = vmatprep.mubr.bf16.mxu0 0
    %7414 = vmatmul.mubr.bf16.gmra.mrb[0].mxu0 %v6765
    %v7415 = vpop.f32.mrb[0].mxu0
    %v7416 = vadd.f32 0.0, %v7415
    %v7417 = vpop.f32.mrb[0].mxu0
    %v7418 = vpop.f32.mrb[0].mxu0
    %v7419 = vadd.f32 0.0, %v7418
    %v7420 = vpop.f32.mrb[0].mxu0
    %7421 = vmatprep.mubr.bf16.mxu0 0
    %7422 = vmatmul.mubr.bf16.gmra.mrb[0].mxu0 %v6768
    %v7423 = vpop.f32.mrb[0].mxu0
    %v7424 = vadd.f32 0.0, %v7423
    %v7425 = vpop.f32.mrb[0].mxu0
    %v7426 = vpop.f32.mrb[0].mxu0
    %v7427 = vadd.f32 0.0, %v7426
    %v7428 = vpop.f32.mrb[0].mxu0
    %7429 = vmatprep.mubr.bf16.mxu0 0
    %7430 = vmatmul.mubr.bf16.gmra.mrb[0].mxu0 %v6771
    %v7431 = vpop.f32.mrb[0].mxu0
    %v7432 = vadd.f32 0.0, %v7431
    %v7433 = vpop.f32.mrb[0].mxu0
    %v7434 = vpop.f32.mrb[0].mxu0
    %v7435 = vadd.f32 0.0, %v7434
    %v7436 = vpop.f32.mrb[0].mxu0
    %7437 = vmatprep.mubr.bf16.mxu0 0
    %7438 = vmatmul.mubr.bf16.gmra.mrb[0].mxu0 %v6774
    %v7439 = vpop.f32.mrb[0].mxu0
    %v7440 = vadd.f32 0.0, %v7439
    %v7441 = vpop.f32.mrb[0].mxu0
    %v7442 = vpop.f32.mrb[0].mxu0
    %v7443 = vadd.f32 0.0, %v7442
    %v7444 = vpop.f32.mrb[0].mxu0
    %7445 = vmatprep.mubr.bf16.mxu0 0
    %7446 = vmatmul.mubr.bf16.gmra.mrb[0].mxu0 %v6777
    %v7447 = vpop.f32.mrb[0].mxu0
    %v7448 = vadd.f32 0.0, %v7447
    %v7449 = vpop.f32.mrb[0].mxu0
    %v7450 = vpop.f32.mrb[0].mxu0
    %v7451 = vadd.f32 0.0, %v7450
    %v7452 = vpop.f32.mrb[0].mxu0
    %7453 = vmatprep.mubr.bf16.mxu0 0
    %7454 = vmatmul.mubr.bf16.gmra.mrb[0].mxu0 %v6780
    %v7455 = vpop.f32.mrb[0].mxu0
    %v7456 = vadd.f32 0.0, %v7455
    %v7457 = vpop.f32.mrb[0].mxu0
    %v7458 = vpop.f32.mrb[0].mxu0
    %v7459 = vadd.f32 0.0, %v7458
    %v7460 = vpop.f32.mrb[0].mxu0
    %7461 = vmatprep.mubr.bf16.mxu0 0
    %7462 = vmatmul.mubr.bf16.gmra.mrb[0].mxu0 %v6783
    %v7463 = vpop.f32.mrb[0].mxu0
    %v7464 = vadd.f32 0.0, %v7463
    %v7465 = vpop.f32.mrb[0].mxu0
    %v7466 = vpop.f32.mrb[0].mxu0
    %v7467 = vadd.f32 0.0, %v7466
    %v7468 = vpop.f32.mrb[0].mxu0
    %7469 = vmatprep.mubr.bf16.mxu0 0
    %7470 = vmatmul.mubr.bf16.gmra.mrb[0].mxu0 %v6786
    %v7471 = vpop.f32.mrb[0].mxu0
    %v7472 = vadd.f32 0.0, %v7471
    %v7473 = vpop.f32.mrb[0].mxu0
    %v7474 = vpop.f32.mrb[0].mxu0
    %v7475 = vadd.f32 0.0, %v7474
    %v7476 = vpop.f32.mrb[0].mxu0
    %7477 = vmatprep.mubr.bf16.mxu0 0
    %7478 = vmatmul.mubr.bf16.gmra.mrb[0].mxu0 %v6789
    %v7479 = vpop.f32.mrb[0].mxu0
    %v7480 = vadd.f32 0.0, %v7479
    %v7481 = vpop.f32.mrb[0].mxu0
    %v7482 = vpop.f32.mrb[0].mxu0
    %v7483 = vadd.f32 0.0, %v7482
    %v7484 = vpop.f32.mrb[0].mxu0
    %7485 = vmatprep.mubr.bf16.mxu0 0
    %7486 = vmatmul.mubr.bf16.gmra.mrb[0].mxu0 %v6792
    %v7487 = vpop.f32.mrb[0].mxu0
    %v7488 = vadd.f32 0.0, %v7487
    %v7489 = vpop.f32.mrb[0].mxu0
    %v7490 = vpop.f32.mrb[0].mxu0
    %v7491 = vadd.f32 0.0, %v7490
    %v7492 = vpop.f32.mrb[0].mxu0
    %7493 = vmatprep.mubr.bf16.mxu0 0
    %7494 = vmatmul.mubr.bf16.gmra.mrb[0].mxu0 %v6795
    %v7495 = vpop.f32.mrb[0].mxu0
    %v7496 = vadd.f32 0.0, %v7495
    %v7497 = vpop.f32.mrb[0].mxu0
    %v7498 = vpop.f32.mrb[0].mxu0
    %v7499 = vadd.f32 0.0, %v7498
    %v7500 = vpop.f32.mrb[0].mxu0
    %7501 = vmatprep.mubr.bf16.mxu0 0
    %7502 = vmatmul.mubr.bf16.gmra.mrb[0].mxu0 %v6798
    %v7503 = vpop.f32.mrb[0].mxu0
    %v7504 = vadd.f32 0.0, %v7503
    %v7505 = vpop.f32.mrb[0].mxu0
    %v7506 = vpop.f32.mrb[0].mxu0
    %v7507 = vadd.f32 0.0, %v7506
    %v7508 = vpop.f32.mrb[0].mxu0
    %7509 = vmatprep.mubr.bf16.mxu0 0
    %7510 = vmatmul.mubr.bf16.gmra.mrb[0].mxu0 %v6801
    %v7511 = vpop.f32.mrb[0].mxu0
    %v7512 = vadd.f32 0.0, %v7511
    %v7513 = vpop.f32.mrb[0].mxu0
    %v7514 = vpop.f32.mrb[0].mxu0
    %v7515 = vadd.f32 0.0, %v7514
    %v7516 = vpop.f32.mrb[0].mxu0
    %7517 = vmatprep.mubr.bf16.mxu0 0
    %7518 = vmatmul.mubr.bf16.gmra.mrb[0].mxu0 %v6804
    %v7519 = vpop.f32.mrb[0].mxu0
    %v7520 = vadd.f32 0.0, %v7519
    %v7521 = vpop.f32.mrb[0].mxu0
    %v7522 = vpop.f32.mrb[0].mxu0
    %v7523 = vadd.f32 0.0, %v7522
    %v7524 = vpop.f32.mrb[0].mxu0
    %7525 = vmatprep.mubr.bf16.mxu0 0
    %7526 = vmatmul.mubr.bf16.gmra.mrb[0].mxu0 %v6807
    %v7527 = vpop.f32.mrb[0].mxu0
    %v7528 = vadd.f32 0.0, %v7527
    %v7529 = vpop.f32.mrb[0].mxu0
    %v7530 = vpop.f32.mrb[0].mxu0
    %v7531 = vadd.f32 0.0, %v7530
    %v7532 = vpop.f32.mrb[0].mxu0
    %7533 = vmatprep.mubr.bf16.mxu0 0
    %7534 = vmatmul.mubr.bf16.gmra.mrb[0].mxu0 %v6810
    %v7535 = vpop.f32.mrb[0].mxu0
    %v7536 = vadd.f32 0.0, %v7535
    %v7537 = vpop.f32.mrb[0].mxu0
    %v7538 = vpop.f32.mrb[0].mxu0
    %v7539 = vadd.f32 0.0, %v7538
    %v7540 = vpop.f32.mrb[0].mxu0
    %7541 = vmatprep.mubr.bf16.mxu0 0
    %7542 = vmatmul.mubr.bf16.gmra.mrb[0].mxu0 %v6813
    %v7543 = vpop.f32.mrb[0].mxu0
    %v7544 = vadd.f32 0.0, %v7543
    %v7545 = vpop.f32.mrb[0].mxu0
    %v7546 = vpop.f32.mrb[0].mxu0
    %v7547 = vadd.f32 0.0, %v7546
    %v7548 = vpop.f32.mrb[0].mxu0
    %7549 = vmatprep.mubr.bf16.mxu0 0
    %7550 = vmatmul.mubr.bf16.gmra.mrb[0].mxu0 %v6816
    %v7551 = vpop.f32.mrb[0].mxu0
    %v7552 = vadd.f32 0.0, %v7551
    %v7553 = vpop.f32.mrb[0].mxu0
    %v7554 = vpop.f32.mrb[0].mxu0
    %v7555 = vadd.f32 0.0, %v7554
    %v7556 = vpop.f32.mrb[0].mxu0
    %7557 = vmatprep.mubr.bf16.mxu0 0
    %7558 = vmatmul.mubr.bf16.gmra.mrb[0].mxu0 %v6819
    %v7559 = vpop.f32.mrb[0].mxu0
    %v7560 = vadd.f32 0.0, %v7559
    %v7561 = vpop.f32.mrb[0].mxu0
    %v7562 = vpop.f32.mrb[0].mxu0
    %v7563 = vadd.f32 0.0, %v7562
    %v7564 = vpop.f32.mrb[0].mxu0
    %7565 = vmatprep.mubr.bf16.mxu0 0
    %7566 = vmatmul.mubr.bf16.gmra.mrb[0].mxu0 %v6822
    %v7567 = vpop.f32.mrb[0].mxu0
    %v7568 = vadd.f32 0.0, %v7567
    %v7569 = vpop.f32.mrb[0].mxu0
    %v7570 = vpop.f32.mrb[0].mxu0
    %v7571 = vadd.f32 0.0, %v7570
    %v7572 = vpop.f32.mrb[0].mxu0
    %7573 = vmatprep.mubr.bf16.mxu0 0
    %7574 = vmatmul.mubr.bf16.gmra.mrb[0].mxu0 %v6825
    %v7575 = vpop.f32.mrb[0].mxu0
    %v7576 = vadd.f32 0.0, %v7575
    %v7577 = vpop.f32.mrb[0].mxu0
    %v7578 = vpop.f32.mrb[0].mxu0
    %v7579 = vadd.f32 0.0, %v7578
    %v7580 = vpop.f32.mrb[0].mxu0
    %7581 = vmatprep.mubr.bf16.mxu0 0
    %7582 = vmatmul.mubr.bf16.gmra.mrb[0].mxu0 %v6828
    %v7583 = vpop.f32.mrb[0].mxu0
    %v7584 = vadd.f32 0.0, %v7583
    %v7585 = vpop.f32.mrb[0].mxu0
    %v7586 = vpop.f32.mrb[0].mxu0
    %v7587 = vadd.f32 0.0, %v7586
    %v7588 = vpop.f32.mrb[0].mxu0
    %7589 = vmatprep.mubr.bf16.mxu0 0
    %7590 = vmatmul.mubr.bf16.gmra.mrb[0].mxu0 %v6831
    %v7591 = vpop.f32.mrb[0].mxu0
    %v7592 = vadd.f32 0.0, %v7591
    %v7593 = vpop.f32.mrb[0].mxu0
    %v7594 = vpop.f32.mrb[0].mxu0
    %v7595 = vadd.f32 0.0, %v7594
    %v7596 = vpop.f32.mrb[0].mxu0
    %7597 = vmatprep.mubr.bf16.mxu0 0
    %7598 = vmatmul.mubr.bf16.gmra.mrb[0].mxu0 %v6834
    %v7599 = vpop.f32.mrb[0].mxu0
    %v7600 = vadd.f32 0.0, %v7599
    %v7601 = vpop.f32.mrb[0].mxu0
    %v7602 = vpop.f32.mrb[0].mxu0
    %v7603 = vadd.f32 0.0, %v7602
    %v7604 = vpop.f32.mrb[0].mxu0
    %7605 = vmatprep.mubr.bf16.mxu0 0
    %7606 = vmatmul.mubr.bf16.gmra.mrb[0].mxu0 %v6837
    %v7607 = vpop.f32.mrb[0].mxu0
    %v7608 = vadd.f32 0.0, %v7607
    %v7609 = vpop.f32.mrb[0].mxu0
    %v7610 = vpop.f32.mrb[0].mxu0
    %v7611 = vadd.f32 0.0, %v7610
    %v7612 = vpop.f32.mrb[0].mxu0
    %7613 = vmatprep.mubr.bf16.mxu0 0
    %7614 = vmatmul.mubr.bf16.gmra.mrb[0].mxu0 %v6840
    %v7615 = vpop.f32.mrb[0].mxu0
    %v7616 = vadd.f32 0.0, %v7615
    %v7617 = vpop.f32.mrb[0].mxu0
    %v7618 = vpop.f32.mrb[0].mxu0
    %v7619 = vadd.f32 0.0, %v7618
    %v7620 = vpop.f32.mrb[0].mxu0
    %7621 = vmatprep.mubr.bf16.mxu0 0
    %7622 = vmatmul.mubr.bf16.gmra.mrb[0].mxu0 %v6843
    %v7623 = vpop.f32.mrb[0].mxu0
    %v7624 = vadd.f32 0.0, %v7623
    %v7625 = vpop.f32.mrb[0].mxu0
    %v7626 = vpop.f32.mrb[0].mxu0
    %v7627 = vadd.f32 0.0, %v7626
    %v7628 = vpop.f32.mrb[0].mxu0
    %7629 = vmatprep.mubr.bf16.mxu0 0
    %7630 = vmatmul.mubr.bf16.gmra.mrb[0].mxu0 %v6846
    %v7631 = vpop.f32.mrb[0].mxu0
    %v7632 = vadd.f32 0.0, %v7631
    %v7633 = vpop.f32.mrb[0].mxu0
    %v7634 = vpop.f32.mrb[0].mxu0
    %v7635 = vadd.f32 0.0, %v7634
    %v7636 = vpop.f32.mrb[0].mxu0
    %7637 = vmatprep.mubr.bf16.mxu0 0
    %7638 = vmatmul.mubr.bf16.gmra.mrb[0].mxu0 %v6849
    %v7639 = vpop.f32.mrb[0].mxu0
    %v7640 = vadd.f32 0.0, %v7639
    %v7641 = vpop.f32.mrb[0].mxu0
    %v7642 = vpop.f32.mrb[0].mxu0
    %v7643 = vadd.f32 0.0, %v7642
    %v7644 = vpop.f32.mrb[0].mxu0
    %7645 = vmatprep.mubr.bf16.mxu0 0
    %7646 = vmatmul.mubr.bf16.gmra.mrb[0].mxu0 %v6852
    %v7647 = vpop.f32.mrb[0].mxu0
    %v7648 = vadd.f32 0.0, %v7647
    %v7649 = vpop.f32.mrb[0].mxu0
    %v7650 = vpop.f32.mrb[0].mxu0
    %v7651 = vadd.f32 0.0, %v7650
    %v7652 = vpop.f32.mrb[0].mxu0
    %7653 = vmatprep.mubr.bf16.mxu0 0
    %7654 = vmatmul.mubr.bf16.gmra.mrb[0].mxu0 %v6855
    %v7655 = vpop.f32.mrb[0].mxu0
    %v7656 = vadd.f32 0.0, %v7655
    %v7657 = vpop.f32.mrb[0].mxu0
    %v7658 = vpop.f32.mrb[0].mxu0
    %v7659 = vadd.f32 0.0, %v7658
    %v7660 = vpop.f32.mrb[0].mxu0
    %7661 = vmatprep.mubr.bf16.mxu0 0
    %7662 = vmatmul.mubr.bf16.gmra.mrb[0].mxu0 %v6858
    %v7663 = vpop.f32.mrb[0].mxu0
    %v7664 = vadd.f32 0.0, %v7663
    %v7665 = vpop.f32.mrb[0].mxu0
    %v7666 = vpop.f32.mrb[0].mxu0
    %v7667 = vadd.f32 0.0, %v7666
    %v7668 = vpop.f32.mrb[0].mxu0
    %7669 = vmatprep.mubr.bf16.mxu0 0
    %7670 = vmatmul.mubr.bf16.gmra.mrb[0].mxu0 %v6861
    %v7671 = vpop.f32.mrb[0].mxu0
    %v7672 = vadd.f32 0.0, %v7671
    %v7673 = vpop.f32.mrb[0].mxu0
    %v7674 = vpop.f32.mrb[0].mxu0
    %v7675 = vadd.f32 0.0, %v7674
    %v7676 = vpop.f32.mrb[0].mxu0
    %7677 = vmatprep.mubr.bf16.mxu0 0
    %7678 = vmatmul.mubr.bf16.gmra.mrb[0].mxu0 %v6864
    %v7679 = vpop.f32.mrb[0].mxu0
    %v7680 = vadd.f32 0.0, %v7679
    %v7681 = vpop.f32.mrb[0].mxu0
    %v7682 = vpop.f32.mrb[0].mxu0
    %v7683 = vadd.f32 0.0, %v7682
    %v7684 = vpop.f32.mrb[0].mxu0
    %7685 = vmatprep.mubr.bf16.mxu0 0
    %7686 = vmatmul.mubr.bf16.gmra.mrb[0].mxu0 %v6867
    %v7687 = vpop.f32.mrb[0].mxu0
    %v7688 = vadd.f32 0.0, %v7687
    %v7689 = vpop.f32.mrb[0].mxu0
    %v7690 = vpop.f32.mrb[0].mxu0
    %v7691 = vadd.f32 0.0, %v7690
    %v7692 = vpop.f32.mrb[0].mxu0
    %7693 = vmatprep.mubr.bf16.mxu0 0
    %7694 = vmatmul.mubr.bf16.gmra.mrb[0].mxu0 %v6870
    %v7695 = vpop.f32.mrb[0].mxu0
    %v7696 = vadd.f32 0.0, %v7695
    %v7697 = vpop.f32.mrb[0].mxu0
    %v7698 = vpop.f32.mrb[0].mxu0
    %v7699 = vadd.f32 0.0, %v7698
    %v7700 = vpop.f32.mrb[0].mxu0
    %7701 = vmatprep.mubr.bf16.mxu0 0
    %7702 = vmatmul.mubr.bf16.gmra.mrb[0].mxu0 %v6873
    %v7703 = vpop.f32.mrb[0].mxu0
    %v7704 = vadd.f32 0.0, %v7703
    %v7705 = vpop.f32.mrb[0].mxu0
    %v7706 = vpop.f32.mrb[0].mxu0
    %v7707 = vadd.f32 0.0, %v7706
    %v7708 = vpop.f32.mrb[0].mxu0
    %7709 = vmatprep.mubr.bf16.mxu0 0
    %7710 = vmatmul.mubr.bf16.gmra.mrb[0].mxu0 %v6876
    %v7711 = vpop.f32.mrb[0].mxu0
    %v7712 = vadd.f32 0.0, %v7711
    %v7713 = vpop.f32.mrb[0].mxu0
    %v7714 = vpop.f32.mrb[0].mxu0
    %v7715 = vadd.f32 0.0, %v7714
    %v7716 = vpop.f32.mrb[0].mxu0
    %7717 = vmatprep.mubr.bf16.mxu0 0
    %7718 = vmatmul.mubr.bf16.gmra.mrb[0].mxu0 %v6879
    %v7719 = vpop.f32.mrb[0].mxu0
    %v7720 = vadd.f32 0.0, %v7719
    %v7721 = vpop.f32.mrb[0].mxu0
    %v7722 = vpop.f32.mrb[0].mxu0
    %v7723 = vadd.f32 0.0, %v7722
    %v7724 = vpop.f32.mrb[0].mxu0
    %7725 = vmatprep.mubr.bf16.mxu0 0
    %7726 = vmatmul.mubr.bf16.gmra.mrb[0].mxu0 %v6882
    %v7727 = vpop.f32.mrb[0].mxu0
    %v7728 = vadd.f32 0.0, %v7727
    %v7729 = vpop.f32.mrb[0].mxu0
    %v7730 = vpop.f32.mrb[0].mxu0
    %v7731 = vadd.f32 0.0, %v7730
    %v7732 = vpop.f32.mrb[0].mxu0
    %7733 = vmatprep.mubr.bf16.mxu0 0
    %7734 = vmatmul.mubr.bf16.gmra.mrb[0].mxu0 %v6885
    %v7735 = vpop.f32.mrb[0].mxu0
    %v7736 = vadd.f32 0.0, %v7735
    %v7737 = vpop.f32.mrb[0].mxu0
    %v7738 = vpop.f32.mrb[0].mxu0
    %v7739 = vadd.f32 0.0, %v7738
    %v7740 = vpop.f32.mrb[0].mxu0
    %7741 = vmatprep.mubr.bf16.mxu0 0
    %7742 = vmatmul.mubr.bf16.gmra.mrb[0].mxu0 %v6888
    %v7743 = vpop.f32.mrb[0].mxu0
    %v7744 = vadd.f32 0.0, %v7743
    %v7745 = vpop.f32.mrb[0].mxu0
    %v7746 = vpop.f32.mrb[0].mxu0
    %v7747 = vadd.f32 0.0, %v7746
    %v7748 = vpop.f32.mrb[0].mxu0
    %7749 = vmatprep.mubr.bf16.mxu0 0
    %7750 = vmatmul.mubr.bf16.gmra.mrb[0].mxu0 %v6891
    %v7751 = vpop.f32.mrb[0].mxu0
    %v7752 = vadd.f32 0.0, %v7751
    %v7753 = vpop.f32.mrb[0].mxu0
    %v7754 = vpop.f32.mrb[0].mxu0
    %v7755 = vadd.f32 0.0, %v7754
    %v7756 = vpop.f32.mrb[0].mxu0
    %7757 = vmatprep.mubr.bf16.mxu0 0
    %7758 = vmatmul.mubr.bf16.gmra.mrb[0].mxu0 %v6894
    %v7759 = vpop.f32.mrb[0].mxu0
    %v7760 = vadd.f32 0.0, %v7759
    %v7761 = vpop.f32.mrb[0].mxu0
    %v7762 = vpop.f32.mrb[0].mxu0
    %v7763 = vadd.f32 0.0, %v7762
    %v7764 = vpop.f32.mrb[0].mxu0
    %7765 = vmatprep.mubr.bf16.mxu0 0
    %7766 = vmatmul.mubr.bf16.gmra.mrb[0].mxu0 %v6897
    %v7767 = vpop.f32.mrb[0].mxu0
    %v7768 = vadd.f32 0.0, %v7767
    %v7769 = vpop.f32.mrb[0].mxu0
    %v7770 = vpop.f32.mrb[0].mxu0
    %v7771 = vadd.f32 0.0, %v7770
    %v7772 = vpop.f32.mrb[0].mxu0
    %7773 = vmatprep.mubr.bf16.mxu0 0
    %7774 = vmatmul.mubr.bf16.gmra.mrb[0].mxu0 %v6900
    %v7775 = vpop.f32.mrb[0].mxu0
    %v7776 = vadd.f32 0.0, %v7775
    %v7777 = vpop.f32.mrb[0].mxu0
    %v7778 = vpop.f32.mrb[0].mxu0
    %v7779 = vadd.f32 0.0, %v7778
    %v7780 = vpop.f32.mrb[0].mxu0
    %7781 = vmatprep.mubr.bf16.mxu0 0
    %7782 = vmatmul.mubr.bf16.gmra.mrb[0].mxu0 %v6903
    %v7783 = vpop.f32.mrb[0].mxu0
    %v7784 = vadd.f32 0.0, %v7783
    %v7785 = vpop.f32.mrb[0].mxu0
    %v7786 = vpop.f32.mrb[0].mxu0
    %v7787 = vadd.f32 0.0, %v7786
    %v7788 = vpop.f32.mrb[0].mxu0
    %7789 = vmatprep.mubr.bf16.mxu0 0
    %7790 = vmatmul.mubr.bf16.gmra.mrb[0].mxu0 %v6906
    %v7791 = vpop.f32.mrb[0].mxu0
    %v7792 = vadd.f32 0.0, %v7791
    %v7793 = vpop.f32.mrb[0].mxu0
    %v7794 = vpop.f32.mrb[0].mxu0
    %v7795 = vadd.f32 0.0, %v7794
    %v7796 = vpop.f32.mrb[0].mxu0
    %7797 = vmatprep.mubr.bf16.mxu0 0
    %7798 = vmatmul.mubr.bf16.gmra.mrb[0].mxu0 %v6909
    %v7799 = vpop.f32.mrb[0].mxu0
    %v7800 = vadd.f32 0.0, %v7799
    %v7801 = vpop.f32.mrb[0].mxu0
    %v7802 = vpop.f32.mrb[0].mxu0
    %v7803 = vadd.f32 0.0, %v7802
    %v7804 = vpop.f32.mrb[0].mxu0
    %7805 = vmatprep.mubr.bf16.mxu0 0
    %7806 = vmatmul.mubr.bf16.gmra.mrb[0].mxu0 %v6912
    %v7807 = vpop.f32.mrb[0].mxu0
    %v7808 = vadd.f32 0.0, %v7807
    %v7809 = vpop.f32.mrb[0].mxu0
    %v7810 = vpop.f32.mrb[0].mxu0
    %v7811 = vadd.f32 0.0, %v7810
    %v7812 = vpop.f32.mrb[0].mxu0
    %7813 = vmatprep.mubr.bf16.mxu0 0
    %7814 = vmatmul.mubr.bf16.gmra.mrb[0].mxu0 %v6915
    %v7815 = vpop.f32.mrb[0].mxu0
    %v7816 = vadd.f32 0.0, %v7815
    %v7817 = vpop.f32.mrb[0].mxu0
    %v7818 = vpop.f32.mrb[0].mxu0
    %v7819 = vadd.f32 0.0, %v7818
    %v7820 = vpop.f32.mrb[0].mxu0
    %7821 = vmatprep.mubr.bf16.mxu0 0
    %7822 = vmatmul.mubr.bf16.gmra.mrb[0].mxu0 %v6918
    %v7823 = vpop.f32.mrb[0].mxu0
    %v7824 = vadd.f32 0.0, %v7823
    %v7825 = vpop.f32.mrb[0].mxu0
    %v7826 = vpop.f32.mrb[0].mxu0
    %v7827 = vadd.f32 0.0, %v7826
    %v7828 = vpop.f32.mrb[0].mxu0
    %7829 = vmatprep.mubr.bf16.mxu0 0
    %7830 = vmatmul.mubr.bf16.gmra.mrb[0].mxu0 %v6921
    %v7831 = vpop.f32.mrb[0].mxu0
    %v7832 = vadd.f32 0.0, %v7831
    %v7833 = vpop.f32.mrb[0].mxu0
    %v7834 = vpop.f32.mrb[0].mxu0
    %v7835 = vadd.f32 0.0, %v7834
    %v7836 = vpop.f32.mrb[0].mxu0
    %7837 = vmatprep.mubr.bf16.mxu0 0
    %7838 = vmatmul.mubr.bf16.gmra.mrb[0].mxu0 %v6924
    %v7839 = vpop.f32.mrb[0].mxu0
    %v7840 = vadd.f32 0.0, %v7839
    %v7841 = vpop.f32.mrb[0].mxu0
    %v7842 = vpop.f32.mrb[0].mxu0
    %v7843 = vadd.f32 0.0, %v7842
    %v7844 = vpop.f32.mrb[0].mxu0
    %7845 = vmatprep.mubr.bf16.mxu0 0
    %7846 = vmatmul.mubr.bf16.gmra.mrb[0].mxu0 %v6927
    %v7847 = vpop.f32.mrb[0].mxu0
    %v7848 = vadd.f32 0.0, %v7847
    %v7849 = vpop.f32.mrb[0].mxu0
    %v7850 = vpop.f32.mrb[0].mxu0
    %v7851 = vadd.f32 0.0, %v7850
    %v7852 = vpop.f32.mrb[0].mxu0
    %7853 = vmatprep.mubr.bf16.mxu0 0
    %7854 = vmatmul.mubr.bf16.gmra.mrb[0].mxu0 %v6930
    %v7855 = vpop.f32.mrb[0].mxu0
    %v7856 = vadd.f32 0.0, %v7855
    %v7857 = vpop.f32.mrb[0].mxu0
    %v7858 = vpop.f32.mrb[0].mxu0
    %v7859 = vadd.f32 0.0, %v7858
    %v7860 = vpop.f32.mrb[0].mxu0
    %7861 = vmatprep.mubr.bf16.mxu0 0
    %7862 = vmatmul.mubr.bf16.gmra.mrb[0].mxu0 %v6933
    %v7863 = vpop.f32.mrb[0].mxu0
    %v7864 = vadd.f32 0.0, %v7863
    %v7865 = vpop.f32.mrb[0].mxu0
    %v7866 = vpop.f32.mrb[0].mxu0
    %v7867 = vadd.f32 0.0, %v7866
    %v7868 = vpop.f32.mrb[0].mxu0
    %7869 = vmatprep.mubr.bf16.mxu0 0
    %7870 = vmatmul.mubr.bf16.gmra.mrb[0].mxu0 %v6936
    %v7871 = vpop.f32.mrb[0].mxu0
    %v7872 = vadd.f32 0.0, %v7871
    %v7873 = vpop.f32.mrb[0].mxu0
    %v7874 = vpop.f32.mrb[0].mxu0
    %v7875 = vadd.f32 0.0, %v7874
    %v7876 = vpop.f32.mrb[0].mxu0
    %7877 = vmatprep.mubr.bf16.mxu0 0
    %7878 = vmatmul.mubr.bf16.gmra.mrb[0].mxu0 %v6939
    %v7879 = vpop.f32.mrb[0].mxu0
    %v7880 = vadd.f32 0.0, %v7879
    %v7881 = vpop.f32.mrb[0].mxu0
    %v7882 = vpop.f32.mrb[0].mxu0
    %v7883 = vadd.f32 0.0, %v7882
    %v7884 = vpop.f32.mrb[0].mxu0
    %7885 = vmatprep.mubr.bf16.mxu0 0
    %7886 = vmatmul.mubr.bf16.gmra.mrb[0].mxu0 %v6942
    %v7887 = vpop.f32.mrb[0].mxu0
    %v7888 = vadd.f32 0.0, %v7887
    %v7889 = vpop.f32.mrb[0].mxu0
    %v7890 = vpop.f32.mrb[0].mxu0
    %v7891 = vadd.f32 0.0, %v7890
    %v7892 = vpop.f32.mrb[0].mxu0
    %7893 = vmatprep.mubr.bf16.mxu0 0
    %7894 = vmatmul.mubr.bf16.gmra.mrb[0].mxu0 %v6945
    %v7895 = vpop.f32.mrb[0].mxu0
    %v7896 = vadd.f32 0.0, %v7895
    %v7897 = vpop.f32.mrb[0].mxu0
    %v7898 = vpop.f32.mrb[0].mxu0
    %v7899 = vadd.f32 0.0, %v7898
    %v7900 = vpop.f32.mrb[0].mxu0
    %7901 = vmatprep.mubr.bf16.mxu0 0
    %7902 = vmatmul.mubr.bf16.gmra.mrb[0].mxu0 %v6948
    %v7903 = vpop.f32.mrb[0].mxu0
    %v7904 = vadd.f32 0.0, %v7903
    %v7905 = vpop.f32.mrb[0].mxu0
    %v7906 = vpop.f32.mrb[0].mxu0
    %v7907 = vadd.f32 0.0, %v7906
    %v7908 = vpop.f32.mrb[0].mxu0
    %7909 = vmatprep.mubr.bf16.mxu0 0
    %7910 = vmatmul.mubr.bf16.gmra.mrb[0].mxu0 %v6951
    %v7911 = vpop.f32.mrb[0].mxu0
    %v7912 = vadd.f32 0.0, %v7911
    %v7913 = vpop.f32.mrb[0].mxu0
    %v7914 = vpop.f32.mrb[0].mxu0
    %v7915 = vadd.f32 0.0, %v7914
    %v7916 = vpop.f32.mrb[0].mxu0
    %7917 = vmatprep.mubr.bf16.mxu0 0
    %7918 = vmatmul.mubr.bf16.gmra.mrb[0].mxu0 %v6954
    %v7919 = vpop.f32.mrb[0].mxu0
    %v7920 = vadd.f32 0.0, %v7919
    %v7921 = vpop.f32.mrb[0].mxu0
    %v7922 = vpop.f32.mrb[0].mxu0
    %v7923 = vadd.f32 0.0, %v7922
    %v7924 = vpop.f32.mrb[0].mxu0
    %7925 = vmatprep.mubr.bf16.mxu0 0
    %7926 = vmatmul.mubr.bf16.gmra.mrb[0].mxu0 %v6957
    %v7927 = vpop.f32.mrb[0].mxu0
    %v7928 = vadd.f32 0.0, %v7927
    %v7929 = vpop.f32.mrb[0].mxu0
    %v7930 = vpop.f32.mrb[0].mxu0
    %v7931 = vadd.f32 0.0, %v7930
    %v7932 = vpop.f32.mrb[0].mxu0
    %7933 = vmatprep.mubr.bf16.mxu0 0
    %7934 = vmatmul.mubr.bf16.gmra.mrb[0].mxu0 %v6960
    %v7935 = vpop.f32.mrb[0].mxu0
    %v7936 = vadd.f32 0.0, %v7935
    %v7937 = vpop.f32.mrb[0].mxu0
    %v7938 = vpop.f32.mrb[0].mxu0
    %v7939 = vadd.f32 0.0, %v7938
    %v7940 = vpop.f32.mrb[0].mxu0
    %7941 = vmatprep.mubr.bf16.mxu0 0
    %7942 = vmatmul.mubr.bf16.gmra.mrb[0].mxu0 %v6963
    %v7943 = vpop.f32.mrb[0].mxu0
    %v7944 = vadd.f32 0.0, %v7943
    %v7945 = vpop.f32.mrb[0].mxu0
    %v7946 = vpop.f32.mrb[0].mxu0
    %v7947 = vadd.f32 0.0, %v7946
    %v7948 = vpop.f32.mrb[0].mxu0
    %7949 = vmatprep.mubr.bf16.mxu0 0
    %7950 = vmatmul.mubr.bf16.gmra.mrb[0].mxu0 %v6966
    %v7951 = vpop.f32.mrb[0].mxu0
    %v7952 = vadd.f32 0.0, %v7951
    %v7953 = vpop.f32.mrb[0].mxu0
    %v7954 = vpop.f32.mrb[0].mxu0
    %v7955 = vadd.f32 0.0, %v7954
    %v7956 = vpop.f32.mrb[0].mxu0
    %7957 = vmatprep.mubr.bf16.mxu0 0
    %7958 = vmatmul.mubr.bf16.gmra.mrb[0].mxu0 %v6969
    %v7959 = vpop.f32.mrb[0].mxu0
    %v7960 = vadd.f32 0.0, %v7959
    %v7961 = vpop.f32.mrb[0].mxu0
    %v7962 = vpop.f32.mrb[0].mxu0
    %v7963 = vadd.f32 0.0, %v7962
    %v7964 = vpop.f32.mrb[0].mxu0
    %7965 = vmatprep.mubr.bf16.mxu0 0
    %7966 = vmatmul.mubr.bf16.gmra.mrb[0].mxu0 %v6972
    %v7967 = vpop.f32.mrb[0].mxu0
    %v7968 = vadd.f32 0.0, %v7967
    %v7969 = vpop.f32.mrb[0].mxu0
    %v7970 = vpop.f32.mrb[0].mxu0
    %v7971 = vadd.f32 0.0, %v7970
    %v7972 = vpop.f32.mrb[0].mxu0
    %7973 = vmatprep.mubr.bf16.mxu0 0
    %7974 = vmatmul.mubr.bf16.gmra.mrb[0].mxu0 %v6975
    %v7975 = vpop.f32.mrb[0].mxu0
    %v7976 = vadd.f32 0.0, %v7975
    %v7977 = vpop.f32.mrb[0].mxu0
    %v7978 = vpop.f32.mrb[0].mxu0
    %v7979 = vadd.f32 0.0, %v7978
    %v7980 = vpop.f32.mrb[0].mxu0
    %7981 = vmatprep.mubr.bf16.mxu0 0
    %7982 = vmatmul.mubr.bf16.gmra.mrb[0].mxu0 %v6978
    %v7983 = vpop.f32.mrb[0].mxu0
    %v7984 = vadd.f32 0.0, %v7983
    %v7985 = vpop.f32.mrb[0].mxu0
    %v7986 = vpop.f32.mrb[0].mxu0
    %v7987 = vadd.f32 0.0, %v7986
    %v7988 = vpop.f32.mrb[0].mxu0
    %7989 = vmatprep.mubr.bf16.mxu0 0
    %7990 = vmatmul.mubr.bf16.gmra.mrb[0].mxu0 %v6981
    %v7991 = vpop.f32.mrb[0].mxu0
    %v7992 = vadd.f32 0.0, %v7991
    %v7993 = vpop.f32.mrb[0].mxu0
    %v7994 = vpop.f32.mrb[0].mxu0
    %v7995 = vadd.f32 0.0, %v7994
    %v7996 = vpop.f32.mrb[0].mxu0
    %7997 = vmatprep.mubr.bf16.mxu0 0
    %7998 = vmatmul.mubr.bf16.gmra.mrb[0].mxu0 %v6984
    %v7999 = vpop.f32.mrb[0].mxu0
    %v8000 = vadd.f32 0.0, %v7999
    %v8001 = vpop.f32.mrb[0].mxu0
    %v8002 = vpop.f32.mrb[0].mxu0
    %v8003 = vadd.f32 0.0, %v8002
    %v8004 = vpop.f32.mrb[0].mxu0
    %8005 = vmatprep.mubr.bf16.mxu0 0
    %8006 = vmatmul.mubr.bf16.gmra.mrb[0].mxu0 %v6987
    %v8007 = vpop.f32.mrb[0].mxu0
    %v8008 = vadd.f32 0.0, %v8007
    %v8009 = vpop.f32.mrb[0].mxu0
    %v8010 = vpop.f32.mrb[0].mxu0
    %v8011 = vadd.f32 0.0, %v8010
    %v8012 = vpop.f32.mrb[0].mxu0
    %8013 = vmatprep.mubr.bf16.mxu0 0
    %8014 = vmatmul.mubr.bf16.gmra.mrb[0].mxu0 %v6990
    %v8015 = vpop.f32.mrb[0].mxu0
    %v8016 = vadd.f32 0.0, %v8015
    %v8017 = vpop.f32.mrb[0].mxu0
    %v8018 = vpop.f32.mrb[0].mxu0
    %v8019 = vadd.f32 0.0, %v8018
    %v8020 = vpop.f32.mrb[0].mxu0
    %8021 = vmatprep.mubr.bf16.mxu0 0
    %8022 = vmatmul.mubr.bf16.gmra.mrb[0].mxu0 %v6993
    %v8023 = vpop.f32.mrb[0].mxu0
    %v8024 = vadd.f32 0.0, %v8023
    %v8025 = vpop.f32.mrb[0].mxu0
    %v8026 = vpop.f32.mrb[0].mxu0
    %v8027 = vadd.f32 0.0, %v8026
    %v8028 = vpop.f32.mrb[0].mxu0
    %8029 = vmatprep.mubr.bf16.mxu0 0
    %8030 = vmatmul.mubr.bf16.gmra.mrb[0].mxu0 %v6996
    %v8031 = vpop.f32.mrb[0].mxu0
    %v8032 = vadd.f32 0.0, %v8031
    %v8033 = vpop.f32.mrb[0].mxu0
    %v8034 = vpop.f32.mrb[0].mxu0
    %v8035 = vadd.f32 0.0, %v8034
    %v8036 = vpop.f32.mrb[0].mxu0
    %8037 = vmatprep.mubr.bf16.mxu0 0
    %8038 = vmatmul.mubr.bf16.gmra.mrb[0].mxu0 %v6999
    %v8039 = vpop.f32.mrb[0].mxu0
    %v8040 = vadd.f32 0.0, %v8039
    %v8041 = vpop.f32.mrb[0].mxu0
    %v8042 = vpop.f32.mrb[0].mxu0
    %v8043 = vadd.f32 0.0, %v8042
    %v8044 = vpop.f32.mrb[0].mxu0
    %8045 = vmatprep.mubr.bf16.mxu0 0
    %8046 = vmatmul.mubr.bf16.gmra.mrb[0].mxu0 %v7002
    %v8047 = vpop.f32.mrb[0].mxu0
    %v8048 = vadd.f32 0.0, %v8047
    %v8049 = vpop.f32.mrb[0].mxu0
    %v8050 = vpop.f32.mrb[0].mxu0
    %v8051 = vadd.f32 0.0, %v8050
    %v8052 = vpop.f32.mrb[0].mxu0
    %8053 = vmatprep.mubr.bf16.mxu0 0
    %8054 = vmatmul.mubr.bf16.gmra.mrb[0].mxu0 %v7005
    %v8055 = vpop.f32.mrb[0].mxu0
    %v8056 = vadd.f32 0.0, %v8055
    %v8057 = vpop.f32.mrb[0].mxu0
    %v8058 = vpop.f32.mrb[0].mxu0
    %v8059 = vadd.f32 0.0, %v8058
    %v8060 = vpop.f32.mrb[0].mxu0
    %8061 = vmatprep.mubr.bf16.mxu0 0
    %8062 = vmatmul.mubr.bf16.gmra.mrb[0].mxu0 %v7008
    %v8063 = vpop.f32.mrb[0].mxu0
    %v8064 = vadd.f32 0.0, %v8063
    %v8065 = vpop.f32.mrb[0].mxu0
    %v8066 = vpop.f32.mrb[0].mxu0
    %v8067 = vadd.f32 0.0, %v8066
    %v8068 = vpop.f32.mrb[0].mxu0
    %8069 = vmatprep.mubr.bf16.mxu0 0
    %8070 = vmatmul.mubr.bf16.gmra.mrb[0].mxu0 %v7011
    %v8071 = vpop.f32.mrb[0].mxu0
    %v8072 = vadd.f32 0.0, %v8071
    %v8073 = vpop.f32.mrb[0].mxu0
    %v8074 = vpop.f32.mrb[0].mxu0
    %v8075 = vadd.f32 0.0, %v8074
    %v8076 = vpop.f32.mrb[0].mxu0
    %8077 = vmatprep.mubr.bf16.mxu0 0
    %8078 = vmatmul.mubr.bf16.gmra.mrb[0].mxu0 %v7014
    %v8079 = vpop.f32.mrb[0].mxu0
    %v8080 = vadd.f32 0.0, %v8079
    %v8081 = vpop.f32.mrb[0].mxu0
    %v8082 = vpop.f32.mrb[0].mxu0
    %v8083 = vadd.f32 0.0, %v8082
    %v8084 = vpop.f32.mrb[0].mxu0
    %8085 = vmatprep.mubr.bf16.mxu0 0
    %8086 = vmatmul.mubr.bf16.gmra.mrb[0].mxu0 %v7017
    %v8087 = vpop.f32.mrb[0].mxu0
    %v8088 = vadd.f32 0.0, %v8087
    %v8089 = vpop.f32.mrb[0].mxu0
    %v8090 = vpop.f32.mrb[0].mxu0
    %v8091 = vadd.f32 0.0, %v8090
    %v8092 = vpop.f32.mrb[0].mxu0
    %8093 = vmatprep.mubr.bf16.mxu0 0
    %8094 = vmatmul.mubr.bf16.gmra.mrb[0].mxu0 %v7020
    %v8095 = vpop.f32.mrb[0].mxu0
    %v8096 = vadd.f32 0.0, %v8095
    %v8097 = vpop.f32.mrb[0].mxu0
    %v8098 = vpop.f32.mrb[0].mxu0
    %v8099 = vadd.f32 0.0, %v8098
    %v8100 = vpop.f32.mrb[0].mxu0
    %8101 = vmatprep.mubr.bf16.mxu0 0
    %8102 = vmatmul.mubr.bf16.gmra.mrb[0].mxu0 %v7023
    %v8103 = vpop.f32.mrb[0].mxu0
    %v8104 = vadd.f32 0.0, %v8103
    %v8105 = vpop.f32.mrb[0].mxu0
    %v8106 = vpop.f32.mrb[0].mxu0
    %v8107 = vadd.f32 0.0, %v8106
    %v8108 = vpop.f32.mrb[0].mxu0
    %8109 = vmatprep.mubr.bf16.mxu0 0
    %8110 = vmatmul.mubr.bf16.gmra.mrb[0].mxu0 %v7026
    %v8111 = vpop.f32.mrb[0].mxu0
    %v8112 = vadd.f32 0.0, %v8111
    %v8113 = vpop.f32.mrb[0].mxu0
    %v8114 = vpop.f32.mrb[0].mxu0
    %v8115 = vadd.f32 0.0, %v8114
    %v8116 = vpop.f32.mrb[0].mxu0
    %8117 = vmatprep.mubr.bf16.mxu0 0
    %8118 = vmatmul.mubr.bf16.gmra.mrb[0].mxu0 %v7029
    %v8119 = vpop.f32.mrb[0].mxu0
    %v8120 = vadd.f32 0.0, %v8119
    %v8121 = vpop.f32.mrb[0].mxu0
    %v8122 = vpop.f32.mrb[0].mxu0
    %v8123 = vadd.f32 0.0, %v8122
    %v8124 = vpop.f32.mrb[0].mxu0
    %8125 = vmatprep.mubr.bf16.mxu0 0
    %8126 = vmatmul.mubr.bf16.gmra.mrb[0].mxu0 %v7032
    %v8127 = vpop.f32.mrb[0].mxu0
    %v8128 = vadd.f32 0.0, %v8127
    %v8129 = vpop.f32.mrb[0].mxu0
    %v8130 = vpop.f32.mrb[0].mxu0
    %v8131 = vadd.f32 0.0, %v8130
    %v8132 = vpop.f32.mrb[0].mxu0
    %8133 = vmatprep.mubr.bf16.mxu0 0
    %8134 = vmatmul.mubr.bf16.gmra.mrb[0].mxu0 %v7035
    %v8135 = vpop.f32.mrb[0].mxu0
    %v8136 = vadd.f32 0.0, %v8135
    %v8137 = vpop.f32.mrb[0].mxu0
    %v8138 = vpop.f32.mrb[0].mxu0
    %v8139 = vadd.f32 0.0, %v8138
    %v8140 = vpop.f32.mrb[0].mxu0
    %8141 = vmatprep.mubr.bf16.mxu0 0
    %8142 = vmatmul.mubr.bf16.gmra.mrb[0].mxu0 %v7038
    %v8143 = vpop.f32.mrb[0].mxu0
    %v8144 = vadd.f32 0.0, %v8143
    %v8145 = vpop.f32.mrb[0].mxu0
    %v8146 = vpop.f32.mrb[0].mxu0
    %v8147 = vadd.f32 0.0, %v8146
    %v8148 = vpop.f32.mrb[0].mxu0
    %8149 = vmatprep.mubr.bf16.mxu0 0
    %8150 = vmatmul.mubr.bf16.gmra.mrb[0].mxu0 %v7041
    %v8151 = vpop.f32.mrb[0].mxu0
    %v8152 = vadd.f32 0.0, %v8151
    %v8153 = vpop.f32.mrb[0].mxu0
    %v8154 = vpop.f32.mrb[0].mxu0
    %v8155 = vadd.f32 0.0, %v8154
    %v8156 = vpop.f32.mrb[0].mxu0
    %8157 = vmatprep.mubr.bf16.mxu0 0
    %8158 = vmatmul.mubr.bf16.gmra.mrb[0].mxu0 %v7044
    %v8159 = vpop.f32.mrb[0].mxu0
    %v8160 = vadd.f32 0.0, %v8159
    %v8161 = vpop.f32.mrb[0].mxu0
    %v8162 = vpop.f32.mrb[0].mxu0
    %v8163 = vadd.f32 0.0, %v8162
    %v8164 = vpop.f32.mrb[0].mxu0
    %8165 = vmatprep.mubr.bf16.mxu0 0
    %8166 = vmatmul.mubr.bf16.gmra.mrb[0].mxu0 %v7047
    %v8167 = vpop.f32.mrb[0].mxu0
    %v8168 = vadd.f32 0.0, %v8167
    %v8169 = vpop.f32.mrb[0].mxu0
    %v8170 = vpop.f32.mrb[0].mxu0
    %v8171 = vadd.f32 0.0, %v8170
    %v8172 = vpop.f32.mrb[0].mxu0
    %8173 = vmatprep.mubr.bf16.mxu0 0
    %8174 = vmatmul.mubr.bf16.gmra.mrb[0].mxu0 %v7050
    %v8175 = vpop.f32.mrb[0].mxu0
    %v8176 = vadd.f32 0.0, %v8175
    %v8177 = vpop.f32.mrb[0].mxu0
    %v8178 = vpop.f32.mrb[0].mxu0
    %v8179 = vadd.f32 0.0, %v8178
    %v8180 = vpop.f32.mrb[0].mxu0
    %8181 = vmatprep.mubr.bf16.mxu0 0
    %8182 = vmatmul.mubr.bf16.gmra.mrb[0].mxu0 %v7053
    %v8183 = vpop.f32.mrb[0].mxu0
    %v8184 = vadd.f32 0.0, %v8183
    %v8185 = vpop.f32.mrb[0].mxu0
    %v8186 = vpop.f32.mrb[0].mxu0
    %v8187 = vadd.f32 0.0, %v8186
    %v8188 = vpop.f32.mrb[0].mxu0
    %8189 = vmatprep.mubr.bf16.mxu0 0
    %8190 = vmatmul.mubr.bf16.gmra.mrb[0].mxu0 %v7056
    %v8191 = vpop.f32.mrb[0].mxu0
    %v8192 = vadd.f32 0.0, %v8191
    %v8193 = vpop.f32.mrb[0].mxu0
    %v8194 = vpop.f32.mrb[0].mxu0
    %v8195 = vadd.f32 0.0, %v8194
    %v8196 = vpop.f32.mrb[0].mxu0
    %8197 = vmatprep.mubr.bf16.mxu0 0
    %8198 = vmatmul.mubr.bf16.gmra.mrb[0].mxu0 %v7059
    %v8199 = vpop.f32.mrb[0].mxu0
    %v8200 = vadd.f32 0.0, %v8199
    %v8201 = vpop.f32.mrb[0].mxu0
    %v8202 = vpop.f32.mrb[0].mxu0
    %v8203 = vadd.f32 0.0, %v8202
    %v8204 = vpop.f32.mrb[0].mxu0
    %8205 = vmatprep.mubr.bf16.mxu0 0
    %8206 = vmatmul.mubr.bf16.gmra.mrb[0].mxu0 %v7062
    %v8207 = vpop.f32.mrb[0].mxu0
    %v8208 = vadd.f32 0.0, %v8207
    %v8209 = vpop.f32.mrb[0].mxu0
    %v8210 = vpop.f32.mrb[0].mxu0
    %v8211 = vadd.f32 0.0, %v8210
    %v8212 = vpop.f32.mrb[0].mxu0
    %8213 = vmatprep.mubr.bf16.mxu0 0
    %8214 = vmatmul.mubr.bf16.gmra.mrb[0].mxu0 %v7065
    %v8215 = vpop.f32.mrb[0].mxu0
    %v8216 = vadd.f32 0.0, %v8215
    %v8217 = vpop.f32.mrb[0].mxu0
    %v8218 = vpop.f32.mrb[0].mxu0
    %v8219 = vadd.f32 0.0, %v8218
    %v8220 = vpop.f32.mrb[0].mxu0
    %8221 = vmatprep.mubr.bf16.mxu0 0
    %8222 = vmatmul.mubr.bf16.gmra.mrb[0].mxu0 %v7068
    %v8223 = vpop.f32.mrb[0].mxu0
    %v8224 = vadd.f32 0.0, %v8223
    %v8225 = vpop.f32.mrb[0].mxu0
    %v8226 = vpop.f32.mrb[0].mxu0
    %v8227 = vadd.f32 0.0, %v8226
    %v8228 = vpop.f32.mrb[0].mxu0
    %8229 = vmatprep.mubr.bf16.mxu0 0
    %8230 = vmatmul.mubr.bf16.gmra.mrb[0].mxu0 %v7071
    %v8231 = vpop.f32.mrb[0].mxu0
    %v8232 = vadd.f32 0.0, %v8231
    %v8233 = vpop.f32.mrb[0].mxu0
    %v8234 = vpop.f32.mrb[0].mxu0
    %v8235 = vadd.f32 0.0, %v8234
    %v8236 = vpop.f32.mrb[0].mxu0
    %8237 = vmatprep.mubr.bf16.mxu0 0
    %8238 = vmatmul.mubr.bf16.gmra.mrb[0].mxu0 %v7074
    %v8239 = vpop.f32.mrb[0].mxu0
    %v8240 = vadd.f32 0.0, %v8239
    %v8241 = vpop.f32.mrb[0].mxu0
    %v8242 = vpop.f32.mrb[0].mxu0
    %v8243 = vadd.f32 0.0, %v8242
    %v8244 = vpop.f32.mrb[0].mxu0
    %8245 = vmatprep.mubr.bf16.mxu0 0
    %8246 = vmatmul.mubr.bf16.gmra.mrb[0].mxu0 %v7077
    %v8247 = vpop.f32.mrb[0].mxu0
    %v8248 = vadd.f32 0.0, %v8247
    %v8249 = vpop.f32.mrb[0].mxu0
    %v8250 = vpop.f32.mrb[0].mxu0
    %v8251 = vadd.f32 0.0, %v8250
    %v8252 = vpop.f32.mrb[0].mxu0
    %8253 = vmatprep.mubr.bf16.mxu0 0
    %8254 = vmatmul.mubr.bf16.gmra.mrb[0].mxu0 %v7080
    %v8255 = vpop.f32.mrb[0].mxu0
    %v8256 = vadd.f32 0.0, %v8255
    %v8257 = vpop.f32.mrb[0].mxu0
    %v8258 = vpop.f32.mrb[0].mxu0
    %v8259 = vadd.f32 0.0, %v8258
    %v8260 = vpop.f32.mrb[0].mxu0
    %8261 = vmatprep.mubr.bf16.mxu0 0
    %8262 = vmatmul.mubr.bf16.gmra.mrb[0].mxu0 %v7083
    %v8263 = vpop.f32.mrb[0].mxu0
    %v8264 = vadd.f32 0.0, %v8263
    %v8265 = vpop.f32.mrb[0].mxu0
    %v8266 = vpop.f32.mrb[0].mxu0
    %v8267 = vpop.f32.mrb[0].mxu0
    %8268 = vdwg.mxu0
    %v8269 = vadd.f32 %v4178, %v7120
    %v8270 = vadd.f32 %v4181, %v7123
    %v8271 = vadd.f32 %v4186, %v7128
    %v8272 = vadd.f32 %v4189, %v7131
    %v8273 = vadd.f32 %v4194, %v7136
    %v8274 = vadd.f32 %v4197, %v7139
    %v8275 = vadd.f32 %v4202, %v7144
    %v8276 = vadd.f32 %v4205, %v7147
    %v8277 = vadd.f32 %v4210, %v7152
    %v8278 = vadd.f32 %v4213, %v7155
    %v8279 = vadd.f32 %v4218, %v7160
    %v8280 = vadd.f32 %v4221, %v7163
    %v8281 = vadd.f32 %v4226, %v7168
    %v8282 = vadd.f32 %v4229, %v7171
    %v8283 = vadd.f32 %v4234, %v7176
    %v8284 = vadd.f32 %v4237, %v7179
    %v8285 = vadd.f32 %v4242, %v7184
    %v8286 = vadd.f32 %v4245, %v7187
    %v8287 = vadd.f32 %v4250, %v7192
    %v8288 = vadd.f32 %v4253, %v7195
    %v8289 = vadd.f32 %v4258, %v7200
    %v8290 = vadd.f32 %v4261, %v7203
    %v8291 = vadd.f32 %v4266, %v7208
    %v8292 = vadd.f32 %v4269, %v7211
    %v8293 = vadd.f32 %v4274, %v7216
    %v8294 = vadd.f32 %v4277, %v7219
    %v8295 = vadd.f32 %v4282, %v7224
    %v8296 = vadd.f32 %v4285, %v7227
    %v8297 = vadd.f32 %v4290, %v7232
    %v8298 = vadd.f32 %v4293, %v7235
    %v8299 = vadd.f32 %v4298, %v7240
    %v8300 = vadd.f32 %v4301, %v7243
    %v8301 = vadd.f32 %v4306, %v7248
    %v8302 = vadd.f32 %v4309, %v7251
    %v8303 = vadd.f32 %v4314, %v7256
    %v8304 = vadd.f32 %v4317, %v7259
    %v8305 = vadd.f32 %v4322, %v7264
    %v8306 = vadd.f32 %v4325, %v7267
    %v8307 = vadd.f32 %v4330, %v7272
    %v8308 = vadd.f32 %v4333, %v7275
    %v8309 = vadd.f32 %v4338, %v7280
    %v8310 = vadd.f32 %v4341, %v7283
    %v8311 = vadd.f32 %v4346, %v7288
    %v8312 = vadd.f32 %v4349, %v7291
    %v8313 = vadd.f32 %v4354, %v7296
    %v8314 = vadd.f32 %v4357, %v7299
    %v8315 = vadd.f32 %v4362, %v7304
    %v8316 = vadd.f32 %v4365, %v7307
    %v8317 = vadd.f32 %v4370, %v7312
    %v8318 = vadd.f32 %v4373, %v7315
    %v8319 = vadd.f32 %v4378, %v7320
    %v8320 = vadd.f32 %v4381, %v7323
    %v8321 = vadd.f32 %v4386, %v7328
    %v8322 = vadd.f32 %v4389, %v7331
    %v8323 = vadd.f32 %v4394, %v7336
    %v8324 = vadd.f32 %v4397, %v7339
    %v8325 = vadd.f32 %v4402, %v7344
    %v8326 = vadd.f32 %v4405, %v7347
    %v8327 = vadd.f32 %v4410, %v7352
    %v8328 = vadd.f32 %v4413, %v7355
    %v8329 = vadd.f32 %v4418, %v7360
    %v8330 = vadd.f32 %v4421, %v7363
    %v8331 = vadd.f32 %v4426, %v7368
    %v8332 = vadd.f32 %v4429, %v7371
    %v8333 = vadd.f32 %v4434, %v7376
    %v8334 = vadd.f32 %v4437, %v7379
    %v8335 = vadd.f32 %v4442, %v7384
    %v8336 = vadd.f32 %v4445, %v7387
    %v8337 = vadd.f32 %v4450, %v7392
    %v8338 = vadd.f32 %v4453, %v7395
    %v8339 = vadd.f32 %v4458, %v7400
    %v8340 = vadd.f32 %v4461, %v7403
    %v8341 = vadd.f32 %v4466, %v7408
    %v8342 = vadd.f32 %v4469, %v7411
    %v8343 = vadd.f32 %v4474, %v7416
    %v8344 = vadd.f32 %v4477, %v7419
    %v8345 = vadd.f32 %v4482, %v7424
    %v8346 = vadd.f32 %v4485, %v7427
    %v8347 = vadd.f32 %v4490, %v7432
    %v8348 = vadd.f32 %v4493, %v7435
    %v8349 = vadd.f32 %v4498, %v7440
    %v8350 = vadd.f32 %v4501, %v7443
    %v8351 = vadd.f32 %v4506, %v7448
    %v8352 = vadd.f32 %v4509, %v7451
    %v8353 = vadd.f32 %v4514, %v7456
    %v8354 = vadd.f32 %v4517, %v7459
    %v8355 = vadd.f32 %v4522, %v7464
    %v8356 = vadd.f32 %v4525, %v7467
    %v8357 = vadd.f32 %v4530, %v7472
    %v8358 = vadd.f32 %v4533, %v7475
    %v8359 = vadd.f32 %v4538, %v7480
    %v8360 = vadd.f32 %v4541, %v7483
    %v8361 = vadd.f32 %v4546, %v7488
    %v8362 = vadd.f32 %v4549, %v7491
    %v8363 = vadd.f32 %v4554, %v7496
    %v8364 = vadd.f32 %v4557, %v7499
    %v8365 = vadd.f32 %v4562, %v7504
    %v8366 = vadd.f32 %v4565, %v7507
    %v8367 = vadd.f32 %v4570, %v7512
    %v8368 = vadd.f32 %v4573, %v7515
    %v8369 = vadd.f32 %v4578, %v7520
    %v8370 = vadd.f32 %v4581, %v7523
    %v8371 = vadd.f32 %v4586, %v7528
    %v8372 = vadd.f32 %v4589, %v7531
    %v8373 = vadd.f32 %v4594, %v7536
    %v8374 = vadd.f32 %v4597, %v7539
    %v8375 = vadd.f32 %v4602, %v7544
    %v8376 = vadd.f32 %v4605, %v7547
    %v8377 = vadd.f32 %v4610, %v7552
    %v8378 = vadd.f32 %v4613, %v7555
    %v8379 = vadd.f32 %v4618, %v7560
    %v8380 = vadd.f32 %v4621, %v7563
    %v8381 = vadd.f32 %v4626, %v7568
    %v8382 = vadd.f32 %v4629, %v7571
    %v8383 = vadd.f32 %v4634, %v7576
    %v8384 = vadd.f32 %v4637, %v7579
    %v8385 = vadd.f32 %v4642, %v7584
    %v8386 = vadd.f32 %v4645, %v7587
    %v8387 = vadd.f32 %v4650, %v7592
    %v8388 = vadd.f32 %v4653, %v7595
    %v8389 = vadd.f32 %v4658, %v7600
    %v8390 = vadd.f32 %v4661, %v7603
    %v8391 = vadd.f32 %v4666, %v7608
    %v8392 = vadd.f32 %v4669, %v7611
    %v8393 = vadd.f32 %v4674, %v7616
    %v8394 = vadd.f32 %v4677, %v7619
    %v8395 = vadd.f32 %v4682, %v7624
    %v8396 = vadd.f32 %v4685, %v7627
    %v8397 = vadd.f32 %v4690, %v7632
    %v8398 = vadd.f32 %v4693, %v7635
    %v8399 = vadd.f32 %v4698, %v7640
    %v8400 = vadd.f32 %v4701, %v7643
    %v8401 = vadd.f32 %v4706, %v7648
    %v8402 = vadd.f32 %v4709, %v7651
    %v8403 = vadd.f32 %v4714, %v7656
    %v8404 = vadd.f32 %v4717, %v7659
    %v8405 = vadd.f32 %v4722, %v7664
    %v8406 = vadd.f32 %v4725, %v7667
    %v8407 = vadd.f32 %v4730, %v7672
    %v8408 = vadd.f32 %v4733, %v7675
    %v8409 = vadd.f32 %v4738, %v7680
    %v8410 = vadd.f32 %v4741, %v7683
    %v8411 = vadd.f32 %v4746, %v7688
    %v8412 = vadd.f32 %v4749, %v7691
    %v8413 = vadd.f32 %v4754, %v7696
    %v8414 = vadd.f32 %v4757, %v7699
    %v8415 = vadd.f32 %v4762, %v7704
    %v8416 = vadd.f32 %v4765, %v7707
    %v8417 = vadd.f32 %v4770, %v7712
    %v8418 = vadd.f32 %v4773, %v7715
    %v8419 = vadd.f32 %v4778, %v7720
    %v8420 = vadd.f32 %v4781, %v7723
    %v8421 = vadd.f32 %v4786, %v7728
    %v8422 = vadd.f32 %v4789, %v7731
    %v8423 = vadd.f32 %v4794, %v7736
    %v8424 = vadd.f32 %v4797, %v7739
    %v8425 = vadd.f32 %v4802, %v7744
    %v8426 = vadd.f32 %v4805, %v7747
    %v8427 = vadd.f32 %v4810, %v7752
    %v8428 = vadd.f32 %v4813, %v7755
    %v8429 = vadd.f32 %v4818, %v7760
    %v8430 = vadd.f32 %v4821, %v7763
    %v8431 = vadd.f32 %v4826, %v7768
    %v8432 = vadd.f32 %v4829, %v7771
    %v8433 = vadd.f32 %v4834, %v7776
    %v8434 = vadd.f32 %v4837, %v7779
    %v8435 = vadd.f32 %v4842, %v7784
    %v8436 = vadd.f32 %v4845, %v7787
    %v8437 = vadd.f32 %v4850, %v7792
    %v8438 = vadd.f32 %v4853, %v7795
    %v8439 = vadd.f32 %v4858, %v7800
    %v8440 = vadd.f32 %v4861, %v7803
    %v8441 = vadd.f32 %v4866, %v7808
    %v8442 = vadd.f32 %v4869, %v7811
    %v8443 = vadd.f32 %v4874, %v7816
    %v8444 = vadd.f32 %v4877, %v7819
    %v8445 = vadd.f32 %v4882, %v7824
    %v8446 = vadd.f32 %v4885, %v7827
    %v8447 = vadd.f32 %v4890, %v7832
    %v8448 = vadd.f32 %v4893, %v7835
    %v8449 = vadd.f32 %v4898, %v7840
    %v8450 = vadd.f32 %v4901, %v7843
    %v8451 = vadd.f32 %v4906, %v7848
    %v8452 = vadd.f32 %v4909, %v7851
    %v8453 = vadd.f32 %v4914, %v7856
    %v8454 = vadd.f32 %v4917, %v7859
    %v8455 = vadd.f32 %v4922, %v7864
    %v8456 = vadd.f32 %v4925, %v7867
    %v8457 = vadd.f32 %v4930, %v7872
    %v8458 = vadd.f32 %v4933, %v7875
    %v8459 = vadd.f32 %v4938, %v7880
    %v8460 = vadd.f32 %v4941, %v7883
    %v8461 = vadd.f32 %v4946, %v7888
    %v8462 = vadd.f32 %v4949, %v7891
    %v8463 = vadd.f32 %v4954, %v7896
    %v8464 = vadd.f32 %v4957, %v7899
    %v8465 = vadd.f32 %v4962, %v7904
    %v8466 = vadd.f32 %v4965, %v7907
    %v8467 = vadd.f32 %v4970, %v7912
    %v8468 = vadd.f32 %v4973, %v7915
    %v8469 = vadd.f32 %v4978, %v7920
    %v8470 = vadd.f32 %v4981, %v7923
    %v8471 = vadd.f32 %v4986, %v7928
    %v8472 = vadd.f32 %v4989, %v7931
    %v8473 = vadd.f32 %v4994, %v7936
    %v8474 = vadd.f32 %v4997, %v7939
    %v8475 = vadd.f32 %v5002, %v7944
    %v8476 = vadd.f32 %v5005, %v7947
    %v8477 = vadd.f32 %v5010, %v7952
    %v8478 = vadd.f32 %v5013, %v7955
    %v8479 = vadd.f32 %v5018, %v7960
    %v8480 = vadd.f32 %v5021, %v7963
    %v8481 = vadd.f32 %v5026, %v7968
    %v8482 = vadd.f32 %v5029, %v7971
    %v8483 = vadd.f32 %v5034, %v7976
    %v8484 = vadd.f32 %v5037, %v7979
    %v8485 = vadd.f32 %v5042, %v7984
    %v8486 = vadd.f32 %v5045, %v7987
    %v8487 = vadd.f32 %v5050, %v7992
    %v8488 = vadd.f32 %v5053, %v7995
    %v8489 = vadd.f32 %v5058, %v8000
    %v8490 = vadd.f32 %v5061, %v8003
    %v8491 = vadd.f32 %v5066, %v8008
    %v8492 = vadd.f32 %v5069, %v8011
    %v8493 = vadd.f32 %v5074, %v8016
    %v8494 = vadd.f32 %v5077, %v8019
    %v8495 = vadd.f32 %v5082, %v8024
    %v8496 = vadd.f32 %v5085, %v8027
    %v8497 = vadd.f32 %v5090, %v8032
    %v8498 = vadd.f32 %v5093, %v8035
    %v8499 = vadd.f32 %v5098, %v8040
    %v8500 = vadd.f32 %v5101, %v8043
    %v8501 = vadd.f32 %v5106, %v8048
    %v8502 = vadd.f32 %v5109, %v8051
    %v8503 = vadd.f32 %v5114, %v8056
    %v8504 = vadd.f32 %v5117, %v8059
    %v8505 = vadd.f32 %v5122, %v8064
    %v8506 = vadd.f32 %v5125, %v8067
    %v8507 = vadd.f32 %v5130, %v8072
    %v8508 = vadd.f32 %v5133, %v8075
    %v8509 = vadd.f32 %v5138, %v8080
    %v8510 = vadd.f32 %v5141, %v8083
    %v8511 = vadd.f32 %v5146, %v8088
    %v8512 = vadd.f32 %v5149, %v8091
    %v8513 = vadd.f32 %v5154, %v8096
    %v8514 = vadd.f32 %v5157, %v8099
    %v8515 = vadd.f32 %v5162, %v8104
    %v8516 = vadd.f32 %v5165, %v8107
    %v8517 = vadd.f32 %v5170, %v8112
    %v8518 = vadd.f32 %v5173, %v8115
    %v8519 = vadd.f32 %v5178, %v8120
    %v8520 = vadd.f32 %v5181, %v8123
    %v8521 = vadd.f32 %v5186, %v8128
    %v8522 = vadd.f32 %v5189, %v8131
    %v8523 = vadd.f32 %v5194, %v8136
    %v8524 = vadd.f32 %v5197, %v8139
    %v8525 = vadd.f32 %v5202, %v8144
    %v8526 = vadd.f32 %v5205, %v8147
    %v8527 = vadd.f32 %v5210, %v8152
    %v8528 = vadd.f32 %v5213, %v8155
    %v8529 = vadd.f32 %v5218, %v8160
    %v8530 = vadd.f32 %v5221, %v8163
    %v8531 = vadd.f32 %v5226, %v8168
    %v8532 = vadd.f32 %v5229, %v8171
    %v8533 = vadd.f32 %v5234, %v8176
    %v8534 = vadd.f32 %v5237, %v8179
    %v8535 = vadd.f32 %v5242, %v8184
    %v8536 = vadd.f32 %v5245, %v8187
    %v8537 = vadd.f32 %v5250, %v8192
    %v8538 = vadd.f32 %v5253, %v8195
    %v8539 = vadd.f32 %v5258, %v8200
    %v8540 = vadd.f32 %v5261, %v8203
    %v8541 = vadd.f32 %v5266, %v8208
    %v8542 = vadd.f32 %v5269, %v8211
    %v8543 = vadd.f32 %v5274, %v8216
    %v8544 = vadd.f32 %v5277, %v8219
    %v8545 = vadd.f32 %v5282, %v8224
    %v8546 = vadd.f32 %v5285, %v8227
    %v8547 = vadd.f32 %v5290, %v8232
    %v8548 = vadd.f32 %v5293, %v8235
    %v8549 = vadd.f32 %v5298, %v8240
    %v8550 = vadd.f32 %v5301, %v8243
    %v8551 = vadd.f32 %v5306, %v8248
    %v8552 = vadd.f32 %v5309, %v8251
    %v8553 = vadd.f32 %v5314, %v8256
    %v8554 = vadd.f32 %v5317, %v8259
    %v8555 = vadd.f32 %v5322, %v8264
    %s8556 = scalar_lea.vmem %s1, 96
    %v8557 = vld [vmem:[%s8556] sm:$0xf]
    %v8558 = vld [vmem:[%s8556 + $0x4] sm:$0xf]
    %v8559 = vld [vmem:[%s8556 + $0x8] sm:$0xf]
    %v8560 = vld [vmem:[%s8556 + $0xc] sm:$0xf]
    %v8561 = vld [vmem:[%s8556 + $0x10] sm:$0xf]
    %v8562 = vld [vmem:[%s8556 + $0x14] sm:$0xf]
    %v8563 = vld [vmem:[%s8556 + $0x18] sm:$0xf]
    %v8564 = vld [vmem:[%s8556 + $0x1c] sm:$0xf]
    %vm8565 = vsmask.f32 5376
    %v8567 = vshrl.u32 %v6197, 16
    %v8569 = vrot.slane %v8567, 2
    %v8570 = vshll.u32 %v6197, 16
    %v8572 = vrot.slane %v8570, 3
    %v8573 = vor.u32 %v8569, %v8572
    %v8575 = vshrl.u32 %v6198, 16
    %v8577 = vrot.slane %v8575, 2
    %v8578 = vshll.u32 %v6198, 16
    %v8580 = vrot.slane %v8578, 3
    %v8581 = vor.u32 %v8577, %v8580
    %v8582 = vsel %vm8565, %v8573, %v8581
    %v8584 = vshrl.u32 %v6199, 16
    %v8586 = vrot.slane %v8584, 2
    %v8587 = vshll.u32 %v6199, 16
    %v8589 = vrot.slane %v8587, 3
    %v8590 = vor.u32 %v8586, %v8589
    %v8591 = vsel %vm8565, %v8581, %v8590
    %v8593 = vshrl.u32 %v6200, 16
    %v8595 = vrot.slane %v8593, 2
    %v8596 = vshll.u32 %v6200, 16
    %v8598 = vrot.slane %v8596, 3
    %v8599 = vor.u32 %v8595, %v8598
    %v8600 = vsel %vm8565, %v8590, %v8599
    %v8602 = vshrl.u32 %v6201, 16
    %v8604 = vrot.slane %v8602, 2
    %v8605 = vshll.u32 %v6201, 16
    %v8607 = vrot.slane %v8605, 3
    %v8608 = vor.u32 %v8604, %v8607
    %v8609 = vsel %vm8565, %v8599, %v8608
    %v8611 = vshrl.u32 %v6202, 16
    %v8613 = vrot.slane %v8611, 2
    %v8614 = vshll.u32 %v6202, 16
    %v8616 = vrot.slane %v8614, 3
    %v8617 = vor.u32 %v8613, %v8616
    %v8618 = vsel %vm8565, %v8608, %v8617
    %v8620 = vshrl.u32 %v6203, 16
    %v8622 = vrot.slane %v8620, 2
    %v8623 = vshll.u32 %v6203, 16
    %v8625 = vrot.slane %v8623, 3
    %v8626 = vor.u32 %v8622, %v8625
    %v8627 = vsel %vm8565, %v8617, %v8626
    %v8629 = vshrl.u32 %v6204, 16
    %v8631 = vrot.slane %v8629, 2
    %v8632 = vshll.u32 %v6204, 16
    %v8634 = vrot.slane %v8632, 3
    %v8635 = vor.u32 %v8631, %v8634
    %v8636 = vsel %vm8565, %v8626, %v8635
    %v8638 = vshrl.u32 %v6205, 16
    %v8640 = vrot.slane %v8638, 2
    %v8641 = vshll.u32 %v6205, 16
    %v8643 = vrot.slane %v8641, 3
    %v8644 = vor.u32 %v8640, %v8643
    %v8645 = vsel %vm8565, %v8635, %v8644
    %v8647 = vshrl.u32 %v6206, 16
    %v8649 = vrot.slane %v8647, 2
    %v8650 = vshll.u32 %v6206, 16
    %v8652 = vrot.slane %v8650, 3
    %v8653 = vor.u32 %v8649, %v8652
    %v8654 = vsel %vm8565, %v8644, %v8653
    %v8656 = vshrl.u32 %v6207, 16
    %v8658 = vrot.slane %v8656, 2
    %v8659 = vshll.u32 %v6207, 16
    %v8661 = vrot.slane %v8659, 3
    %v8662 = vor.u32 %v8658, %v8661
    %v8663 = vsel %vm8565, %v8653, %v8662
    %v8665 = vshrl.u32 %v6208, 16
    %v8667 = vrot.slane %v8665, 2
    %v8668 = vshll.u32 %v6208, 16
    %v8670 = vrot.slane %v8668, 3
    %v8671 = vor.u32 %v8667, %v8670
    %v8672 = vsel %vm8565, %v8662, %v8671
    %v8674 = vshrl.u32 %v6209, 16
    %v8676 = vrot.slane %v8674, 2
    %v8677 = vshll.u32 %v6209, 16
    %v8679 = vrot.slane %v8677, 3
    %v8680 = vor.u32 %v8676, %v8679
    %v8681 = vsel %vm8565, %v8671, %v8680
    %v8683 = vshrl.u32 %v6210, 16
    %v8685 = vrot.slane %v8683, 2
    %v8686 = vshll.u32 %v6210, 16
    %v8688 = vrot.slane %v8686, 3
    %v8689 = vor.u32 %v8685, %v8688
    %v8690 = vsel %vm8565, %v8680, %v8689
    %v8692 = vshrl.u32 %v6211, 16
    %v8694 = vrot.slane %v8692, 2
    %v8695 = vshll.u32 %v6211, 16
    %v8697 = vrot.slane %v8695, 3
    %v8698 = vor.u32 %v8694, %v8697
    %v8699 = vsel %vm8565, %v8689, %v8698
    %v8701 = vshrl.u32 %v6212, 16
    %v8703 = vrot.slane %v8701, 2
    %v8704 = vshll.u32 %v6212, 16
    %v8706 = vrot.slane %v8704, 3
    %v8707 = vor.u32 %v8703, %v8706
    %v8708 = vsel %vm8565, %v8698, %v8707
    %v8710 = vshrl.u32 %v6213, 16
    %v8712 = vrot.slane %v8710, 2
    %v8713 = vshll.u32 %v6213, 16
    %v8715 = vrot.slane %v8713, 3
    %v8716 = vor.u32 %v8712, %v8715
    %v8717 = vsel %vm8565, %v8707, %v8716
    %v8719 = vshrl.u32 %v6214, 16
    %v8721 = vrot.slane %v8719, 2
    %v8722 = vshll.u32 %v6214, 16
    %v8724 = vrot.slane %v8722, 3
    %v8725 = vor.u32 %v8721, %v8724
    %v8726 = vsel %vm8565, %v8716, %v8725
    %v8728 = vshrl.u32 %v6215, 16
    %v8730 = vrot.slane %v8728, 2
    %v8731 = vshll.u32 %v6215, 16
    %v8733 = vrot.slane %v8731, 3
    %v8734 = vor.u32 %v8730, %v8733
    %v8735 = vsel %vm8565, %v8725, %v8734
    %v8737 = vshrl.u32 %v6216, 16
    %v8739 = vrot.slane %v8737, 2
    %v8740 = vshll.u32 %v6216, 16
    %v8742 = vrot.slane %v8740, 3
    %v8743 = vor.u32 %v8739, %v8742
    %v8744 = vsel %vm8565, %v8734, %v8743
    %v8746 = vshrl.u32 %v6217, 16
    %v8748 = vrot.slane %v8746, 2
    %v8749 = vshll.u32 %v6217, 16
    %v8751 = vrot.slane %v8749, 3
    %v8752 = vor.u32 %v8748, %v8751
    %v8753 = vsel %vm8565, %v8743, %v8752
    %v8755 = vshrl.u32 %v6218, 16
    %v8757 = vrot.slane %v8755, 2
    %v8758 = vshll.u32 %v6218, 16
    %v8760 = vrot.slane %v8758, 3
    %v8761 = vor.u32 %v8757, %v8760
    %v8762 = vsel %vm8565, %v8752, %v8761
    %v8764 = vshrl.u32 %v6219, 16
    %v8766 = vrot.slane %v8764, 2
    %v8767 = vshll.u32 %v6219, 16
    %v8769 = vrot.slane %v8767, 3
    %v8770 = vor.u32 %v8766, %v8769
    %v8771 = vsel %vm8565, %v8761, %v8770
    %v8773 = vshrl.u32 %v6220, 16
    %v8775 = vrot.slane %v8773, 2
    %v8776 = vshll.u32 %v6220, 16
    %v8778 = vrot.slane %v8776, 3
    %v8779 = vor.u32 %v8775, %v8778
    %v8780 = vsel %vm8565, %v8770, %v8779
    %v8782 = vshrl.u32 %v6221, 16
    %v8784 = vrot.slane %v8782, 2
    %v8785 = vshll.u32 %v6221, 16
    %v8787 = vrot.slane %v8785, 3
    %v8788 = vor.u32 %v8784, %v8787
    %v8789 = vsel %vm8565, %v8779, %v8788
    %v8791 = vshrl.u32 %v6222, 16
    %v8793 = vrot.slane %v8791, 2
    %v8794 = vshll.u32 %v6222, 16
    %v8796 = vrot.slane %v8794, 3
    %v8797 = vor.u32 %v8793, %v8796
    %v8798 = vsel %vm8565, %v8788, %v8797
    %v8800 = vshrl.u32 %v6223, 16
    %v8802 = vrot.slane %v8800, 2
    %v8803 = vshll.u32 %v6223, 16
    %v8805 = vrot.slane %v8803, 3
    %v8806 = vor.u32 %v8802, %v8805
    %v8807 = vsel %vm8565, %v8797, %v8806
    %v8809 = vshrl.u32 %v6224, 16
    %v8811 = vrot.slane %v8809, 2
    %v8812 = vshll.u32 %v6224, 16
    %v8814 = vrot.slane %v8812, 3
    %v8815 = vor.u32 %v8811, %v8814
    %v8816 = vsel %vm8565, %v8806, %v8815
    %v8818 = vshrl.u32 %v6225, 16
    %v8820 = vrot.slane %v8818, 2
    %v8821 = vshll.u32 %v6225, 16
    %v8823 = vrot.slane %v8821, 3
    %v8824 = vor.u32 %v8820, %v8823
    %v8825 = vsel %vm8565, %v8815, %v8824
    %v8827 = vshrl.u32 %v6226, 16
    %v8829 = vrot.slane %v8827, 2
    %v8830 = vshll.u32 %v6226, 16
    %v8832 = vrot.slane %v8830, 3
    %v8833 = vor.u32 %v8829, %v8832
    %v8834 = vsel %vm8565, %v8824, %v8833
    %v8836 = vshrl.u32 %v6227, 16
    %v8838 = vrot.slane %v8836, 2
    %v8839 = vshll.u32 %v6227, 16
    %v8841 = vrot.slane %v8839, 3
    %v8842 = vor.u32 %v8838, %v8841
    %v8843 = vsel %vm8565, %v8833, %v8842
    %v8845 = vshrl.u32 %v6228, 16
    %v8847 = vrot.slane %v8845, 2
    %v8848 = vshll.u32 %v6228, 16
    %v8850 = vrot.slane %v8848, 3
    %v8851 = vor.u32 %v8847, %v8850
    %v8852 = vsel %vm8565, %v8842, %v8851
    %v8854 = vshrl.u32 %v6229, 16
    %v8856 = vrot.slane %v8854, 2
    %v8857 = vshll.u32 %v6229, 16
    %v8859 = vrot.slane %v8857, 3
    %v8860 = vor.u32 %v8856, %v8859
    %v8861 = vsel %vm8565, %v8851, %v8860
    %v8863 = vshrl.u32 %v6230, 16
    %v8865 = vrot.slane %v8863, 2
    %v8866 = vshll.u32 %v6230, 16
    %v8868 = vrot.slane %v8866, 3
    %v8869 = vor.u32 %v8865, %v8868
    %v8870 = vsel %vm8565, %v8860, %v8869
    %v8872 = vshrl.u32 %v6231, 16
    %v8874 = vrot.slane %v8872, 2
    %v8875 = vshll.u32 %v6231, 16
    %v8877 = vrot.slane %v8875, 3
    %v8878 = vor.u32 %v8874, %v8877
    %v8879 = vsel %vm8565, %v8869, %v8878
    %v8881 = vshrl.u32 %v6232, 16
    %v8883 = vrot.slane %v8881, 2
    %v8884 = vshll.u32 %v6232, 16
    %v8886 = vrot.slane %v8884, 3
    %v8887 = vor.u32 %v8883, %v8886
    %v8888 = vsel %vm8565, %v8878, %v8887
    %v8890 = vshrl.u32 %v6233, 16
    %v8892 = vrot.slane %v8890, 2
    %v8893 = vshll.u32 %v6233, 16
    %v8895 = vrot.slane %v8893, 3
    %v8896 = vor.u32 %v8892, %v8895
    %v8897 = vsel %vm8565, %v8887, %v8896
    %v8899 = vshrl.u32 %v6234, 16
    %v8901 = vrot.slane %v8899, 2
    %v8902 = vshll.u32 %v6234, 16
    %v8904 = vrot.slane %v8902, 3
    %v8905 = vor.u32 %v8901, %v8904
    %v8906 = vsel %vm8565, %v8896, %v8905
    %v8908 = vshrl.u32 %v6235, 16
    %v8910 = vrot.slane %v8908, 2
    %v8911 = vshll.u32 %v6235, 16
    %v8913 = vrot.slane %v8911, 3
    %v8914 = vor.u32 %v8910, %v8913
    %v8915 = vsel %vm8565, %v8905, %v8914
    %v8917 = vshrl.u32 %v6236, 16
    %v8919 = vrot.slane %v8917, 2
    %v8920 = vshll.u32 %v6236, 16
    %v8922 = vrot.slane %v8920, 3
    %v8923 = vor.u32 %v8919, %v8922
    %v8924 = vsel %vm8565, %v8914, %v8923
    %v8926 = vshrl.u32 %v6237, 16
    %v8928 = vrot.slane %v8926, 2
    %v8929 = vshll.u32 %v6237, 16
    %v8931 = vrot.slane %v8929, 3
    %v8932 = vor.u32 %v8928, %v8931
    %v8933 = vsel %vm8565, %v8923, %v8932
    %v8935 = vshrl.u32 %v6238, 16
    %v8937 = vrot.slane %v8935, 2
    %v8938 = vshll.u32 %v6238, 16
    %v8940 = vrot.slane %v8938, 3
    %v8941 = vor.u32 %v8937, %v8940
    %v8942 = vsel %vm8565, %v8932, %v8941
    %v8944 = vshrl.u32 %v6239, 16
    %v8946 = vrot.slane %v8944, 2
    %v8947 = vshll.u32 %v6239, 16
    %v8949 = vrot.slane %v8947, 3
    %v8950 = vor.u32 %v8946, %v8949
    %v8951 = vsel %vm8565, %v8941, %v8950
    %v8953 = vshrl.u32 %v6240, 16
    %v8955 = vrot.slane %v8953, 2
    %v8956 = vshll.u32 %v6240, 16
    %v8958 = vrot.slane %v8956, 3
    %v8959 = vor.u32 %v8955, %v8958
    %v8960 = vsel %vm8565, %v8950, %v8959
    %v8962 = vshrl.u32 %v6241, 16
    %v8964 = vrot.slane %v8962, 2
    %v8965 = vshll.u32 %v6241, 16
    %v8967 = vrot.slane %v8965, 3
    %v8968 = vor.u32 %v8964, %v8967
    %v8969 = vsel %vm8565, %v8959, %v8968
    %v8971 = vshrl.u32 %v6242, 16
    %v8973 = vrot.slane %v8971, 2
    %v8974 = vshll.u32 %v6242, 16
    %v8976 = vrot.slane %v8974, 3
    %v8977 = vor.u32 %v8973, %v8976
    %v8978 = vsel %vm8565, %v8968, %v8977
    %v8980 = vshrl.u32 %v6243, 16
    %v8982 = vrot.slane %v8980, 2
    %v8983 = vshll.u32 %v6243, 16
    %v8985 = vrot.slane %v8983, 3
    %v8986 = vor.u32 %v8982, %v8985
    %v8987 = vsel %vm8565, %v8977, %v8986
    %v8989 = vshrl.u32 %v6244, 16
    %v8991 = vrot.slane %v8989, 2
    %v8992 = vshll.u32 %v6244, 16
    %v8994 = vrot.slane %v8992, 3
    %v8995 = vor.u32 %v8991, %v8994
    %v8996 = vsel %vm8565, %v8986, %v8995
    %v8998 = vshrl.u32 %v6245, 16
    %v9000 = vrot.slane %v8998, 2
    %v9001 = vshll.u32 %v6245, 16
    %v9003 = vrot.slane %v9001, 3
    %v9004 = vor.u32 %v9000, %v9003
    %v9005 = vsel %vm8565, %v8995, %v9004
    %v9007 = vshrl.u32 %v6246, 16
    %v9009 = vrot.slane %v9007, 2
    %v9010 = vshll.u32 %v6246, 16
    %v9012 = vrot.slane %v9010, 3
    %v9013 = vor.u32 %v9009, %v9012
    %v9014 = vsel %vm8565, %v9004, %v9013
    %v9016 = vshrl.u32 %v6247, 16
    %v9018 = vrot.slane %v9016, 2
    %v9019 = vshll.u32 %v6247, 16
    %v9021 = vrot.slane %v9019, 3
    %v9022 = vor.u32 %v9018, %v9021
    %v9023 = vsel %vm8565, %v9013, %v9022
    %v9025 = vshrl.u32 %v6248, 16
    %v9027 = vrot.slane %v9025, 2
    %v9028 = vshll.u32 %v6248, 16
    %v9030 = vrot.slane %v9028, 3
    %v9031 = vor.u32 %v9027, %v9030
    %v9032 = vsel %vm8565, %v9022, %v9031
    %v9034 = vshrl.u32 %v6249, 16
    %v9036 = vrot.slane %v9034, 2
    %v9037 = vshll.u32 %v6249, 16
    %v9039 = vrot.slane %v9037, 3
    %v9040 = vor.u32 %v9036, %v9039
    %v9041 = vsel %vm8565, %v9031, %v9040
    %v9043 = vshrl.u32 %v6250, 16
    %v9045 = vrot.slane %v9043, 2
    %v9046 = vshll.u32 %v6250, 16
    %v9048 = vrot.slane %v9046, 3
    %v9049 = vor.u32 %v9045, %v9048
    %v9050 = vsel %vm8565, %v9040, %v9049
    %v9052 = vshrl.u32 %v6251, 16
    %v9054 = vrot.slane %v9052, 2
    %v9055 = vshll.u32 %v6251, 16
    %v9057 = vrot.slane %v9055, 3
    %v9058 = vor.u32 %v9054, %v9057
    %v9059 = vsel %vm8565, %v9049, %v9058
    %v9061 = vshrl.u32 %v6252, 16
    %v9063 = vrot.slane %v9061, 2
    %v9064 = vshll.u32 %v6252, 16
    %v9066 = vrot.slane %v9064, 3
    %v9067 = vor.u32 %v9063, %v9066
    %v9068 = vsel %vm8565, %v9058, %v9067
    %v9070 = vshrl.u32 %v6253, 16
    %v9072 = vrot.slane %v9070, 2
    %v9073 = vshll.u32 %v6253, 16
    %v9075 = vrot.slane %v9073, 3
    %v9076 = vor.u32 %v9072, %v9075
    %v9077 = vsel %vm8565, %v9067, %v9076
    %v9079 = vshrl.u32 %v6254, 16
    %v9081 = vrot.slane %v9079, 2
    %v9082 = vshll.u32 %v6254, 16
    %v9084 = vrot.slane %v9082, 3
    %v9085 = vor.u32 %v9081, %v9084
    %v9086 = vsel %vm8565, %v9076, %v9085
    %v9088 = vshrl.u32 %v6255, 16
    %v9090 = vrot.slane %v9088, 2
    %v9091 = vshll.u32 %v6255, 16
    %v9093 = vrot.slane %v9091, 3
    %v9094 = vor.u32 %v9090, %v9093
    %v9095 = vsel %vm8565, %v9085, %v9094
    %v9097 = vshrl.u32 %v6256, 16
    %v9099 = vrot.slane %v9097, 2
    %v9100 = vshll.u32 %v6256, 16
    %v9102 = vrot.slane %v9100, 3
    %v9103 = vor.u32 %v9099, %v9102
    %v9104 = vsel %vm8565, %v9094, %v9103
    %v9106 = vshrl.u32 %v6257, 16
    %v9108 = vrot.slane %v9106, 2
    %v9109 = vshll.u32 %v6257, 16
    %v9111 = vrot.slane %v9109, 3
    %v9112 = vor.u32 %v9108, %v9111
    %v9113 = vsel %vm8565, %v9103, %v9112
    %v9115 = vshrl.u32 %v6258, 16
    %v9117 = vrot.slane %v9115, 2
    %v9118 = vshll.u32 %v6258, 16
    %v9120 = vrot.slane %v9118, 3
    %v9121 = vor.u32 %v9117, %v9120
    %v9122 = vsel %vm8565, %v9112, %v9121
    %v9124 = vshrl.u32 %v6259, 16
    %v9126 = vrot.slane %v9124, 2
    %v9127 = vshll.u32 %v6259, 16
    %v9129 = vrot.slane %v9127, 3
    %v9130 = vor.u32 %v9126, %v9129
    %v9131 = vsel %vm8565, %v9121, %v9130
    %v9133 = vshrl.u32 %v6260, 16
    %v9135 = vrot.slane %v9133, 2
    %v9136 = vshll.u32 %v6260, 16
    %v9138 = vrot.slane %v9136, 3
    %v9139 = vor.u32 %v9135, %v9138
    %v9140 = vsel %vm8565, %v9130, %v9139
    %v9142 = vshrl.u32 %v6261, 16
    %v9144 = vrot.slane %v9142, 2
    %v9145 = vshll.u32 %v6261, 16
    %v9147 = vrot.slane %v9145, 3
    %v9148 = vor.u32 %v9144, %v9147
    %v9149 = vsel %vm8565, %v9139, %v9148
    %v9151 = vshrl.u32 %v6262, 16
    %v9153 = vrot.slane %v9151, 2
    %v9154 = vshll.u32 %v6262, 16
    %v9156 = vrot.slane %v9154, 3
    %v9157 = vor.u32 %v9153, %v9156
    %v9158 = vsel %vm8565, %v9148, %v9157
    %v9160 = vshrl.u32 %v6263, 16
    %v9162 = vrot.slane %v9160, 2
    %v9163 = vshll.u32 %v6263, 16
    %v9165 = vrot.slane %v9163, 3
    %v9166 = vor.u32 %v9162, %v9165
    %v9167 = vsel %vm8565, %v9157, %v9166
    %v9169 = vshrl.u32 %v6264, 16
    %v9171 = vrot.slane %v9169, 2
    %v9172 = vshll.u32 %v6264, 16
    %v9174 = vrot.slane %v9172, 3
    %v9175 = vor.u32 %v9171, %v9174
    %v9176 = vsel %vm8565, %v9166, %v9175
    %v9178 = vshrl.u32 %v6265, 16
    %v9180 = vrot.slane %v9178, 2
    %v9181 = vshll.u32 %v6265, 16
    %v9183 = vrot.slane %v9181, 3
    %v9184 = vor.u32 %v9180, %v9183
    %v9185 = vsel %vm8565, %v9175, %v9184
    %v9187 = vshrl.u32 %v6266, 16
    %v9189 = vrot.slane %v9187, 2
    %v9190 = vshll.u32 %v6266, 16
    %v9192 = vrot.slane %v9190, 3
    %v9193 = vor.u32 %v9189, %v9192
    %v9194 = vsel %vm8565, %v9184, %v9193
    %v9196 = vshrl.u32 %v6267, 16
    %v9198 = vrot.slane %v9196, 2
    %v9199 = vshll.u32 %v6267, 16
    %v9201 = vrot.slane %v9199, 3
    %v9202 = vor.u32 %v9198, %v9201
    %v9203 = vsel %vm8565, %v9193, %v9202
    %v9205 = vshrl.u32 %v6268, 16
    %v9207 = vrot.slane %v9205, 2
    %v9208 = vshll.u32 %v6268, 16
    %v9210 = vrot.slane %v9208, 3
    %v9211 = vor.u32 %v9207, %v9210
    %v9212 = vsel %vm8565, %v9202, %v9211
    %v9214 = vshrl.u32 %v6269, 16
    %v9216 = vrot.slane %v9214, 2
    %v9217 = vshll.u32 %v6269, 16
    %v9219 = vrot.slane %v9217, 3
    %v9220 = vor.u32 %v9216, %v9219
    %v9221 = vsel %vm8565, %v9211, %v9220
    %v9223 = vshrl.u32 %v6270, 16
    %v9225 = vrot.slane %v9223, 2
    %v9226 = vshll.u32 %v6270, 16
    %v9228 = vrot.slane %v9226, 3
    %v9229 = vor.u32 %v9225, %v9228
    %v9230 = vsel %vm8565, %v9220, %v9229
    %v9232 = vshrl.u32 %v6271, 16
    %v9234 = vrot.slane %v9232, 2
    %v9235 = vshll.u32 %v6271, 16
    %v9237 = vrot.slane %v9235, 3
    %v9238 = vor.u32 %v9234, %v9237
    %v9239 = vsel %vm8565, %v9229, %v9238
    %v9241 = vshrl.u32 %v6272, 16
    %v9243 = vrot.slane %v9241, 2
    %v9244 = vshll.u32 %v6272, 16
    %v9246 = vrot.slane %v9244, 3
    %v9247 = vor.u32 %v9243, %v9246
    %v9248 = vsel %vm8565, %v9238, %v9247
    %v9250 = vshrl.u32 %v6273, 16
    %v9252 = vrot.slane %v9250, 2
    %v9253 = vshll.u32 %v6273, 16
    %v9255 = vrot.slane %v9253, 3
    %v9256 = vor.u32 %v9252, %v9255
    %v9257 = vsel %vm8565, %v9247, %v9256
    %v9259 = vshrl.u32 %v6274, 16
    %v9261 = vrot.slane %v9259, 2
    %v9262 = vshll.u32 %v6274, 16
    %v9264 = vrot.slane %v9262, 3
    %v9265 = vor.u32 %v9261, %v9264
    %v9266 = vsel %vm8565, %v9256, %v9265
    %v9268 = vshrl.u32 %v6275, 16
    %v9270 = vrot.slane %v9268, 2
    %v9271 = vshll.u32 %v6275, 16
    %v9273 = vrot.slane %v9271, 3
    %v9274 = vor.u32 %v9270, %v9273
    %v9275 = vsel %vm8565, %v9265, %v9274
    %v9277 = vshrl.u32 %v6276, 16
    %v9279 = vrot.slane %v9277, 2
    %v9280 = vshll.u32 %v6276, 16
    %v9282 = vrot.slane %v9280, 3
    %v9283 = vor.u32 %v9279, %v9282
    %v9284 = vsel %vm8565, %v9274, %v9283
    %v9286 = vshrl.u32 %v6277, 16
    %v9288 = vrot.slane %v9286, 2
    %v9289 = vshll.u32 %v6277, 16
    %v9291 = vrot.slane %v9289, 3
    %v9292 = vor.u32 %v9288, %v9291
    %v9293 = vsel %vm8565, %v9283, %v9292
    %v9295 = vshrl.u32 %v6278, 16
    %v9297 = vrot.slane %v9295, 2
    %v9298 = vshll.u32 %v6278, 16
    %v9300 = vrot.slane %v9298, 3
    %v9301 = vor.u32 %v9297, %v9300
    %v9302 = vsel %vm8565, %v9292, %v9301
    %v9304 = vshrl.u32 %v6279, 16
    %v9306 = vrot.slane %v9304, 2
    %v9307 = vshll.u32 %v6279, 16
    %v9309 = vrot.slane %v9307, 3
    %v9310 = vor.u32 %v9306, %v9309
    %v9311 = vsel %vm8565, %v9301, %v9310
    %v9313 = vshrl.u32 %v6280, 16
    %v9315 = vrot.slane %v9313, 2
    %v9316 = vshll.u32 %v6280, 16
    %v9318 = vrot.slane %v9316, 3
    %v9319 = vor.u32 %v9315, %v9318
    %v9320 = vsel %vm8565, %v9310, %v9319
    %v9322 = vshrl.u32 %v6281, 16
    %v9324 = vrot.slane %v9322, 2
    %v9325 = vshll.u32 %v6281, 16
    %v9327 = vrot.slane %v9325, 3
    %v9328 = vor.u32 %v9324, %v9327
    %v9329 = vsel %vm8565, %v9319, %v9328
    %v9331 = vshrl.u32 %v6282, 16
    %v9333 = vrot.slane %v9331, 2
    %v9334 = vshll.u32 %v6282, 16
    %v9336 = vrot.slane %v9334, 3
    %v9337 = vor.u32 %v9333, %v9336
    %v9338 = vsel %vm8565, %v9328, %v9337
    %v9340 = vshrl.u32 %v6283, 16
    %v9342 = vrot.slane %v9340, 2
    %v9343 = vshll.u32 %v6283, 16
    %v9345 = vrot.slane %v9343, 3
    %v9346 = vor.u32 %v9342, %v9345
    %v9347 = vsel %vm8565, %v9337, %v9346
    %v9349 = vshrl.u32 %v6284, 16
    %v9351 = vrot.slane %v9349, 2
    %v9352 = vshll.u32 %v6284, 16
    %v9354 = vrot.slane %v9352, 3
    %v9355 = vor.u32 %v9351, %v9354
    %v9356 = vsel %vm8565, %v9346, %v9355
    %v9358 = vshrl.u32 %v6285, 16
    %v9360 = vrot.slane %v9358, 2
    %v9361 = vshll.u32 %v6285, 16
    %v9363 = vrot.slane %v9361, 3
    %v9364 = vor.u32 %v9360, %v9363
    %v9365 = vsel %vm8565, %v9355, %v9364
    %v9367 = vshrl.u32 %v6286, 16
    %v9369 = vrot.slane %v9367, 2
    %v9370 = vshll.u32 %v6286, 16
    %v9372 = vrot.slane %v9370, 3
    %v9373 = vor.u32 %v9369, %v9372
    %v9374 = vsel %vm8565, %v9364, %v9373
    %v9376 = vshrl.u32 %v6287, 16
    %v9378 = vrot.slane %v9376, 2
    %v9379 = vshll.u32 %v6287, 16
    %v9381 = vrot.slane %v9379, 3
    %v9382 = vor.u32 %v9378, %v9381
    %v9383 = vsel %vm8565, %v9373, %v9382
    %v9385 = vshrl.u32 %v6288, 16
    %v9387 = vrot.slane %v9385, 2
    %v9388 = vshll.u32 %v6288, 16
    %v9390 = vrot.slane %v9388, 3
    %v9391 = vor.u32 %v9387, %v9390
    %v9392 = vsel %vm8565, %v9382, %v9391
    %v9394 = vshrl.u32 %v6289, 16
    %v9396 = vrot.slane %v9394, 2
    %v9397 = vshll.u32 %v6289, 16
    %v9399 = vrot.slane %v9397, 3
    %v9400 = vor.u32 %v9396, %v9399
    %v9401 = vsel %vm8565, %v9391, %v9400
    %v9403 = vshrl.u32 %v6290, 16
    %v9405 = vrot.slane %v9403, 2
    %v9406 = vshll.u32 %v6290, 16
    %v9408 = vrot.slane %v9406, 3
    %v9409 = vor.u32 %v9405, %v9408
    %v9410 = vsel %vm8565, %v9400, %v9409
    %v9412 = vshrl.u32 %v6291, 16
    %v9414 = vrot.slane %v9412, 2
    %v9415 = vshll.u32 %v6291, 16
    %v9417 = vrot.slane %v9415, 3
    %v9418 = vor.u32 %v9414, %v9417
    %v9419 = vsel %vm8565, %v9409, %v9418
    %v9421 = vshrl.u32 %v6292, 16
    %v9423 = vrot.slane %v9421, 2
    %v9424 = vshll.u32 %v6292, 16
    %v9426 = vrot.slane %v9424, 3
    %v9427 = vor.u32 %v9423, %v9426
    %v9428 = vsel %vm8565, %v9418, %v9427
    %v9430 = vshrl.u32 %v6293, 16
    %v9432 = vrot.slane %v9430, 2
    %v9433 = vshll.u32 %v6293, 16
    %v9435 = vrot.slane %v9433, 3
    %v9436 = vor.u32 %v9432, %v9435
    %v9437 = vsel %vm8565, %v9427, %v9436
    %v9439 = vshrl.u32 %v6294, 16
    %v9441 = vrot.slane %v9439, 2
    %v9442 = vshll.u32 %v6294, 16
    %v9444 = vrot.slane %v9442, 3
    %v9445 = vor.u32 %v9441, %v9444
    %v9446 = vsel %vm8565, %v9436, %v9445
    %v9448 = vshrl.u32 %v6295, 16
    %v9450 = vrot.slane %v9448, 2
    %v9451 = vshll.u32 %v6295, 16
    %v9453 = vrot.slane %v9451, 3
    %v9454 = vor.u32 %v9450, %v9453
    %v9455 = vsel %vm8565, %v9445, %v9454
    %v9457 = vshrl.u32 %v6296, 16
    %v9459 = vrot.slane %v9457, 2
    %v9460 = vshll.u32 %v6296, 16
    %v9462 = vrot.slane %v9460, 3
    %v9463 = vor.u32 %v9459, %v9462
    %v9464 = vsel %vm8565, %v9454, %v9463
    %v9466 = vshrl.u32 %v6297, 16
    %v9468 = vrot.slane %v9466, 2
    %v9469 = vshll.u32 %v6297, 16
    %v9471 = vrot.slane %v9469, 3
    %v9472 = vor.u32 %v9468, %v9471
    %v9473 = vsel %vm8565, %v9463, %v9472
    %v9475 = vshrl.u32 %v6298, 16
    %v9477 = vrot.slane %v9475, 2
    %v9478 = vshll.u32 %v6298, 16
    %v9480 = vrot.slane %v9478, 3
    %v9481 = vor.u32 %v9477, %v9480
    %v9482 = vsel %vm8565, %v9472, %v9481
    %v9484 = vshrl.u32 %v6299, 16
    %v9486 = vrot.slane %v9484, 2
    %v9487 = vshll.u32 %v6299, 16
    %v9489 = vrot.slane %v9487, 3
    %v9490 = vor.u32 %v9486, %v9489
    %v9491 = vsel %vm8565, %v9481, %v9490
    %v9493 = vshrl.u32 %v6300, 16
    %v9495 = vrot.slane %v9493, 2
    %v9496 = vshll.u32 %v6300, 16
    %v9498 = vrot.slane %v9496, 3
    %v9499 = vor.u32 %v9495, %v9498
    %v9500 = vsel %vm8565, %v9490, %v9499
    %v9502 = vshrl.u32 %v6301, 16
    %v9504 = vrot.slane %v9502, 2
    %v9505 = vshll.u32 %v6301, 16
    %v9507 = vrot.slane %v9505, 3
    %v9508 = vor.u32 %v9504, %v9507
    %v9509 = vsel %vm8565, %v9499, %v9508
    %v9511 = vshrl.u32 %v6302, 16
    %v9513 = vrot.slane %v9511, 2
    %v9514 = vshll.u32 %v6302, 16
    %v9516 = vrot.slane %v9514, 3
    %v9517 = vor.u32 %v9513, %v9516
    %v9518 = vsel %vm8565, %v9508, %v9517
    %v9520 = vshrl.u32 %v6303, 16
    %v9522 = vrot.slane %v9520, 2
    %v9523 = vshll.u32 %v6303, 16
    %v9525 = vrot.slane %v9523, 3
    %v9526 = vor.u32 %v9522, %v9525
    %v9527 = vsel %vm8565, %v9517, %v9526
    %v9529 = vshrl.u32 %v6304, 16
    %v9531 = vrot.slane %v9529, 2
    %v9532 = vshll.u32 %v6304, 16
    %v9534 = vrot.slane %v9532, 3
    %v9535 = vor.u32 %v9531, %v9534
    %v9536 = vsel %vm8565, %v9526, %v9535
    %v9538 = vshrl.u32 %v6305, 16
    %v9540 = vrot.slane %v9538, 2
    %v9541 = vshll.u32 %v6305, 16
    %v9543 = vrot.slane %v9541, 3
    %v9544 = vor.u32 %v9540, %v9543
    %v9545 = vsel %vm8565, %v9535, %v9544
    %v9547 = vshrl.u32 %v6306, 16
    %v9549 = vrot.slane %v9547, 2
    %v9550 = vshll.u32 %v6306, 16
    %v9552 = vrot.slane %v9550, 3
    %v9553 = vor.u32 %v9549, %v9552
    %v9554 = vsel %vm8565, %v9544, %v9553
    %v9556 = vshrl.u32 %v6307, 16
    %v9558 = vrot.slane %v9556, 2
    %v9559 = vshll.u32 %v6307, 16
    %v9561 = vrot.slane %v9559, 3
    %v9562 = vor.u32 %v9558, %v9561
    %v9563 = vsel %vm8565, %v9553, %v9562
    %v9565 = vshrl.u32 %v6308, 16
    %v9567 = vrot.slane %v9565, 2
    %v9568 = vshll.u32 %v6308, 16
    %v9570 = vrot.slane %v9568, 3
    %v9571 = vor.u32 %v9567, %v9570
    %v9572 = vsel %vm8565, %v9562, %v9571
    %v9574 = vshrl.u32 %v6309, 16
    %v9576 = vrot.slane %v9574, 2
    %v9577 = vshll.u32 %v6309, 16
    %v9579 = vrot.slane %v9577, 3
    %v9580 = vor.u32 %v9576, %v9579
    %v9581 = vsel %vm8565, %v9571, %v9580
    %v9583 = vshrl.u32 %v6310, 16
    %v9585 = vrot.slane %v9583, 2
    %v9586 = vshll.u32 %v6310, 16
    %v9588 = vrot.slane %v9586, 3
    %v9589 = vor.u32 %v9585, %v9588
    %v9590 = vsel %vm8565, %v9580, %v9589
    %v9592 = vshrl.u32 %v6311, 16
    %v9594 = vrot.slane %v9592, 2
    %v9595 = vshll.u32 %v6311, 16
    %v9597 = vrot.slane %v9595, 3
    %v9598 = vor.u32 %v9594, %v9597
    %v9599 = vsel %vm8565, %v9589, %v9598
    %v9601 = vshrl.u32 %v6312, 16
    %v9603 = vrot.slane %v9601, 2
    %v9604 = vshll.u32 %v6312, 16
    %v9606 = vrot.slane %v9604, 3
    %v9607 = vor.u32 %v9603, %v9606
    %v9608 = vsel %vm8565, %v9598, %v9607
    %v9610 = vshrl.u32 %v6313, 16
    %v9612 = vrot.slane %v9610, 2
    %v9613 = vshll.u32 %v6313, 16
    %v9615 = vrot.slane %v9613, 3
    %v9616 = vor.u32 %v9612, %v9615
    %v9617 = vsel %vm8565, %v9607, %v9616
    %v9619 = vshrl.u32 %v6314, 16
    %v9621 = vrot.slane %v9619, 2
    %v9622 = vshll.u32 %v6314, 16
    %v9624 = vrot.slane %v9622, 3
    %v9625 = vor.u32 %v9621, %v9624
    %v9626 = vsel %vm8565, %v9616, %v9625
    %v9628 = vshrl.u32 %v6315, 16
    %v9630 = vrot.slane %v9628, 2
    %v9631 = vshll.u32 %v6315, 16
    %v9633 = vrot.slane %v9631, 3
    %v9634 = vor.u32 %v9630, %v9633
    %v9635 = vsel %vm8565, %v9625, %v9634
    %v9637 = vshrl.u32 %v6316, 16
    %v9639 = vrot.slane %v9637, 2
    %v9640 = vshll.u32 %v6316, 16
    %v9642 = vrot.slane %v9640, 3
    %v9643 = vor.u32 %v9639, %v9642
    %v9644 = vsel %vm8565, %v9634, %v9643
    %v9646 = vshrl.u32 %v6317, 16
    %v9648 = vrot.slane %v9646, 2
    %v9649 = vshll.u32 %v6317, 16
    %v9651 = vrot.slane %v9649, 3
    %v9652 = vor.u32 %v9648, %v9651
    %v9653 = vsel %vm8565, %v9643, %v9652
    %v9655 = vshrl.u32 %v6318, 16
    %v9657 = vrot.slane %v9655, 2
    %v9658 = vshll.u32 %v6318, 16
    %v9660 = vrot.slane %v9658, 3
    %v9661 = vor.u32 %v9657, %v9660
    %v9662 = vsel %vm8565, %v9652, %v9661
    %v9664 = vshrl.u32 %v6319, 16
    %v9666 = vrot.slane %v9664, 2
    %v9667 = vshll.u32 %v6319, 16
    %v9669 = vrot.slane %v9667, 3
    %v9670 = vor.u32 %v9666, %v9669
    %v9671 = vsel %vm8565, %v9661, %v9670
    %v9673 = vshrl.u32 %v6320, 16
    %v9675 = vrot.slane %v9673, 2
    %v9676 = vshll.u32 %v6320, 16
    %v9678 = vrot.slane %v9676, 3
    %v9679 = vor.u32 %v9675, %v9678
    %v9680 = vsel %vm8565, %v9670, %v9679
    %v9682 = vshrl.u32 %v6321, 16
    %v9684 = vrot.slane %v9682, 2
    %v9685 = vshll.u32 %v6321, 16
    %v9687 = vrot.slane %v9685, 3
    %v9688 = vor.u32 %v9684, %v9687
    %v9689 = vsel %vm8565, %v9679, %v9688
    %v9691 = vshrl.u32 %v6322, 16
    %v9693 = vrot.slane %v9691, 2
    %v9694 = vshll.u32 %v6322, 16
    %v9696 = vrot.slane %v9694, 3
    %v9697 = vor.u32 %v9693, %v9696
    %v9698 = vsel %vm8565, %v9688, %v9697
    %v9700 = vshrl.u32 %v6323, 16
    %v9702 = vrot.slane %v9700, 2
    %v9703 = vshll.u32 %v6323, 16
    %v9705 = vrot.slane %v9703, 3
    %v9706 = vor.u32 %v9702, %v9705
    %v9707 = vsel %vm8565, %v9697, %v9706
    %v9709 = vshrl.u32 %v6324, 16
    %v9711 = vrot.slane %v9709, 2
    %v9712 = vshll.u32 %v6324, 16
    %v9714 = vrot.slane %v9712, 3
    %v9715 = vor.u32 %v9711, %v9714
    %v9716 = vsel %vm8565, %v9706, %v9715
    %v9718 = vshrl.u32 %v6325, 16
    %v9720 = vrot.slane %v9718, 2
    %v9721 = vshll.u32 %v6325, 16
    %v9723 = vrot.slane %v9721, 3
    %v9724 = vor.u32 %v9720, %v9723
    %v9725 = vsel %vm8565, %v9715, %v9724
    %v9727 = vshrl.u32 %v6326, 16
    %v9729 = vrot.slane %v9727, 2
    %v9730 = vshll.u32 %v6326, 16
    %v9732 = vrot.slane %v9730, 3
    %v9733 = vor.u32 %v9729, %v9732
    %v9734 = vsel %vm8565, %v9724, %v9733
    %v9736 = vshrl.u32 %v6327, 16
    %v9738 = vrot.slane %v9736, 2
    %v9739 = vshll.u32 %v6327, 16
    %v9741 = vrot.slane %v9739, 3
    %v9742 = vor.u32 %v9738, %v9741
    %v9743 = vsel %vm8565, %v9733, %v9742
    %v9745 = vshrl.u32 %v6328, 16
    %v9747 = vrot.slane %v9745, 2
    %v9748 = vshll.u32 %v6328, 16
    %v9750 = vrot.slane %v9748, 3
    %v9751 = vor.u32 %v9747, %v9750
    %v9752 = vsel %vm8565, %v9742, %v9751
    %v9754 = vshrl.u32 %v6329, 16
    %v9756 = vrot.slane %v9754, 2
    %v9757 = vshll.u32 %v6329, 16
    %v9759 = vrot.slane %v9757, 3
    %v9760 = vor.u32 %v9756, %v9759
    %v9761 = vsel %vm8565, %v9751, %v9760
    %v9763 = vshrl.u32 %v6330, 16
    %v9765 = vrot.slane %v9763, 2
    %v9766 = vshll.u32 %v6330, 16
    %v9768 = vrot.slane %v9766, 3
    %v9769 = vor.u32 %v9765, %v9768
    %v9770 = vsel %vm8565, %v9760, %v9769
    %v9772 = vshrl.u32 %v6331, 16
    %v9774 = vrot.slane %v9772, 2
    %v9775 = vshll.u32 %v6331, 16
    %v9777 = vrot.slane %v9775, 3
    %v9778 = vor.u32 %v9774, %v9777
    %v9779 = vsel %vm8565, %v9769, %v9778
    %v9781 = vshrl.u32 %v6332, 16
    %v9783 = vrot.slane %v9781, 2
    %v9784 = vshll.u32 %v6332, 16
    %v9786 = vrot.slane %v9784, 3
    %v9787 = vor.u32 %v9783, %v9786
    %v9788 = vsel %vm8565, %v9778, %v9787
    %v9790 = vshrl.u32 %v6333, 16
    %v9792 = vrot.slane %v9790, 2
    %v9793 = vshll.u32 %v6333, 16
    %v9795 = vrot.slane %v9793, 3
    %v9796 = vor.u32 %v9792, %v9795
    %v9797 = vsel %vm8565, %v9787, %v9796
    %v9799 = vshrl.u32 %v6334, 16
    %v9801 = vrot.slane %v9799, 2
    %v9802 = vshll.u32 %v6334, 16
    %v9804 = vrot.slane %v9802, 3
    %v9805 = vor.u32 %v9801, %v9804
    %v9806 = vsel %vm8565, %v9796, %v9805
    %v9808 = vshrl.u32 %v6335, 16
    %v9810 = vrot.slane %v9808, 2
    %v9811 = vshll.u32 %v6335, 16
    %v9813 = vrot.slane %v9811, 3
    %v9814 = vor.u32 %v9810, %v9813
    %v9815 = vsel %vm8565, %v9805, %v9814
    %v9817 = vshrl.u32 %v6336, 16
    %v9819 = vrot.slane %v9817, 2
    %v9820 = vshll.u32 %v6336, 16
    %v9822 = vrot.slane %v9820, 3
    %v9823 = vor.u32 %v9819, %v9822
    %v9824 = vsel %vm8565, %v9814, %v9823
    %v9826 = vshrl.u32 %v6337, 16
    %v9828 = vrot.slane %v9826, 2
    %v9829 = vshll.u32 %v6337, 16
    %v9831 = vrot.slane %v9829, 3
    %v9832 = vor.u32 %v9828, %v9831
    %v9833 = vsel %vm8565, %v9823, %v9832
    %v9835 = vshrl.u32 %v6338, 16
    %v9837 = vrot.slane %v9835, 2
    %v9838 = vshll.u32 %v6338, 16
    %v9840 = vrot.slane %v9838, 3
    %v9841 = vor.u32 %v9837, %v9840
    %v9842 = vsel %vm8565, %v9832, %v9841
    %v9844 = vshrl.u32 %v6339, 16
    %v9846 = vrot.slane %v9844, 2
    %v9847 = vshll.u32 %v6339, 16
    %v9849 = vrot.slane %v9847, 3
    %v9850 = vor.u32 %v9846, %v9849
    %v9851 = vsel %vm8565, %v9841, %v9850
    %v9853 = vshrl.u32 %v6340, 16
    %v9855 = vrot.slane %v9853, 2
    %v9856 = vshll.u32 %v6340, 16
    %v9858 = vrot.slane %v9856, 3
    %v9859 = vor.u32 %v9855, %v9858
    %v9860 = vsel %vm8565, %v9850, %v9859
    %v9869 = vunpack.c.l.b16 %v8557
    %v9870 = vunpack.c.l.b16 %v8558
    %v9871 = vunpack.c.l.b16 %v8559
    %v9872 = vunpack.c.l.b16 %v8560
    %v9873 = vunpack.c.l.b16 %v8561
    %v9874 = vunpack.c.l.b16 %v8562
    %v9875 = vunpack.c.l.b16 %v8563
    %v9876 = vunpack.c.l.b16 %v8564
    %v9877 = vpack.c.b16 %v9870, %v9869
    %v9878 = vpack.c.b16 %v9872, %v9871
    %v9879 = vpack.c.b16 %v9874, %v9873
    %v9880 = vpack.c.b16 %v9876, %v9875
    %v9886 = vsel %vm2214, %v8582, 0
    %v9889 = vsel %vm2214, %v8591, 0
    %v9892 = vsel %vm2214, %v8600, 0
    %v9895 = vsel %vm2214, %v8609, 0
    %v9898 = vsel %vm2214, %v8618, 0
    %v9901 = vsel %vm2214, %v8627, 0
    %v9904 = vsel %vm2214, %v8636, 0
    %v9907 = vsel %vm2214, %v8645, 0
    %v9910 = vsel %vm2214, %v8654, 0
    %v9913 = vsel %vm2214, %v8663, 0
    %v9916 = vsel %vm2214, %v8672, 0
    %v9919 = vsel %vm2214, %v8681, 0
    %v9922 = vsel %vm2214, %v8690, 0
    %v9925 = vsel %vm2214, %v8699, 0
    %v9928 = vsel %vm2214, %v8708, 0
    %v9931 = vsel %vm2214, %v8717, 0
    %v9934 = vsel %vm2214, %v8726, 0
    %v9937 = vsel %vm2214, %v8735, 0
    %v9940 = vsel %vm2214, %v8744, 0
    %v9943 = vsel %vm2214, %v8753, 0
    %v9946 = vsel %vm2214, %v8762, 0
    %v9949 = vsel %vm2214, %v8771, 0
    %v9952 = vsel %vm2214, %v8780, 0
    %v9955 = vsel %vm2214, %v8789, 0
    %v9958 = vsel %vm2214, %v8798, 0
    %v9961 = vsel %vm2214, %v8807, 0
    %v9964 = vsel %vm2214, %v8816, 0
    %v9967 = vsel %vm2214, %v8825, 0
    %v9970 = vsel %vm2214, %v8834, 0
    %v9973 = vsel %vm2214, %v8843, 0
    %v9976 = vsel %vm2214, %v8852, 0
    %v9979 = vsel %vm2214, %v8861, 0
    %v9982 = vsel %vm2214, %v8870, 0
    %v9985 = vsel %vm2214, %v8879, 0
    %v9988 = vsel %vm2214, %v8888, 0
    %v9991 = vsel %vm2214, %v8897, 0
    %v9994 = vsel %vm2214, %v8906, 0
    %v9997 = vsel %vm2214, %v8915, 0
    %v10000 = vsel %vm2214, %v8924, 0
    %v10003 = vsel %vm2214, %v8933, 0
    %v10006 = vsel %vm2214, %v8942, 0
    %v10009 = vsel %vm2214, %v8951, 0
    %v10012 = vsel %vm2214, %v8960, 0
    %v10015 = vsel %vm2214, %v8969, 0
    %v10018 = vsel %vm2214, %v8978, 0
    %v10021 = vsel %vm2214, %v8987, 0
    %v10024 = vsel %vm2214, %v8996, 0
    %v10027 = vsel %vm2214, %v9005, 0
    %v10030 = vsel %vm2214, %v9014, 0
    %v10033 = vsel %vm2214, %v9023, 0
    %v10036 = vsel %vm2214, %v9032, 0
    %v10039 = vsel %vm2214, %v9041, 0
    %v10042 = vsel %vm2214, %v9050, 0
    %v10045 = vsel %vm2214, %v9059, 0
    %v10048 = vsel %vm2214, %v9068, 0
    %v10051 = vsel %vm2214, %v9077, 0
    %v10054 = vsel %vm2214, %v9086, 0
    %v10057 = vsel %vm2214, %v9095, 0
    %v10060 = vsel %vm2214, %v9104, 0
    %v10063 = vsel %vm2214, %v9113, 0
    %v10066 = vsel %vm2214, %v9122, 0
    %v10069 = vsel %vm2214, %v9131, 0
    %v10072 = vsel %vm2214, %v9140, 0
    %v10075 = vsel %vm2214, %v9149, 0
    %v10078 = vsel %vm2214, %v9158, 0
    %v10081 = vsel %vm2214, %v9167, 0
    %v10084 = vsel %vm2214, %v9176, 0
    %v10087 = vsel %vm2214, %v9185, 0
    %v10090 = vsel %vm2214, %v9194, 0
    %v10093 = vsel %vm2214, %v9203, 0
    %v10096 = vsel %vm2214, %v9212, 0
    %v10099 = vsel %vm2214, %v9221, 0
    %v10102 = vsel %vm2214, %v9230, 0
    %v10105 = vsel %vm2214, %v9239, 0
    %v10108 = vsel %vm2214, %v9248, 0
    %v10111 = vsel %vm2214, %v9257, 0
    %v10114 = vsel %vm2214, %v9266, 0
    %v10117 = vsel %vm2214, %v9275, 0
    %v10120 = vsel %vm2214, %v9284, 0
    %v10123 = vsel %vm2214, %v9293, 0
    %v10126 = vsel %vm2214, %v9302, 0
    %v10129 = vsel %vm2214, %v9311, 0
    %v10132 = vsel %vm2214, %v9320, 0
    %v10135 = vsel %vm2214, %v9329, 0
    %v10138 = vsel %vm2214, %v9338, 0
    %v10141 = vsel %vm2214, %v9347, 0
    %v10144 = vsel %vm2214, %v9356, 0
    %v10147 = vsel %vm2214, %v9365, 0
    %v10150 = vsel %vm2214, %v9374, 0
    %v10153 = vsel %vm2214, %v9383, 0
    %v10156 = vsel %vm2214, %v9392, 0
    %v10159 = vsel %vm2214, %v9401, 0
    %v10162 = vsel %vm2214, %v9410, 0
    %v10165 = vsel %vm2214, %v9419, 0
    %v10168 = vsel %vm2214, %v9428, 0
    %v10171 = vsel %vm2214, %v9437, 0
    %v10174 = vsel %vm2214, %v9446, 0
    %v10177 = vsel %vm2214, %v9455, 0
    %v10180 = vsel %vm2214, %v9464, 0
    %v10183 = vsel %vm2214, %v9473, 0
    %v10186 = vsel %vm2214, %v9482, 0
    %v10189 = vsel %vm2214, %v9491, 0
    %v10192 = vsel %vm2214, %v9500, 0
    %v10195 = vsel %vm2214, %v9509, 0
    %v10198 = vsel %vm2214, %v9518, 0
    %v10201 = vsel %vm2214, %v9527, 0
    %v10204 = vsel %vm2214, %v9536, 0
    %v10207 = vsel %vm2214, %v9545, 0
    %v10210 = vsel %vm2214, %v9554, 0
    %v10213 = vsel %vm2214, %v9563, 0
    %v10216 = vsel %vm2214, %v9572, 0
    %v10219 = vsel %vm2214, %v9581, 0
    %v10222 = vsel %vm2214, %v9590, 0
    %v10225 = vsel %vm2214, %v9599, 0
    %v10228 = vsel %vm2214, %v9608, 0
    %v10231 = vsel %vm2214, %v9617, 0
    %v10234 = vsel %vm2214, %v9626, 0
    %v10237 = vsel %vm2214, %v9635, 0
    %v10240 = vsel %vm2214, %v9644, 0
    %v10243 = vsel %vm2214, %v9653, 0
    %v10246 = vsel %vm2214, %v9662, 0
    %v10249 = vsel %vm2214, %v9671, 0
    %v10252 = vsel %vm2214, %v9680, 0
    %v10255 = vsel %vm2214, %v9689, 0
    %v10258 = vsel %vm2214, %v9698, 0
    %v10261 = vsel %vm2214, %v9707, 0
    %v10264 = vsel %vm2214, %v9716, 0
    %v10267 = vsel %vm2214, %v9725, 0
    %v10270 = vsel %vm2214, %v9734, 0
    %v10273 = vsel %vm2214, %v9743, 0
    %v10276 = vsel %vm2214, %v9752, 0
    %v10279 = vsel %vm2214, %v9761, 0
    %v10282 = vsel %vm2214, %v9770, 0
    %v10285 = vsel %vm2214, %v9779, 0
    %v10288 = vsel %vm2214, %v9788, 0
    %v10291 = vsel %vm2214, %v9797, 0
    %v10294 = vsel %vm2214, %v9806, 0
    %v10297 = vsel %vm2214, %v9815, 0
    %v10300 = vsel %vm2214, %v9824, 0
    %v10303 = vsel %vm2214, %v9833, 0
    %v10306 = vsel %vm2214, %v9842, 0
    %v10309 = vsel %vm2214, %v9851, 0
    %v10312 = vsel %vm2214, %v9860, 0
    %v10315 = vsel %vm2214, %v9859, 0
    %10317 = vmatprep.subr.bf16.mxu0 0
    %10318 = vmatpush1.bf16.msra.mxu0 %v9877
    %10319 = vmatprep.subr.bf16.mxu0 0
    %10320 = vmatpush1.bf16.msra.mxu0 %v9878
    %10321 = vmatprep.subr.bf16.mxu0 0
    %10322 = vmatpush1.bf16.msra.mxu0 %v9879
    %10323 = vmatprep.subr.bf16.mxu0 0
    %10324 = vmatpush1.bf16.msra.mxu0 %v9880
    %10325 = vmatprep.subr.bf16.mxu0 0
    %10326 = vmatpush1.bf16.msra.mxu0 0
    %10327 = vmatprep.subr.bf16.mxu0 0
    %10328 = vmatpush1.bf16.msra.mxu0 0
    %10329 = vmatprep.subr.bf16.mxu0 0
    %10330 = vmatpush1.bf16.msra.mxu0 0
    %10331 = vmatprep.subr.bf16.mxu0 0
    %10332 = vmatpush1.bf16.msra.mxu0 0
    %10333 = vmatprep.subr.bf16.mxu0 0
    %10334 = vmatpush1.bf16.msra.mxu0 0
    %10335 = vmatprep.subr.bf16.mxu0 0
    %10336 = vmatpush1.bf16.msra.mxu0 0
    %10337 = vmatprep.subr.bf16.mxu0 0
    %10338 = vmatpush1.bf16.msra.mxu0 0
    %10339 = vmatprep.subr.bf16.mxu0 0
    %10340 = vmatpush1.bf16.msra.mxu0 0
    %10341 = vmatprep.subr.bf16.mxu0 0
    %10342 = vmatpush1.bf16.msra.mxu0 0
    %10343 = vmatprep.subr.bf16.mxu0 0
    %10344 = vmatpush1.bf16.msra.mxu0 0
    %10345 = vmatprep.subr.bf16.mxu0 0
    %10346 = vmatpush1.bf16.msra.mxu0 0
    %10347 = vmatprep.subr.bf16.mxu0 0
    %10348 = vmatpush1.bf16.msra.mxu0 0
    %10349 = vmatprep.mubr.bf16.mxu0 0
    %10350 = vmatmul.mubr.bf16.gmra.mrb[0].mxu0 %v9886
    %v10351 = vpop.f32.mrb[0].mxu0
    %v10352 = vadd.f32 0.0, %v10351
    %v10353 = vpop.f32.mrb[0].mxu0
    %v10354 = vpop.f32.mrb[0].mxu0
    %v10355 = vadd.f32 0.0, %v10354
    %v10356 = vpop.f32.mrb[0].mxu0
    %10357 = vmatprep.mubr.bf16.mxu0 0
    %10358 = vmatmul.mubr.bf16.gmra.mrb[0].mxu0 %v9889
    %v10359 = vpop.f32.mrb[0].mxu0
    %v10360 = vadd.f32 0.0, %v10359
    %v10361 = vpop.f32.mrb[0].mxu0
    %v10362 = vpop.f32.mrb[0].mxu0
    %v10363 = vadd.f32 0.0, %v10362
    %v10364 = vpop.f32.mrb[0].mxu0
    %10365 = vmatprep.mubr.bf16.mxu0 0
    %10366 = vmatmul.mubr.bf16.gmra.mrb[0].mxu0 %v9892
    %v10367 = vpop.f32.mrb[0].mxu0
    %v10368 = vadd.f32 0.0, %v10367
    %v10369 = vpop.f32.mrb[0].mxu0
    %v10370 = vpop.f32.mrb[0].mxu0
    %v10371 = vadd.f32 0.0, %v10370
    %v10372 = vpop.f32.mrb[0].mxu0
    %10373 = vmatprep.mubr.bf16.mxu0 0
    %10374 = vmatmul.mubr.bf16.gmra.mrb[0].mxu0 %v9895
    %v10375 = vpop.f32.mrb[0].mxu0
    %v10376 = vadd.f32 0.0, %v10375
    %v10377 = vpop.f32.mrb[0].mxu0
    %v10378 = vpop.f32.mrb[0].mxu0
    %v10379 = vadd.f32 0.0, %v10378
    %v10380 = vpop.f32.mrb[0].mxu0
    %10381 = vmatprep.mubr.bf16.mxu0 0
    %10382 = vmatmul.mubr.bf16.gmra.mrb[0].mxu0 %v9898
    %v10383 = vpop.f32.mrb[0].mxu0
    %v10384 = vadd.f32 0.0, %v10383
    %v10385 = vpop.f32.mrb[0].mxu0
    %v10386 = vpop.f32.mrb[0].mxu0
    %v10387 = vadd.f32 0.0, %v10386
    %v10388 = vpop.f32.mrb[0].mxu0
    %10389 = vmatprep.mubr.bf16.mxu0 0
    %10390 = vmatmul.mubr.bf16.gmra.mrb[0].mxu0 %v9901
    %v10391 = vpop.f32.mrb[0].mxu0
    %v10392 = vadd.f32 0.0, %v10391
    %v10393 = vpop.f32.mrb[0].mxu0
    %v10394 = vpop.f32.mrb[0].mxu0
    %v10395 = vadd.f32 0.0, %v10394
    %v10396 = vpop.f32.mrb[0].mxu0
    %10397 = vmatprep.mubr.bf16.mxu0 0
    %10398 = vmatmul.mubr.bf16.gmra.mrb[0].mxu0 %v9904
    %v10399 = vpop.f32.mrb[0].mxu0
    %v10400 = vadd.f32 0.0, %v10399
    %v10401 = vpop.f32.mrb[0].mxu0
    %v10402 = vpop.f32.mrb[0].mxu0
    %v10403 = vadd.f32 0.0, %v10402
    %v10404 = vpop.f32.mrb[0].mxu0
    %10405 = vmatprep.mubr.bf16.mxu0 0
    %10406 = vmatmul.mubr.bf16.gmra.mrb[0].mxu0 %v9907
    %v10407 = vpop.f32.mrb[0].mxu0
    %v10408 = vadd.f32 0.0, %v10407
    %v10409 = vpop.f32.mrb[0].mxu0
    %v10410 = vpop.f32.mrb[0].mxu0
    %v10411 = vadd.f32 0.0, %v10410
    %v10412 = vpop.f32.mrb[0].mxu0
    %10413 = vmatprep.mubr.bf16.mxu0 0
    %10414 = vmatmul.mubr.bf16.gmra.mrb[0].mxu0 %v9910
    %v10415 = vpop.f32.mrb[0].mxu0
    %v10416 = vadd.f32 0.0, %v10415
    %v10417 = vpop.f32.mrb[0].mxu0
    %v10418 = vpop.f32.mrb[0].mxu0
    %v10419 = vadd.f32 0.0, %v10418
    %v10420 = vpop.f32.mrb[0].mxu0
    %10421 = vmatprep.mubr.bf16.mxu0 0
    %10422 = vmatmul.mubr.bf16.gmra.mrb[0].mxu0 %v9913
    %v10423 = vpop.f32.mrb[0].mxu0
    %v10424 = vadd.f32 0.0, %v10423
    %v10425 = vpop.f32.mrb[0].mxu0
    %v10426 = vpop.f32.mrb[0].mxu0
    %v10427 = vadd.f32 0.0, %v10426
    %v10428 = vpop.f32.mrb[0].mxu0
    %10429 = vmatprep.mubr.bf16.mxu0 0
    %10430 = vmatmul.mubr.bf16.gmra.mrb[0].mxu0 %v9916
    %v10431 = vpop.f32.mrb[0].mxu0
    %v10432 = vadd.f32 0.0, %v10431
    %v10433 = vpop.f32.mrb[0].mxu0
    %v10434 = vpop.f32.mrb[0].mxu0
    %v10435 = vadd.f32 0.0, %v10434
    %v10436 = vpop.f32.mrb[0].mxu0
    %10437 = vmatprep.mubr.bf16.mxu0 0
    %10438 = vmatmul.mubr.bf16.gmra.mrb[0].mxu0 %v9919
    %v10439 = vpop.f32.mrb[0].mxu0
    %v10440 = vadd.f32 0.0, %v10439
    %v10441 = vpop.f32.mrb[0].mxu0
    %v10442 = vpop.f32.mrb[0].mxu0
    %v10443 = vadd.f32 0.0, %v10442
    %v10444 = vpop.f32.mrb[0].mxu0
    %10445 = vmatprep.mubr.bf16.mxu0 0
    %10446 = vmatmul.mubr.bf16.gmra.mrb[0].mxu0 %v9922
    %v10447 = vpop.f32.mrb[0].mxu0
    %v10448 = vadd.f32 0.0, %v10447
    %v10449 = vpop.f32.mrb[0].mxu0
    %v10450 = vpop.f32.mrb[0].mxu0
    %v10451 = vadd.f32 0.0, %v10450
    %v10452 = vpop.f32.mrb[0].mxu0
    %10453 = vmatprep.mubr.bf16.mxu0 0
    %10454 = vmatmul.mubr.bf16.gmra.mrb[0].mxu0 %v9925
    %v10455 = vpop.f32.mrb[0].mxu0
    %v10456 = vadd.f32 0.0, %v10455
    %v10457 = vpop.f32.mrb[0].mxu0
    %v10458 = vpop.f32.mrb[0].mxu0
    %v10459 = vadd.f32 0.0, %v10458
    %v10460 = vpop.f32.mrb[0].mxu0
    %10461 = vmatprep.mubr.bf16.mxu0 0
    %10462 = vmatmul.mubr.bf16.gmra.mrb[0].mxu0 %v9928
    %v10463 = vpop.f32.mrb[0].mxu0
    %v10464 = vadd.f32 0.0, %v10463
    %v10465 = vpop.f32.mrb[0].mxu0
    %v10466 = vpop.f32.mrb[0].mxu0
    %v10467 = vadd.f32 0.0, %v10466
    %v10468 = vpop.f32.mrb[0].mxu0
    %10469 = vmatprep.mubr.bf16.mxu0 0
    %10470 = vmatmul.mubr.bf16.gmra.mrb[0].mxu0 %v9931
    %v10471 = vpop.f32.mrb[0].mxu0
    %v10472 = vadd.f32 0.0, %v10471
    %v10473 = vpop.f32.mrb[0].mxu0
    %v10474 = vpop.f32.mrb[0].mxu0
    %v10475 = vadd.f32 0.0, %v10474
    %v10476 = vpop.f32.mrb[0].mxu0
    %10477 = vmatprep.mubr.bf16.mxu0 0
    %10478 = vmatmul.mubr.bf16.gmra.mrb[0].mxu0 %v9934
    %v10479 = vpop.f32.mrb[0].mxu0
    %v10480 = vadd.f32 0.0, %v10479
    %v10481 = vpop.f32.mrb[0].mxu0
    %v10482 = vpop.f32.mrb[0].mxu0
    %v10483 = vadd.f32 0.0, %v10482
    %v10484 = vpop.f32.mrb[0].mxu0
    %10485 = vmatprep.mubr.bf16.mxu0 0
    %10486 = vmatmul.mubr.bf16.gmra.mrb[0].mxu0 %v9937
    %v10487 = vpop.f32.mrb[0].mxu0
    %v10488 = vadd.f32 0.0, %v10487
    %v10489 = vpop.f32.mrb[0].mxu0
    %v10490 = vpop.f32.mrb[0].mxu0
    %v10491 = vadd.f32 0.0, %v10490
    %v10492 = vpop.f32.mrb[0].mxu0
    %10493 = vmatprep.mubr.bf16.mxu0 0
    %10494 = vmatmul.mubr.bf16.gmra.mrb[0].mxu0 %v9940
    %v10495 = vpop.f32.mrb[0].mxu0
    %v10496 = vadd.f32 0.0, %v10495
    %v10497 = vpop.f32.mrb[0].mxu0
    %v10498 = vpop.f32.mrb[0].mxu0
    %v10499 = vadd.f32 0.0, %v10498
    %v10500 = vpop.f32.mrb[0].mxu0
    %10501 = vmatprep.mubr.bf16.mxu0 0
    %10502 = vmatmul.mubr.bf16.gmra.mrb[0].mxu0 %v9943
    %v10503 = vpop.f32.mrb[0].mxu0
    %v10504 = vadd.f32 0.0, %v10503
    %v10505 = vpop.f32.mrb[0].mxu0
    %v10506 = vpop.f32.mrb[0].mxu0
    %v10507 = vadd.f32 0.0, %v10506
    %v10508 = vpop.f32.mrb[0].mxu0
    %10509 = vmatprep.mubr.bf16.mxu0 0
    %10510 = vmatmul.mubr.bf16.gmra.mrb[0].mxu0 %v9946
    %v10511 = vpop.f32.mrb[0].mxu0
    %v10512 = vadd.f32 0.0, %v10511
    %v10513 = vpop.f32.mrb[0].mxu0
    %v10514 = vpop.f32.mrb[0].mxu0
    %v10515 = vadd.f32 0.0, %v10514
    %v10516 = vpop.f32.mrb[0].mxu0
    %10517 = vmatprep.mubr.bf16.mxu0 0
    %10518 = vmatmul.mubr.bf16.gmra.mrb[0].mxu0 %v9949
    %v10519 = vpop.f32.mrb[0].mxu0
    %v10520 = vadd.f32 0.0, %v10519
    %v10521 = vpop.f32.mrb[0].mxu0
    %v10522 = vpop.f32.mrb[0].mxu0
    %v10523 = vadd.f32 0.0, %v10522
    %v10524 = vpop.f32.mrb[0].mxu0
    %10525 = vmatprep.mubr.bf16.mxu0 0
    %10526 = vmatmul.mubr.bf16.gmra.mrb[0].mxu0 %v9952
    %v10527 = vpop.f32.mrb[0].mxu0
    %v10528 = vadd.f32 0.0, %v10527
    %v10529 = vpop.f32.mrb[0].mxu0
    %v10530 = vpop.f32.mrb[0].mxu0
    %v10531 = vadd.f32 0.0, %v10530
    %v10532 = vpop.f32.mrb[0].mxu0
    %10533 = vmatprep.mubr.bf16.mxu0 0
    %10534 = vmatmul.mubr.bf16.gmra.mrb[0].mxu0 %v9955
    %v10535 = vpop.f32.mrb[0].mxu0
    %v10536 = vadd.f32 0.0, %v10535
    %v10537 = vpop.f32.mrb[0].mxu0
    %v10538 = vpop.f32.mrb[0].mxu0
    %v10539 = vadd.f32 0.0, %v10538
    %v10540 = vpop.f32.mrb[0].mxu0
    %10541 = vmatprep.mubr.bf16.mxu0 0
    %10542 = vmatmul.mubr.bf16.gmra.mrb[0].mxu0 %v9958
    %v10543 = vpop.f32.mrb[0].mxu0
    %v10544 = vadd.f32 0.0, %v10543
    %v10545 = vpop.f32.mrb[0].mxu0
    %v10546 = vpop.f32.mrb[0].mxu0
    %v10547 = vadd.f32 0.0, %v10546
    %v10548 = vpop.f32.mrb[0].mxu0
    %10549 = vmatprep.mubr.bf16.mxu0 0
    %10550 = vmatmul.mubr.bf16.gmra.mrb[0].mxu0 %v9961
    %v10551 = vpop.f32.mrb[0].mxu0
    %v10552 = vadd.f32 0.0, %v10551
    %v10553 = vpop.f32.mrb[0].mxu0
    %v10554 = vpop.f32.mrb[0].mxu0
    %v10555 = vadd.f32 0.0, %v10554
    %v10556 = vpop.f32.mrb[0].mxu0
    %10557 = vmatprep.mubr.bf16.mxu0 0
    %10558 = vmatmul.mubr.bf16.gmra.mrb[0].mxu0 %v9964
    %v10559 = vpop.f32.mrb[0].mxu0
    %v10560 = vadd.f32 0.0, %v10559
    %v10561 = vpop.f32.mrb[0].mxu0
    %v10562 = vpop.f32.mrb[0].mxu0
    %v10563 = vadd.f32 0.0, %v10562
    %v10564 = vpop.f32.mrb[0].mxu0
    %10565 = vmatprep.mubr.bf16.mxu0 0
    %10566 = vmatmul.mubr.bf16.gmra.mrb[0].mxu0 %v9967
    %v10567 = vpop.f32.mrb[0].mxu0
    %v10568 = vadd.f32 0.0, %v10567
    %v10569 = vpop.f32.mrb[0].mxu0
    %v10570 = vpop.f32.mrb[0].mxu0
    %v10571 = vadd.f32 0.0, %v10570
    %v10572 = vpop.f32.mrb[0].mxu0
    %10573 = vmatprep.mubr.bf16.mxu0 0
    %10574 = vmatmul.mubr.bf16.gmra.mrb[0].mxu0 %v9970
    %v10575 = vpop.f32.mrb[0].mxu0
    %v10576 = vadd.f32 0.0, %v10575
    %v10577 = vpop.f32.mrb[0].mxu0
    %v10578 = vpop.f32.mrb[0].mxu0
    %v10579 = vadd.f32 0.0, %v10578
    %v10580 = vpop.f32.mrb[0].mxu0
    %10581 = vmatprep.mubr.bf16.mxu0 0
    %10582 = vmatmul.mubr.bf16.gmra.mrb[0].mxu0 %v9973
    %v10583 = vpop.f32.mrb[0].mxu0
    %v10584 = vadd.f32 0.0, %v10583
    %v10585 = vpop.f32.mrb[0].mxu0
    %v10586 = vpop.f32.mrb[0].mxu0
    %v10587 = vadd.f32 0.0, %v10586
    %v10588 = vpop.f32.mrb[0].mxu0
    %10589 = vmatprep.mubr.bf16.mxu0 0
    %10590 = vmatmul.mubr.bf16.gmra.mrb[0].mxu0 %v9976
    %v10591 = vpop.f32.mrb[0].mxu0
    %v10592 = vadd.f32 0.0, %v10591
    %v10593 = vpop.f32.mrb[0].mxu0
    %v10594 = vpop.f32.mrb[0].mxu0
    %v10595 = vadd.f32 0.0, %v10594
    %v10596 = vpop.f32.mrb[0].mxu0
    %10597 = vmatprep.mubr.bf16.mxu0 0
    %10598 = vmatmul.mubr.bf16.gmra.mrb[0].mxu0 %v9979
    %v10599 = vpop.f32.mrb[0].mxu0
    %v10600 = vadd.f32 0.0, %v10599
    %v10601 = vpop.f32.mrb[0].mxu0
    %v10602 = vpop.f32.mrb[0].mxu0
    %v10603 = vadd.f32 0.0, %v10602
    %v10604 = vpop.f32.mrb[0].mxu0
    %10605 = vmatprep.mubr.bf16.mxu0 0
    %10606 = vmatmul.mubr.bf16.gmra.mrb[0].mxu0 %v9982
    %v10607 = vpop.f32.mrb[0].mxu0
    %v10608 = vadd.f32 0.0, %v10607
    %v10609 = vpop.f32.mrb[0].mxu0
    %v10610 = vpop.f32.mrb[0].mxu0
    %v10611 = vadd.f32 0.0, %v10610
    %v10612 = vpop.f32.mrb[0].mxu0
    %10613 = vmatprep.mubr.bf16.mxu0 0
    %10614 = vmatmul.mubr.bf16.gmra.mrb[0].mxu0 %v9985
    %v10615 = vpop.f32.mrb[0].mxu0
    %v10616 = vadd.f32 0.0, %v10615
    %v10617 = vpop.f32.mrb[0].mxu0
    %v10618 = vpop.f32.mrb[0].mxu0
    %v10619 = vadd.f32 0.0, %v10618
    %v10620 = vpop.f32.mrb[0].mxu0
    %10621 = vmatprep.mubr.bf16.mxu0 0
    %10622 = vmatmul.mubr.bf16.gmra.mrb[0].mxu0 %v9988
    %v10623 = vpop.f32.mrb[0].mxu0
    %v10624 = vadd.f32 0.0, %v10623
    %v10625 = vpop.f32.mrb[0].mxu0
    %v10626 = vpop.f32.mrb[0].mxu0
    %v10627 = vadd.f32 0.0, %v10626
    %v10628 = vpop.f32.mrb[0].mxu0
    %10629 = vmatprep.mubr.bf16.mxu0 0
    %10630 = vmatmul.mubr.bf16.gmra.mrb[0].mxu0 %v9991
    %v10631 = vpop.f32.mrb[0].mxu0
    %v10632 = vadd.f32 0.0, %v10631
    %v10633 = vpop.f32.mrb[0].mxu0
    %v10634 = vpop.f32.mrb[0].mxu0
    %v10635 = vadd.f32 0.0, %v10634
    %v10636 = vpop.f32.mrb[0].mxu0
    %10637 = vmatprep.mubr.bf16.mxu0 0
    %10638 = vmatmul.mubr.bf16.gmra.mrb[0].mxu0 %v9994
    %v10639 = vpop.f32.mrb[0].mxu0
    %v10640 = vadd.f32 0.0, %v10639
    %v10641 = vpop.f32.mrb[0].mxu0
    %v10642 = vpop.f32.mrb[0].mxu0
    %v10643 = vadd.f32 0.0, %v10642
    %v10644 = vpop.f32.mrb[0].mxu0
    %10645 = vmatprep.mubr.bf16.mxu0 0
    %10646 = vmatmul.mubr.bf16.gmra.mrb[0].mxu0 %v9997
    %v10647 = vpop.f32.mrb[0].mxu0
    %v10648 = vadd.f32 0.0, %v10647
    %v10649 = vpop.f32.mrb[0].mxu0
    %v10650 = vpop.f32.mrb[0].mxu0
    %v10651 = vadd.f32 0.0, %v10650
    %v10652 = vpop.f32.mrb[0].mxu0
    %10653 = vmatprep.mubr.bf16.mxu0 0
    %10654 = vmatmul.mubr.bf16.gmra.mrb[0].mxu0 %v10000
    %v10655 = vpop.f32.mrb[0].mxu0
    %v10656 = vadd.f32 0.0, %v10655
    %v10657 = vpop.f32.mrb[0].mxu0
    %v10658 = vpop.f32.mrb[0].mxu0
    %v10659 = vadd.f32 0.0, %v10658
    %v10660 = vpop.f32.mrb[0].mxu0
    %10661 = vmatprep.mubr.bf16.mxu0 0
    %10662 = vmatmul.mubr.bf16.gmra.mrb[0].mxu0 %v10003
    %v10663 = vpop.f32.mrb[0].mxu0
    %v10664 = vadd.f32 0.0, %v10663
    %v10665 = vpop.f32.mrb[0].mxu0
    %v10666 = vpop.f32.mrb[0].mxu0
    %v10667 = vadd.f32 0.0, %v10666
    %v10668 = vpop.f32.mrb[0].mxu0
    %10669 = vmatprep.mubr.bf16.mxu0 0
    %10670 = vmatmul.mubr.bf16.gmra.mrb[0].mxu0 %v10006
    %v10671 = vpop.f32.mrb[0].mxu0
    %v10672 = vadd.f32 0.0, %v10671
    %v10673 = vpop.f32.mrb[0].mxu0
    %v10674 = vpop.f32.mrb[0].mxu0
    %v10675 = vadd.f32 0.0, %v10674
    %v10676 = vpop.f32.mrb[0].mxu0
    %10677 = vmatprep.mubr.bf16.mxu0 0
    %10678 = vmatmul.mubr.bf16.gmra.mrb[0].mxu0 %v10009
    %v10679 = vpop.f32.mrb[0].mxu0
    %v10680 = vadd.f32 0.0, %v10679
    %v10681 = vpop.f32.mrb[0].mxu0
    %v10682 = vpop.f32.mrb[0].mxu0
    %v10683 = vadd.f32 0.0, %v10682
    %v10684 = vpop.f32.mrb[0].mxu0
    %10685 = vmatprep.mubr.bf16.mxu0 0
    %10686 = vmatmul.mubr.bf16.gmra.mrb[0].mxu0 %v10012
    %v10687 = vpop.f32.mrb[0].mxu0
    %v10688 = vadd.f32 0.0, %v10687
    %v10689 = vpop.f32.mrb[0].mxu0
    %v10690 = vpop.f32.mrb[0].mxu0
    %v10691 = vadd.f32 0.0, %v10690
    %v10692 = vpop.f32.mrb[0].mxu0
    %10693 = vmatprep.mubr.bf16.mxu0 0
    %10694 = vmatmul.mubr.bf16.gmra.mrb[0].mxu0 %v10015
    %v10695 = vpop.f32.mrb[0].mxu0
    %v10696 = vadd.f32 0.0, %v10695
    %v10697 = vpop.f32.mrb[0].mxu0
    %v10698 = vpop.f32.mrb[0].mxu0
    %v10699 = vadd.f32 0.0, %v10698
    %v10700 = vpop.f32.mrb[0].mxu0
    %10701 = vmatprep.mubr.bf16.mxu0 0
    %10702 = vmatmul.mubr.bf16.gmra.mrb[0].mxu0 %v10018
    %v10703 = vpop.f32.mrb[0].mxu0
    %v10704 = vadd.f32 0.0, %v10703
    %v10705 = vpop.f32.mrb[0].mxu0
    %v10706 = vpop.f32.mrb[0].mxu0
    %v10707 = vadd.f32 0.0, %v10706
    %v10708 = vpop.f32.mrb[0].mxu0
    %10709 = vmatprep.mubr.bf16.mxu0 0
    %10710 = vmatmul.mubr.bf16.gmra.mrb[0].mxu0 %v10021
    %v10711 = vpop.f32.mrb[0].mxu0
    %v10712 = vadd.f32 0.0, %v10711
    %v10713 = vpop.f32.mrb[0].mxu0
    %v10714 = vpop.f32.mrb[0].mxu0
    %v10715 = vadd.f32 0.0, %v10714
    %v10716 = vpop.f32.mrb[0].mxu0
    %10717 = vmatprep.mubr.bf16.mxu0 0
    %10718 = vmatmul.mubr.bf16.gmra.mrb[0].mxu0 %v10024
    %v10719 = vpop.f32.mrb[0].mxu0
    %v10720 = vadd.f32 0.0, %v10719
    %v10721 = vpop.f32.mrb[0].mxu0
    %v10722 = vpop.f32.mrb[0].mxu0
    %v10723 = vadd.f32 0.0, %v10722
    %v10724 = vpop.f32.mrb[0].mxu0
    %10725 = vmatprep.mubr.bf16.mxu0 0
    %10726 = vmatmul.mubr.bf16.gmra.mrb[0].mxu0 %v10027
    %v10727 = vpop.f32.mrb[0].mxu0
    %v10728 = vadd.f32 0.0, %v10727
    %v10729 = vpop.f32.mrb[0].mxu0
    %v10730 = vpop.f32.mrb[0].mxu0
    %v10731 = vadd.f32 0.0, %v10730
    %v10732 = vpop.f32.mrb[0].mxu0
    %10733 = vmatprep.mubr.bf16.mxu0 0
    %10734 = vmatmul.mubr.bf16.gmra.mrb[0].mxu0 %v10030
    %v10735 = vpop.f32.mrb[0].mxu0
    %v10736 = vadd.f32 0.0, %v10735
    %v10737 = vpop.f32.mrb[0].mxu0
    %v10738 = vpop.f32.mrb[0].mxu0
    %v10739 = vadd.f32 0.0, %v10738
    %v10740 = vpop.f32.mrb[0].mxu0
    %10741 = vmatprep.mubr.bf16.mxu0 0
    %10742 = vmatmul.mubr.bf16.gmra.mrb[0].mxu0 %v10033
    %v10743 = vpop.f32.mrb[0].mxu0
    %v10744 = vadd.f32 0.0, %v10743
    %v10745 = vpop.f32.mrb[0].mxu0
    %v10746 = vpop.f32.mrb[0].mxu0
    %v10747 = vadd.f32 0.0, %v10746
    %v10748 = vpop.f32.mrb[0].mxu0
    %10749 = vmatprep.mubr.bf16.mxu0 0
    %10750 = vmatmul.mubr.bf16.gmra.mrb[0].mxu0 %v10036
    %v10751 = vpop.f32.mrb[0].mxu0
    %v10752 = vadd.f32 0.0, %v10751
    %v10753 = vpop.f32.mrb[0].mxu0
    %v10754 = vpop.f32.mrb[0].mxu0
    %v10755 = vadd.f32 0.0, %v10754
    %v10756 = vpop.f32.mrb[0].mxu0
    %10757 = vmatprep.mubr.bf16.mxu0 0
    %10758 = vmatmul.mubr.bf16.gmra.mrb[0].mxu0 %v10039
    %v10759 = vpop.f32.mrb[0].mxu0
    %v10760 = vadd.f32 0.0, %v10759
    %v10761 = vpop.f32.mrb[0].mxu0
    %v10762 = vpop.f32.mrb[0].mxu0
    %v10763 = vadd.f32 0.0, %v10762
    %v10764 = vpop.f32.mrb[0].mxu0
    %10765 = vmatprep.mubr.bf16.mxu0 0
    %10766 = vmatmul.mubr.bf16.gmra.mrb[0].mxu0 %v10042
    %v10767 = vpop.f32.mrb[0].mxu0
    %v10768 = vadd.f32 0.0, %v10767
    %v10769 = vpop.f32.mrb[0].mxu0
    %v10770 = vpop.f32.mrb[0].mxu0
    %v10771 = vadd.f32 0.0, %v10770
    %v10772 = vpop.f32.mrb[0].mxu0
    %10773 = vmatprep.mubr.bf16.mxu0 0
    %10774 = vmatmul.mubr.bf16.gmra.mrb[0].mxu0 %v10045
    %v10775 = vpop.f32.mrb[0].mxu0
    %v10776 = vadd.f32 0.0, %v10775
    %v10777 = vpop.f32.mrb[0].mxu0
    %v10778 = vpop.f32.mrb[0].mxu0
    %v10779 = vadd.f32 0.0, %v10778
    %v10780 = vpop.f32.mrb[0].mxu0
    %10781 = vmatprep.mubr.bf16.mxu0 0
    %10782 = vmatmul.mubr.bf16.gmra.mrb[0].mxu0 %v10048
    %v10783 = vpop.f32.mrb[0].mxu0
    %v10784 = vadd.f32 0.0, %v10783
    %v10785 = vpop.f32.mrb[0].mxu0
    %v10786 = vpop.f32.mrb[0].mxu0
    %v10787 = vadd.f32 0.0, %v10786
    %v10788 = vpop.f32.mrb[0].mxu0
    %10789 = vmatprep.mubr.bf16.mxu0 0
    %10790 = vmatmul.mubr.bf16.gmra.mrb[0].mxu0 %v10051
    %v10791 = vpop.f32.mrb[0].mxu0
    %v10792 = vadd.f32 0.0, %v10791
    %v10793 = vpop.f32.mrb[0].mxu0
    %v10794 = vpop.f32.mrb[0].mxu0
    %v10795 = vadd.f32 0.0, %v10794
    %v10796 = vpop.f32.mrb[0].mxu0
    %10797 = vmatprep.mubr.bf16.mxu0 0
    %10798 = vmatmul.mubr.bf16.gmra.mrb[0].mxu0 %v10054
    %v10799 = vpop.f32.mrb[0].mxu0
    %v10800 = vadd.f32 0.0, %v10799
    %v10801 = vpop.f32.mrb[0].mxu0
    %v10802 = vpop.f32.mrb[0].mxu0
    %v10803 = vadd.f32 0.0, %v10802
    %v10804 = vpop.f32.mrb[0].mxu0
    %10805 = vmatprep.mubr.bf16.mxu0 0
    %10806 = vmatmul.mubr.bf16.gmra.mrb[0].mxu0 %v10057
    %v10807 = vpop.f32.mrb[0].mxu0
    %v10808 = vadd.f32 0.0, %v10807
    %v10809 = vpop.f32.mrb[0].mxu0
    %v10810 = vpop.f32.mrb[0].mxu0
    %v10811 = vadd.f32 0.0, %v10810
    %v10812 = vpop.f32.mrb[0].mxu0
    %10813 = vmatprep.mubr.bf16.mxu0 0
    %10814 = vmatmul.mubr.bf16.gmra.mrb[0].mxu0 %v10060
    %v10815 = vpop.f32.mrb[0].mxu0
    %v10816 = vadd.f32 0.0, %v10815
    %v10817 = vpop.f32.mrb[0].mxu0
    %v10818 = vpop.f32.mrb[0].mxu0
    %v10819 = vadd.f32 0.0, %v10818
    %v10820 = vpop.f32.mrb[0].mxu0
    %10821 = vmatprep.mubr.bf16.mxu0 0
    %10822 = vmatmul.mubr.bf16.gmra.mrb[0].mxu0 %v10063
    %v10823 = vpop.f32.mrb[0].mxu0
    %v10824 = vadd.f32 0.0, %v10823
    %v10825 = vpop.f32.mrb[0].mxu0
    %v10826 = vpop.f32.mrb[0].mxu0
    %v10827 = vadd.f32 0.0, %v10826
    %v10828 = vpop.f32.mrb[0].mxu0
    %10829 = vmatprep.mubr.bf16.mxu0 0
    %10830 = vmatmul.mubr.bf16.gmra.mrb[0].mxu0 %v10066
    %v10831 = vpop.f32.mrb[0].mxu0
    %v10832 = vadd.f32 0.0, %v10831
    %v10833 = vpop.f32.mrb[0].mxu0
    %v10834 = vpop.f32.mrb[0].mxu0
    %v10835 = vadd.f32 0.0, %v10834
    %v10836 = vpop.f32.mrb[0].mxu0
    %10837 = vmatprep.mubr.bf16.mxu0 0
    %10838 = vmatmul.mubr.bf16.gmra.mrb[0].mxu0 %v10069
    %v10839 = vpop.f32.mrb[0].mxu0
    %v10840 = vadd.f32 0.0, %v10839
    %v10841 = vpop.f32.mrb[0].mxu0
    %v10842 = vpop.f32.mrb[0].mxu0
    %v10843 = vadd.f32 0.0, %v10842
    %v10844 = vpop.f32.mrb[0].mxu0
    %10845 = vmatprep.mubr.bf16.mxu0 0
    %10846 = vmatmul.mubr.bf16.gmra.mrb[0].mxu0 %v10072
    %v10847 = vpop.f32.mrb[0].mxu0
    %v10848 = vadd.f32 0.0, %v10847
    %v10849 = vpop.f32.mrb[0].mxu0
    %v10850 = vpop.f32.mrb[0].mxu0
    %v10851 = vadd.f32 0.0, %v10850
    %v10852 = vpop.f32.mrb[0].mxu0
    %10853 = vmatprep.mubr.bf16.mxu0 0
    %10854 = vmatmul.mubr.bf16.gmra.mrb[0].mxu0 %v10075
    %v10855 = vpop.f32.mrb[0].mxu0
    %v10856 = vadd.f32 0.0, %v10855
    %v10857 = vpop.f32.mrb[0].mxu0
    %v10858 = vpop.f32.mrb[0].mxu0
    %v10859 = vadd.f32 0.0, %v10858
    %v10860 = vpop.f32.mrb[0].mxu0
    %10861 = vmatprep.mubr.bf16.mxu0 0
    %10862 = vmatmul.mubr.bf16.gmra.mrb[0].mxu0 %v10078
    %v10863 = vpop.f32.mrb[0].mxu0
    %v10864 = vadd.f32 0.0, %v10863
    %v10865 = vpop.f32.mrb[0].mxu0
    %v10866 = vpop.f32.mrb[0].mxu0
    %v10867 = vadd.f32 0.0, %v10866
    %v10868 = vpop.f32.mrb[0].mxu0
    %10869 = vmatprep.mubr.bf16.mxu0 0
    %10870 = vmatmul.mubr.bf16.gmra.mrb[0].mxu0 %v10081
    %v10871 = vpop.f32.mrb[0].mxu0
    %v10872 = vadd.f32 0.0, %v10871
    %v10873 = vpop.f32.mrb[0].mxu0
    %v10874 = vpop.f32.mrb[0].mxu0
    %v10875 = vadd.f32 0.0, %v10874
    %v10876 = vpop.f32.mrb[0].mxu0
    %10877 = vmatprep.mubr.bf16.mxu0 0
    %10878 = vmatmul.mubr.bf16.gmra.mrb[0].mxu0 %v10084
    %v10879 = vpop.f32.mrb[0].mxu0
    %v10880 = vadd.f32 0.0, %v10879
    %v10881 = vpop.f32.mrb[0].mxu0
    %v10882 = vpop.f32.mrb[0].mxu0
    %v10883 = vadd.f32 0.0, %v10882
    %v10884 = vpop.f32.mrb[0].mxu0
    %10885 = vmatprep.mubr.bf16.mxu0 0
    %10886 = vmatmul.mubr.bf16.gmra.mrb[0].mxu0 %v10087
    %v10887 = vpop.f32.mrb[0].mxu0
    %v10888 = vadd.f32 0.0, %v10887
    %v10889 = vpop.f32.mrb[0].mxu0
    %v10890 = vpop.f32.mrb[0].mxu0
    %v10891 = vadd.f32 0.0, %v10890
    %v10892 = vpop.f32.mrb[0].mxu0
    %10893 = vmatprep.mubr.bf16.mxu0 0
    %10894 = vmatmul.mubr.bf16.gmra.mrb[0].mxu0 %v10090
    %v10895 = vpop.f32.mrb[0].mxu0
    %v10896 = vadd.f32 0.0, %v10895
    %v10897 = vpop.f32.mrb[0].mxu0
    %v10898 = vpop.f32.mrb[0].mxu0
    %v10899 = vadd.f32 0.0, %v10898
    %v10900 = vpop.f32.mrb[0].mxu0
    %10901 = vmatprep.mubr.bf16.mxu0 0
    %10902 = vmatmul.mubr.bf16.gmra.mrb[0].mxu0 %v10093
    %v10903 = vpop.f32.mrb[0].mxu0
    %v10904 = vadd.f32 0.0, %v10903
    %v10905 = vpop.f32.mrb[0].mxu0
    %v10906 = vpop.f32.mrb[0].mxu0
    %v10907 = vadd.f32 0.0, %v10906
    %v10908 = vpop.f32.mrb[0].mxu0
    %10909 = vmatprep.mubr.bf16.mxu0 0
    %10910 = vmatmul.mubr.bf16.gmra.mrb[0].mxu0 %v10096
    %v10911 = vpop.f32.mrb[0].mxu0
    %v10912 = vadd.f32 0.0, %v10911
    %v10913 = vpop.f32.mrb[0].mxu0
    %v10914 = vpop.f32.mrb[0].mxu0
    %v10915 = vadd.f32 0.0, %v10914
    %v10916 = vpop.f32.mrb[0].mxu0
    %10917 = vmatprep.mubr.bf16.mxu0 0
    %10918 = vmatmul.mubr.bf16.gmra.mrb[0].mxu0 %v10099
    %v10919 = vpop.f32.mrb[0].mxu0
    %v10920 = vadd.f32 0.0, %v10919
    %v10921 = vpop.f32.mrb[0].mxu0
    %v10922 = vpop.f32.mrb[0].mxu0
    %v10923 = vadd.f32 0.0, %v10922
    %v10924 = vpop.f32.mrb[0].mxu0
    %10925 = vmatprep.mubr.bf16.mxu0 0
    %10926 = vmatmul.mubr.bf16.gmra.mrb[0].mxu0 %v10102
    %v10927 = vpop.f32.mrb[0].mxu0
    %v10928 = vadd.f32 0.0, %v10927
    %v10929 = vpop.f32.mrb[0].mxu0
    %v10930 = vpop.f32.mrb[0].mxu0
    %v10931 = vadd.f32 0.0, %v10930
    %v10932 = vpop.f32.mrb[0].mxu0
    %10933 = vmatprep.mubr.bf16.mxu0 0
    %10934 = vmatmul.mubr.bf16.gmra.mrb[0].mxu0 %v10105
    %v10935 = vpop.f32.mrb[0].mxu0
    %v10936 = vadd.f32 0.0, %v10935
    %v10937 = vpop.f32.mrb[0].mxu0
    %v10938 = vpop.f32.mrb[0].mxu0
    %v10939 = vadd.f32 0.0, %v10938
    %v10940 = vpop.f32.mrb[0].mxu0
    %10941 = vmatprep.mubr.bf16.mxu0 0
    %10942 = vmatmul.mubr.bf16.gmra.mrb[0].mxu0 %v10108
    %v10943 = vpop.f32.mrb[0].mxu0
    %v10944 = vadd.f32 0.0, %v10943
    %v10945 = vpop.f32.mrb[0].mxu0
    %v10946 = vpop.f32.mrb[0].mxu0
    %v10947 = vadd.f32 0.0, %v10946
    %v10948 = vpop.f32.mrb[0].mxu0
    %10949 = vmatprep.mubr.bf16.mxu0 0
    %10950 = vmatmul.mubr.bf16.gmra.mrb[0].mxu0 %v10111
    %v10951 = vpop.f32.mrb[0].mxu0
    %v10952 = vadd.f32 0.0, %v10951
    %v10953 = vpop.f32.mrb[0].mxu0
    %v10954 = vpop.f32.mrb[0].mxu0
    %v10955 = vadd.f32 0.0, %v10954
    %v10956 = vpop.f32.mrb[0].mxu0
    %10957 = vmatprep.mubr.bf16.mxu0 0
    %10958 = vmatmul.mubr.bf16.gmra.mrb[0].mxu0 %v10114
    %v10959 = vpop.f32.mrb[0].mxu0
    %v10960 = vadd.f32 0.0, %v10959
    %v10961 = vpop.f32.mrb[0].mxu0
    %v10962 = vpop.f32.mrb[0].mxu0
    %v10963 = vadd.f32 0.0, %v10962
    %v10964 = vpop.f32.mrb[0].mxu0
    %10965 = vmatprep.mubr.bf16.mxu0 0
    %10966 = vmatmul.mubr.bf16.gmra.mrb[0].mxu0 %v10117
    %v10967 = vpop.f32.mrb[0].mxu0
    %v10968 = vadd.f32 0.0, %v10967
    %v10969 = vpop.f32.mrb[0].mxu0
    %v10970 = vpop.f32.mrb[0].mxu0
    %v10971 = vadd.f32 0.0, %v10970
    %v10972 = vpop.f32.mrb[0].mxu0
    %10973 = vmatprep.mubr.bf16.mxu0 0
    %10974 = vmatmul.mubr.bf16.gmra.mrb[0].mxu0 %v10120
    %v10975 = vpop.f32.mrb[0].mxu0
    %v10976 = vadd.f32 0.0, %v10975
    %v10977 = vpop.f32.mrb[0].mxu0
    %v10978 = vpop.f32.mrb[0].mxu0
    %v10979 = vadd.f32 0.0, %v10978
    %v10980 = vpop.f32.mrb[0].mxu0
    %10981 = vmatprep.mubr.bf16.mxu0 0
    %10982 = vmatmul.mubr.bf16.gmra.mrb[0].mxu0 %v10123
    %v10983 = vpop.f32.mrb[0].mxu0
    %v10984 = vadd.f32 0.0, %v10983
    %v10985 = vpop.f32.mrb[0].mxu0
    %v10986 = vpop.f32.mrb[0].mxu0
    %v10987 = vadd.f32 0.0, %v10986
    %v10988 = vpop.f32.mrb[0].mxu0
    %10989 = vmatprep.mubr.bf16.mxu0 0
    %10990 = vmatmul.mubr.bf16.gmra.mrb[0].mxu0 %v10126
    %v10991 = vpop.f32.mrb[0].mxu0
    %v10992 = vadd.f32 0.0, %v10991
    %v10993 = vpop.f32.mrb[0].mxu0
    %v10994 = vpop.f32.mrb[0].mxu0
    %v10995 = vadd.f32 0.0, %v10994
    %v10996 = vpop.f32.mrb[0].mxu0
    %10997 = vmatprep.mubr.bf16.mxu0 0
    %10998 = vmatmul.mubr.bf16.gmra.mrb[0].mxu0 %v10129
    %v10999 = vpop.f32.mrb[0].mxu0
    %v11000 = vadd.f32 0.0, %v10999
    %v11001 = vpop.f32.mrb[0].mxu0
    %v11002 = vpop.f32.mrb[0].mxu0
    %v11003 = vadd.f32 0.0, %v11002
    %v11004 = vpop.f32.mrb[0].mxu0
    %11005 = vmatprep.mubr.bf16.mxu0 0
    %11006 = vmatmul.mubr.bf16.gmra.mrb[0].mxu0 %v10132
    %v11007 = vpop.f32.mrb[0].mxu0
    %v11008 = vadd.f32 0.0, %v11007
    %v11009 = vpop.f32.mrb[0].mxu0
    %v11010 = vpop.f32.mrb[0].mxu0
    %v11011 = vadd.f32 0.0, %v11010
    %v11012 = vpop.f32.mrb[0].mxu0
    %11013 = vmatprep.mubr.bf16.mxu0 0
    %11014 = vmatmul.mubr.bf16.gmra.mrb[0].mxu0 %v10135
    %v11015 = vpop.f32.mrb[0].mxu0
    %v11016 = vadd.f32 0.0, %v11015
    %v11017 = vpop.f32.mrb[0].mxu0
    %v11018 = vpop.f32.mrb[0].mxu0
    %v11019 = vadd.f32 0.0, %v11018
    %v11020 = vpop.f32.mrb[0].mxu0
    %11021 = vmatprep.mubr.bf16.mxu0 0
    %11022 = vmatmul.mubr.bf16.gmra.mrb[0].mxu0 %v10138
    %v11023 = vpop.f32.mrb[0].mxu0
    %v11024 = vadd.f32 0.0, %v11023
    %v11025 = vpop.f32.mrb[0].mxu0
    %v11026 = vpop.f32.mrb[0].mxu0
    %v11027 = vadd.f32 0.0, %v11026
    %v11028 = vpop.f32.mrb[0].mxu0
    %11029 = vmatprep.mubr.bf16.mxu0 0
    %11030 = vmatmul.mubr.bf16.gmra.mrb[0].mxu0 %v10141
    %v11031 = vpop.f32.mrb[0].mxu0
    %v11032 = vadd.f32 0.0, %v11031
    %v11033 = vpop.f32.mrb[0].mxu0
    %v11034 = vpop.f32.mrb[0].mxu0
    %v11035 = vadd.f32 0.0, %v11034
    %v11036 = vpop.f32.mrb[0].mxu0
    %11037 = vmatprep.mubr.bf16.mxu0 0
    %11038 = vmatmul.mubr.bf16.gmra.mrb[0].mxu0 %v10144
    %v11039 = vpop.f32.mrb[0].mxu0
    %v11040 = vadd.f32 0.0, %v11039
    %v11041 = vpop.f32.mrb[0].mxu0
    %v11042 = vpop.f32.mrb[0].mxu0
    %v11043 = vadd.f32 0.0, %v11042
    %v11044 = vpop.f32.mrb[0].mxu0
    %11045 = vmatprep.mubr.bf16.mxu0 0
    %11046 = vmatmul.mubr.bf16.gmra.mrb[0].mxu0 %v10147
    %v11047 = vpop.f32.mrb[0].mxu0
    %v11048 = vadd.f32 0.0, %v11047
    %v11049 = vpop.f32.mrb[0].mxu0
    %v11050 = vpop.f32.mrb[0].mxu0
    %v11051 = vadd.f32 0.0, %v11050
    %v11052 = vpop.f32.mrb[0].mxu0
    %11053 = vmatprep.mubr.bf16.mxu0 0
    %11054 = vmatmul.mubr.bf16.gmra.mrb[0].mxu0 %v10150
    %v11055 = vpop.f32.mrb[0].mxu0
    %v11056 = vadd.f32 0.0, %v11055
    %v11057 = vpop.f32.mrb[0].mxu0
    %v11058 = vpop.f32.mrb[0].mxu0
    %v11059 = vadd.f32 0.0, %v11058
    %v11060 = vpop.f32.mrb[0].mxu0
    %11061 = vmatprep.mubr.bf16.mxu0 0
    %11062 = vmatmul.mubr.bf16.gmra.mrb[0].mxu0 %v10153
    %v11063 = vpop.f32.mrb[0].mxu0
    %v11064 = vadd.f32 0.0, %v11063
    %v11065 = vpop.f32.mrb[0].mxu0
    %v11066 = vpop.f32.mrb[0].mxu0
    %v11067 = vadd.f32 0.0, %v11066
    %v11068 = vpop.f32.mrb[0].mxu0
    %11069 = vmatprep.mubr.bf16.mxu0 0
    %11070 = vmatmul.mubr.bf16.gmra.mrb[0].mxu0 %v10156
    %v11071 = vpop.f32.mrb[0].mxu0
    %v11072 = vadd.f32 0.0, %v11071
    %v11073 = vpop.f32.mrb[0].mxu0
    %v11074 = vpop.f32.mrb[0].mxu0
    %v11075 = vadd.f32 0.0, %v11074
    %v11076 = vpop.f32.mrb[0].mxu0
    %11077 = vmatprep.mubr.bf16.mxu0 0
    %11078 = vmatmul.mubr.bf16.gmra.mrb[0].mxu0 %v10159
    %v11079 = vpop.f32.mrb[0].mxu0
    %v11080 = vadd.f32 0.0, %v11079
    %v11081 = vpop.f32.mrb[0].mxu0
    %v11082 = vpop.f32.mrb[0].mxu0
    %v11083 = vadd.f32 0.0, %v11082
    %v11084 = vpop.f32.mrb[0].mxu0
    %11085 = vmatprep.mubr.bf16.mxu0 0
    %11086 = vmatmul.mubr.bf16.gmra.mrb[0].mxu0 %v10162
    %v11087 = vpop.f32.mrb[0].mxu0
    %v11088 = vadd.f32 0.0, %v11087
    %v11089 = vpop.f32.mrb[0].mxu0
    %v11090 = vpop.f32.mrb[0].mxu0
    %v11091 = vadd.f32 0.0, %v11090
    %v11092 = vpop.f32.mrb[0].mxu0
    %11093 = vmatprep.mubr.bf16.mxu0 0
    %11094 = vmatmul.mubr.bf16.gmra.mrb[0].mxu0 %v10165
    %v11095 = vpop.f32.mrb[0].mxu0
    %v11096 = vadd.f32 0.0, %v11095
    %v11097 = vpop.f32.mrb[0].mxu0
    %v11098 = vpop.f32.mrb[0].mxu0
    %v11099 = vadd.f32 0.0, %v11098
    %v11100 = vpop.f32.mrb[0].mxu0
    %11101 = vmatprep.mubr.bf16.mxu0 0
    %11102 = vmatmul.mubr.bf16.gmra.mrb[0].mxu0 %v10168
    %v11103 = vpop.f32.mrb[0].mxu0
    %v11104 = vadd.f32 0.0, %v11103
    %v11105 = vpop.f32.mrb[0].mxu0
    %v11106 = vpop.f32.mrb[0].mxu0
    %v11107 = vadd.f32 0.0, %v11106
    %v11108 = vpop.f32.mrb[0].mxu0
    %11109 = vmatprep.mubr.bf16.mxu0 0
    %11110 = vmatmul.mubr.bf16.gmra.mrb[0].mxu0 %v10171
    %v11111 = vpop.f32.mrb[0].mxu0
    %v11112 = vadd.f32 0.0, %v11111
    %v11113 = vpop.f32.mrb[0].mxu0
    %v11114 = vpop.f32.mrb[0].mxu0
    %v11115 = vadd.f32 0.0, %v11114
    %v11116 = vpop.f32.mrb[0].mxu0
    %11117 = vmatprep.mubr.bf16.mxu0 0
    %11118 = vmatmul.mubr.bf16.gmra.mrb[0].mxu0 %v10174
    %v11119 = vpop.f32.mrb[0].mxu0
    %v11120 = vadd.f32 0.0, %v11119
    %v11121 = vpop.f32.mrb[0].mxu0
    %v11122 = vpop.f32.mrb[0].mxu0
    %v11123 = vadd.f32 0.0, %v11122
    %v11124 = vpop.f32.mrb[0].mxu0
    %11125 = vmatprep.mubr.bf16.mxu0 0
    %11126 = vmatmul.mubr.bf16.gmra.mrb[0].mxu0 %v10177
    %v11127 = vpop.f32.mrb[0].mxu0
    %v11128 = vadd.f32 0.0, %v11127
    %v11129 = vpop.f32.mrb[0].mxu0
    %v11130 = vpop.f32.mrb[0].mxu0
    %v11131 = vadd.f32 0.0, %v11130
    %v11132 = vpop.f32.mrb[0].mxu0
    %11133 = vmatprep.mubr.bf16.mxu0 0
    %11134 = vmatmul.mubr.bf16.gmra.mrb[0].mxu0 %v10180
    %v11135 = vpop.f32.mrb[0].mxu0
    %v11136 = vadd.f32 0.0, %v11135
    %v11137 = vpop.f32.mrb[0].mxu0
    %v11138 = vpop.f32.mrb[0].mxu0
    %v11139 = vadd.f32 0.0, %v11138
    %v11140 = vpop.f32.mrb[0].mxu0
    %11141 = vmatprep.mubr.bf16.mxu0 0
    %11142 = vmatmul.mubr.bf16.gmra.mrb[0].mxu0 %v10183
    %v11143 = vpop.f32.mrb[0].mxu0
    %v11144 = vadd.f32 0.0, %v11143
    %v11145 = vpop.f32.mrb[0].mxu0
    %v11146 = vpop.f32.mrb[0].mxu0
    %v11147 = vadd.f32 0.0, %v11146
    %v11148 = vpop.f32.mrb[0].mxu0
    %11149 = vmatprep.mubr.bf16.mxu0 0
    %11150 = vmatmul.mubr.bf16.gmra.mrb[0].mxu0 %v10186
    %v11151 = vpop.f32.mrb[0].mxu0
    %v11152 = vadd.f32 0.0, %v11151
    %v11153 = vpop.f32.mrb[0].mxu0
    %v11154 = vpop.f32.mrb[0].mxu0
    %v11155 = vadd.f32 0.0, %v11154
    %v11156 = vpop.f32.mrb[0].mxu0
    %11157 = vmatprep.mubr.bf16.mxu0 0
    %11158 = vmatmul.mubr.bf16.gmra.mrb[0].mxu0 %v10189
    %v11159 = vpop.f32.mrb[0].mxu0
    %v11160 = vadd.f32 0.0, %v11159
    %v11161 = vpop.f32.mrb[0].mxu0
    %v11162 = vpop.f32.mrb[0].mxu0
    %v11163 = vadd.f32 0.0, %v11162
    %v11164 = vpop.f32.mrb[0].mxu0
    %11165 = vmatprep.mubr.bf16.mxu0 0
    %11166 = vmatmul.mubr.bf16.gmra.mrb[0].mxu0 %v10192
    %v11167 = vpop.f32.mrb[0].mxu0
    %v11168 = vadd.f32 0.0, %v11167
    %v11169 = vpop.f32.mrb[0].mxu0
    %v11170 = vpop.f32.mrb[0].mxu0
    %v11171 = vadd.f32 0.0, %v11170
    %v11172 = vpop.f32.mrb[0].mxu0
    %11173 = vmatprep.mubr.bf16.mxu0 0
    %11174 = vmatmul.mubr.bf16.gmra.mrb[0].mxu0 %v10195
    %v11175 = vpop.f32.mrb[0].mxu0
    %v11176 = vadd.f32 0.0, %v11175
    %v11177 = vpop.f32.mrb[0].mxu0
    %v11178 = vpop.f32.mrb[0].mxu0
    %v11179 = vadd.f32 0.0, %v11178
    %v11180 = vpop.f32.mrb[0].mxu0
    %11181 = vmatprep.mubr.bf16.mxu0 0
    %11182 = vmatmul.mubr.bf16.gmra.mrb[0].mxu0 %v10198
    %v11183 = vpop.f32.mrb[0].mxu0
    %v11184 = vadd.f32 0.0, %v11183
    %v11185 = vpop.f32.mrb[0].mxu0
    %v11186 = vpop.f32.mrb[0].mxu0
    %v11187 = vadd.f32 0.0, %v11186
    %v11188 = vpop.f32.mrb[0].mxu0
    %11189 = vmatprep.mubr.bf16.mxu0 0
    %11190 = vmatmul.mubr.bf16.gmra.mrb[0].mxu0 %v10201
    %v11191 = vpop.f32.mrb[0].mxu0
    %v11192 = vadd.f32 0.0, %v11191
    %v11193 = vpop.f32.mrb[0].mxu0
    %v11194 = vpop.f32.mrb[0].mxu0
    %v11195 = vadd.f32 0.0, %v11194
    %v11196 = vpop.f32.mrb[0].mxu0
    %11197 = vmatprep.mubr.bf16.mxu0 0
    %11198 = vmatmul.mubr.bf16.gmra.mrb[0].mxu0 %v10204
    %v11199 = vpop.f32.mrb[0].mxu0
    %v11200 = vadd.f32 0.0, %v11199
    %v11201 = vpop.f32.mrb[0].mxu0
    %v11202 = vpop.f32.mrb[0].mxu0
    %v11203 = vadd.f32 0.0, %v11202
    %v11204 = vpop.f32.mrb[0].mxu0
    %11205 = vmatprep.mubr.bf16.mxu0 0
    %11206 = vmatmul.mubr.bf16.gmra.mrb[0].mxu0 %v10207
    %v11207 = vpop.f32.mrb[0].mxu0
    %v11208 = vadd.f32 0.0, %v11207
    %v11209 = vpop.f32.mrb[0].mxu0
    %v11210 = vpop.f32.mrb[0].mxu0
    %v11211 = vadd.f32 0.0, %v11210
    %v11212 = vpop.f32.mrb[0].mxu0
    %11213 = vmatprep.mubr.bf16.mxu0 0
    %11214 = vmatmul.mubr.bf16.gmra.mrb[0].mxu0 %v10210
    %v11215 = vpop.f32.mrb[0].mxu0
    %v11216 = vadd.f32 0.0, %v11215
    %v11217 = vpop.f32.mrb[0].mxu0
    %v11218 = vpop.f32.mrb[0].mxu0
    %v11219 = vadd.f32 0.0, %v11218
    %v11220 = vpop.f32.mrb[0].mxu0
    %11221 = vmatprep.mubr.bf16.mxu0 0
    %11222 = vmatmul.mubr.bf16.gmra.mrb[0].mxu0 %v10213
    %v11223 = vpop.f32.mrb[0].mxu0
    %v11224 = vadd.f32 0.0, %v11223
    %v11225 = vpop.f32.mrb[0].mxu0
    %v11226 = vpop.f32.mrb[0].mxu0
    %v11227 = vadd.f32 0.0, %v11226
    %v11228 = vpop.f32.mrb[0].mxu0
    %11229 = vmatprep.mubr.bf16.mxu0 0
    %11230 = vmatmul.mubr.bf16.gmra.mrb[0].mxu0 %v10216
    %v11231 = vpop.f32.mrb[0].mxu0
    %v11232 = vadd.f32 0.0, %v11231
    %v11233 = vpop.f32.mrb[0].mxu0
    %v11234 = vpop.f32.mrb[0].mxu0
    %v11235 = vadd.f32 0.0, %v11234
    %v11236 = vpop.f32.mrb[0].mxu0
    %11237 = vmatprep.mubr.bf16.mxu0 0
    %11238 = vmatmul.mubr.bf16.gmra.mrb[0].mxu0 %v10219
    %v11239 = vpop.f32.mrb[0].mxu0
    %v11240 = vadd.f32 0.0, %v11239
    %v11241 = vpop.f32.mrb[0].mxu0
    %v11242 = vpop.f32.mrb[0].mxu0
    %v11243 = vadd.f32 0.0, %v11242
    %v11244 = vpop.f32.mrb[0].mxu0
    %11245 = vmatprep.mubr.bf16.mxu0 0
    %11246 = vmatmul.mubr.bf16.gmra.mrb[0].mxu0 %v10222
    %v11247 = vpop.f32.mrb[0].mxu0
    %v11248 = vadd.f32 0.0, %v11247
    %v11249 = vpop.f32.mrb[0].mxu0
    %v11250 = vpop.f32.mrb[0].mxu0
    %v11251 = vadd.f32 0.0, %v11250
    %v11252 = vpop.f32.mrb[0].mxu0
    %11253 = vmatprep.mubr.bf16.mxu0 0
    %11254 = vmatmul.mubr.bf16.gmra.mrb[0].mxu0 %v10225
    %v11255 = vpop.f32.mrb[0].mxu0
    %v11256 = vadd.f32 0.0, %v11255
    %v11257 = vpop.f32.mrb[0].mxu0
    %v11258 = vpop.f32.mrb[0].mxu0
    %v11259 = vadd.f32 0.0, %v11258
    %v11260 = vpop.f32.mrb[0].mxu0
    %11261 = vmatprep.mubr.bf16.mxu0 0
    %11262 = vmatmul.mubr.bf16.gmra.mrb[0].mxu0 %v10228
    %v11263 = vpop.f32.mrb[0].mxu0
    %v11264 = vadd.f32 0.0, %v11263
    %v11265 = vpop.f32.mrb[0].mxu0
    %v11266 = vpop.f32.mrb[0].mxu0
    %v11267 = vadd.f32 0.0, %v11266
    %v11268 = vpop.f32.mrb[0].mxu0
    %11269 = vmatprep.mubr.bf16.mxu0 0
    %11270 = vmatmul.mubr.bf16.gmra.mrb[0].mxu0 %v10231
    %v11271 = vpop.f32.mrb[0].mxu0
    %v11272 = vadd.f32 0.0, %v11271
    %v11273 = vpop.f32.mrb[0].mxu0
    %v11274 = vpop.f32.mrb[0].mxu0
    %v11275 = vadd.f32 0.0, %v11274
    %v11276 = vpop.f32.mrb[0].mxu0
    %11277 = vmatprep.mubr.bf16.mxu0 0
    %11278 = vmatmul.mubr.bf16.gmra.mrb[0].mxu0 %v10234
    %v11279 = vpop.f32.mrb[0].mxu0
    %v11280 = vadd.f32 0.0, %v11279
    %v11281 = vpop.f32.mrb[0].mxu0
    %v11282 = vpop.f32.mrb[0].mxu0
    %v11283 = vadd.f32 0.0, %v11282
    %v11284 = vpop.f32.mrb[0].mxu0
    %11285 = vmatprep.mubr.bf16.mxu0 0
    %11286 = vmatmul.mubr.bf16.gmra.mrb[0].mxu0 %v10237
    %v11287 = vpop.f32.mrb[0].mxu0
    %v11288 = vadd.f32 0.0, %v11287
    %v11289 = vpop.f32.mrb[0].mxu0
    %v11290 = vpop.f32.mrb[0].mxu0
    %v11291 = vadd.f32 0.0, %v11290
    %v11292 = vpop.f32.mrb[0].mxu0
    %11293 = vmatprep.mubr.bf16.mxu0 0
    %11294 = vmatmul.mubr.bf16.gmra.mrb[0].mxu0 %v10240
    %v11295 = vpop.f32.mrb[0].mxu0
    %v11296 = vadd.f32 0.0, %v11295
    %v11297 = vpop.f32.mrb[0].mxu0
    %v11298 = vpop.f32.mrb[0].mxu0
    %v11299 = vadd.f32 0.0, %v11298
    %v11300 = vpop.f32.mrb[0].mxu0
    %11301 = vmatprep.mubr.bf16.mxu0 0
    %11302 = vmatmul.mubr.bf16.gmra.mrb[0].mxu0 %v10243
    %v11303 = vpop.f32.mrb[0].mxu0
    %v11304 = vadd.f32 0.0, %v11303
    %v11305 = vpop.f32.mrb[0].mxu0
    %v11306 = vpop.f32.mrb[0].mxu0
    %v11307 = vadd.f32 0.0, %v11306
    %v11308 = vpop.f32.mrb[0].mxu0
    %11309 = vmatprep.mubr.bf16.mxu0 0
    %11310 = vmatmul.mubr.bf16.gmra.mrb[0].mxu0 %v10246
    %v11311 = vpop.f32.mrb[0].mxu0
    %v11312 = vadd.f32 0.0, %v11311
    %v11313 = vpop.f32.mrb[0].mxu0
    %v11314 = vpop.f32.mrb[0].mxu0
    %v11315 = vadd.f32 0.0, %v11314
    %v11316 = vpop.f32.mrb[0].mxu0
    %11317 = vmatprep.mubr.bf16.mxu0 0
    %11318 = vmatmul.mubr.bf16.gmra.mrb[0].mxu0 %v10249
    %v11319 = vpop.f32.mrb[0].mxu0
    %v11320 = vadd.f32 0.0, %v11319
    %v11321 = vpop.f32.mrb[0].mxu0
    %v11322 = vpop.f32.mrb[0].mxu0
    %v11323 = vadd.f32 0.0, %v11322
    %v11324 = vpop.f32.mrb[0].mxu0
    %11325 = vmatprep.mubr.bf16.mxu0 0
    %11326 = vmatmul.mubr.bf16.gmra.mrb[0].mxu0 %v10252
    %v11327 = vpop.f32.mrb[0].mxu0
    %v11328 = vadd.f32 0.0, %v11327
    %v11329 = vpop.f32.mrb[0].mxu0
    %v11330 = vpop.f32.mrb[0].mxu0
    %v11331 = vadd.f32 0.0, %v11330
    %v11332 = vpop.f32.mrb[0].mxu0
    %11333 = vmatprep.mubr.bf16.mxu0 0
    %11334 = vmatmul.mubr.bf16.gmra.mrb[0].mxu0 %v10255
    %v11335 = vpop.f32.mrb[0].mxu0
    %v11336 = vadd.f32 0.0, %v11335
    %v11337 = vpop.f32.mrb[0].mxu0
    %v11338 = vpop.f32.mrb[0].mxu0
    %v11339 = vadd.f32 0.0, %v11338
    %v11340 = vpop.f32.mrb[0].mxu0
    %11341 = vmatprep.mubr.bf16.mxu0 0
    %11342 = vmatmul.mubr.bf16.gmra.mrb[0].mxu0 %v10258
    %v11343 = vpop.f32.mrb[0].mxu0
    %v11344 = vadd.f32 0.0, %v11343
    %v11345 = vpop.f32.mrb[0].mxu0
    %v11346 = vpop.f32.mrb[0].mxu0
    %v11347 = vadd.f32 0.0, %v11346
    %v11348 = vpop.f32.mrb[0].mxu0
    %11349 = vmatprep.mubr.bf16.mxu0 0
    %11350 = vmatmul.mubr.bf16.gmra.mrb[0].mxu0 %v10261
    %v11351 = vpop.f32.mrb[0].mxu0
    %v11352 = vadd.f32 0.0, %v11351
    %v11353 = vpop.f32.mrb[0].mxu0
    %v11354 = vpop.f32.mrb[0].mxu0
    %v11355 = vadd.f32 0.0, %v11354
    %v11356 = vpop.f32.mrb[0].mxu0
    %11357 = vmatprep.mubr.bf16.mxu0 0
    %11358 = vmatmul.mubr.bf16.gmra.mrb[0].mxu0 %v10264
    %v11359 = vpop.f32.mrb[0].mxu0
    %v11360 = vadd.f32 0.0, %v11359
    %v11361 = vpop.f32.mrb[0].mxu0
    %v11362 = vpop.f32.mrb[0].mxu0
    %v11363 = vadd.f32 0.0, %v11362
    %v11364 = vpop.f32.mrb[0].mxu0
    %11365 = vmatprep.mubr.bf16.mxu0 0
    %11366 = vmatmul.mubr.bf16.gmra.mrb[0].mxu0 %v10267
    %v11367 = vpop.f32.mrb[0].mxu0
    %v11368 = vadd.f32 0.0, %v11367
    %v11369 = vpop.f32.mrb[0].mxu0
    %v11370 = vpop.f32.mrb[0].mxu0
    %v11371 = vadd.f32 0.0, %v11370
    %v11372 = vpop.f32.mrb[0].mxu0
    %11373 = vmatprep.mubr.bf16.mxu0 0
    %11374 = vmatmul.mubr.bf16.gmra.mrb[0].mxu0 %v10270
    %v11375 = vpop.f32.mrb[0].mxu0
    %v11376 = vadd.f32 0.0, %v11375
    %v11377 = vpop.f32.mrb[0].mxu0
    %v11378 = vpop.f32.mrb[0].mxu0
    %v11379 = vadd.f32 0.0, %v11378
    %v11380 = vpop.f32.mrb[0].mxu0
    %11381 = vmatprep.mubr.bf16.mxu0 0
    %11382 = vmatmul.mubr.bf16.gmra.mrb[0].mxu0 %v10273
    %v11383 = vpop.f32.mrb[0].mxu0
    %v11384 = vadd.f32 0.0, %v11383
    %v11385 = vpop.f32.mrb[0].mxu0
    %v11386 = vpop.f32.mrb[0].mxu0
    %v11387 = vadd.f32 0.0, %v11386
    %v11388 = vpop.f32.mrb[0].mxu0
    %11389 = vmatprep.mubr.bf16.mxu0 0
    %11390 = vmatmul.mubr.bf16.gmra.mrb[0].mxu0 %v10276
    %v11391 = vpop.f32.mrb[0].mxu0
    %v11392 = vadd.f32 0.0, %v11391
    %v11393 = vpop.f32.mrb[0].mxu0
    %v11394 = vpop.f32.mrb[0].mxu0
    %v11395 = vadd.f32 0.0, %v11394
    %v11396 = vpop.f32.mrb[0].mxu0
    %11397 = vmatprep.mubr.bf16.mxu0 0
    %11398 = vmatmul.mubr.bf16.gmra.mrb[0].mxu0 %v10279
    %v11399 = vpop.f32.mrb[0].mxu0
    %v11400 = vadd.f32 0.0, %v11399
    %v11401 = vpop.f32.mrb[0].mxu0
    %v11402 = vpop.f32.mrb[0].mxu0
    %v11403 = vadd.f32 0.0, %v11402
    %v11404 = vpop.f32.mrb[0].mxu0
    %11405 = vmatprep.mubr.bf16.mxu0 0
    %11406 = vmatmul.mubr.bf16.gmra.mrb[0].mxu0 %v10282
    %v11407 = vpop.f32.mrb[0].mxu0
    %v11408 = vadd.f32 0.0, %v11407
    %v11409 = vpop.f32.mrb[0].mxu0
    %v11410 = vpop.f32.mrb[0].mxu0
    %v11411 = vadd.f32 0.0, %v11410
    %v11412 = vpop.f32.mrb[0].mxu0
    %11413 = vmatprep.mubr.bf16.mxu0 0
    %11414 = vmatmul.mubr.bf16.gmra.mrb[0].mxu0 %v10285
    %v11415 = vpop.f32.mrb[0].mxu0
    %v11416 = vadd.f32 0.0, %v11415
    %v11417 = vpop.f32.mrb[0].mxu0
    %v11418 = vpop.f32.mrb[0].mxu0
    %v11419 = vadd.f32 0.0, %v11418
    %v11420 = vpop.f32.mrb[0].mxu0
    %11421 = vmatprep.mubr.bf16.mxu0 0
    %11422 = vmatmul.mubr.bf16.gmra.mrb[0].mxu0 %v10288
    %v11423 = vpop.f32.mrb[0].mxu0
    %v11424 = vadd.f32 0.0, %v11423
    %v11425 = vpop.f32.mrb[0].mxu0
    %v11426 = vpop.f32.mrb[0].mxu0
    %v11427 = vadd.f32 0.0, %v11426
    %v11428 = vpop.f32.mrb[0].mxu0
    %11429 = vmatprep.mubr.bf16.mxu0 0
    %11430 = vmatmul.mubr.bf16.gmra.mrb[0].mxu0 %v10291
    %v11431 = vpop.f32.mrb[0].mxu0
    %v11432 = vadd.f32 0.0, %v11431
    %v11433 = vpop.f32.mrb[0].mxu0
    %v11434 = vpop.f32.mrb[0].mxu0
    %v11435 = vadd.f32 0.0, %v11434
    %v11436 = vpop.f32.mrb[0].mxu0
    %11437 = vmatprep.mubr.bf16.mxu0 0
    %11438 = vmatmul.mubr.bf16.gmra.mrb[0].mxu0 %v10294
    %v11439 = vpop.f32.mrb[0].mxu0
    %v11440 = vadd.f32 0.0, %v11439
    %v11441 = vpop.f32.mrb[0].mxu0
    %v11442 = vpop.f32.mrb[0].mxu0
    %v11443 = vadd.f32 0.0, %v11442
    %v11444 = vpop.f32.mrb[0].mxu0
    %11445 = vmatprep.mubr.bf16.mxu0 0
    %11446 = vmatmul.mubr.bf16.gmra.mrb[0].mxu0 %v10297
    %v11447 = vpop.f32.mrb[0].mxu0
    %v11448 = vadd.f32 0.0, %v11447
    %v11449 = vpop.f32.mrb[0].mxu0
    %v11450 = vpop.f32.mrb[0].mxu0
    %v11451 = vadd.f32 0.0, %v11450
    %v11452 = vpop.f32.mrb[0].mxu0
    %11453 = vmatprep.mubr.bf16.mxu0 0
    %11454 = vmatmul.mubr.bf16.gmra.mrb[0].mxu0 %v10300
    %v11455 = vpop.f32.mrb[0].mxu0
    %v11456 = vadd.f32 0.0, %v11455
    %v11457 = vpop.f32.mrb[0].mxu0
    %v11458 = vpop.f32.mrb[0].mxu0
    %v11459 = vadd.f32 0.0, %v11458
    %v11460 = vpop.f32.mrb[0].mxu0
    %11461 = vmatprep.mubr.bf16.mxu0 0
    %11462 = vmatmul.mubr.bf16.gmra.mrb[0].mxu0 %v10303
    %v11463 = vpop.f32.mrb[0].mxu0
    %v11464 = vadd.f32 0.0, %v11463
    %v11465 = vpop.f32.mrb[0].mxu0
    %v11466 = vpop.f32.mrb[0].mxu0
    %v11467 = vadd.f32 0.0, %v11466
    %v11468 = vpop.f32.mrb[0].mxu0
    %11469 = vmatprep.mubr.bf16.mxu0 0
    %11470 = vmatmul.mubr.bf16.gmra.mrb[0].mxu0 %v10306
    %v11471 = vpop.f32.mrb[0].mxu0
    %v11472 = vadd.f32 0.0, %v11471
    %v11473 = vpop.f32.mrb[0].mxu0
    %v11474 = vpop.f32.mrb[0].mxu0
    %v11475 = vadd.f32 0.0, %v11474
    %v11476 = vpop.f32.mrb[0].mxu0
    %11477 = vmatprep.mubr.bf16.mxu0 0
    %11478 = vmatmul.mubr.bf16.gmra.mrb[0].mxu0 %v10309
    %v11479 = vpop.f32.mrb[0].mxu0
    %v11480 = vadd.f32 0.0, %v11479
    %v11481 = vpop.f32.mrb[0].mxu0
    %v11482 = vpop.f32.mrb[0].mxu0
    %v11483 = vadd.f32 0.0, %v11482
    %v11484 = vpop.f32.mrb[0].mxu0
    %11485 = vmatprep.mubr.bf16.mxu0 0
    %11486 = vmatmul.mubr.bf16.gmra.mrb[0].mxu0 %v10312
    %v11487 = vpop.f32.mrb[0].mxu0
    %v11488 = vadd.f32 0.0, %v11487
    %v11489 = vpop.f32.mrb[0].mxu0
    %v11490 = vpop.f32.mrb[0].mxu0
    %v11491 = vadd.f32 0.0, %v11490
    %v11492 = vpop.f32.mrb[0].mxu0
    %11493 = vmatprep.mubr.bf16.mxu0 0
    %11494 = vmatmul.mubr.bf16.gmra.mrb[0].mxu0 %v10315
    %v11495 = vpop.f32.mrb[0].mxu0
    %v11496 = vadd.f32 0.0, %v11495
    %v11497 = vpop.f32.mrb[0].mxu0
    %v11498 = vpop.f32.mrb[0].mxu0
    %v11499 = vpop.f32.mrb[0].mxu0
    %11500 = vdwg.mxu0
    %v11501 = vadd.f32 %v8269, %v10352
    %v11502 = vadd.f32 %v8270, %v10355
    %v11503 = vadd.f32 %v8271, %v10360
    %v11504 = vadd.f32 %v8272, %v10363
    %v11505 = vadd.f32 %v8273, %v10368
    %v11506 = vadd.f32 %v8274, %v10371
    %v11507 = vadd.f32 %v8275, %v10376
    %v11508 = vadd.f32 %v8276, %v10379
    %v11509 = vadd.f32 %v8277, %v10384
    %v11510 = vadd.f32 %v8278, %v10387
    %v11511 = vadd.f32 %v8279, %v10392
    %v11512 = vadd.f32 %v8280, %v10395
    %v11513 = vadd.f32 %v8281, %v10400
    %v11514 = vadd.f32 %v8282, %v10403
    %v11515 = vadd.f32 %v8283, %v10408
    %v11516 = vadd.f32 %v8284, %v10411
    %v11517 = vadd.f32 %v8285, %v10416
    %v11518 = vadd.f32 %v8286, %v10419
    %v11519 = vadd.f32 %v8287, %v10424
    %v11520 = vadd.f32 %v8288, %v10427
    %v11521 = vadd.f32 %v8289, %v10432
    %v11522 = vadd.f32 %v8290, %v10435
    %v11523 = vadd.f32 %v8291, %v10440
    %v11524 = vadd.f32 %v8292, %v10443
    %v11525 = vadd.f32 %v8293, %v10448
    %v11526 = vadd.f32 %v8294, %v10451
    %v11527 = vadd.f32 %v8295, %v10456
    %v11528 = vadd.f32 %v8296, %v10459
    %v11529 = vadd.f32 %v8297, %v10464
    %v11530 = vadd.f32 %v8298, %v10467
    %v11531 = vadd.f32 %v8299, %v10472
    %v11532 = vadd.f32 %v8300, %v10475
    %v11533 = vadd.f32 %v8301, %v10480
    %v11534 = vadd.f32 %v8302, %v10483
    %v11535 = vadd.f32 %v8303, %v10488
    %v11536 = vadd.f32 %v8304, %v10491
    %v11537 = vadd.f32 %v8305, %v10496
    %v11538 = vadd.f32 %v8306, %v10499
    %v11539 = vadd.f32 %v8307, %v10504
    %v11540 = vadd.f32 %v8308, %v10507
    %v11541 = vadd.f32 %v8309, %v10512
    %v11542 = vadd.f32 %v8310, %v10515
    %v11543 = vadd.f32 %v8311, %v10520
    %v11544 = vadd.f32 %v8312, %v10523
    %v11545 = vadd.f32 %v8313, %v10528
    %v11546 = vadd.f32 %v8314, %v10531
    %v11547 = vadd.f32 %v8315, %v10536
    %v11548 = vadd.f32 %v8316, %v10539
    %v11549 = vadd.f32 %v8317, %v10544
    %v11550 = vadd.f32 %v8318, %v10547
    %v11551 = vadd.f32 %v8319, %v10552
    %v11552 = vadd.f32 %v8320, %v10555
    %v11553 = vadd.f32 %v8321, %v10560
    %v11554 = vadd.f32 %v8322, %v10563
    %v11555 = vadd.f32 %v8323, %v10568
    %v11556 = vadd.f32 %v8324, %v10571
    %v11557 = vadd.f32 %v8325, %v10576
    %v11558 = vadd.f32 %v8326, %v10579
    %v11559 = vadd.f32 %v8327, %v10584
    %v11560 = vadd.f32 %v8328, %v10587
    %v11561 = vadd.f32 %v8329, %v10592
    %v11562 = vadd.f32 %v8330, %v10595
    %v11563 = vadd.f32 %v8331, %v10600
    %v11564 = vadd.f32 %v8332, %v10603
    %v11565 = vadd.f32 %v8333, %v10608
    %v11566 = vadd.f32 %v8334, %v10611
    %v11567 = vadd.f32 %v8335, %v10616
    %v11568 = vadd.f32 %v8336, %v10619
    %v11569 = vadd.f32 %v8337, %v10624
    %v11570 = vadd.f32 %v8338, %v10627
    %v11571 = vadd.f32 %v8339, %v10632
    %v11572 = vadd.f32 %v8340, %v10635
    %v11573 = vadd.f32 %v8341, %v10640
    %v11574 = vadd.f32 %v8342, %v10643
    %v11575 = vadd.f32 %v8343, %v10648
    %v11576 = vadd.f32 %v8344, %v10651
    %v11577 = vadd.f32 %v8345, %v10656
    %v11578 = vadd.f32 %v8346, %v10659
    %v11579 = vadd.f32 %v8347, %v10664
    %v11580 = vadd.f32 %v8348, %v10667
    %v11581 = vadd.f32 %v8349, %v10672
    %v11582 = vadd.f32 %v8350, %v10675
    %v11583 = vadd.f32 %v8351, %v10680
    %v11584 = vadd.f32 %v8352, %v10683
    %v11585 = vadd.f32 %v8353, %v10688
    %v11586 = vadd.f32 %v8354, %v10691
    %v11587 = vadd.f32 %v8355, %v10696
    %v11588 = vadd.f32 %v8356, %v10699
    %v11589 = vadd.f32 %v8357, %v10704
    %v11590 = vadd.f32 %v8358, %v10707
    %v11591 = vadd.f32 %v8359, %v10712
    %v11592 = vadd.f32 %v8360, %v10715
    %v11593 = vadd.f32 %v8361, %v10720
    %v11594 = vadd.f32 %v8362, %v10723
    %v11595 = vadd.f32 %v8363, %v10728
    %v11596 = vadd.f32 %v8364, %v10731
    %v11597 = vadd.f32 %v8365, %v10736
    %v11598 = vadd.f32 %v8366, %v10739
    %v11599 = vadd.f32 %v8367, %v10744
    %v11600 = vadd.f32 %v8368, %v10747
    %v11601 = vadd.f32 %v8369, %v10752
    %v11602 = vadd.f32 %v8370, %v10755
    %v11603 = vadd.f32 %v8371, %v10760
    %v11604 = vadd.f32 %v8372, %v10763
    %v11605 = vadd.f32 %v8373, %v10768
    %v11606 = vadd.f32 %v8374, %v10771
    %v11607 = vadd.f32 %v8375, %v10776
    %v11608 = vadd.f32 %v8376, %v10779
    %v11609 = vadd.f32 %v8377, %v10784
    %v11610 = vadd.f32 %v8378, %v10787
    %v11611 = vadd.f32 %v8379, %v10792
    %v11612 = vadd.f32 %v8380, %v10795
    %v11613 = vadd.f32 %v8381, %v10800
    %v11614 = vadd.f32 %v8382, %v10803
    %v11615 = vadd.f32 %v8383, %v10808
    %v11616 = vadd.f32 %v8384, %v10811
    %v11617 = vadd.f32 %v8385, %v10816
    %v11618 = vadd.f32 %v8386, %v10819
    %v11619 = vadd.f32 %v8387, %v10824
    %v11620 = vadd.f32 %v8388, %v10827
    %v11621 = vadd.f32 %v8389, %v10832
    %v11622 = vadd.f32 %v8390, %v10835
    %v11623 = vadd.f32 %v8391, %v10840
    %v11624 = vadd.f32 %v8392, %v10843
    %v11625 = vadd.f32 %v8393, %v10848
    %v11626 = vadd.f32 %v8394, %v10851
    %v11627 = vadd.f32 %v8395, %v10856
    %v11628 = vadd.f32 %v8396, %v10859
    %v11629 = vadd.f32 %v8397, %v10864
    %v11630 = vadd.f32 %v8398, %v10867
    %v11631 = vadd.f32 %v8399, %v10872
    %v11632 = vadd.f32 %v8400, %v10875
    %v11633 = vadd.f32 %v8401, %v10880
    %v11634 = vadd.f32 %v8402, %v10883
    %v11635 = vadd.f32 %v8403, %v10888
    %v11636 = vadd.f32 %v8404, %v10891
    %v11637 = vadd.f32 %v8405, %v10896
    %v11638 = vadd.f32 %v8406, %v10899
    %v11639 = vadd.f32 %v8407, %v10904
    %v11640 = vadd.f32 %v8408, %v10907
    %v11641 = vadd.f32 %v8409, %v10912
    %v11642 = vadd.f32 %v8410, %v10915
    %v11643 = vadd.f32 %v8411, %v10920
    %v11644 = vadd.f32 %v8412, %v10923
    %v11645 = vadd.f32 %v8413, %v10928
    %v11646 = vadd.f32 %v8414, %v10931
    %v11647 = vadd.f32 %v8415, %v10936
    %v11648 = vadd.f32 %v8416, %v10939
    %v11649 = vadd.f32 %v8417, %v10944
    %v11650 = vadd.f32 %v8418, %v10947
    %v11651 = vadd.f32 %v8419, %v10952
    %v11652 = vadd.f32 %v8420, %v10955
    %v11653 = vadd.f32 %v8421, %v10960
    %v11654 = vadd.f32 %v8422, %v10963
    %v11655 = vadd.f32 %v8423, %v10968
    %v11656 = vadd.f32 %v8424, %v10971
    %v11657 = vadd.f32 %v8425, %v10976
    %v11658 = vadd.f32 %v8426, %v10979
    %v11659 = vadd.f32 %v8427, %v10984
    %v11660 = vadd.f32 %v8428, %v10987
    %v11661 = vadd.f32 %v8429, %v10992
    %v11662 = vadd.f32 %v8430, %v10995
    %v11663 = vadd.f32 %v8431, %v11000
    %v11664 = vadd.f32 %v8432, %v11003
    %v11665 = vadd.f32 %v8433, %v11008
    %v11666 = vadd.f32 %v8434, %v11011
    %v11667 = vadd.f32 %v8435, %v11016
    %v11668 = vadd.f32 %v8436, %v11019
    %v11669 = vadd.f32 %v8437, %v11024
    %v11670 = vadd.f32 %v8438, %v11027
    %v11671 = vadd.f32 %v8439, %v11032
    %v11672 = vadd.f32 %v8440, %v11035
    %v11673 = vadd.f32 %v8441, %v11040
    %v11674 = vadd.f32 %v8442, %v11043
    %v11675 = vadd.f32 %v8443, %v11048
    %v11676 = vadd.f32 %v8444, %v11051
    %v11677 = vadd.f32 %v8445, %v11056
    %v11678 = vadd.f32 %v8446, %v11059
    %v11679 = vadd.f32 %v8447, %v11064
    %v11680 = vadd.f32 %v8448, %v11067
    %v11681 = vadd.f32 %v8449, %v11072
    %v11682 = vadd.f32 %v8450, %v11075
    %v11683 = vadd.f32 %v8451, %v11080
    %v11684 = vadd.f32 %v8452, %v11083
    %v11685 = vadd.f32 %v8453, %v11088
    %v11686 = vadd.f32 %v8454, %v11091
    %v11687 = vadd.f32 %v8455, %v11096
    %v11688 = vadd.f32 %v8456, %v11099
    %v11689 = vadd.f32 %v8457, %v11104
    %v11690 = vadd.f32 %v8458, %v11107
    %v11691 = vadd.f32 %v8459, %v11112
    %v11692 = vadd.f32 %v8460, %v11115
    %v11693 = vadd.f32 %v8461, %v11120
    %v11694 = vadd.f32 %v8462, %v11123
    %v11695 = vadd.f32 %v8463, %v11128
    %v11696 = vadd.f32 %v8464, %v11131
    %v11697 = vadd.f32 %v8465, %v11136
    %v11698 = vadd.f32 %v8466, %v11139
    %v11699 = vadd.f32 %v8467, %v11144
    %v11700 = vadd.f32 %v8468, %v11147
    %v11701 = vadd.f32 %v8469, %v11152
    %v11702 = vadd.f32 %v8470, %v11155
    %v11703 = vadd.f32 %v8471, %v11160
    %v11704 = vadd.f32 %v8472, %v11163
    %v11705 = vadd.f32 %v8473, %v11168
    %v11706 = vadd.f32 %v8474, %v11171
    %v11707 = vadd.f32 %v8475, %v11176
    %v11708 = vadd.f32 %v8476, %v11179
    %v11709 = vadd.f32 %v8477, %v11184
    %v11710 = vadd.f32 %v8478, %v11187
    %v11711 = vadd.f32 %v8479, %v11192
    %v11712 = vadd.f32 %v8480, %v11195
    %v11713 = vadd.f32 %v8481, %v11200
    %v11714 = vadd.f32 %v8482, %v11203
    %v11715 = vadd.f32 %v8483, %v11208
    %v11716 = vadd.f32 %v8484, %v11211
    %v11717 = vadd.f32 %v8485, %v11216
    %v11718 = vadd.f32 %v8486, %v11219
    %v11719 = vadd.f32 %v8487, %v11224
    %v11720 = vadd.f32 %v8488, %v11227
    %v11721 = vadd.f32 %v8489, %v11232
    %v11722 = vadd.f32 %v8490, %v11235
    %v11723 = vadd.f32 %v8491, %v11240
    %v11724 = vadd.f32 %v8492, %v11243
    %v11725 = vadd.f32 %v8493, %v11248
    %v11726 = vadd.f32 %v8494, %v11251
    %v11727 = vadd.f32 %v8495, %v11256
    %v11728 = vadd.f32 %v8496, %v11259
    %v11729 = vadd.f32 %v8497, %v11264
    %v11730 = vadd.f32 %v8498, %v11267
    %v11731 = vadd.f32 %v8499, %v11272
    %v11732 = vadd.f32 %v8500, %v11275
    %v11733 = vadd.f32 %v8501, %v11280
    %v11734 = vadd.f32 %v8502, %v11283
    %v11735 = vadd.f32 %v8503, %v11288
    %v11736 = vadd.f32 %v8504, %v11291
    %v11737 = vadd.f32 %v8505, %v11296
    %v11738 = vadd.f32 %v8506, %v11299
    %v11739 = vadd.f32 %v8507, %v11304
    %v11740 = vadd.f32 %v8508, %v11307
    %v11741 = vadd.f32 %v8509, %v11312
    %v11742 = vadd.f32 %v8510, %v11315
    %v11743 = vadd.f32 %v8511, %v11320
    %v11744 = vadd.f32 %v8512, %v11323
    %v11745 = vadd.f32 %v8513, %v11328
    %v11746 = vadd.f32 %v8514, %v11331
    %v11747 = vadd.f32 %v8515, %v11336
    %v11748 = vadd.f32 %v8516, %v11339
    %v11749 = vadd.f32 %v8517, %v11344
    %v11750 = vadd.f32 %v8518, %v11347
    %v11751 = vadd.f32 %v8519, %v11352
    %v11752 = vadd.f32 %v8520, %v11355
    %v11753 = vadd.f32 %v8521, %v11360
    %v11754 = vadd.f32 %v8522, %v11363
    %v11755 = vadd.f32 %v8523, %v11368
    %v11756 = vadd.f32 %v8524, %v11371
    %v11757 = vadd.f32 %v8525, %v11376
    %v11758 = vadd.f32 %v8526, %v11379
    %v11759 = vadd.f32 %v8527, %v11384
    %v11760 = vadd.f32 %v8528, %v11387
    %v11761 = vadd.f32 %v8529, %v11392
    %v11762 = vadd.f32 %v8530, %v11395
    %v11763 = vadd.f32 %v8531, %v11400
    %v11764 = vadd.f32 %v8532, %v11403
    %v11765 = vadd.f32 %v8533, %v11408
    %v11766 = vadd.f32 %v8534, %v11411
    %v11767 = vadd.f32 %v8535, %v11416
    %v11768 = vadd.f32 %v8536, %v11419
    %v11769 = vadd.f32 %v8537, %v11424
    %v11770 = vadd.f32 %v8538, %v11427
    %v11771 = vadd.f32 %v8539, %v11432
    %v11772 = vadd.f32 %v8540, %v11435
    %v11773 = vadd.f32 %v8541, %v11440
    %v11774 = vadd.f32 %v8542, %v11443
    %v11775 = vadd.f32 %v8543, %v11448
    %v11776 = vadd.f32 %v8544, %v11451
    %v11777 = vadd.f32 %v8545, %v11456
    %v11778 = vadd.f32 %v8546, %v11459
    %v11779 = vadd.f32 %v8547, %v11464
    %v11780 = vadd.f32 %v8548, %v11467
    %v11781 = vadd.f32 %v8549, %v11472
    %v11782 = vadd.f32 %v8550, %v11475
    %v11783 = vadd.f32 %v8551, %v11480
    %v11784 = vadd.f32 %v8552, %v11483
    %v11785 = vadd.f32 %v8553, %v11488
    %v11786 = vadd.f32 %v8554, %v11491
    %v11787 = vadd.f32 %v8555, %v11496
    %v11788 = vld [vmem:[%s2] sm:$0x1]
    %v11790 = vlaneseq
    %v11791 = vshrl.u32 %v11790, 7
    %v11792 = vsub.s32 0, %v11791
    %v11793 = vrot.slane %v11788, %v11792
    %v11795 = vadd.f32 %v11501, %v11793
    %v11796 = vadd.f32 %v11502, %v11793
    %v11797 = vadd.f32 %v11503, %v11793
    %v11798 = vadd.f32 %v11504, %v11793
    %v11799 = vadd.f32 %v11505, %v11793
    %v11800 = vadd.f32 %v11506, %v11793
    %v11801 = vadd.f32 %v11507, %v11793
    %v11802 = vadd.f32 %v11508, %v11793
    %v11803 = vadd.f32 %v11509, %v11793
    %v11804 = vadd.f32 %v11510, %v11793
    %v11805 = vadd.f32 %v11511, %v11793
    %v11806 = vadd.f32 %v11512, %v11793
    %v11807 = vadd.f32 %v11513, %v11793
    %v11808 = vadd.f32 %v11514, %v11793
    %v11809 = vadd.f32 %v11515, %v11793
    %v11810 = vadd.f32 %v11516, %v11793
    %v11811 = vadd.f32 %v11517, %v11793
    %v11812 = vadd.f32 %v11518, %v11793
    %v11813 = vadd.f32 %v11519, %v11793
    %v11814 = vadd.f32 %v11520, %v11793
    %v11815 = vadd.f32 %v11521, %v11793
    %v11816 = vadd.f32 %v11522, %v11793
    %v11817 = vadd.f32 %v11523, %v11793
    %v11818 = vadd.f32 %v11524, %v11793
    %v11819 = vadd.f32 %v11525, %v11793
    %v11820 = vadd.f32 %v11526, %v11793
    %v11821 = vadd.f32 %v11527, %v11793
    %v11822 = vadd.f32 %v11528, %v11793
    %v11823 = vadd.f32 %v11529, %v11793
    %v11824 = vadd.f32 %v11530, %v11793
    %v11825 = vadd.f32 %v11531, %v11793
    %v11826 = vadd.f32 %v11532, %v11793
    %v11827 = vadd.f32 %v11533, %v11793
    %v11828 = vadd.f32 %v11534, %v11793
    %v11829 = vadd.f32 %v11535, %v11793
    %v11830 = vadd.f32 %v11536, %v11793
    %v11831 = vadd.f32 %v11537, %v11793
    %v11832 = vadd.f32 %v11538, %v11793
    %v11833 = vadd.f32 %v11539, %v11793
    %v11834 = vadd.f32 %v11540, %v11793
    %v11835 = vadd.f32 %v11541, %v11793
    %v11836 = vadd.f32 %v11542, %v11793
    %v11837 = vadd.f32 %v11543, %v11793
    %v11838 = vadd.f32 %v11544, %v11793
    %v11839 = vadd.f32 %v11545, %v11793
    %v11840 = vadd.f32 %v11546, %v11793
    %v11841 = vadd.f32 %v11547, %v11793
    %v11842 = vadd.f32 %v11548, %v11793
    %v11843 = vadd.f32 %v11549, %v11793
    %v11844 = vadd.f32 %v11550, %v11793
    %v11845 = vadd.f32 %v11551, %v11793
    %v11846 = vadd.f32 %v11552, %v11793
    %v11847 = vadd.f32 %v11553, %v11793
    %v11848 = vadd.f32 %v11554, %v11793
    %v11849 = vadd.f32 %v11555, %v11793
    %v11850 = vadd.f32 %v11556, %v11793
    %v11851 = vadd.f32 %v11557, %v11793
    %v11852 = vadd.f32 %v11558, %v11793
    %v11853 = vadd.f32 %v11559, %v11793
    %v11854 = vadd.f32 %v11560, %v11793
    %v11855 = vadd.f32 %v11561, %v11793
    %v11856 = vadd.f32 %v11562, %v11793
    %v11857 = vadd.f32 %v11563, %v11793
    %v11858 = vadd.f32 %v11564, %v11793
    %v11859 = vadd.f32 %v11565, %v11793
    %v11860 = vadd.f32 %v11566, %v11793
    %v11861 = vadd.f32 %v11567, %v11793
    %v11862 = vadd.f32 %v11568, %v11793
    %v11863 = vadd.f32 %v11569, %v11793
    %v11864 = vadd.f32 %v11570, %v11793
    %v11865 = vadd.f32 %v11571, %v11793
    %v11866 = vadd.f32 %v11572, %v11793
    %v11867 = vadd.f32 %v11573, %v11793
    %v11868 = vadd.f32 %v11574, %v11793
    %v11869 = vadd.f32 %v11575, %v11793
    %v11870 = vadd.f32 %v11576, %v11793
    %v11871 = vadd.f32 %v11577, %v11793
    %v11872 = vadd.f32 %v11578, %v11793
    %v11873 = vadd.f32 %v11579, %v11793
    %v11874 = vadd.f32 %v11580, %v11793
    %v11875 = vadd.f32 %v11581, %v11793
    %v11876 = vadd.f32 %v11582, %v11793
    %v11877 = vadd.f32 %v11583, %v11793
    %v11878 = vadd.f32 %v11584, %v11793
    %v11879 = vadd.f32 %v11585, %v11793
    %v11880 = vadd.f32 %v11586, %v11793
    %v11881 = vadd.f32 %v11587, %v11793
    %v11882 = vadd.f32 %v11588, %v11793
    %v11883 = vadd.f32 %v11589, %v11793
    %v11884 = vadd.f32 %v11590, %v11793
    %v11885 = vadd.f32 %v11591, %v11793
    %v11886 = vadd.f32 %v11592, %v11793
    %v11887 = vadd.f32 %v11593, %v11793
    %v11888 = vadd.f32 %v11594, %v11793
    %v11889 = vadd.f32 %v11595, %v11793
    %v11890 = vadd.f32 %v11596, %v11793
    %v11891 = vadd.f32 %v11597, %v11793
    %v11892 = vadd.f32 %v11598, %v11793
    %v11893 = vadd.f32 %v11599, %v11793
    %v11894 = vadd.f32 %v11600, %v11793
    %v11895 = vadd.f32 %v11601, %v11793
    %v11896 = vadd.f32 %v11602, %v11793
    %v11897 = vadd.f32 %v11603, %v11793
    %v11898 = vadd.f32 %v11604, %v11793
    %v11899 = vadd.f32 %v11605, %v11793
    %v11900 = vadd.f32 %v11606, %v11793
    %v11901 = vadd.f32 %v11607, %v11793
    %v11902 = vadd.f32 %v11608, %v11793
    %v11903 = vadd.f32 %v11609, %v11793
    %v11904 = vadd.f32 %v11610, %v11793
    %v11905 = vadd.f32 %v11611, %v11793
    %v11906 = vadd.f32 %v11612, %v11793
    %v11907 = vadd.f32 %v11613, %v11793
    %v11908 = vadd.f32 %v11614, %v11793
    %v11909 = vadd.f32 %v11615, %v11793
    %v11910 = vadd.f32 %v11616, %v11793
    %v11911 = vadd.f32 %v11617, %v11793
    %v11912 = vadd.f32 %v11618, %v11793
    %v11913 = vadd.f32 %v11619, %v11793
    %v11914 = vadd.f32 %v11620, %v11793
    %v11915 = vadd.f32 %v11621, %v11793
    %v11916 = vadd.f32 %v11622, %v11793
    %v11917 = vadd.f32 %v11623, %v11793
    %v11918 = vadd.f32 %v11624, %v11793
    %v11919 = vadd.f32 %v11625, %v11793
    %v11920 = vadd.f32 %v11626, %v11793
    %v11921 = vadd.f32 %v11627, %v11793
    %v11922 = vadd.f32 %v11628, %v11793
    %v11923 = vadd.f32 %v11629, %v11793
    %v11924 = vadd.f32 %v11630, %v11793
    %v11925 = vadd.f32 %v11631, %v11793
    %v11926 = vadd.f32 %v11632, %v11793
    %v11927 = vadd.f32 %v11633, %v11793
    %v11928 = vadd.f32 %v11634, %v11793
    %v11929 = vadd.f32 %v11635, %v11793
    %v11930 = vadd.f32 %v11636, %v11793
    %v11931 = vadd.f32 %v11637, %v11793
    %v11932 = vadd.f32 %v11638, %v11793
    %v11933 = vadd.f32 %v11639, %v11793
    %v11934 = vadd.f32 %v11640, %v11793
    %v11935 = vadd.f32 %v11641, %v11793
    %v11936 = vadd.f32 %v11642, %v11793
    %v11937 = vadd.f32 %v11643, %v11793
    %v11938 = vadd.f32 %v11644, %v11793
    %v11939 = vadd.f32 %v11645, %v11793
    %v11940 = vadd.f32 %v11646, %v11793
    %v11941 = vadd.f32 %v11647, %v11793
    %v11942 = vadd.f32 %v11648, %v11793
    %v11943 = vadd.f32 %v11649, %v11793
    %v11944 = vadd.f32 %v11650, %v11793
    %v11945 = vadd.f32 %v11651, %v11793
    %v11946 = vadd.f32 %v11652, %v11793
    %v11947 = vadd.f32 %v11653, %v11793
    %v11948 = vadd.f32 %v11654, %v11793
    %v11949 = vadd.f32 %v11655, %v11793
    %v11950 = vadd.f32 %v11656, %v11793
    %v11951 = vadd.f32 %v11657, %v11793
    %v11952 = vadd.f32 %v11658, %v11793
    %v11953 = vadd.f32 %v11659, %v11793
    %v11954 = vadd.f32 %v11660, %v11793
    %v11955 = vadd.f32 %v11661, %v11793
    %v11956 = vadd.f32 %v11662, %v11793
    %v11957 = vadd.f32 %v11663, %v11793
    %v11958 = vadd.f32 %v11664, %v11793
    %v11959 = vadd.f32 %v11665, %v11793
    %v11960 = vadd.f32 %v11666, %v11793
    %v11961 = vadd.f32 %v11667, %v11793
    %v11962 = vadd.f32 %v11668, %v11793
    %v11963 = vadd.f32 %v11669, %v11793
    %v11964 = vadd.f32 %v11670, %v11793
    %v11965 = vadd.f32 %v11671, %v11793
    %v11966 = vadd.f32 %v11672, %v11793
    %v11967 = vadd.f32 %v11673, %v11793
    %v11968 = vadd.f32 %v11674, %v11793
    %v11969 = vadd.f32 %v11675, %v11793
    %v11970 = vadd.f32 %v11676, %v11793
    %v11971 = vadd.f32 %v11677, %v11793
    %v11972 = vadd.f32 %v11678, %v11793
    %v11973 = vadd.f32 %v11679, %v11793
    %v11974 = vadd.f32 %v11680, %v11793
    %v11975 = vadd.f32 %v11681, %v11793
    %v11976 = vadd.f32 %v11682, %v11793
    %v11977 = vadd.f32 %v11683, %v11793
    %v11978 = vadd.f32 %v11684, %v11793
    %v11979 = vadd.f32 %v11685, %v11793
    %v11980 = vadd.f32 %v11686, %v11793
    %v11981 = vadd.f32 %v11687, %v11793
    %v11982 = vadd.f32 %v11688, %v11793
    %v11983 = vadd.f32 %v11689, %v11793
    %v11984 = vadd.f32 %v11690, %v11793
    %v11985 = vadd.f32 %v11691, %v11793
    %v11986 = vadd.f32 %v11692, %v11793
    %v11987 = vadd.f32 %v11693, %v11793
    %v11988 = vadd.f32 %v11694, %v11793
    %v11989 = vadd.f32 %v11695, %v11793
    %v11990 = vadd.f32 %v11696, %v11793
    %v11991 = vadd.f32 %v11697, %v11793
    %v11992 = vadd.f32 %v11698, %v11793
    %v11993 = vadd.f32 %v11699, %v11793
    %v11994 = vadd.f32 %v11700, %v11793
    %v11995 = vadd.f32 %v11701, %v11793
    %v11996 = vadd.f32 %v11702, %v11793
    %v11997 = vadd.f32 %v11703, %v11793
    %v11998 = vadd.f32 %v11704, %v11793
    %v11999 = vadd.f32 %v11705, %v11793
    %v12000 = vadd.f32 %v11706, %v11793
    %v12001 = vadd.f32 %v11707, %v11793
    %v12002 = vadd.f32 %v11708, %v11793
    %v12003 = vadd.f32 %v11709, %v11793
    %v12004 = vadd.f32 %v11710, %v11793
    %v12005 = vadd.f32 %v11711, %v11793
    %v12006 = vadd.f32 %v11712, %v11793
    %v12007 = vadd.f32 %v11713, %v11793
    %v12008 = vadd.f32 %v11714, %v11793
    %v12009 = vadd.f32 %v11715, %v11793
    %v12010 = vadd.f32 %v11716, %v11793
    %v12011 = vadd.f32 %v11717, %v11793
    %v12012 = vadd.f32 %v11718, %v11793
    %v12013 = vadd.f32 %v11719, %v11793
    %v12014 = vadd.f32 %v11720, %v11793
    %v12015 = vadd.f32 %v11721, %v11793
    %v12016 = vadd.f32 %v11722, %v11793
    %v12017 = vadd.f32 %v11723, %v11793
    %v12018 = vadd.f32 %v11724, %v11793
    %v12019 = vadd.f32 %v11725, %v11793
    %v12020 = vadd.f32 %v11726, %v11793
    %v12021 = vadd.f32 %v11727, %v11793
    %v12022 = vadd.f32 %v11728, %v11793
    %v12023 = vadd.f32 %v11729, %v11793
    %v12024 = vadd.f32 %v11730, %v11793
    %v12025 = vadd.f32 %v11731, %v11793
    %v12026 = vadd.f32 %v11732, %v11793
    %v12027 = vadd.f32 %v11733, %v11793
    %v12028 = vadd.f32 %v11734, %v11793
    %v12029 = vadd.f32 %v11735, %v11793
    %v12030 = vadd.f32 %v11736, %v11793
    %v12031 = vadd.f32 %v11737, %v11793
    %v12032 = vadd.f32 %v11738, %v11793
    %v12033 = vadd.f32 %v11739, %v11793
    %v12034 = vadd.f32 %v11740, %v11793
    %v12035 = vadd.f32 %v11741, %v11793
    %v12036 = vadd.f32 %v11742, %v11793
    %v12037 = vadd.f32 %v11743, %v11793
    %v12038 = vadd.f32 %v11744, %v11793
    %v12039 = vadd.f32 %v11745, %v11793
    %v12040 = vadd.f32 %v11746, %v11793
    %v12041 = vadd.f32 %v11747, %v11793
    %v12042 = vadd.f32 %v11748, %v11793
    %v12043 = vadd.f32 %v11749, %v11793
    %v12044 = vadd.f32 %v11750, %v11793
    %v12045 = vadd.f32 %v11751, %v11793
    %v12046 = vadd.f32 %v11752, %v11793
    %v12047 = vadd.f32 %v11753, %v11793
    %v12048 = vadd.f32 %v11754, %v11793
    %v12049 = vadd.f32 %v11755, %v11793
    %v12050 = vadd.f32 %v11756, %v11793
    %v12051 = vadd.f32 %v11757, %v11793
    %v12052 = vadd.f32 %v11758, %v11793
    %v12053 = vadd.f32 %v11759, %v11793
    %v12054 = vadd.f32 %v11760, %v11793
    %v12055 = vadd.f32 %v11761, %v11793
    %v12056 = vadd.f32 %v11762, %v11793
    %v12057 = vadd.f32 %v11763, %v11793
    %v12058 = vadd.f32 %v11764, %v11793
    %v12059 = vadd.f32 %v11765, %v11793
    %v12060 = vadd.f32 %v11766, %v11793
    %v12061 = vadd.f32 %v11767, %v11793
    %v12062 = vadd.f32 %v11768, %v11793
    %v12063 = vadd.f32 %v11769, %v11793
    %v12064 = vadd.f32 %v11770, %v11793
    %v12065 = vadd.f32 %v11771, %v11793
    %v12066 = vadd.f32 %v11772, %v11793
    %v12067 = vadd.f32 %v11773, %v11793
    %v12068 = vadd.f32 %v11774, %v11793
    %v12069 = vadd.f32 %v11775, %v11793
    %v12070 = vadd.f32 %v11776, %v11793
    %v12071 = vadd.f32 %v11777, %v11793
    %v12072 = vadd.f32 %v11778, %v11793
    %v12073 = vadd.f32 %v11779, %v11793
    %v12074 = vadd.f32 %v11780, %v11793
    %v12075 = vadd.f32 %v11781, %v11793
    %v12076 = vadd.f32 %v11782, %v11793
    %v12077 = vadd.f32 %v11783, %v11793
    %v12078 = vadd.f32 %v11784, %v11793
    %v12079 = vadd.f32 %v11785, %v11793
    %v12080 = vadd.f32 %v11786, %v11793
    %v12081 = vadd.f32 %v11787, %v11793
    %v12082 = vmax.f32 %v11795, 0.0
    %v12083 = vmax.f32 %v11796, 0.0
    %v12084 = vmax.f32 %v11797, 0.0
    %v12085 = vmax.f32 %v11798, 0.0
    %v12086 = vmax.f32 %v11799, 0.0
    %v12087 = vmax.f32 %v11800, 0.0
    %v12088 = vmax.f32 %v11801, 0.0
    %v12089 = vmax.f32 %v11802, 0.0
    %v12090 = vmax.f32 %v11803, 0.0
    %v12091 = vmax.f32 %v11804, 0.0
    %v12092 = vmax.f32 %v11805, 0.0
    %v12093 = vmax.f32 %v11806, 0.0
    %v12094 = vmax.f32 %v11807, 0.0
    %v12095 = vmax.f32 %v11808, 0.0
    %v12096 = vmax.f32 %v11809, 0.0
    %v12097 = vmax.f32 %v11810, 0.0
    %v12098 = vmax.f32 %v11811, 0.0
    %v12099 = vmax.f32 %v11812, 0.0
    %v12100 = vmax.f32 %v11813, 0.0
    %v12101 = vmax.f32 %v11814, 0.0
    %v12102 = vmax.f32 %v11815, 0.0
    %v12103 = vmax.f32 %v11816, 0.0
    %v12104 = vmax.f32 %v11817, 0.0
    %v12105 = vmax.f32 %v11818, 0.0
    %v12106 = vmax.f32 %v11819, 0.0
    %v12107 = vmax.f32 %v11820, 0.0
    %v12108 = vmax.f32 %v11821, 0.0
    %v12109 = vmax.f32 %v11822, 0.0
    %v12110 = vmax.f32 %v11823, 0.0
    %v12111 = vmax.f32 %v11824, 0.0
    %v12112 = vmax.f32 %v11825, 0.0
    %v12113 = vmax.f32 %v11826, 0.0
    %v12114 = vmax.f32 %v11827, 0.0
    %v12115 = vmax.f32 %v11828, 0.0
    %v12116 = vmax.f32 %v11829, 0.0
    %v12117 = vmax.f32 %v11830, 0.0
    %v12118 = vmax.f32 %v11831, 0.0
    %v12119 = vmax.f32 %v11832, 0.0
    %v12120 = vmax.f32 %v11833, 0.0
    %v12121 = vmax.f32 %v11834, 0.0
    %v12122 = vmax.f32 %v11835, 0.0
    %v12123 = vmax.f32 %v11836, 0.0
    %v12124 = vmax.f32 %v11837, 0.0
    %v12125 = vmax.f32 %v11838, 0.0
    %v12126 = vmax.f32 %v11839, 0.0
    %v12127 = vmax.f32 %v11840, 0.0
    %v12128 = vmax.f32 %v11841, 0.0
    %v12129 = vmax.f32 %v11842, 0.0
    %v12130 = vmax.f32 %v11843, 0.0
    %v12131 = vmax.f32 %v11844, 0.0
    %v12132 = vmax.f32 %v11845, 0.0
    %v12133 = vmax.f32 %v11846, 0.0
    %v12134 = vmax.f32 %v11847, 0.0
    %v12135 = vmax.f32 %v11848, 0.0
    %v12136 = vmax.f32 %v11849, 0.0
    %v12137 = vmax.f32 %v11850, 0.0
    %v12138 = vmax.f32 %v11851, 0.0
    %v12139 = vmax.f32 %v11852, 0.0
    %v12140 = vmax.f32 %v11853, 0.0
    %v12141 = vmax.f32 %v11854, 0.0
    %v12142 = vmax.f32 %v11855, 0.0
    %v12143 = vmax.f32 %v11856, 0.0
    %v12144 = vmax.f32 %v11857, 0.0
    %v12145 = vmax.f32 %v11858, 0.0
    %v12146 = vmax.f32 %v11859, 0.0
    %v12147 = vmax.f32 %v11860, 0.0
    %v12148 = vmax.f32 %v11861, 0.0
    %v12149 = vmax.f32 %v11862, 0.0
    %v12150 = vmax.f32 %v11863, 0.0
    %v12151 = vmax.f32 %v11864, 0.0
    %v12152 = vmax.f32 %v11865, 0.0
    %v12153 = vmax.f32 %v11866, 0.0
    %v12154 = vmax.f32 %v11867, 0.0
    %v12155 = vmax.f32 %v11868, 0.0
    %v12156 = vmax.f32 %v11869, 0.0
    %v12157 = vmax.f32 %v11870, 0.0
    %v12158 = vmax.f32 %v11871, 0.0
    %v12159 = vmax.f32 %v11872, 0.0
    %v12160 = vmax.f32 %v11873, 0.0
    %v12161 = vmax.f32 %v11874, 0.0
    %v12162 = vmax.f32 %v11875, 0.0
    %v12163 = vmax.f32 %v11876, 0.0
    %v12164 = vmax.f32 %v11877, 0.0
    %v12165 = vmax.f32 %v11878, 0.0
    %v12166 = vmax.f32 %v11879, 0.0
    %v12167 = vmax.f32 %v11880, 0.0
    %v12168 = vmax.f32 %v11881, 0.0
    %v12169 = vmax.f32 %v11882, 0.0
    %v12170 = vmax.f32 %v11883, 0.0
    %v12171 = vmax.f32 %v11884, 0.0
    %v12172 = vmax.f32 %v11885, 0.0
    %v12173 = vmax.f32 %v11886, 0.0
    %v12174 = vmax.f32 %v11887, 0.0
    %v12175 = vmax.f32 %v11888, 0.0
    %v12176 = vmax.f32 %v11889, 0.0
    %v12177 = vmax.f32 %v11890, 0.0
    %v12178 = vmax.f32 %v11891, 0.0
    %v12179 = vmax.f32 %v11892, 0.0
    %v12180 = vmax.f32 %v11893, 0.0
    %v12181 = vmax.f32 %v11894, 0.0
    %v12182 = vmax.f32 %v11895, 0.0
    %v12183 = vmax.f32 %v11896, 0.0
    %v12184 = vmax.f32 %v11897, 0.0
    %v12185 = vmax.f32 %v11898, 0.0
    %v12186 = vmax.f32 %v11899, 0.0
    %v12187 = vmax.f32 %v11900, 0.0
    %v12188 = vmax.f32 %v11901, 0.0
    %v12189 = vmax.f32 %v11902, 0.0
    %v12190 = vmax.f32 %v11903, 0.0
    %v12191 = vmax.f32 %v11904, 0.0
    %v12192 = vmax.f32 %v11905, 0.0
    %v12193 = vmax.f32 %v11906, 0.0
    %v12194 = vmax.f32 %v11907, 0.0
    %v12195 = vmax.f32 %v11908, 0.0
    %v12196 = vmax.f32 %v11909, 0.0
    %v12197 = vmax.f32 %v11910, 0.0
    %v12198 = vmax.f32 %v11911, 0.0
    %v12199 = vmax.f32 %v11912, 0.0
    %v12200 = vmax.f32 %v11913, 0.0
    %v12201 = vmax.f32 %v11914, 0.0
    %v12202 = vmax.f32 %v11915, 0.0
    %v12203 = vmax.f32 %v11916, 0.0
    %v12204 = vmax.f32 %v11917, 0.0
    %v12205 = vmax.f32 %v11918, 0.0
    %v12206 = vmax.f32 %v11919, 0.0
    %v12207 = vmax.f32 %v11920, 0.0
    %v12208 = vmax.f32 %v11921, 0.0
    %v12209 = vmax.f32 %v11922, 0.0
    %v12210 = vmax.f32 %v11923, 0.0
    %v12211 = vmax.f32 %v11924, 0.0
    %v12212 = vmax.f32 %v11925, 0.0
    %v12213 = vmax.f32 %v11926, 0.0
    %v12214 = vmax.f32 %v11927, 0.0
    %v12215 = vmax.f32 %v11928, 0.0
    %v12216 = vmax.f32 %v11929, 0.0
    %v12217 = vmax.f32 %v11930, 0.0
    %v12218 = vmax.f32 %v11931, 0.0
    %v12219 = vmax.f32 %v11932, 0.0
    %v12220 = vmax.f32 %v11933, 0.0
    %v12221 = vmax.f32 %v11934, 0.0
    %v12222 = vmax.f32 %v11935, 0.0
    %v12223 = vmax.f32 %v11936, 0.0
    %v12224 = vmax.f32 %v11937, 0.0
    %v12225 = vmax.f32 %v11938, 0.0
    %v12226 = vmax.f32 %v11939, 0.0
    %v12227 = vmax.f32 %v11940, 0.0
    %v12228 = vmax.f32 %v11941, 0.0
    %v12229 = vmax.f32 %v11942, 0.0
    %v12230 = vmax.f32 %v11943, 0.0
    %v12231 = vmax.f32 %v11944, 0.0
    %v12232 = vmax.f32 %v11945, 0.0
    %v12233 = vmax.f32 %v11946, 0.0
    %v12234 = vmax.f32 %v11947, 0.0
    %v12235 = vmax.f32 %v11948, 0.0
    %v12236 = vmax.f32 %v11949, 0.0
    %v12237 = vmax.f32 %v11950, 0.0
    %v12238 = vmax.f32 %v11951, 0.0
    %v12239 = vmax.f32 %v11952, 0.0
    %v12240 = vmax.f32 %v11953, 0.0
    %v12241 = vmax.f32 %v11954, 0.0
    %v12242 = vmax.f32 %v11955, 0.0
    %v12243 = vmax.f32 %v11956, 0.0
    %v12244 = vmax.f32 %v11957, 0.0
    %v12245 = vmax.f32 %v11958, 0.0
    %v12246 = vmax.f32 %v11959, 0.0
    %v12247 = vmax.f32 %v11960, 0.0
    %v12248 = vmax.f32 %v11961, 0.0
    %v12249 = vmax.f32 %v11962, 0.0
    %v12250 = vmax.f32 %v11963, 0.0
    %v12251 = vmax.f32 %v11964, 0.0
    %v12252 = vmax.f32 %v11965, 0.0
    %v12253 = vmax.f32 %v11966, 0.0
    %v12254 = vmax.f32 %v11967, 0.0
    %v12255 = vmax.f32 %v11968, 0.0
    %v12256 = vmax.f32 %v11969, 0.0
    %v12257 = vmax.f32 %v11970, 0.0
    %v12258 = vmax.f32 %v11971, 0.0
    %v12259 = vmax.f32 %v11972, 0.0
    %v12260 = vmax.f32 %v11973, 0.0
    %v12261 = vmax.f32 %v11974, 0.0
    %v12262 = vmax.f32 %v11975, 0.0
    %v12263 = vmax.f32 %v11976, 0.0
    %v12264 = vmax.f32 %v11977, 0.0
    %v12265 = vmax.f32 %v11978, 0.0
    %v12266 = vmax.f32 %v11979, 0.0
    %v12267 = vmax.f32 %v11980, 0.0
    %v12268 = vmax.f32 %v11981, 0.0
    %v12269 = vmax.f32 %v11982, 0.0
    %v12270 = vmax.f32 %v11983, 0.0
    %v12271 = vmax.f32 %v11984, 0.0
    %v12272 = vmax.f32 %v11985, 0.0
    %v12273 = vmax.f32 %v11986, 0.0
    %v12274 = vmax.f32 %v11987, 0.0
    %v12275 = vmax.f32 %v11988, 0.0
    %v12276 = vmax.f32 %v11989, 0.0
    %v12277 = vmax.f32 %v11990, 0.0
    %v12278 = vmax.f32 %v11991, 0.0
    %v12279 = vmax.f32 %v11992, 0.0
    %v12280 = vmax.f32 %v11993, 0.0
    %v12281 = vmax.f32 %v11994, 0.0
    %v12282 = vmax.f32 %v11995, 0.0
    %v12283 = vmax.f32 %v11996, 0.0
    %v12284 = vmax.f32 %v11997, 0.0
    %v12285 = vmax.f32 %v11998, 0.0
    %v12286 = vmax.f32 %v11999, 0.0
    %v12287 = vmax.f32 %v12000, 0.0
    %v12288 = vmax.f32 %v12001, 0.0
    %v12289 = vmax.f32 %v12002, 0.0
    %v12290 = vmax.f32 %v12003, 0.0
    %v12291 = vmax.f32 %v12004, 0.0
    %v12292 = vmax.f32 %v12005, 0.0
    %v12293 = vmax.f32 %v12006, 0.0
    %v12294 = vmax.f32 %v12007, 0.0
    %v12295 = vmax.f32 %v12008, 0.0
    %v12296 = vmax.f32 %v12009, 0.0
    %v12297 = vmax.f32 %v12010, 0.0
    %v12298 = vmax.f32 %v12011, 0.0
    %v12299 = vmax.f32 %v12012, 0.0
    %v12300 = vmax.f32 %v12013, 0.0
    %v12301 = vmax.f32 %v12014, 0.0
    %v12302 = vmax.f32 %v12015, 0.0
    %v12303 = vmax.f32 %v12016, 0.0
    %v12304 = vmax.f32 %v12017, 0.0
    %v12305 = vmax.f32 %v12018, 0.0
    %v12306 = vmax.f32 %v12019, 0.0
    %v12307 = vmax.f32 %v12020, 0.0
    %v12308 = vmax.f32 %v12021, 0.0
    %v12309 = vmax.f32 %v12022, 0.0
    %v12310 = vmax.f32 %v12023, 0.0
    %v12311 = vmax.f32 %v12024, 0.0
    %v12312 = vmax.f32 %v12025, 0.0
    %v12313 = vmax.f32 %v12026, 0.0
    %v12314 = vmax.f32 %v12027, 0.0
    %v12315 = vmax.f32 %v12028, 0.0
    %v12316 = vmax.f32 %v12029, 0.0
    %v12317 = vmax.f32 %v12030, 0.0
    %v12318 = vmax.f32 %v12031, 0.0
    %v12319 = vmax.f32 %v12032, 0.0
    %v12320 = vmax.f32 %v12033, 0.0
    %v12321 = vmax.f32 %v12034, 0.0
    %v12322 = vmax.f32 %v12035, 0.0
    %v12323 = vmax.f32 %v12036, 0.0
    %v12324 = vmax.f32 %v12037, 0.0
    %v12325 = vmax.f32 %v12038, 0.0
    %v12326 = vmax.f32 %v12039, 0.0
    %v12327 = vmax.f32 %v12040, 0.0
    %v12328 = vmax.f32 %v12041, 0.0
    %v12329 = vmax.f32 %v12042, 0.0
    %v12330 = vmax.f32 %v12043, 0.0
    %v12331 = vmax.f32 %v12044, 0.0
    %v12332 = vmax.f32 %v12045, 0.0
    %v12333 = vmax.f32 %v12046, 0.0
    %v12334 = vmax.f32 %v12047, 0.0
    %v12335 = vmax.f32 %v12048, 0.0
    %v12336 = vmax.f32 %v12049, 0.0
    %v12337 = vmax.f32 %v12050, 0.0
    %v12338 = vmax.f32 %v12051, 0.0
    %v12339 = vmax.f32 %v12052, 0.0
    %v12340 = vmax.f32 %v12053, 0.0
    %v12341 = vmax.f32 %v12054, 0.0
    %v12342 = vmax.f32 %v12055, 0.0
    %v12343 = vmax.f32 %v12056, 0.0
    %v12344 = vmax.f32 %v12057, 0.0
    %v12345 = vmax.f32 %v12058, 0.0
    %v12346 = vmax.f32 %v12059, 0.0
    %v12347 = vmax.f32 %v12060, 0.0
    %v12348 = vmax.f32 %v12061, 0.0
    %v12349 = vmax.f32 %v12062, 0.0
    %v12350 = vmax.f32 %v12063, 0.0
    %v12351 = vmax.f32 %v12064, 0.0
    %v12352 = vmax.f32 %v12065, 0.0
    %v12353 = vmax.f32 %v12066, 0.0
    %v12354 = vmax.f32 %v12067, 0.0
    %v12355 = vmax.f32 %v12068, 0.0
    %v12356 = vmax.f32 %v12069, 0.0
    %v12357 = vmax.f32 %v12070, 0.0
    %v12358 = vmax.f32 %v12071, 0.0
    %v12359 = vmax.f32 %v12072, 0.0
    %v12360 = vmax.f32 %v12073, 0.0
    %v12361 = vmax.f32 %v12074, 0.0
    %v12362 = vmax.f32 %v12075, 0.0
    %v12363 = vmax.f32 %v12076, 0.0
    %v12364 = vmax.f32 %v12077, 0.0
    %v12365 = vmax.f32 %v12078, 0.0
    %v12366 = vmax.f32 %v12079, 0.0
    %v12367 = vmax.f32 %v12080, 0.0
    %v12368 = vmax.f32 %v12081, 0.0
    %v12369 = vpack.c.bf16 %v12083, %v12082
    %v12370 = vpack.c.bf16 %v12085, %v12084
    %v12371 = vpack.c.bf16 %v12087, %v12086
    %v12372 = vpack.c.bf16 %v12089, %v12088
    %v12373 = vpack.c.bf16 %v12091, %v12090
    %v12374 = vpack.c.bf16 %v12093, %v12092
    %v12375 = vpack.c.bf16 %v12095, %v12094
    %v12376 = vpack.c.bf16 %v12097, %v12096
    %v12377 = vpack.c.bf16 %v12099, %v12098
    %v12378 = vpack.c.bf16 %v12101, %v12100
    %v12379 = vpack.c.bf16 %v12103, %v12102
    %v12380 = vpack.c.bf16 %v12105, %v12104
    %v12381 = vpack.c.bf16 %v12107, %v12106
    %v12382 = vpack.c.bf16 %v12109, %v12108
    %v12383 = vpack.c.bf16 %v12111, %v12110
    %v12384 = vpack.c.bf16 %v12113, %v12112
    %v12385 = vpack.c.bf16 %v12115, %v12114
    %v12386 = vpack.c.bf16 %v12117, %v12116
    %v12387 = vpack.c.bf16 %v12119, %v12118
    %v12388 = vpack.c.bf16 %v12121, %v12120
    %v12389 = vpack.c.bf16 %v12123, %v12122
    %v12390 = vpack.c.bf16 %v12125, %v12124
    %v12391 = vpack.c.bf16 %v12127, %v12126
    %v12392 = vpack.c.bf16 %v12129, %v12128
    %v12393 = vpack.c.bf16 %v12131, %v12130
    %v12394 = vpack.c.bf16 %v12133, %v12132
    %v12395 = vpack.c.bf16 %v12135, %v12134
    %v12396 = vpack.c.bf16 %v12137, %v12136
    %v12397 = vpack.c.bf16 %v12139, %v12138
    %v12398 = vpack.c.bf16 %v12141, %v12140
    %v12399 = vpack.c.bf16 %v12143, %v12142
    %v12400 = vpack.c.bf16 %v12145, %v12144
    %v12401 = vpack.c.bf16 %v12147, %v12146
    %v12402 = vpack.c.bf16 %v12149, %v12148
    %v12403 = vpack.c.bf16 %v12151, %v12150
    %v12404 = vpack.c.bf16 %v12153, %v12152
    %v12405 = vpack.c.bf16 %v12155, %v12154
    %v12406 = vpack.c.bf16 %v12157, %v12156
    %v12407 = vpack.c.bf16 %v12159, %v12158
    %v12408 = vpack.c.bf16 %v12161, %v12160
    %v12409 = vpack.c.bf16 %v12163, %v12162
    %v12410 = vpack.c.bf16 %v12165, %v12164
    %v12411 = vpack.c.bf16 %v12167, %v12166
    %v12412 = vpack.c.bf16 %v12169, %v12168
    %v12413 = vpack.c.bf16 %v12171, %v12170
    %v12414 = vpack.c.bf16 %v12173, %v12172
    %v12415 = vpack.c.bf16 %v12175, %v12174
    %v12416 = vpack.c.bf16 %v12177, %v12176
    %v12417 = vpack.c.bf16 %v12179, %v12178
    %v12418 = vpack.c.bf16 %v12181, %v12180
    %v12419 = vpack.c.bf16 %v12183, %v12182
    %v12420 = vpack.c.bf16 %v12185, %v12184
    %v12421 = vpack.c.bf16 %v12187, %v12186
    %v12422 = vpack.c.bf16 %v12189, %v12188
    %v12423 = vpack.c.bf16 %v12191, %v12190
    %v12424 = vpack.c.bf16 %v12193, %v12192
    %v12425 = vpack.c.bf16 %v12195, %v12194
    %v12426 = vpack.c.bf16 %v12197, %v12196
    %v12427 = vpack.c.bf16 %v12199, %v12198
    %v12428 = vpack.c.bf16 %v12201, %v12200
    %v12429 = vpack.c.bf16 %v12203, %v12202
    %v12430 = vpack.c.bf16 %v12205, %v12204
    %v12431 = vpack.c.bf16 %v12207, %v12206
    %v12432 = vpack.c.bf16 %v12209, %v12208
    %v12433 = vpack.c.bf16 %v12211, %v12210
    %v12434 = vpack.c.bf16 %v12213, %v12212
    %v12435 = vpack.c.bf16 %v12215, %v12214
    %v12436 = vpack.c.bf16 %v12217, %v12216
    %v12437 = vpack.c.bf16 %v12219, %v12218
    %v12438 = vpack.c.bf16 %v12221, %v12220
    %v12439 = vpack.c.bf16 %v12223, %v12222
    %v12440 = vpack.c.bf16 %v12225, %v12224
    %v12441 = vpack.c.bf16 %v12227, %v12226
    %v12442 = vpack.c.bf16 %v12229, %v12228
    %v12443 = vpack.c.bf16 %v12231, %v12230
    %v12444 = vpack.c.bf16 %v12233, %v12232
    %v12445 = vpack.c.bf16 %v12235, %v12234
    %v12446 = vpack.c.bf16 %v12237, %v12236
    %v12447 = vpack.c.bf16 %v12239, %v12238
    %v12448 = vpack.c.bf16 %v12241, %v12240
    %v12449 = vpack.c.bf16 %v12243, %v12242
    %v12450 = vpack.c.bf16 %v12245, %v12244
    %v12451 = vpack.c.bf16 %v12247, %v12246
    %v12452 = vpack.c.bf16 %v12249, %v12248
    %v12453 = vpack.c.bf16 %v12251, %v12250
    %v12454 = vpack.c.bf16 %v12253, %v12252
    %v12455 = vpack.c.bf16 %v12255, %v12254
    %v12456 = vpack.c.bf16 %v12257, %v12256
    %v12457 = vpack.c.bf16 %v12259, %v12258
    %v12458 = vpack.c.bf16 %v12261, %v12260
    %v12459 = vpack.c.bf16 %v12263, %v12262
    %v12460 = vpack.c.bf16 %v12265, %v12264
    %v12461 = vpack.c.bf16 %v12267, %v12266
    %v12462 = vpack.c.bf16 %v12269, %v12268
    %v12463 = vpack.c.bf16 %v12271, %v12270
    %v12464 = vpack.c.bf16 %v12273, %v12272
    %v12465 = vpack.c.bf16 %v12275, %v12274
    %v12466 = vpack.c.bf16 %v12277, %v12276
    %v12467 = vpack.c.bf16 %v12279, %v12278
    %v12468 = vpack.c.bf16 %v12281, %v12280
    %v12469 = vpack.c.bf16 %v12283, %v12282
    %v12470 = vpack.c.bf16 %v12285, %v12284
    %v12471 = vpack.c.bf16 %v12287, %v12286
    %v12472 = vpack.c.bf16 %v12289, %v12288
    %v12473 = vpack.c.bf16 %v12291, %v12290
    %v12474 = vpack.c.bf16 %v12293, %v12292
    %v12475 = vpack.c.bf16 %v12295, %v12294
    %v12476 = vpack.c.bf16 %v12297, %v12296
    %v12477 = vpack.c.bf16 %v12299, %v12298
    %v12478 = vpack.c.bf16 %v12301, %v12300
    %v12479 = vpack.c.bf16 %v12303, %v12302
    %v12480 = vpack.c.bf16 %v12305, %v12304
    %v12481 = vpack.c.bf16 %v12307, %v12306
    %v12482 = vpack.c.bf16 %v12309, %v12308
    %v12483 = vpack.c.bf16 %v12311, %v12310
    %v12484 = vpack.c.bf16 %v12313, %v12312
    %v12485 = vpack.c.bf16 %v12315, %v12314
    %v12486 = vpack.c.bf16 %v12317, %v12316
    %v12487 = vpack.c.bf16 %v12319, %v12318
    %v12488 = vpack.c.bf16 %v12321, %v12320
    %v12489 = vpack.c.bf16 %v12323, %v12322
    %v12490 = vpack.c.bf16 %v12325, %v12324
    %v12491 = vpack.c.bf16 %v12327, %v12326
    %v12492 = vpack.c.bf16 %v12329, %v12328
    %v12493 = vpack.c.bf16 %v12331, %v12330
    %v12494 = vpack.c.bf16 %v12333, %v12332
    %v12495 = vpack.c.bf16 %v12335, %v12334
    %v12496 = vpack.c.bf16 %v12337, %v12336
    %v12497 = vpack.c.bf16 %v12339, %v12338
    %v12498 = vpack.c.bf16 %v12341, %v12340
    %v12499 = vpack.c.bf16 %v12343, %v12342
    %v12500 = vpack.c.bf16 %v12345, %v12344
    %v12501 = vpack.c.bf16 %v12347, %v12346
    %v12502 = vpack.c.bf16 %v12349, %v12348
    %v12503 = vpack.c.bf16 %v12351, %v12350
    %v12504 = vpack.c.bf16 %v12353, %v12352
    %v12505 = vpack.c.bf16 %v12355, %v12354
    %v12506 = vpack.c.bf16 %v12357, %v12356
    %v12507 = vpack.c.bf16 %v12359, %v12358
    %v12508 = vpack.c.bf16 %v12361, %v12360
    %v12509 = vpack.c.bf16 %v12363, %v12362
    %v12510 = vpack.c.bf16 %v12365, %v12364
    %v12511 = vpack.c.bf16 %v12367, %v12366
    %v12512 = vpack.c.bf16 %v12368, %v12368
    %v12657 = vunpack.c.l.b16 %v12369
    %v12658 = vunpack.c.h.b16 %v12369
    %v12659 = vunpack.c.l.b16 %v12370
    %v12660 = vunpack.c.h.b16 %v12370
    %v12661 = vunpack.c.l.b16 %v12371
    %v12662 = vunpack.c.h.b16 %v12371
    %v12663 = vunpack.c.l.b16 %v12372
    %v12664 = vunpack.c.h.b16 %v12372
    %v12665 = vunpack.c.l.b16 %v12373
    %v12666 = vunpack.c.h.b16 %v12373
    %v12667 = vunpack.c.l.b16 %v12374
    %v12668 = vunpack.c.h.b16 %v12374
    %v12669 = vunpack.c.l.b16 %v12375
    %v12670 = vunpack.c.h.b16 %v12375
    %v12671 = vunpack.c.l.b16 %v12376
    %v12672 = vunpack.c.h.b16 %v12376
    %v12673 = vunpack.c.l.b16 %v12377
    %v12674 = vunpack.c.h.b16 %v12377
    %v12675 = vunpack.c.l.b16 %v12378
    %v12676 = vunpack.c.h.b16 %v12378
    %v12677 = vunpack.c.l.b16 %v12379
    %v12678 = vunpack.c.h.b16 %v12379
    %v12679 = vunpack.c.l.b16 %v12380
    %v12680 = vunpack.c.h.b16 %v12380
    %v12681 = vunpack.c.l.b16 %v12381
    %v12682 = vunpack.c.h.b16 %v12381
    %v12683 = vunpack.c.l.b16 %v12382
    %v12684 = vunpack.c.h.b16 %v12382
    %v12685 = vunpack.c.l.b16 %v12383
    %v12686 = vunpack.c.h.b16 %v12383
    %v12687 = vunpack.c.l.b16 %v12384
    %v12688 = vunpack.c.h.b16 %v12384
    %v12689 = vunpack.c.l.b16 %v12385
    %v12690 = vunpack.c.h.b16 %v12385
    %v12691 = vunpack.c.l.b16 %v12386
    %v12692 = vunpack.c.h.b16 %v12386
    %v12693 = vunpack.c.l.b16 %v12387
    %v12694 = vunpack.c.h.b16 %v12387
    %v12695 = vunpack.c.l.b16 %v12388
    %v12696 = vunpack.c.h.b16 %v12388
    %v12697 = vunpack.c.l.b16 %v12389
    %v12698 = vunpack.c.h.b16 %v12389
    %v12699 = vunpack.c.l.b16 %v12390
    %v12700 = vunpack.c.h.b16 %v12390
    %v12701 = vunpack.c.l.b16 %v12391
    %v12702 = vunpack.c.h.b16 %v12391
    %v12703 = vunpack.c.l.b16 %v12392
    %v12704 = vunpack.c.h.b16 %v12392
    %v12705 = vunpack.c.l.b16 %v12393
    %v12706 = vunpack.c.h.b16 %v12393
    %v12707 = vunpack.c.l.b16 %v12394
    %v12708 = vunpack.c.h.b16 %v12394
    %v12709 = vunpack.c.l.b16 %v12395
    %v12710 = vunpack.c.h.b16 %v12395
    %v12711 = vunpack.c.l.b16 %v12396
    %v12712 = vunpack.c.h.b16 %v12396
    %v12713 = vunpack.c.l.b16 %v12397
    %v12714 = vunpack.c.h.b16 %v12397
    %v12715 = vunpack.c.l.b16 %v12398
    %v12716 = vunpack.c.h.b16 %v12398
    %v12717 = vunpack.c.l.b16 %v12399
    %v12718 = vunpack.c.h.b16 %v12399
    %v12719 = vunpack.c.l.b16 %v12400
    %v12720 = vunpack.c.h.b16 %v12400
    %v12721 = vunpack.c.l.b16 %v12401
    %v12722 = vunpack.c.h.b16 %v12401
    %v12723 = vunpack.c.l.b16 %v12402
    %v12724 = vunpack.c.h.b16 %v12402
    %v12725 = vunpack.c.l.b16 %v12403
    %v12726 = vunpack.c.h.b16 %v12403
    %v12727 = vunpack.c.l.b16 %v12404
    %v12728 = vunpack.c.h.b16 %v12404
    %v12729 = vunpack.c.l.b16 %v12405
    %v12730 = vunpack.c.h.b16 %v12405
    %v12731 = vunpack.c.l.b16 %v12406
    %v12732 = vunpack.c.h.b16 %v12406
    %v12733 = vunpack.c.l.b16 %v12407
    %v12734 = vunpack.c.h.b16 %v12407
    %v12735 = vunpack.c.l.b16 %v12408
    %v12736 = vunpack.c.h.b16 %v12408
    %v12737 = vunpack.c.l.b16 %v12409
    %v12738 = vunpack.c.h.b16 %v12409
    %v12739 = vunpack.c.l.b16 %v12410
    %v12740 = vunpack.c.h.b16 %v12410
    %v12741 = vunpack.c.l.b16 %v12411
    %v12742 = vunpack.c.h.b16 %v12411
    %v12743 = vunpack.c.l.b16 %v12412
    %v12744 = vunpack.c.h.b16 %v12412
    %v12745 = vunpack.c.l.b16 %v12413
    %v12746 = vunpack.c.h.b16 %v12413
    %v12747 = vunpack.c.l.b16 %v12414
    %v12748 = vunpack.c.h.b16 %v12414
    %v12749 = vunpack.c.l.b16 %v12415
    %v12750 = vunpack.c.h.b16 %v12415
    %v12751 = vunpack.c.l.b16 %v12416
    %v12752 = vunpack.c.h.b16 %v12416
    %v12753 = vunpack.c.l.b16 %v12417
    %v12754 = vunpack.c.h.b16 %v12417
    %v12755 = vunpack.c.l.b16 %v12418
    %v12756 = vunpack.c.h.b16 %v12418
    %v12757 = vunpack.c.l.b16 %v12419
    %v12758 = vunpack.c.h.b16 %v12419
    %v12759 = vunpack.c.l.b16 %v12420
    %v12760 = vunpack.c.h.b16 %v12420
    %v12761 = vunpack.c.l.b16 %v12421
    %v12762 = vunpack.c.h.b16 %v12421
    %v12763 = vunpack.c.l.b16 %v12422
    %v12764 = vunpack.c.h.b16 %v12422
    %v12765 = vunpack.c.l.b16 %v12423
    %v12766 = vunpack.c.h.b16 %v12423
    %v12767 = vunpack.c.l.b16 %v12424
    %v12768 = vunpack.c.h.b16 %v12424
    %v12769 = vunpack.c.l.b16 %v12425
    %v12770 = vunpack.c.h.b16 %v12425
    %v12771 = vunpack.c.l.b16 %v12426
    %v12772 = vunpack.c.h.b16 %v12426
    %v12773 = vunpack.c.l.b16 %v12427
    %v12774 = vunpack.c.h.b16 %v12427
    %v12775 = vunpack.c.l.b16 %v12428
    %v12776 = vunpack.c.h.b16 %v12428
    %v12777 = vunpack.c.l.b16 %v12429
    %v12778 = vunpack.c.h.b16 %v12429
    %v12779 = vunpack.c.l.b16 %v12430
    %v12780 = vunpack.c.h.b16 %v12430
    %v12781 = vunpack.c.l.b16 %v12431
    %v12782 = vunpack.c.h.b16 %v12431
    %v12783 = vunpack.c.l.b16 %v12432
    %v12784 = vunpack.c.h.b16 %v12432
    %v12785 = vunpack.c.l.b16 %v12433
    %v12786 = vunpack.c.h.b16 %v12433
    %v12787 = vunpack.c.l.b16 %v12434
    %v12788 = vunpack.c.h.b16 %v12434
    %v12789 = vunpack.c.l.b16 %v12435
    %v12790 = vunpack.c.h.b16 %v12435
    %v12791 = vunpack.c.l.b16 %v12436
    %v12792 = vunpack.c.h.b16 %v12436
    %v12793 = vunpack.c.l.b16 %v12437
    %v12794 = vunpack.c.h.b16 %v12437
    %v12795 = vunpack.c.l.b16 %v12438
    %v12796 = vunpack.c.h.b16 %v12438
    %v12797 = vunpack.c.l.b16 %v12439
    %v12798 = vunpack.c.h.b16 %v12439
    %v12799 = vunpack.c.l.b16 %v12440
    %v12800 = vunpack.c.h.b16 %v12440
    %v12801 = vunpack.c.l.b16 %v12441
    %v12802 = vunpack.c.h.b16 %v12441
    %v12803 = vunpack.c.l.b16 %v12442
    %v12804 = vunpack.c.h.b16 %v12442
    %v12805 = vunpack.c.l.b16 %v12443
    %v12806 = vunpack.c.h.b16 %v12443
    %v12807 = vunpack.c.l.b16 %v12444
    %v12808 = vunpack.c.h.b16 %v12444
    %v12809 = vunpack.c.l.b16 %v12445
    %v12810 = vunpack.c.h.b16 %v12445
    %v12811 = vunpack.c.l.b16 %v12446
    %v12812 = vunpack.c.h.b16 %v12446
    %v12813 = vunpack.c.l.b16 %v12447
    %v12814 = vunpack.c.h.b16 %v12447
    %v12815 = vunpack.c.l.b16 %v12448
    %v12816 = vunpack.c.h.b16 %v12448
    %v12817 = vunpack.c.l.b16 %v12449
    %v12818 = vunpack.c.h.b16 %v12449
    %v12819 = vunpack.c.l.b16 %v12450
    %v12820 = vunpack.c.h.b16 %v12450
    %v12821 = vunpack.c.l.b16 %v12451
    %v12822 = vunpack.c.h.b16 %v12451
    %v12823 = vunpack.c.l.b16 %v12452
    %v12824 = vunpack.c.h.b16 %v12452
    %v12825 = vunpack.c.l.b16 %v12453
    %v12826 = vunpack.c.h.b16 %v12453
    %v12827 = vunpack.c.l.b16 %v12454
    %v12828 = vunpack.c.h.b16 %v12454
    %v12829 = vunpack.c.l.b16 %v12455
    %v12830 = vunpack.c.h.b16 %v12455
    %v12831 = vunpack.c.l.b16 %v12456
    %v12832 = vunpack.c.h.b16 %v12456
    %v12833 = vunpack.c.l.b16 %v12457
    %v12834 = vunpack.c.h.b16 %v12457
    %v12835 = vunpack.c.l.b16 %v12458
    %v12836 = vunpack.c.h.b16 %v12458
    %v12837 = vunpack.c.l.b16 %v12459
    %v12838 = vunpack.c.h.b16 %v12459
    %v12839 = vunpack.c.l.b16 %v12460
    %v12840 = vunpack.c.h.b16 %v12460
    %v12841 = vunpack.c.l.b16 %v12461
    %v12842 = vunpack.c.h.b16 %v12461
    %v12843 = vunpack.c.l.b16 %v12462
    %v12844 = vunpack.c.h.b16 %v12462
    %v12845 = vunpack.c.l.b16 %v12463
    %v12846 = vunpack.c.h.b16 %v12463
    %v12847 = vunpack.c.l.b16 %v12464
    %v12848 = vunpack.c.h.b16 %v12464
    %v12849 = vunpack.c.l.b16 %v12465
    %v12850 = vunpack.c.h.b16 %v12465
    %v12851 = vunpack.c.l.b16 %v12466
    %v12852 = vunpack.c.h.b16 %v12466
    %v12853 = vunpack.c.l.b16 %v12467
    %v12854 = vunpack.c.h.b16 %v12467
    %v12855 = vunpack.c.l.b16 %v12468
    %v12856 = vunpack.c.h.b16 %v12468
    %v12857 = vunpack.c.l.b16 %v12469
    %v12858 = vunpack.c.h.b16 %v12469
    %v12859 = vunpack.c.l.b16 %v12470
    %v12860 = vunpack.c.h.b16 %v12470
    %v12861 = vunpack.c.l.b16 %v12471
    %v12862 = vunpack.c.h.b16 %v12471
    %v12863 = vunpack.c.l.b16 %v12472
    %v12864 = vunpack.c.h.b16 %v12472
    %v12865 = vunpack.c.l.b16 %v12473
    %v12866 = vunpack.c.h.b16 %v12473
    %v12867 = vunpack.c.l.b16 %v12474
    %v12868 = vunpack.c.h.b16 %v12474
    %v12869 = vunpack.c.l.b16 %v12475
    %v12870 = vunpack.c.h.b16 %v12475
    %v12871 = vunpack.c.l.b16 %v12476
    %v12872 = vunpack.c.h.b16 %v12476
    %v12873 = vunpack.c.l.b16 %v12477
    %v12874 = vunpack.c.h.b16 %v12477
    %v12875 = vunpack.c.l.b16 %v12478
    %v12876 = vunpack.c.h.b16 %v12478
    %v12877 = vunpack.c.l.b16 %v12479
    %v12878 = vunpack.c.h.b16 %v12479
    %v12879 = vunpack.c.l.b16 %v12480
    %v12880 = vunpack.c.h.b16 %v12480
    %v12881 = vunpack.c.l.b16 %v12481
    %v12882 = vunpack.c.h.b16 %v12481
    %v12883 = vunpack.c.l.b16 %v12482
    %v12884 = vunpack.c.h.b16 %v12482
    %v12885 = vunpack.c.l.b16 %v12483
    %v12886 = vunpack.c.h.b16 %v12483
    %v12887 = vunpack.c.l.b16 %v12484
    %v12888 = vunpack.c.h.b16 %v12484
    %v12889 = vunpack.c.l.b16 %v12485
    %v12890 = vunpack.c.h.b16 %v12485
    %v12891 = vunpack.c.l.b16 %v12486
    %v12892 = vunpack.c.h.b16 %v12486
    %v12893 = vunpack.c.l.b16 %v12487
    %v12894 = vunpack.c.h.b16 %v12487
    %v12895 = vunpack.c.l.b16 %v12488
    %v12896 = vunpack.c.h.b16 %v12488
    %v12897 = vunpack.c.l.b16 %v12489
    %v12898 = vunpack.c.h.b16 %v12489
    %v12899 = vunpack.c.l.b16 %v12490
    %v12900 = vunpack.c.h.b16 %v12490
    %v12901 = vunpack.c.l.b16 %v12491
    %v12902 = vunpack.c.h.b16 %v12491
    %v12903 = vunpack.c.l.b16 %v12492
    %v12904 = vunpack.c.h.b16 %v12492
    %v12905 = vunpack.c.l.b16 %v12493
    %v12906 = vunpack.c.h.b16 %v12493
    %v12907 = vunpack.c.l.b16 %v12494
    %v12908 = vunpack.c.h.b16 %v12494
    %v12909 = vunpack.c.l.b16 %v12495
    %v12910 = vunpack.c.h.b16 %v12495
    %v12911 = vunpack.c.l.b16 %v12496
    %v12912 = vunpack.c.h.b16 %v12496
    %v12913 = vunpack.c.l.b16 %v12497
    %v12914 = vunpack.c.h.b16 %v12497
    %v12915 = vunpack.c.l.b16 %v12498
    %v12916 = vunpack.c.h.b16 %v12498
    %v12917 = vunpack.c.l.b16 %v12499
    %v12918 = vunpack.c.h.b16 %v12499
    %v12919 = vunpack.c.l.b16 %v12500
    %v12920 = vunpack.c.h.b16 %v12500
    %v12921 = vunpack.c.l.b16 %v12501
    %v12922 = vunpack.c.h.b16 %v12501
    %v12923 = vunpack.c.l.b16 %v12502
    %v12924 = vunpack.c.h.b16 %v12502
    %v12925 = vunpack.c.l.b16 %v12503
    %v12926 = vunpack.c.h.b16 %v12503
    %v12927 = vunpack.c.l.b16 %v12504
    %v12928 = vunpack.c.h.b16 %v12504
    %v12929 = vunpack.c.l.b16 %v12505
    %v12930 = vunpack.c.h.b16 %v12505
    %v12931 = vunpack.c.l.b16 %v12506
    %v12932 = vunpack.c.h.b16 %v12506
    %v12933 = vunpack.c.l.b16 %v12507
    %v12934 = vunpack.c.h.b16 %v12507
    %v12935 = vunpack.c.l.b16 %v12508
    %v12936 = vunpack.c.h.b16 %v12508
    %v12937 = vunpack.c.l.b16 %v12509
    %v12938 = vunpack.c.h.b16 %v12509
    %v12939 = vunpack.c.l.b16 %v12510
    %v12940 = vunpack.c.h.b16 %v12510
    %v12941 = vunpack.c.l.b16 %v12511
    %v12942 = vunpack.c.h.b16 %v12511
    %v12943 = vunpack.c.l.b16 %v12512
    %v12944 = vpack.c.b16 %v12657, %v12657
    %v12945 = vpack.c.b16 %v12658, %v12658
    %v12946 = vpack.c.b16 %v12659, %v12659
    %v12947 = vpack.c.b16 %v12660, %v12660
    %v12948 = vpack.c.b16 %v12661, %v12661
    %v12949 = vpack.c.b16 %v12662, %v12662
    %v12950 = vpack.c.b16 %v12663, %v12663
    %v12951 = vpack.c.b16 %v12664, %v12664
    %v12952 = vpack.c.b16 %v12665, %v12665
    %v12953 = vpack.c.b16 %v12666, %v12666
    %v12954 = vpack.c.b16 %v12667, %v12667
    %v12955 = vpack.c.b16 %v12668, %v12668
    %v12956 = vpack.c.b16 %v12669, %v12669
    %v12957 = vpack.c.b16 %v12670, %v12670
    %v12958 = vpack.c.b16 %v12671, %v12671
    %v12959 = vpack.c.b16 %v12672, %v12672
    %v12960 = vpack.c.b16 %v12673, %v12673
    %v12961 = vpack.c.b16 %v12674, %v12674
    %v12962 = vpack.c.b16 %v12675, %v12675
    %v12963 = vpack.c.b16 %v12676, %v12676
    %v12964 = vpack.c.b16 %v12677, %v12677
    %v12965 = vpack.c.b16 %v12678, %v12678
    %v12966 = vpack.c.b16 %v12679, %v12679
    %v12967 = vpack.c.b16 %v12680, %v12680
    %v12968 = vpack.c.b16 %v12681, %v12681
    %v12969 = vpack.c.b16 %v12682, %v12682
    %v12970 = vpack.c.b16 %v12683, %v12683
    %v12971 = vpack.c.b16 %v12684, %v12684
    %v12972 = vpack.c.b16 %v12685, %v12685
    %v12973 = vpack.c.b16 %v12686, %v12686
    %v12974 = vpack.c.b16 %v12687, %v12687
    %v12975 = vpack.c.b16 %v12688, %v12688
    %v12976 = vpack.c.b16 %v12689, %v12689
    %v12977 = vpack.c.b16 %v12690, %v12690
    %v12978 = vpack.c.b16 %v12691, %v12691
    %v12979 = vpack.c.b16 %v12692, %v12692
    %v12980 = vpack.c.b16 %v12693, %v12693
    %v12981 = vpack.c.b16 %v12694, %v12694
    %v12982 = vpack.c.b16 %v12695, %v12695
    %v12983 = vpack.c.b16 %v12696, %v12696
    %v12984 = vpack.c.b16 %v12697, %v12697
    %v12985 = vpack.c.b16 %v12698, %v12698
    %v12986 = vpack.c.b16 %v12699, %v12699
    %v12987 = vpack.c.b16 %v12700, %v12700
    %v12988 = vpack.c.b16 %v12701, %v12701
    %v12989 = vpack.c.b16 %v12702, %v12702
    %v12990 = vpack.c.b16 %v12703, %v12703
    %v12991 = vpack.c.b16 %v12704, %v12704
    %v12992 = vpack.c.b16 %v12705, %v12705
    %v12993 = vpack.c.b16 %v12706, %v12706
    %v12994 = vpack.c.b16 %v12707, %v12707
    %v12995 = vpack.c.b16 %v12708, %v12708
    %v12996 = vpack.c.b16 %v12709, %v12709
    %v12997 = vpack.c.b16 %v12710, %v12710
    %v12998 = vpack.c.b16 %v12711, %v12711
    %v12999 = vpack.c.b16 %v12712, %v12712
    %v13000 = vpack.c.b16 %v12713, %v12713
    %v13001 = vpack.c.b16 %v12714, %v12714
    %v13002 = vpack.c.b16 %v12715, %v12715
    %v13003 = vpack.c.b16 %v12716, %v12716
    %v13004 = vpack.c.b16 %v12717, %v12717
    %v13005 = vpack.c.b16 %v12718, %v12718
    %v13006 = vpack.c.b16 %v12719, %v12719
    %v13007 = vpack.c.b16 %v12720, %v12720
    %v13008 = vpack.c.b16 %v12721, %v12721
    %v13009 = vpack.c.b16 %v12722, %v12722
    %v13010 = vpack.c.b16 %v12723, %v12723
    %v13011 = vpack.c.b16 %v12724, %v12724
    %v13012 = vpack.c.b16 %v12725, %v12725
    %v13013 = vpack.c.b16 %v12726, %v12726
    %v13014 = vpack.c.b16 %v12727, %v12727
    %v13015 = vpack.c.b16 %v12728, %v12728
    %v13016 = vpack.c.b16 %v12729, %v12729
    %v13017 = vpack.c.b16 %v12730, %v12730
    %v13018 = vpack.c.b16 %v12731, %v12731
    %v13019 = vpack.c.b16 %v12732, %v12732
    %v13020 = vpack.c.b16 %v12733, %v12733
    %v13021 = vpack.c.b16 %v12734, %v12734
    %v13022 = vpack.c.b16 %v12735, %v12735
    %v13023 = vpack.c.b16 %v12736, %v12736
    %v13024 = vpack.c.b16 %v12737, %v12737
    %v13025 = vpack.c.b16 %v12738, %v12738
    %v13026 = vpack.c.b16 %v12739, %v12739
    %v13027 = vpack.c.b16 %v12740, %v12740
    %v13028 = vpack.c.b16 %v12741, %v12741
    %v13029 = vpack.c.b16 %v12742, %v12742
    %v13030 = vpack.c.b16 %v12743, %v12743
    %v13031 = vpack.c.b16 %v12744, %v12744
    %v13032 = vpack.c.b16 %v12745, %v12745
    %v13033 = vpack.c.b16 %v12746, %v12746
    %v13034 = vpack.c.b16 %v12747, %v12747
    %v13035 = vpack.c.b16 %v12748, %v12748
    %v13036 = vpack.c.b16 %v12749, %v12749
    %v13037 = vpack.c.b16 %v12750, %v12750
    %v13038 = vpack.c.b16 %v12751, %v12751
    %v13039 = vpack.c.b16 %v12752, %v12752
    %v13040 = vpack.c.b16 %v12753, %v12753
    %v13041 = vpack.c.b16 %v12754, %v12754
    %v13042 = vpack.c.b16 %v12755, %v12755
    %v13043 = vpack.c.b16 %v12756, %v12756
    %v13044 = vpack.c.b16 %v12757, %v12757
    %v13045 = vpack.c.b16 %v12758, %v12758
    %v13046 = vpack.c.b16 %v12759, %v12759
    %v13047 = vpack.c.b16 %v12760, %v12760
    %v13048 = vpack.c.b16 %v12761, %v12761
    %v13049 = vpack.c.b16 %v12762, %v12762
    %v13050 = vpack.c.b16 %v12763, %v12763
    %v13051 = vpack.c.b16 %v12764, %v12764
    %v13052 = vpack.c.b16 %v12765, %v12765
    %v13053 = vpack.c.b16 %v12766, %v12766
    %v13054 = vpack.c.b16 %v12767, %v12767
    %v13055 = vpack.c.b16 %v12768, %v12768
    %v13056 = vpack.c.b16 %v12769, %v12769
    %v13057 = vpack.c.b16 %v12770, %v12770
    %v13058 = vpack.c.b16 %v12771, %v12771
    %v13059 = vpack.c.b16 %v12772, %v12772
    %v13060 = vpack.c.b16 %v12773, %v12773
    %v13061 = vpack.c.b16 %v12774, %v12774
    %v13062 = vpack.c.b16 %v12775, %v12775
    %v13063 = vpack.c.b16 %v12776, %v12776
    %v13064 = vpack.c.b16 %v12777, %v12777
    %v13065 = vpack.c.b16 %v12778, %v12778
    %v13066 = vpack.c.b16 %v12779, %v12779
    %v13067 = vpack.c.b16 %v12780, %v12780
    %v13068 = vpack.c.b16 %v12781, %v12781
    %v13069 = vpack.c.b16 %v12782, %v12782
    %v13070 = vpack.c.b16 %v12783, %v12783
    %v13071 = vpack.c.b16 %v12784, %v12784
    %v13072 = vpack.c.b16 %v12785, %v12785
    %v13073 = vpack.c.b16 %v12786, %v12786
    %v13074 = vpack.c.b16 %v12787, %v12787
    %v13075 = vpack.c.b16 %v12788, %v12788
    %v13076 = vpack.c.b16 %v12789, %v12789
    %v13077 = vpack.c.b16 %v12790, %v12790
    %v13078 = vpack.c.b16 %v12791, %v12791
    %v13079 = vpack.c.b16 %v12792, %v12792
    %v13080 = vpack.c.b16 %v12793, %v12793
    %v13081 = vpack.c.b16 %v12794, %v12794
    %v13082 = vpack.c.b16 %v12795, %v12795
    %v13083 = vpack.c.b16 %v12796, %v12796
    %v13084 = vpack.c.b16 %v12797, %v12797
    %v13085 = vpack.c.b16 %v12798, %v12798
    %v13086 = vpack.c.b16 %v12799, %v12799
    %v13087 = vpack.c.b16 %v12800, %v12800
    %v13088 = vpack.c.b16 %v12801, %v12801
    %v13089 = vpack.c.b16 %v12802, %v12802
    %v13090 = vpack.c.b16 %v12803, %v12803
    %v13091 = vpack.c.b16 %v12804, %v12804
    %v13092 = vpack.c.b16 %v12805, %v12805
    %v13093 = vpack.c.b16 %v12806, %v12806
    %v13094 = vpack.c.b16 %v12807, %v12807
    %v13095 = vpack.c.b16 %v12808, %v12808
    %v13096 = vpack.c.b16 %v12809, %v12809
    %v13097 = vpack.c.b16 %v12810, %v12810
    %v13098 = vpack.c.b16 %v12811, %v12811
    %v13099 = vpack.c.b16 %v12812, %v12812
    %v13100 = vpack.c.b16 %v12813, %v12813
    %v13101 = vpack.c.b16 %v12814, %v12814
    %v13102 = vpack.c.b16 %v12815, %v12815
    %v13103 = vpack.c.b16 %v12816, %v12816
    %v13104 = vpack.c.b16 %v12817, %v12817
    %v13105 = vpack.c.b16 %v12818, %v12818
    %v13106 = vpack.c.b16 %v12819, %v12819
    %v13107 = vpack.c.b16 %v12820, %v12820
    %v13108 = vpack.c.b16 %v12821, %v12821
    %v13109 = vpack.c.b16 %v12822, %v12822
    %v13110 = vpack.c.b16 %v12823, %v12823
    %v13111 = vpack.c.b16 %v12824, %v12824
    %v13112 = vpack.c.b16 %v12825, %v12825
    %v13113 = vpack.c.b16 %v12826, %v12826
    %v13114 = vpack.c.b16 %v12827, %v12827
    %v13115 = vpack.c.b16 %v12828, %v12828
    %v13116 = vpack.c.b16 %v12829, %v12829
    %v13117 = vpack.c.b16 %v12830, %v12830
    %v13118 = vpack.c.b16 %v12831, %v12831
    %v13119 = vpack.c.b16 %v12832, %v12832
    %v13120 = vpack.c.b16 %v12833, %v12833
    %v13121 = vpack.c.b16 %v12834, %v12834
    %v13122 = vpack.c.b16 %v12835, %v12835
    %v13123 = vpack.c.b16 %v12836, %v12836
    %v13124 = vpack.c.b16 %v12837, %v12837
    %v13125 = vpack.c.b16 %v12838, %v12838
    %v13126 = vpack.c.b16 %v12839, %v12839
    %v13127 = vpack.c.b16 %v12840, %v12840
    %v13128 = vpack.c.b16 %v12841, %v12841
    %v13129 = vpack.c.b16 %v12842, %v12842
    %v13130 = vpack.c.b16 %v12843, %v12843
    %v13131 = vpack.c.b16 %v12844, %v12844
    %v13132 = vpack.c.b16 %v12845, %v12845
    %v13133 = vpack.c.b16 %v12846, %v12846
    %v13134 = vpack.c.b16 %v12847, %v12847
    %v13135 = vpack.c.b16 %v12848, %v12848
    %v13136 = vpack.c.b16 %v12849, %v12849
    %v13137 = vpack.c.b16 %v12850, %v12850
    %v13138 = vpack.c.b16 %v12851, %v12851
    %v13139 = vpack.c.b16 %v12852, %v12852
    %v13140 = vpack.c.b16 %v12853, %v12853
    %v13141 = vpack.c.b16 %v12854, %v12854
    %v13142 = vpack.c.b16 %v12855, %v12855
    %v13143 = vpack.c.b16 %v12856, %v12856
    %v13144 = vpack.c.b16 %v12857, %v12857
    %v13145 = vpack.c.b16 %v12858, %v12858
    %v13146 = vpack.c.b16 %v12859, %v12859
    %v13147 = vpack.c.b16 %v12860, %v12860
    %v13148 = vpack.c.b16 %v12861, %v12861
    %v13149 = vpack.c.b16 %v12862, %v12862
    %v13150 = vpack.c.b16 %v12863, %v12863
    %v13151 = vpack.c.b16 %v12864, %v12864
    %v13152 = vpack.c.b16 %v12865, %v12865
    %v13153 = vpack.c.b16 %v12866, %v12866
    %v13154 = vpack.c.b16 %v12867, %v12867
    %v13155 = vpack.c.b16 %v12868, %v12868
    %v13156 = vpack.c.b16 %v12869, %v12869
    %v13157 = vpack.c.b16 %v12870, %v12870
    %v13158 = vpack.c.b16 %v12871, %v12871
    %v13159 = vpack.c.b16 %v12872, %v12872
    %v13160 = vpack.c.b16 %v12873, %v12873
    %v13161 = vpack.c.b16 %v12874, %v12874
    %v13162 = vpack.c.b16 %v12875, %v12875
    %v13163 = vpack.c.b16 %v12876, %v12876
    %v13164 = vpack.c.b16 %v12877, %v12877
    %v13165 = vpack.c.b16 %v12878, %v12878
    %v13166 = vpack.c.b16 %v12879, %v12879
    %v13167 = vpack.c.b16 %v12880, %v12880
    %v13168 = vpack.c.b16 %v12881, %v12881
    %v13169 = vpack.c.b16 %v12882, %v12882
    %v13170 = vpack.c.b16 %v12883, %v12883
    %v13171 = vpack.c.b16 %v12884, %v12884
    %v13172 = vpack.c.b16 %v12885, %v12885
    %v13173 = vpack.c.b16 %v12886, %v12886
    %v13174 = vpack.c.b16 %v12887, %v12887
    %v13175 = vpack.c.b16 %v12888, %v12888
    %v13176 = vpack.c.b16 %v12889, %v12889
    %v13177 = vpack.c.b16 %v12890, %v12890
    %v13178 = vpack.c.b16 %v12891, %v12891
    %v13179 = vpack.c.b16 %v12892, %v12892
    %v13180 = vpack.c.b16 %v12893, %v12893
    %v13181 = vpack.c.b16 %v12894, %v12894
    %v13182 = vpack.c.b16 %v12895, %v12895
    %v13183 = vpack.c.b16 %v12896, %v12896
    %v13184 = vpack.c.b16 %v12897, %v12897
    %v13185 = vpack.c.b16 %v12898, %v12898
    %v13186 = vpack.c.b16 %v12899, %v12899
    %v13187 = vpack.c.b16 %v12900, %v12900
    %v13188 = vpack.c.b16 %v12901, %v12901
    %v13189 = vpack.c.b16 %v12902, %v12902
    %v13190 = vpack.c.b16 %v12903, %v12903
    %v13191 = vpack.c.b16 %v12904, %v12904
    %v13192 = vpack.c.b16 %v12905, %v12905
    %v13193 = vpack.c.b16 %v12906, %v12906
    %v13194 = vpack.c.b16 %v12907, %v12907
    %v13195 = vpack.c.b16 %v12908, %v12908
    %v13196 = vpack.c.b16 %v12909, %v12909
    %v13197 = vpack.c.b16 %v12910, %v12910
    %v13198 = vpack.c.b16 %v12911, %v12911
    %v13199 = vpack.c.b16 %v12912, %v12912
    %v13200 = vpack.c.b16 %v12913, %v12913
    %v13201 = vpack.c.b16 %v12914, %v12914
    %v13202 = vpack.c.b16 %v12915, %v12915
    %v13203 = vpack.c.b16 %v12916, %v12916
    %v13204 = vpack.c.b16 %v12917, %v12917
    %v13205 = vpack.c.b16 %v12918, %v12918
    %v13206 = vpack.c.b16 %v12919, %v12919
    %v13207 = vpack.c.b16 %v12920, %v12920
    %v13208 = vpack.c.b16 %v12921, %v12921
    %v13209 = vpack.c.b16 %v12922, %v12922
    %v13210 = vpack.c.b16 %v12923, %v12923
    %v13211 = vpack.c.b16 %v12924, %v12924
    %v13212 = vpack.c.b16 %v12925, %v12925
    %v13213 = vpack.c.b16 %v12926, %v12926
    %v13214 = vpack.c.b16 %v12927, %v12927
    %v13215 = vpack.c.b16 %v12928, %v12928
    %v13216 = vpack.c.b16 %v12929, %v12929
    %v13217 = vpack.c.b16 %v12930, %v12930
    %v13218 = vpack.c.b16 %v12931, %v12931
    %v13219 = vpack.c.b16 %v12932, %v12932
    %v13220 = vpack.c.b16 %v12933, %v12933
    %v13221 = vpack.c.b16 %v12934, %v12934
    %v13222 = vpack.c.b16 %v12935, %v12935
    %v13223 = vpack.c.b16 %v12936, %v12936
    %v13224 = vpack.c.b16 %v12937, %v12937
    %v13225 = vpack.c.b16 %v12938, %v12938
    %v13226 = vpack.c.b16 %v12939, %v12939
    %v13227 = vpack.c.b16 %v12940, %v12940
    %v13228 = vpack.c.b16 %v12941, %v12941
    %v13229 = vpack.c.b16 %v12942, %v12942
    %v13230 = vpack.c.b16 %v12943, %v12943
    %13518 = vst [vmem:[#allocation2] sm:$0xf] %v12944
    %13519 = vst [vmem:[#allocation2 + $0x4] sm:$0xf] %v12945
    %13520 = vst [vmem:[#allocation2 + $0x8] sm:$0xf] %v12946
    %13521 = vst [vmem:[#allocation2 + $0xc] sm:$0xf] %v12947
    %13522 = vst [vmem:[#allocation2 + $0x10] sm:$0xf] %v12948
    %13523 = vst [vmem:[#allocation2 + $0x14] sm:$0xf] %v12949
    %13524 = vst [vmem:[#allocation2 + $0x18] sm:$0xf] %v12950
    %13525 = vst [vmem:[#allocation2 + $0x1c] sm:$0xf] %v12951
    %13526 = vst [vmem:[#allocation2 + $0x20] sm:$0xf] %v12952
    %13527 = vst [vmem:[#allocation2 + $0x24] sm:$0xf] %v12953
    %13528 = vst [vmem:[#allocation2 + $0x28] sm:$0xf] %v12954
    %13529 = vst [vmem:[#allocation2 + $0x2c] sm:$0xf] %v12955
    %13530 = vst [vmem:[#allocation2 + $0x30] sm:$0xf] %v12956
    %13531 = vst [vmem:[#allocation2 + $0x34] sm:$0xf] %v12957
    %13532 = vst [vmem:[#allocation2 + $0x38] sm:$0xf] %v12958
    %13533 = vst [vmem:[#allocation2 + $0x3c] sm:$0xf] %v12959
    %13534 = vst [vmem:[#allocation2 + $0x40] sm:$0xf] %v12960
    %13535 = vst [vmem:[#allocation2 + $0x44] sm:$0xf] %v12961
    %13536 = vst [vmem:[#allocation2 + $0x48] sm:$0xf] %v12962
    %13537 = vst [vmem:[#allocation2 + $0x4c] sm:$0xf] %v12963
    %13538 = vst [vmem:[#allocation2 + $0x50] sm:$0xf] %v12964
    %13539 = vst [vmem:[#allocation2 + $0x54] sm:$0xf] %v12965
    %13540 = vst [vmem:[#allocation2 + $0x58] sm:$0xf] %v12966
    %13541 = vst [vmem:[#allocation2 + $0x5c] sm:$0xf] %v12967
    %13542 = vst [vmem:[#allocation2 + $0x60] sm:$0xf] %v12968
    %13543 = vst [vmem:[#allocation2 + $0x64] sm:$0xf] %v12969
    %13544 = vst [vmem:[#allocation2 + $0x68] sm:$0xf] %v12970
    %13545 = vst [vmem:[#allocation2 + $0x6c] sm:$0xf] %v12971
    %13546 = vst [vmem:[#allocation2 + $0x70] sm:$0xf] %v12972
    %13547 = vst [vmem:[#allocation2 + $0x74] sm:$0xf] %v12973
    %13548 = vst [vmem:[#allocation2 + $0x78] sm:$0xf] %v12974
    %13549 = vst [vmem:[#allocation2 + $0x7c] sm:$0xf] %v12975
    %13550 = vst [vmem:[#allocation2 + $0x80] sm:$0xf] %v12976
    %13551 = vst [vmem:[#allocation2 + $0x84] sm:$0xf] %v12977
    %13552 = vst [vmem:[#allocation2 + $0x88] sm:$0xf] %v12978
    %13553 = vst [vmem:[#allocation2 + $0x8c] sm:$0xf] %v12979
    %13554 = vst [vmem:[#allocation2 + $0x90] sm:$0xf] %v12980
    %13555 = vst [vmem:[#allocation2 + $0x94] sm:$0xf] %v12981
    %13556 = vst [vmem:[#allocation2 + $0x98] sm:$0xf] %v12982
    %13557 = vst [vmem:[#allocation2 + $0x9c] sm:$0xf] %v12983
    %13558 = vst [vmem:[#allocation2 + $0xa0] sm:$0xf] %v12984
    %13559 = vst [vmem:[#allocation2 + $0xa4] sm:$0xf] %v12985
    %13560 = vst [vmem:[#allocation2 + $0xa8] sm:$0xf] %v12986
    %13561 = vst [vmem:[#allocation2 + $0xac] sm:$0xf] %v12987
    %13562 = vst [vmem:[#allocation2 + $0xb0] sm:$0xf] %v12988
    %13563 = vst [vmem:[#allocation2 + $0xb4] sm:$0xf] %v12989
    %13564 = vst [vmem:[#allocation2 + $0xb8] sm:$0xf] %v12990
    %13565 = vst [vmem:[#allocation2 + $0xbc] sm:$0xf] %v12991
    %13566 = vst [vmem:[#allocation2 + $0xc0] sm:$0xf] %v12992
    %13567 = vst [vmem:[#allocation2 + $0xc4] sm:$0xf] %v12993
    %13568 = vst [vmem:[#allocation2 + $0xc8] sm:$0xf] %v12994
    %13569 = vst [vmem:[#allocation2 + $0xcc] sm:$0xf] %v12995
    %13570 = vst [vmem:[#allocation2 + $0xd0] sm:$0xf] %v12996
    %13571 = vst [vmem:[#allocation2 + $0xd4] sm:$0xf] %v12997
    %13572 = vst [vmem:[#allocation2 + $0xd8] sm:$0xf] %v12998
    %13573 = vst [vmem:[#allocation2 + $0xdc] sm:$0xf] %v12999
    %13574 = vst [vmem:[#allocation2 + $0xe0] sm:$0xf] %v13000
    %13575 = vst [vmem:[#allocation2 + $0xe4] sm:$0xf] %v13001
    %13576 = vst [vmem:[#allocation2 + $0xe8] sm:$0xf] %v13002
    %13577 = vst [vmem:[#allocation2 + $0xec] sm:$0xf] %v13003
    %13578 = vst [vmem:[#allocation2 + $0xf0] sm:$0xf] %v13004
    %13579 = vst [vmem:[#allocation2 + $0xf4] sm:$0xf] %v13005
    %13580 = vst [vmem:[#allocation2 + $0xf8] sm:$0xf] %v13006
    %13581 = vst [vmem:[#allocation2 + $0xfc] sm:$0xf] %v13007
    %13582 = vst [vmem:[#allocation2 + $0x100] sm:$0xf] %v13008
    %13583 = vst [vmem:[#allocation2 + $0x104] sm:$0xf] %v13009
    %13584 = vst [vmem:[#allocation2 + $0x108] sm:$0xf] %v13010
    %13585 = vst [vmem:[#allocation2 + $0x10c] sm:$0xf] %v13011
    %13586 = vst [vmem:[#allocation2 + $0x110] sm:$0xf] %v13012
    %13587 = vst [vmem:[#allocation2 + $0x114] sm:$0xf] %v13013
    %13588 = vst [vmem:[#allocation2 + $0x118] sm:$0xf] %v13014
    %13589 = vst [vmem:[#allocation2 + $0x11c] sm:$0xf] %v13015
    %13590 = vst [vmem:[#allocation2 + $0x120] sm:$0xf] %v13016
    %13591 = vst [vmem:[#allocation2 + $0x124] sm:$0xf] %v13017
    %13592 = vst [vmem:[#allocation2 + $0x128] sm:$0xf] %v13018
    %13593 = vst [vmem:[#allocation2 + $0x12c] sm:$0xf] %v13019
    %13594 = vst [vmem:[#allocation2 + $0x130] sm:$0xf] %v13020
    %13595 = vst [vmem:[#allocation2 + $0x134] sm:$0xf] %v13021
    %13596 = vst [vmem:[#allocation2 + $0x138] sm:$0xf] %v13022
    %13597 = vst [vmem:[#allocation2 + $0x13c] sm:$0xf] %v13023
    %13598 = vst [vmem:[#allocation2 + $0x140] sm:$0xf] %v13024
    %13599 = vst [vmem:[#allocation2 + $0x144] sm:$0xf] %v13025
    %13600 = vst [vmem:[#allocation2 + $0x148] sm:$0xf] %v13026
    %13601 = vst [vmem:[#allocation2 + $0x14c] sm:$0xf] %v13027
    %13602 = vst [vmem:[#allocation2 + $0x150] sm:$0xf] %v13028
    %13603 = vst [vmem:[#allocation2 + $0x154] sm:$0xf] %v13029
    %13604 = vst [vmem:[#allocation2 + $0x158] sm:$0xf] %v13030
    %13605 = vst [vmem:[#allocation2 + $0x15c] sm:$0xf] %v13031
    %13606 = vst [vmem:[#allocation2 + $0x160] sm:$0xf] %v13032
    %13607 = vst [vmem:[#allocation2 + $0x164] sm:$0xf] %v13033
    %13608 = vst [vmem:[#allocation2 + $0x168] sm:$0xf] %v13034
    %13609 = vst [vmem:[#allocation2 + $0x16c] sm:$0xf] %v13035
    %13610 = vst [vmem:[#allocation2 + $0x170] sm:$0xf] %v13036
    %13611 = vst [vmem:[#allocation2 + $0x174] sm:$0xf] %v13037
    %13612 = vst [vmem:[#allocation2 + $0x178] sm:$0xf] %v13038
    %13613 = vst [vmem:[#allocation2 + $0x17c] sm:$0xf] %v13039
    %13614 = vst [vmem:[#allocation2 + $0x180] sm:$0xf] %v13040
    %13615 = vst [vmem:[#allocation2 + $0x184] sm:$0xf] %v13041
    %13616 = vst [vmem:[#allocation2 + $0x188] sm:$0xf] %v13042
    %13617 = vst [vmem:[#allocation2 + $0x18c] sm:$0xf] %v13043
    %13618 = vst [vmem:[#allocation2 + $0x190] sm:$0xf] %v13044
    %13619 = vst [vmem:[#allocation2 + $0x194] sm:$0xf] %v13045
    %13620 = vst [vmem:[#allocation2 + $0x198] sm:$0xf] %v13046
    %13621 = vst [vmem:[#allocation2 + $0x19c] sm:$0xf] %v13047
    %13622 = vst [vmem:[#allocation2 + $0x1a0] sm:$0xf] %v13048
    %13623 = vst [vmem:[#allocation2 + $0x1a4] sm:$0xf] %v13049
    %13624 = vst [vmem:[#allocation2 + $0x1a8] sm:$0xf] %v13050
    %13625 = vst [vmem:[#allocation2 + $0x1ac] sm:$0xf] %v13051
    %13626 = vst [vmem:[#allocation2 + $0x1b0] sm:$0xf] %v13052
    %13627 = vst [vmem:[#allocation2 + $0x1b4] sm:$0xf] %v13053
    %13628 = vst [vmem:[#allocation2 + $0x1b8] sm:$0xf] %v13054
    %13629 = vst [vmem:[#allocation2 + $0x1bc] sm:$0xf] %v13055
    %13630 = vst [vmem:[#allocation2 + $0x1c0] sm:$0xf] %v13056
    %13631 = vst [vmem:[#allocation2 + $0x1c4] sm:$0xf] %v13057
    %13632 = vst [vmem:[#allocation2 + $0x1c8] sm:$0xf] %v13058
    %13633 = vst [vmem:[#allocation2 + $0x1cc] sm:$0xf] %v13059
    %13634 = vst [vmem:[#allocation2 + $0x1d0] sm:$0xf] %v13060
    %13635 = vst [vmem:[#allocation2 + $0x1d4] sm:$0xf] %v13061
    %13636 = vst [vmem:[#allocation2 + $0x1d8] sm:$0xf] %v13062
    %13637 = vst [vmem:[#allocation2 + $0x1dc] sm:$0xf] %v13063
    %13638 = vst [vmem:[#allocation2 + $0x1e0] sm:$0xf] %v13064
    %13639 = vst [vmem:[#allocation2 + $0x1e4] sm:$0xf] %v13065
    %13640 = vst [vmem:[#allocation2 + $0x1e8] sm:$0xf] %v13066
    %13641 = vst [vmem:[#allocation2 + $0x1ec] sm:$0xf] %v13067
    %13642 = vst [vmem:[#allocation2 + $0x1f0] sm:$0xf] %v13068
    %13643 = vst [vmem:[#allocation2 + $0x1f4] sm:$0xf] %v13069
    %13644 = vst [vmem:[#allocation2 + $0x1f8] sm:$0xf] %v13070
    %13645 = vst [vmem:[#allocation2 + $0x1fc] sm:$0xf] %v13071
    %13646 = vst [vmem:[#allocation2 + $0x200] sm:$0xf] %v13072
    %13647 = vst [vmem:[#allocation2 + $0x204] sm:$0xf] %v13073
    %13648 = vst [vmem:[#allocation2 + $0x208] sm:$0xf] %v13074
    %13649 = vst [vmem:[#allocation2 + $0x20c] sm:$0xf] %v13075
    %13650 = vst [vmem:[#allocation2 + $0x210] sm:$0xf] %v13076
    %13651 = vst [vmem:[#allocation2 + $0x214] sm:$0xf] %v13077
    %13652 = vst [vmem:[#allocation2 + $0x218] sm:$0xf] %v13078
    %13653 = vst [vmem:[#allocation2 + $0x21c] sm:$0xf] %v13079
    %13654 = vst [vmem:[#allocation2 + $0x220] sm:$0xf] %v13080
    %13655 = vst [vmem:[#allocation2 + $0x224] sm:$0xf] %v13081
    %13656 = vst [vmem:[#allocation2 + $0x228] sm:$0xf] %v13082
    %13657 = vst [vmem:[#allocation2 + $0x22c] sm:$0xf] %v13083
    %13658 = vst [vmem:[#allocation2 + $0x230] sm:$0xf] %v13084
    %13659 = vst [vmem:[#allocation2 + $0x234] sm:$0xf] %v13085
    %13660 = vst [vmem:[#allocation2 + $0x238] sm:$0xf] %v13086
    %13661 = vst [vmem:[#allocation2 + $0x23c] sm:$0xf] %v13087
    %13662 = vst [vmem:[#allocation2 + $0x240] sm:$0xf] %v13088
    %13663 = vst [vmem:[#allocation2 + $0x244] sm:$0xf] %v13089
    %13664 = vst [vmem:[#allocation2 + $0x248] sm:$0xf] %v13090
    %13665 = vst [vmem:[#allocation2 + $0x24c] sm:$0xf] %v13091
    %13666 = vst [vmem:[#allocation2 + $0x250] sm:$0xf] %v13092
    %13667 = vst [vmem:[#allocation2 + $0x254] sm:$0xf] %v13093
    %13668 = vst [vmem:[#allocation2 + $0x258] sm:$0xf] %v13094
    %13669 = vst [vmem:[#allocation2 + $0x25c] sm:$0xf] %v13095
    %13670 = vst [vmem:[#allocation2 + $0x260] sm:$0xf] %v13096
    %13671 = vst [vmem:[#allocation2 + $0x264] sm:$0xf] %v13097
    %13672 = vst [vmem:[#allocation2 + $0x268] sm:$0xf] %v13098
    %13673 = vst [vmem:[#allocation2 + $0x26c] sm:$0xf] %v13099
    %13674 = vst [vmem:[#allocation2 + $0x270] sm:$0xf] %v13100
    %13675 = vst [vmem:[#allocation2 + $0x274] sm:$0xf] %v13101
    %13676 = vst [vmem:[#allocation2 + $0x278] sm:$0xf] %v13102
    %13677 = vst [vmem:[#allocation2 + $0x27c] sm:$0xf] %v13103
    %13678 = vst [vmem:[#allocation2 + $0x280] sm:$0xf] %v13104
    %13679 = vst [vmem:[#allocation2 + $0x284] sm:$0xf] %v13105
    %13680 = vst [vmem:[#allocation2 + $0x288] sm:$0xf] %v13106
    %13681 = vst [vmem:[#allocation2 + $0x28c] sm:$0xf] %v13107
    %13682 = vst [vmem:[#allocation2 + $0x290] sm:$0xf] %v13108
    %13683 = vst [vmem:[#allocation2 + $0x294] sm:$0xf] %v13109
    %13684 = vst [vmem:[#allocation2 + $0x298] sm:$0xf] %v13110
    %13685 = vst [vmem:[#allocation2 + $0x29c] sm:$0xf] %v13111
    %13686 = vst [vmem:[#allocation2 + $0x2a0] sm:$0xf] %v13112
    %13687 = vst [vmem:[#allocation2 + $0x2a4] sm:$0xf] %v13113
    %13688 = vst [vmem:[#allocation2 + $0x2a8] sm:$0xf] %v13114
    %13689 = vst [vmem:[#allocation2 + $0x2ac] sm:$0xf] %v13115
    %13690 = vst [vmem:[#allocation2 + $0x2b0] sm:$0xf] %v13116
    %13691 = vst [vmem:[#allocation2 + $0x2b4] sm:$0xf] %v13117
    %13692 = vst [vmem:[#allocation2 + $0x2b8] sm:$0xf] %v13118
    %13693 = vst [vmem:[#allocation2 + $0x2bc] sm:$0xf] %v13119
    %13694 = vst [vmem:[#allocation2 + $0x2c0] sm:$0xf] %v13120
    %13695 = vst [vmem:[#allocation2 + $0x2c4] sm:$0xf] %v13121
    %13696 = vst [vmem:[#allocation2 + $0x2c8] sm:$0xf] %v13122
    %13697 = vst [vmem:[#allocation2 + $0x2cc] sm:$0xf] %v13123
    %13698 = vst [vmem:[#allocation2 + $0x2d0] sm:$0xf] %v13124
    %13699 = vst [vmem:[#allocation2 + $0x2d4] sm:$0xf] %v13125
    %13700 = vst [vmem:[#allocation2 + $0x2d8] sm:$0xf] %v13126
    %13701 = vst [vmem:[#allocation2 + $0x2dc] sm:$0xf] %v13127
    %13702 = vst [vmem:[#allocation2 + $0x2e0] sm:$0xf] %v13128
    %13703 = vst [vmem:[#allocation2 + $0x2e4] sm:$0xf] %v13129
    %13704 = vst [vmem:[#allocation2 + $0x2e8] sm:$0xf] %v13130
    %13705 = vst [vmem:[#allocation2 + $0x2ec] sm:$0xf] %v13131
    %13706 = vst [vmem:[#allocation2 + $0x2f0] sm:$0xf] %v13132
    %13707 = vst [vmem:[#allocation2 + $0x2f4] sm:$0xf] %v13133
    %13708 = vst [vmem:[#allocation2 + $0x2f8] sm:$0xf] %v13134
    %13709 = vst [vmem:[#allocation2 + $0x2fc] sm:$0xf] %v13135
    %13710 = vst [vmem:[#allocation2 + $0x300] sm:$0xf] %v13136
    %13711 = vst [vmem:[#allocation2 + $0x304] sm:$0xf] %v13137
    %13712 = vst [vmem:[#allocation2 + $0x308] sm:$0xf] %v13138
    %13713 = vst [vmem:[#allocation2 + $0x30c] sm:$0xf] %v13139
    %13714 = vst [vmem:[#allocation2 + $0x310] sm:$0xf] %v13140
    %13715 = vst [vmem:[#allocation2 + $0x314] sm:$0xf] %v13141
    %13716 = vst [vmem:[#allocation2 + $0x318] sm:$0xf] %v13142
    %13717 = vst [vmem:[#allocation2 + $0x31c] sm:$0xf] %v13143
    %13718 = vst [vmem:[#allocation2 + $0x320] sm:$0xf] %v13144
    %13719 = vst [vmem:[#allocation2 + $0x324] sm:$0xf] %v13145
    %13720 = vst [vmem:[#allocation2 + $0x328] sm:$0xf] %v13146
    %13721 = vst [vmem:[#allocation2 + $0x32c] sm:$0xf] %v13147
    %13722 = vst [vmem:[#allocation2 + $0x330] sm:$0xf] %v13148
    %13723 = vst [vmem:[#allocation2 + $0x334] sm:$0xf] %v13149
    %13724 = vst [vmem:[#allocation2 + $0x338] sm:$0xf] %v13150
    %13725 = vst [vmem:[#allocation2 + $0x33c] sm:$0xf] %v13151
    %13726 = vst [vmem:[#allocation2 + $0x340] sm:$0xf] %v13152
    %13727 = vst [vmem:[#allocation2 + $0x344] sm:$0xf] %v13153
    %13728 = vst [vmem:[#allocation2 + $0x348] sm:$0xf] %v13154
    %13729 = vst [vmem:[#allocation2 + $0x34c] sm:$0xf] %v13155
    %13730 = vst [vmem:[#allocation2 + $0x350] sm:$0xf] %v13156
    %13731 = vst [vmem:[#allocation2 + $0x354] sm:$0xf] %v13157
    %13732 = vst [vmem:[#allocation2 + $0x358] sm:$0xf] %v13158
    %13733 = vst [vmem:[#allocation2 + $0x35c] sm:$0xf] %v13159
    %13734 = vst [vmem:[#allocation2 + $0x360] sm:$0xf] %v13160
    %13735 = vst [vmem:[#allocation2 + $0x364] sm:$0xf] %v13161
    %13736 = vst [vmem:[#allocation2 + $0x368] sm:$0xf] %v13162
    %13737 = vst [vmem:[#allocation2 + $0x36c] sm:$0xf] %v13163
    %13738 = vst [vmem:[#allocation2 + $0x370] sm:$0xf] %v13164
    %13739 = vst [vmem:[#allocation2 + $0x374] sm:$0xf] %v13165
    %13740 = vst [vmem:[#allocation2 + $0x378] sm:$0xf] %v13166
    %13741 = vst [vmem:[#allocation2 + $0x37c] sm:$0xf] %v13167
    %13742 = vst [vmem:[#allocation2 + $0x380] sm:$0xf] %v13168
    %13743 = vst [vmem:[#allocation2 + $0x384] sm:$0xf] %v13169
    %13744 = vst [vmem:[#allocation2 + $0x388] sm:$0xf] %v13170
    %13745 = vst [vmem:[#allocation2 + $0x38c] sm:$0xf] %v13171
    %13746 = vst [vmem:[#allocation2 + $0x390] sm:$0xf] %v13172
    %13747 = vst [vmem:[#allocation2 + $0x394] sm:$0xf] %v13173
    %13748 = vst [vmem:[#allocation2 + $0x398] sm:$0xf] %v13174
    %13749 = vst [vmem:[#allocation2 + $0x39c] sm:$0xf] %v13175
    %13750 = vst [vmem:[#allocation2 + $0x3a0] sm:$0xf] %v13176
    %13751 = vst [vmem:[#allocation2 + $0x3a4] sm:$0xf] %v13177
    %13752 = vst [vmem:[#allocation2 + $0x3a8] sm:$0xf] %v13178
    %13753 = vst [vmem:[#allocation2 + $0x3ac] sm:$0xf] %v13179
    %13754 = vst [vmem:[#allocation2 + $0x3b0] sm:$0xf] %v13180
    %13755 = vst [vmem:[#allocation2 + $0x3b4] sm:$0xf] %v13181
    %13756 = vst [vmem:[#allocation2 + $0x3b8] sm:$0xf] %v13182
    %13757 = vst [vmem:[#allocation2 + $0x3bc] sm:$0xf] %v13183
    %13758 = vst [vmem:[#allocation2 + $0x3c0] sm:$0xf] %v13184
    %13759 = vst [vmem:[#allocation2 + $0x3c4] sm:$0xf] %v13185
    %13760 = vst [vmem:[#allocation2 + $0x3c8] sm:$0xf] %v13186
    %13761 = vst [vmem:[#allocation2 + $0x3cc] sm:$0xf] %v13187
    %13762 = vst [vmem:[#allocation2 + $0x3d0] sm:$0xf] %v13188
    %13763 = vst [vmem:[#allocation2 + $0x3d4] sm:$0xf] %v13189
    %13764 = vst [vmem:[#allocation2 + $0x3d8] sm:$0xf] %v13190
    %13765 = vst [vmem:[#allocation2 + $0x3dc] sm:$0xf] %v13191
    %13766 = vst [vmem:[#allocation2 + $0x3e0] sm:$0xf] %v13192
    %13767 = vst [vmem:[#allocation2 + $0x3e4] sm:$0xf] %v13193
    %13768 = vst [vmem:[#allocation2 + $0x3e8] sm:$0xf] %v13194
    %13769 = vst [vmem:[#allocation2 + $0x3ec] sm:$0xf] %v13195
    %13770 = vst [vmem:[#allocation2 + $0x3f0] sm:$0xf] %v13196
    %13771 = vst [vmem:[#allocation2 + $0x3f4] sm:$0xf] %v13197
    %13772 = vst [vmem:[#allocation2 + $0x3f8] sm:$0xf] %v13198
    %13773 = vst [vmem:[#allocation2 + $0x3fc] sm:$0xf] %v13199
    %13774 = vst [vmem:[#allocation2 + $0x400] sm:$0xf] %v13200
    %13775 = vst [vmem:[#allocation2 + $0x404] sm:$0xf] %v13201
    %13776 = vst [vmem:[#allocation2 + $0x408] sm:$0xf] %v13202
    %13777 = vst [vmem:[#allocation2 + $0x40c] sm:$0xf] %v13203
    %13778 = vst [vmem:[#allocation2 + $0x410] sm:$0xf] %v13204
    %13779 = vst [vmem:[#allocation2 + $0x414] sm:$0xf] %v13205
    %13780 = vst [vmem:[#allocation2 + $0x418] sm:$0xf] %v13206
    %13781 = vst [vmem:[#allocation2 + $0x41c] sm:$0xf] %v13207
    %13782 = vst [vmem:[#allocation2 + $0x420] sm:$0xf] %v13208
    %13783 = vst [vmem:[#allocation2 + $0x424] sm:$0xf] %v13209
    %13784 = vst [vmem:[#allocation2 + $0x428] sm:$0xf] %v13210
    %13785 = vst [vmem:[#allocation2 + $0x42c] sm:$0xf] %v13211
    %13786 = vst [vmem:[#allocation2 + $0x430] sm:$0xf] %v13212
    %13787 = vst [vmem:[#allocation2 + $0x434] sm:$0xf] %v13213
    %13788 = vst [vmem:[#allocation2 + $0x438] sm:$0xf] %v13214
    %13789 = vst [vmem:[#allocation2 + $0x43c] sm:$0xf] %v13215
    %13790 = vst [vmem:[#allocation2 + $0x440] sm:$0xf] %v13216
    %13791 = vst [vmem:[#allocation2 + $0x444] sm:$0xf] %v13217
    %13792 = vst [vmem:[#allocation2 + $0x448] sm:$0xf] %v13218
    %13793 = vst [vmem:[#allocation2 + $0x44c] sm:$0xf] %v13219
    %13794 = vst [vmem:[#allocation2 + $0x450] sm:$0xf] %v13220
    %13795 = vst [vmem:[#allocation2 + $0x454] sm:$0xf] %v13221
    %13796 = vst [vmem:[#allocation2 + $0x458] sm:$0xf] %v13222
    %13797 = vst [vmem:[#allocation2 + $0x45c] sm:$0xf] %v13223
    %13798 = vst [vmem:[#allocation2 + $0x460] sm:$0xf] %v13224
    %13799 = vst [vmem:[#allocation2 + $0x464] sm:$0xf] %v13225
    %13800 = vst [vmem:[#allocation2 + $0x468] sm:$0xf] %v13226
    %13801 = vst [vmem:[#allocation2 + $0x46c] sm:$0xf] %v13227
    %13802 = vst [vmem:[#allocation2 + $0x470] sm:$0xf] %v13228
    %13803 = vst [vmem:[#allocation2 + $0x474] sm:$0xf] %v13229
    %vm13804 = vcmask 1041408
    %vm13805 = vsmask.f32 1280
    %vm13806 = vmand %vm13804, %vm13805
    %v13807 = vld [vmem:[#allocation2 + $0x478] sm:$0x3]
    %v13808 = vsel %vm13806, %v13230, %v13807
    %13809 = vst [vmem:[#allocation2 + $0x478] sm:$0x3] %v13808
    %vm13810 = vcmask 1043457
    %vm13811 = vsmask.f32 7942
    %vm13812 = vmand %vm13810, %vm13811
    %v13813 = vld [vmem:[#allocation2 + $0x478] sm:$0xe]
    %v13814 = vsel %vm13812, 0, %v13813
    %13815 = vst [vmem:[#allocation2 + $0x478] sm:$0xe] %v13814
    %13816 = vst [vmem:[#allocation2 + $0x47c] sm:$0xf] 0
    // Predicated region
    $region14: #{tpu_custom_call.1} parent=1 // pred_check
      _
    $region15: #{tpu_custom_call.1} parent=1 // pred_check_branch
      %13818 = sbr.rel (0) target = $region17
    $region16: #{tpu_custom_call.1} parent=1 // pred_region
      %s13820 = ssub.s32 18432, 18432
      %13821 = vsyncadd [#allocation3], %s13820
      %s13822 = sshll.u32 [#allocation2], 4
      %s13823 = int_to_ptr.vmem [resolvable:$true] %s13822
      %13828 = dma.vmem_to_hbm [thread:$0]  %s13823, 18432, %s3, [#allocation3], 64, 64, 4
    $region17: #{tpu_custom_call.1} parent=1 // pred_fallthru
      _
    // Predicated region
    $region18: #{tpu_custom_call.1} parent=1 // pred_check
      _
    $region19: #{tpu_custom_call.1} parent=1 // pred_check_branch
      %13830 = sbr.rel (0) target = $region21
    $region20: #{tpu_custom_call.1} parent=1 // pred_region
      %13831 = dma.done [#allocation3], 18432
    $region21: #{tpu_custom_call.1} parent=1 // pred_fallthru
      _
    %13832 = vsyncpa [#allocation3], 1

</llo_original>
